<compile_context>
chip_gen: v7x
topology: tpu7x:2x2x1
jax: 0.10.0
libtpu: 0.0.40
codegen_flags: <defaults>
</compile_context>

<pallas_src>
from functools import partial

import jax
import jax.numpy as jnp
from jax import lax
from jax.experimental import pallas as pl
from jax.experimental.pallas import tpu as pltpu


# 2-D dot_general dimension numbers (no batch dims).
_NN = (((1,), (0,)), ((), ()))   # A @ B
_NT = (((1,), (1,)), ((), ()))   # A @ B.T   (contract last dim of both)
_TN = (((0,), (0,)), ((), ()))   # A.T @ B   (contract first dim of both)


# ----------------------------------------------------------------------------
# in-kernel helpers
# ----------------------------------------------------------------------------

def _channel_layernorm(x, g, eps):
    """LayerNorm over the channel (sublane) axis of a (C, n) tile, * g.

    Centered two-pass variance (avoids the E[x^2]-mean^2 cancellation flagged
    in the review)."""
    mean = jnp.mean(x, axis=0, keepdims=True)
    xc = x - mean
    var = jnp.mean(xc * xc, axis=0, keepdims=True)
    return xc * lax.rsqrt(var + eps) * g


def _softmax_lastaxis(x):
    m = jnp.max(x, axis=-1, keepdims=True)
    e = jnp.exp(x - m)
    s = jnp.sum(e, axis=-1, keepdims=True)
    return e * pl.reciprocal(s, approx=True)          # EUP slot


def _softmax_firstaxis(x):
    m = jnp.max(x, axis=0, keepdims=True)
    e = jnp.exp(x - m)
    s = jnp.sum(e, axis=0, keepdims=True)
    return e * pl.reciprocal(s, approx=True)


# ----------------------------------------------------------------------------
# Fused kernels: Residual(PreNorm(dim, LinearAttention/Attention(dim)))
# ----------------------------------------------------------------------------

def _linattn_kernel(x_ref, wqkv_ref, wout_ref, bout_ref, gpre_ref, gout_ref,
                    o_ref, *, heads, dim_head, eps):
    x = x_ref[0].astype(jnp.float32)                       # (C, n), channel-major
    n = x.shape[-1]
    hidden = heads * dim_head
    scale = dim_head ** -0.5

    # PreNorm LayerNorm over channels, then 1x1 to_qkv conv as W @ x.
    xn = _channel_layernorm(x, gpre_ref[...], eps).astype(jnp.bfloat16)
    qkv = jnp.dot(wqkv_ref[...], xn,
                  preferred_element_type=jnp.float32)      # (3*hidden, n) d-major

    outs = []
    for h in range(heads):                                 # static unroll
        q = qkv[h * dim_head:(h + 1) * dim_head]                              # (d, n)
        k = qkv[hidden + h * dim_head:hidden + (h + 1) * dim_head]            # (d, n)
        v = qkv[2 * hidden + h * dim_head:2 * hidden + (h + 1) * dim_head]    # (d, n)

        q = _softmax_firstaxis(q) * scale       # softmax over d (sublanes)
        k = _softmax_lastaxis(k)                # softmax over n (lanes, dense)
        v = v * (1.0 / n)

        # context^T = v @ k^T (contract over n): (e, d)
        ctx_t = lax.dot_general(v.astype(jnp.bfloat16), k.astype(jnp.bfloat16),
                                _NT, preferred_element_type=jnp.float32)
        # out_h = context^T @ q : (e, n) -> n on lanes (lane-dense result)
        out_h = lax.dot_general(ctx_t.astype(jnp.bfloat16),
                                q.astype(jnp.bfloat16),
                                _NN, preferred_element_type=jnp.float32)
        outs.append(out_h)

    # Head folding: one (hidden=128, n) lane-dense slab -> to_out K = 128.
    attn = jnp.concatenate(outs, axis=0).astype(jnp.bfloat16)

    # to_out: 1x1 conv (+ bias), out-LayerNorm, fused residual add.
    y = jnp.dot(wout_ref[...], attn, preferred_element_type=jnp.float32)
    y = y + bout_ref[...]
    y = _channel_layernorm(y, gout_ref[...], eps)
    o_ref[0] = (y + x).astype(o_ref.dtype)                 # Residual: fn(x) + x


def _attn_kernel(x_ref, wqkv_ref, wout_ref, bout_ref, gpre_ref,
                 o_ref, *, heads, dim_head, eps):
    x = x_ref[0].astype(jnp.float32)                       # (C, n)
    hidden = heads * dim_head
    scale = dim_head ** -0.5

    xn = _channel_layernorm(x, gpre_ref[...], eps).astype(jnp.bfloat16)
    qkv = jnp.dot(wqkv_ref[...], xn,
                  preferred_element_type=jnp.float32)      # (3*hidden, n)

    outs = []
    for h in range(heads):
        q = (qkv[h * dim_head:(h + 1) * dim_head] * scale).astype(jnp.bfloat16)
        k = qkv[hidden + h * dim_head:hidden + (h + 1) * dim_head].astype(jnp.bfloat16)
        v = qkv[2 * hidden + h * dim_head:2 * hidden + (h + 1) * dim_head].astype(jnp.bfloat16)

        # sim = q^T @ k : (n_i, n_j); softmax over lanes (n_j), fully dense.
        sim = lax.dot_general(q, k, _TN, preferred_element_type=jnp.float32)
        attn = _softmax_lastaxis(sim).astype(jnp.bfloat16)
        # out_h = v @ attn^T : (d, n_i), channel-major, n on lanes.
        out_h = lax.dot_general(v, attn, _NT, preferred_element_type=jnp.float32)
        outs.append(out_h)

    out = jnp.concatenate(outs, axis=0).astype(jnp.bfloat16)   # (hidden, n)
    y = jnp.dot(wout_ref[...], out, preferred_element_type=jnp.float32)
    y = y + bout_ref[...]
    o_ref[0] = (y + x).astype(o_ref.dtype)                 # Residual: fn(x) + x


# ----------------------------------------------------------------------------
# Wrappers (pure reshapes only — no pads, no transposes)
# ----------------------------------------------------------------------------

def _residual_attention_call(kernel, x, wqkv, wout, bout, gains):
    B, C, H, W = x.shape
    n = H * W
    three_hidden, _ = wqkv.shape
    hidden = three_hidden // 3
    x3 = x.reshape(B, C, n)          # NCHW -> (B, C, n): contiguous reshape

    gain_specs = [pl.BlockSpec((C, 1), lambda b: (0, 0)) for _ in gains]
    out = pl.pallas_call(
        kernel,
        out_shape=jax.ShapeDtypeStruct((B, C, n), x.dtype),
        # B = 2 "parallel" steps -> one batch element per v7x TensorCore;
        # on single-TC v5e/v6e the extra step costs ~0.35 us.
        grid=(B,),
        in_specs=[pl.BlockSpec((1, C, n), lambda b: (b, 0, 0)),
                  pl.BlockSpec((three_hidden, C), lambda b: (0, 0)),
                  pl.BlockSpec((C, hidden), lambda b: (0, 0)),
                  pl.BlockSpec((C, 1), lambda b: (0, 0))] + gain_specs,
        out_specs=pl.BlockSpec((1, C, n), lambda b: (b, 0, 0)),
        compiler_params=pltpu.CompilerParams(
            dimension_semantics=("parallel",)),
    )(x3, wqkv, wout, bout, *gains)
    return out.reshape(B, C, H, W)


def residual_prenorm_linear_attention(x, p, heads=4, dim_head=32):
    """Residual(PreNorm(dim, LinearAttention(dim)))(x) = fn(x) + x, NCHW."""
    C = x.shape[1]
    hidden = heads * dim_head
    wqkv = p['to_qkv_w'].reshape(3 * hidden, C).astype(jnp.bfloat16)
    wout = p['to_out_w'].reshape(C, hidden).astype(jnp.bfloat16)
    bout = p['to_out_b'].reshape(C, 1).astype(jnp.float32)
    gpre = p['prenorm_g'].reshape(C, 1).astype(jnp.float32)
    gout = p['out_ln_g'].reshape(C, 1).astype(jnp.float32)
    kernel = partial(_linattn_kernel, heads=heads, dim_head=dim_head, eps=1e-5)
    return _residual_attention_call(kernel, x, wqkv, wout, bout, [gpre, gout])


def residual_prenorm_attention(x, p, heads=4, dim_head=32):
    """Residual(PreNorm(dim, Attention(dim)))(x) = fn(x) + x, NCHW."""
    C = x.shape[1]
    hidden = heads * dim_head
    wqkv = p['to_qkv_w'].reshape(3 * hidden, C).astype(jnp.bfloat16)
    wout = p['to_out_w'].reshape(C, hidden).astype(jnp.bfloat16)
    bout = p['to_out_b'].reshape(C, 1).astype(jnp.float32)
    gpre = p['prenorm_g'].reshape(C, 1).astype(jnp.float32)
    kernel = partial(_attn_kernel, heads=heads, dim_head=dim_head, eps=1e-5)
    return _residual_attention_call(kernel, x, wqkv, wout, bout, [gpre])


# ----------------------------------------------------------------------------
# Pure-JAX f32 references (mirror the PyTorch modules)
# ----------------------------------------------------------------------------

def _layernorm_ref(x, g, eps=1e-5):
    mean = jnp.mean(x, axis=1, keepdims=True)
    xc = x - mean
    var = jnp.mean(xc * xc, axis=1, keepdims=True)
    return xc * lax.rsqrt(var + eps) * g.reshape(1, -1, 1)


def residual_linear_attention_ref(x, p, heads=4, dim_head=32):
    B, C, H, W = x.shape
    n = H * W
    hidden = heads * dim_head
    x3 = x.reshape(B, C, n).astype(jnp.float32)
    xn = _layernorm_ref(x3, p['prenorm_g'])
    qkv = jnp.einsum('oc,bcn->bon', p['to_qkv_w'].reshape(3 * hidden, C), xn)
    q, k, v = [t.reshape(B, heads, dim_head, n) for t in jnp.split(qkv, 3, axis=1)]
    q = jax.nn.softmax(q, axis=-2) * (dim_head ** -0.5)
    k = jax.nn.softmax(k, axis=-1)
    v = v / n
    ctx = jnp.einsum('bhdn,bhen->bhde', k, v)
    out = jnp.einsum('bhde,bhdn->bhen', ctx, q).reshape(B, hidden, n)
    y = jnp.einsum('oc,bcn->bon', p['to_out_w'].reshape(C, hidden), out)
    y = y + p['to_out_b'].reshape(1, C, 1)
    y = _layernorm_ref(y, p['out_ln_g'])
    return (y + x3).reshape(B, C, H, W)


def residual_attention_ref(x, p, heads=4, dim_head=32):
    B, C, H, W = x.shape
    n = H * W
    hidden = heads * dim_head
    x3 = x.reshape(B, C, n).astype(jnp.float32)
    xn = _layernorm_ref(x3, p['prenorm_g'])
    qkv = jnp.einsum('oc,bcn->bon', p['to_qkv_w'].reshape(3 * hidden, C), xn)
    q, k, v = [t.reshape(B, heads, dim_head, n) for t in jnp.split(qkv, 3, axis=1)]
    q = q * (dim_head ** -0.5)
    sim = jnp.einsum('bhdi,bhdj->bhij', q, k)
    attn = jax.nn.softmax(sim, axis=-1)
    out = jnp.einsum('bhij,bhdj->bhdi', attn, v).reshape(B, hidden, n)
    y = jnp.einsum('oc,bcn->bon', p['to_out_w'].reshape(C, hidden), out)
    y = y + p['to_out_b'].reshape(1, C, 1)
    return (y + x3).reshape(B, C, H, W)


# ----------------------------------------------------------------------------
# Main
# ----------------------------------------------------------------------------

if __name__ == "__main__":
    B, C, H, W = 2, 64, 16, 16
    HEADS, DIM_HEAD = 4, 32
    HIDDEN = HEADS * DIM_HEAD

    key = jax.random.PRNGKey(0)
    keys = jax.random.split(key, 10)
    x = jax.random.normal(keys[0], (B, C, H, W), jnp.float32)

    lin_p = {
        'prenorm_g': 1.0 + 0.1 * jax.random.normal(keys[1], (C,), jnp.float32),
        'to_qkv_w': 0.05 * jax.random.normal(keys[2], (3 * HIDDEN, C, 1, 1), jnp.float32),
        'to_out_w': 0.05 * jax.random.normal(keys[3], (C, HIDDEN, 1, 1), jnp.float32),
        'to_out_b': 0.02 * jax.random.normal(keys[4], (C,), jnp.float32),
        'out_ln_g': 1.0 + 0.1 * jax.random.normal(keys[5], (C,), jnp.float32),
    }
    attn_p = {
        'prenorm_g': 1.0 + 0.1 * jax.random.normal(keys[6], (C,), jnp.float32),
        'to_qkv_w': 0.05 * jax.random.normal(keys[7], (3 * HIDDEN, C, 1, 1), jnp.float32),
        'to_out_w': 0.05 * jax.random.normal(keys[8], (C, HIDDEN, 1, 1), jnp.float32),
        'to_out_b': 0.02 * jax.random.normal(keys[9], (C,), jnp.float32),
    }

    @jax.jit
    def forward(x, lin_p, attn_p):
        y = residual_prenorm_linear_attention(x, lin_p, HEADS, DIM_HEAD)
        return residual_prenorm_attention(y, attn_p, HEADS, DIM_HEAD)

    out = jax.block_until_ready(forward(x, lin_p, attn_p))
    assert out.shape == (B, C, H, W), out.shape
    assert bool(jnp.isfinite(out).all())

    # Pure-JAX f32 reference check; loose tolerance for bf16 MXU operands and
    # the EUP approx-reciprocal in the softmax denominators.
    ref = residual_attention_ref(
        residual_linear_attention_ref(x, lin_p, HEADS, DIM_HEAD),
        attn_p, HEADS, DIM_HEAD)
    err = float(jnp.max(jnp.abs(out - ref)))
    assert err < 2e-2, f"max abs error {err}"

    print("KERNEL_OK")
</pallas_src>

<mosaic_0001>
module attributes {stable_mosaic.version = 11 : i64} {
  func.func @_attn_kernel(%arg0: i32, %arg1: memref<1x64x256xf32, #tpu.memory_space<vmem>>, %arg2: memref<384x64xbf16, #tpu.memory_space<vmem>>, %arg3: memref<64x128xbf16, #tpu.memory_space<vmem>>, %arg4: memref<64x1xf32, #tpu.memory_space<vmem>>, %arg5: memref<64x1xf32, #tpu.memory_space<vmem>>, %arg6: memref<1x64x256xf32, #tpu.memory_space<vmem>>) attributes {dimension_semantics = [#tpu.dimension_semantics<parallel>], iteration_bounds = array<i64: 2>, scalar_prefetch = 0 : i64, scratch_operands = 0 : i64, tpu.core_type = #tpu.core_type<tc>, window_params = [{transform_indices = @transform_0, window_bounds = array<i64: 1, 64, 256>}, {pipeline_mode = #tpu.pipeline_mode<synchronous>, transform_indices = @transform_1, window_bounds = array<i64: 384, 64>}, {pipeline_mode = #tpu.pipeline_mode<synchronous>, transform_indices = @transform_2, window_bounds = array<i64: 64, 128>}, {pipeline_mode = #tpu.pipeline_mode<synchronous>, transform_indices = @transform_3, window_bounds = array<i64: 64, 1>}, {pipeline_mode = #tpu.pipeline_mode<synchronous>, transform_indices = @transform_4, window_bounds = array<i64: 64, 1>}, {transform_indices = @transform_5, window_bounds = array<i64: 1, 64, 256>}]} {
    %c0 = arith.constant 0 : index
    %c0_0 = arith.constant 0 : index
    %c0_1 = arith.constant 0 : index
    %0 = vector.load %arg1[%c0, %c0_0, %c0_1] : memref<1x64x256xf32, #tpu.memory_space<vmem>>, vector<1x64x256xf32>
    %1 = vector.shape_cast %0 : vector<1x64x256xf32> to vector<64x256xf32>
    %c0_2 = arith.constant 0 : index
    %c0_3 = arith.constant 0 : index
    %2 = vector.load %arg5[%c0_2, %c0_3] : memref<64x1xf32, #tpu.memory_space<vmem>>, vector<64x1xf32>
    %cst = arith.constant dense<0.000000e+00> : vector<256xf32>
    %3 = vector.multi_reduction <add>, %1, %cst [0] : vector<64x256xf32> to vector<256xf32>
    %4 = vector.shape_cast %3 : vector<256xf32> to vector<1x256xf32>
    %cst_4 = arith.constant 6.400000e+01 : f32
    %5 = vector.broadcast %cst_4 : f32 to vector<1x256xf32>
    %6 = arith.divf %4, %5 : vector<1x256xf32>
    %7 = vector.broadcast %6 : vector<1x256xf32> to vector<64x256xf32>
    %8 = arith.subf %1, %7 : vector<64x256xf32>
    %9 = arith.mulf %8, %8 : vector<64x256xf32>
    %cst_5 = arith.constant dense<0.000000e+00> : vector<256xf32>
    %10 = vector.multi_reduction <add>, %9, %cst_5 [0] : vector<64x256xf32> to vector<256xf32>
    %11 = vector.shape_cast %10 : vector<256xf32> to vector<1x256xf32>
    %cst_6 = arith.constant 6.400000e+01 : f32
    %12 = vector.broadcast %cst_6 : f32 to vector<1x256xf32>
    %13 = arith.divf %11, %12 : vector<1x256xf32>
    %cst_7 = arith.constant 9.99999974E-6 : f32
    %14 = vector.broadcast %cst_7 : f32 to vector<1x256xf32>
    %15 = arith.addf %13, %14 : vector<1x256xf32>
    %16 = math.rsqrt %15 : vector<1x256xf32>
    %17 = vector.broadcast %16 : vector<1x256xf32> to vector<64x256xf32>
    %18 = arith.mulf %8, %17 : vector<64x256xf32>
    %19 = vector.broadcast %2 : vector<64x1xf32> to vector<64x256xf32>
    %20 = arith.mulf %18, %19 : vector<64x256xf32>
    %21 = arith.truncf %20 : vector<64x256xf32> to vector<64x256xbf16>
    %c0_8 = arith.constant 0 : index
    %c0_9 = arith.constant 0 : index
    %22 = vector.load %arg2[%c0_8, %c0_9] : memref<384x64xbf16, #tpu.memory_space<vmem>>, vector<384x64xbf16>
    %cst_10 = arith.constant dense<0.000000e+00> : vector<384x256xf32>
    %23 = tpu.matmul %22, %21, %cst_10 {dimension_numbers = #tpu.dot_dimension_numbers<[1], [0], [0], [1], [0, 0, 1, 1], [], []>} : vector<384x64xbf16>, vector<64x256xbf16>, vector<384x256xf32> -> vector<384x256xf32>
    %24 = vector.extract_strided_slice %23 {offsets = [0, 0], sizes = [32, 256], strides = [1, 1]} : vector<384x256xf32> to vector<32x256xf32>
    %cst_11 = arith.constant 0.176776692 : f32
    %25 = vector.broadcast %cst_11 : f32 to vector<32x256xf32>
    %26 = arith.mulf %24, %25 : vector<32x256xf32>
    %27 = arith.truncf %26 : vector<32x256xf32> to vector<32x256xbf16>
    %28 = vector.extract_strided_slice %23 {offsets = [128, 0], sizes = [32, 256], strides = [1, 1]} : vector<384x256xf32> to vector<32x256xf32>
    %29 = arith.truncf %28 : vector<32x256xf32> to vector<32x256xbf16>
    %30 = vector.extract_strided_slice %23 {offsets = [256, 0], sizes = [32, 256], strides = [1, 1]} : vector<384x256xf32> to vector<32x256xf32>
    %31 = arith.truncf %30 : vector<32x256xf32> to vector<32x256xbf16>
    %cst_12 = arith.constant dense<0.000000e+00> : vector<256x256xf32>
    %32 = tpu.matmul %27, %29, %cst_12 {dimension_numbers = #tpu.dot_dimension_numbers<[0], [0], [1], [1], [0, 1, 1, 1], [], []>} : vector<32x256xbf16>, vector<32x256xbf16>, vector<256x256xf32> -> vector<256x256xf32>
    %cst_13 = arith.constant dense<0xFF800000> : vector<256xf32>
    %33 = vector.multi_reduction <maximumf>, %32, %cst_13 [1] : vector<256x256xf32> to vector<256xf32>
    %34 = vector.shape_cast %33 : vector<256xf32> to vector<256x1xf32>
    %35 = vector.broadcast %34 : vector<256x1xf32> to vector<256x256xf32>
    %36 = arith.subf %32, %35 : vector<256x256xf32>
    %37 = math.exp %36 : vector<256x256xf32>
    %cst_14 = arith.constant dense<0.000000e+00> : vector<256xf32>
    %38 = vector.multi_reduction <add>, %37, %cst_14 [1] : vector<256x256xf32> to vector<256xf32>
    %39 = vector.shape_cast %38 : vector<256xf32> to vector<256x1xf32>
    %40 = tpu.reciprocal %39 {approx = true} : vector<256x1xf32> -> vector<256x1xf32>
    %41 = vector.broadcast %40 : vector<256x1xf32> to vector<256x256xf32>
    %42 = arith.mulf %37, %41 : vector<256x256xf32>
    %43 = arith.truncf %42 : vector<256x256xf32> to vector<256x256xbf16>
    %cst_15 = arith.constant dense<0.000000e+00> : vector<32x256xf32>
    %44 = tpu.matmul %31, %43, %cst_15 {dimension_numbers = #tpu.dot_dimension_numbers<[1], [1], [0], [0], [0, 0, 1, 0], [], []>} : vector<32x256xbf16>, vector<256x256xbf16>, vector<32x256xf32> -> vector<32x256xf32>
    %45 = vector.extract_strided_slice %23 {offsets = [32, 0], sizes = [32, 256], strides = [1, 1]} : vector<384x256xf32> to vector<32x256xf32>
    %cst_16 = arith.constant 0.176776692 : f32
    %46 = vector.broadcast %cst_16 : f32 to vector<32x256xf32>
    %47 = arith.mulf %45, %46 : vector<32x256xf32>
    %48 = arith.truncf %47 : vector<32x256xf32> to vector<32x256xbf16>
    %49 = vector.extract_strided_slice %23 {offsets = [160, 0], sizes = [32, 256], strides = [1, 1]} : vector<384x256xf32> to vector<32x256xf32>
    %50 = arith.truncf %49 : vector<32x256xf32> to vector<32x256xbf16>
    %51 = vector.extract_strided_slice %23 {offsets = [288, 0], sizes = [32, 256], strides = [1, 1]} : vector<384x256xf32> to vector<32x256xf32>
    %52 = arith.truncf %51 : vector<32x256xf32> to vector<32x256xbf16>
    %cst_17 = arith.constant dense<0.000000e+00> : vector<256x256xf32>
    %53 = tpu.matmul %48, %50, %cst_17 {dimension_numbers = #tpu.dot_dimension_numbers<[0], [0], [1], [1], [0, 1, 1, 1], [], []>} : vector<32x256xbf16>, vector<32x256xbf16>, vector<256x256xf32> -> vector<256x256xf32>
    %cst_18 = arith.constant dense<0xFF800000> : vector<256xf32>
    %54 = vector.multi_reduction <maximumf>, %53, %cst_18 [1] : vector<256x256xf32> to vector<256xf32>
    %55 = vector.shape_cast %54 : vector<256xf32> to vector<256x1xf32>
    %56 = vector.broadcast %55 : vector<256x1xf32> to vector<256x256xf32>
    %57 = arith.subf %53, %56 : vector<256x256xf32>
    %58 = math.exp %57 : vector<256x256xf32>
    %cst_19 = arith.constant dense<0.000000e+00> : vector<256xf32>
    %59 = vector.multi_reduction <add>, %58, %cst_19 [1] : vector<256x256xf32> to vector<256xf32>
    %60 = vector.shape_cast %59 : vector<256xf32> to vector<256x1xf32>
    %61 = tpu.reciprocal %60 {approx = true} : vector<256x1xf32> -> vector<256x1xf32>
    %62 = vector.broadcast %61 : vector<256x1xf32> to vector<256x256xf32>
    %63 = arith.mulf %58, %62 : vector<256x256xf32>
    %64 = arith.truncf %63 : vector<256x256xf32> to vector<256x256xbf16>
    %cst_20 = arith.constant dense<0.000000e+00> : vector<32x256xf32>
    %65 = tpu.matmul %52, %64, %cst_20 {dimension_numbers = #tpu.dot_dimension_numbers<[1], [1], [0], [0], [0, 0, 1, 0], [], []>} : vector<32x256xbf16>, vector<256x256xbf16>, vector<32x256xf32> -> vector<32x256xf32>
    %66 = vector.extract_strided_slice %23 {offsets = [64, 0], sizes = [32, 256], strides = [1, 1]} : vector<384x256xf32> to vector<32x256xf32>
    %cst_21 = arith.constant 0.176776692 : f32
    %67 = vector.broadcast %cst_21 : f32 to vector<32x256xf32>
    %68 = arith.mulf %66, %67 : vector<32x256xf32>
    %69 = arith.truncf %68 : vector<32x256xf32> to vector<32x256xbf16>
    %70 = vector.extract_strided_slice %23 {offsets = [192, 0], sizes = [32, 256], strides = [1, 1]} : vector<384x256xf32> to vector<32x256xf32>
    %71 = arith.truncf %70 : vector<32x256xf32> to vector<32x256xbf16>
    %72 = vector.extract_strided_slice %23 {offsets = [320, 0], sizes = [32, 256], strides = [1, 1]} : vector<384x256xf32> to vector<32x256xf32>
    %73 = arith.truncf %72 : vector<32x256xf32> to vector<32x256xbf16>
    %cst_22 = arith.constant dense<0.000000e+00> : vector<256x256xf32>
    %74 = tpu.matmul %69, %71, %cst_22 {dimension_numbers = #tpu.dot_dimension_numbers<[0], [0], [1], [1], [0, 1, 1, 1], [], []>} : vector<32x256xbf16>, vector<32x256xbf16>, vector<256x256xf32> -> vector<256x256xf32>
    %cst_23 = arith.constant dense<0xFF800000> : vector<256xf32>
    %75 = vector.multi_reduction <maximumf>, %74, %cst_23 [1] : vector<256x256xf32> to vector<256xf32>
    %76 = vector.shape_cast %75 : vector<256xf32> to vector<256x1xf32>
    %77 = vector.broadcast %76 : vector<256x1xf32> to vector<256x256xf32>
    %78 = arith.subf %74, %77 : vector<256x256xf32>
    %79 = math.exp %78 : vector<256x256xf32>
    %cst_24 = arith.constant dense<0.000000e+00> : vector<256xf32>
    %80 = vector.multi_reduction <add>, %79, %cst_24 [1] : vector<256x256xf32> to vector<256xf32>
    %81 = vector.shape_cast %80 : vector<256xf32> to vector<256x1xf32>
    %82 = tpu.reciprocal %81 {approx = true} : vector<256x1xf32> -> vector<256x1xf32>
    %83 = vector.broadcast %82 : vector<256x1xf32> to vector<256x256xf32>
    %84 = arith.mulf %79, %83 : vector<256x256xf32>
    %85 = arith.truncf %84 : vector<256x256xf32> to vector<256x256xbf16>
    %cst_25 = arith.constant dense<0.000000e+00> : vector<32x256xf32>
    %86 = tpu.matmul %73, %85, %cst_25 {dimension_numbers = #tpu.dot_dimension_numbers<[1], [1], [0], [0], [0, 0, 1, 0], [], []>} : vector<32x256xbf16>, vector<256x256xbf16>, vector<32x256xf32> -> vector<32x256xf32>
    %87 = vector.extract_strided_slice %23 {offsets = [96, 0], sizes = [32, 256], strides = [1, 1]} : vector<384x256xf32> to vector<32x256xf32>
    %cst_26 = arith.constant 0.176776692 : f32
    %88 = vector.broadcast %cst_26 : f32 to vector<32x256xf32>
    %89 = arith.mulf %87, %88 : vector<32x256xf32>
    %90 = arith.truncf %89 : vector<32x256xf32> to vector<32x256xbf16>
    %91 = vector.extract_strided_slice %23 {offsets = [224, 0], sizes = [32, 256], strides = [1, 1]} : vector<384x256xf32> to vector<32x256xf32>
    %92 = arith.truncf %91 : vector<32x256xf32> to vector<32x256xbf16>
    %93 = vector.extract_strided_slice %23 {offsets = [352, 0], sizes = [32, 256], strides = [1, 1]} : vector<384x256xf32> to vector<32x256xf32>
    %94 = arith.truncf %93 : vector<32x256xf32> to vector<32x256xbf16>
    %cst_27 = arith.constant dense<0.000000e+00> : vector<256x256xf32>
    %95 = tpu.matmul %90, %92, %cst_27 {dimension_numbers = #tpu.dot_dimension_numbers<[0], [0], [1], [1], [0, 1, 1, 1], [], []>} : vector<32x256xbf16>, vector<32x256xbf16>, vector<256x256xf32> -> vector<256x256xf32>
    %cst_28 = arith.constant dense<0xFF800000> : vector<256xf32>
    %96 = vector.multi_reduction <maximumf>, %95, %cst_28 [1] : vector<256x256xf32> to vector<256xf32>
    %97 = vector.shape_cast %96 : vector<256xf32> to vector<256x1xf32>
    %98 = vector.broadcast %97 : vector<256x1xf32> to vector<256x256xf32>
    %99 = arith.subf %95, %98 : vector<256x256xf32>
    %100 = math.exp %99 : vector<256x256xf32>
    %cst_29 = arith.constant dense<0.000000e+00> : vector<256xf32>
    %101 = vector.multi_reduction <add>, %100, %cst_29 [1] : vector<256x256xf32> to vector<256xf32>
    %102 = vector.shape_cast %101 : vector<256xf32> to vector<256x1xf32>
    %103 = tpu.reciprocal %102 {approx = true} : vector<256x1xf32> -> vector<256x1xf32>
    %104 = vector.broadcast %103 : vector<256x1xf32> to vector<256x256xf32>
    %105 = arith.mulf %100, %104 : vector<256x256xf32>
    %106 = arith.truncf %105 : vector<256x256xf32> to vector<256x256xbf16>
    %cst_30 = arith.constant dense<0.000000e+00> : vector<32x256xf32>
    %107 = tpu.matmul %94, %106, %cst_30 {dimension_numbers = #tpu.dot_dimension_numbers<[1], [1], [0], [0], [0, 0, 1, 0], [], []>} : vector<32x256xbf16>, vector<256x256xbf16>, vector<32x256xf32> -> vector<32x256xf32>
    %108 = tpu.concatenate %44, %65, %86, %107 in 0 : vector<32x256xf32>, vector<32x256xf32>, vector<32x256xf32>, vector<32x256xf32> -> vector<128x256xf32>
    %109 = arith.truncf %108 : vector<128x256xf32> to vector<128x256xbf16>
    %c0_31 = arith.constant 0 : index
    %c0_32 = arith.constant 0 : index
    %110 = vector.load %arg3[%c0_31, %c0_32] : memref<64x128xbf16, #tpu.memory_space<vmem>>, vector<64x128xbf16>
    %cst_33 = arith.constant dense<0.000000e+00> : vector<64x256xf32>
    %111 = tpu.matmul %110, %109, %cst_33 {dimension_numbers = #tpu.dot_dimension_numbers<[1], [0], [0], [1], [0, 0, 1, 1], [], []>} : vector<64x128xbf16>, vector<128x256xbf16>, vector<64x256xf32> -> vector<64x256xf32>
    %c0_34 = arith.constant 0 : index
    %c0_35 = arith.constant 0 : index
    %112 = vector.load %arg4[%c0_34, %c0_35] : memref<64x1xf32, #tpu.memory_space<vmem>>, vector<64x1xf32>
    %113 = vector.broadcast %112 : vector<64x1xf32> to vector<64x256xf32>
    %114 = arith.addf %111, %113 : vector<64x256xf32>
    %115 = arith.addf %114, %1 : vector<64x256xf32>
    %c0_36 = arith.constant 0 : index
    %c0_37 = arith.constant 0 : index
    %c0_38 = arith.constant 0 : index
    %116 = vector.load %arg6[%c0_36, %c0_37, %c0_38] : memref<1x64x256xf32, #tpu.memory_space<vmem>>, vector<1x64x256xf32>
    %117 = vector.shape_cast %116 : vector<1x64x256xf32> to vector<64x256xf32>
    %118 = vector.shape_cast %115 : vector<64x256xf32> to vector<1x64x256xf32>
    tpu.vector_store %arg6[%c0_36, %c0_37, %c0_38], %118 {strides = array<i32>} : memref<1x64x256xf32, #tpu.memory_space<vmem>>, vector<1x64x256xf32>,
    return
  }
  func.func @transform_0(%arg0: i32) -> (i32, i32, i32) {
    %c0_i32 = arith.constant 0 : i32
    %c0_i32_0 = arith.constant 0 : i32
    %c0_i32_1 = arith.constant 0 : i32
    return %arg0, %c0_i32, %c0_i32_0 : i32, i32, i32
  }
  func.func @transform_1(%arg0: i32) -> (i32, i32) {
    %c0_i32 = arith.constant 0 : i32
    %c0_i32_0 = arith.constant 0 : i32
    %c0_i32_1 = arith.constant 0 : i32
    return %c0_i32, %c0_i32_0 : i32, i32
  }
  func.func @transform_2(%arg0: i32) -> (i32, i32) {
    %c0_i32 = arith.constant 0 : i32
    %c0_i32_0 = arith.constant 0 : i32
    %c0_i32_1 = arith.constant 0 : i32
    return %c0_i32, %c0_i32_0 : i32, i32
  }
  func.func @transform_3(%arg0: i32) -> (i32, i32) {
    %c0_i32 = arith.constant 0 : i32
    %c0_i32_0 = arith.constant 0 : i32
    %c0_i32_1 = arith.constant 0 : i32
    return %c0_i32, %c0_i32_0 : i32, i32
  }
  func.func @transform_4(%arg0: i32) -> (i32, i32) {
    %c0_i32 = arith.constant 0 : i32
    %c0_i32_0 = arith.constant 0 : i32
    %c0_i32_1 = arith.constant 0 : i32
    return %c0_i32, %c0_i32_0 : i32, i32
  }
  func.func @transform_5(%arg0: i32) -> (i32, i32, i32) {
    %c0_i32 = arith.constant 0 : i32
    %c0_i32_0 = arith.constant 0 : i32
    %c0_i32_1 = arith.constant 0 : i32
    return %arg0, %c0_i32, %c0_i32_0 : i32, i32, i32
  }
}

module attributes {stable_mosaic.version = 11 : i64} {
  func.func @_linattn_kernel(%arg0: i32, %arg1: memref<1x64x256xf32, #tpu.memory_space<vmem>>, %arg2: memref<384x64xbf16, #tpu.memory_space<vmem>>, %arg3: memref<64x128xbf16, #tpu.memory_space<vmem>>, %arg4: memref<64x1xf32, #tpu.memory_space<vmem>>, %arg5: memref<64x1xf32, #tpu.memory_space<vmem>>, %arg6: memref<64x1xf32, #tpu.memory_space<vmem>>, %arg7: memref<1x64x256xf32, #tpu.memory_space<vmem>>) attributes {dimension_semantics = [#tpu.dimension_semantics<parallel>], iteration_bounds = array<i64: 2>, scalar_prefetch = 0 : i64, scratch_operands = 0 : i64, tpu.core_type = #tpu.core_type<tc>, window_params = [{transform_indices = @transform_0, window_bounds = array<i64: 1, 64, 256>}, {pipeline_mode = #tpu.pipeline_mode<synchronous>, transform_indices = @transform_1, window_bounds = array<i64: 384, 64>}, {pipeline_mode = #tpu.pipeline_mode<synchronous>, transform_indices = @transform_2, window_bounds = array<i64: 64, 128>}, {pipeline_mode = #tpu.pipeline_mode<synchronous>, transform_indices = @transform_3, window_bounds = array<i64: 64, 1>}, {pipeline_mode = #tpu.pipeline_mode<synchronous>, transform_indices = @transform_4, window_bounds = array<i64: 64, 1>}, {pipeline_mode = #tpu.pipeline_mode<synchronous>, transform_indices = @transform_5, window_bounds = array<i64: 64, 1>}, {transform_indices = @transform_6, window_bounds = array<i64: 1, 64, 256>}]} {
    %c0 = arith.constant 0 : index
    %c0_0 = arith.constant 0 : index
    %c0_1 = arith.constant 0 : index
    %0 = vector.load %arg1[%c0, %c0_0, %c0_1] : memref<1x64x256xf32, #tpu.memory_space<vmem>>, vector<1x64x256xf32>
    %1 = vector.shape_cast %0 : vector<1x64x256xf32> to vector<64x256xf32>
    %c0_2 = arith.constant 0 : index
    %c0_3 = arith.constant 0 : index
    %2 = vector.load %arg5[%c0_2, %c0_3] : memref<64x1xf32, #tpu.memory_space<vmem>>, vector<64x1xf32>
    %cst = arith.constant dense<0.000000e+00> : vector<256xf32>
    %3 = vector.multi_reduction <add>, %1, %cst [0] : vector<64x256xf32> to vector<256xf32>
    %4 = vector.shape_cast %3 : vector<256xf32> to vector<1x256xf32>
    %cst_4 = arith.constant 6.400000e+01 : f32
    %5 = vector.broadcast %cst_4 : f32 to vector<1x256xf32>
    %6 = arith.divf %4, %5 : vector<1x256xf32>
    %7 = vector.broadcast %6 : vector<1x256xf32> to vector<64x256xf32>
    %8 = arith.subf %1, %7 : vector<64x256xf32>
    %9 = arith.mulf %8, %8 : vector<64x256xf32>
    %cst_5 = arith.constant dense<0.000000e+00> : vector<256xf32>
    %10 = vector.multi_reduction <add>, %9, %cst_5 [0] : vector<64x256xf32> to vector<256xf32>
    %11 = vector.shape_cast %10 : vector<256xf32> to vector<1x256xf32>
    %cst_6 = arith.constant 6.400000e+01 : f32
    %12 = vector.broadcast %cst_6 : f32 to vector<1x256xf32>
    %13 = arith.divf %11, %12 : vector<1x256xf32>
    %cst_7 = arith.constant 9.99999974E-6 : f32
    %14 = vector.broadcast %cst_7 : f32 to vector<1x256xf32>
    %15 = arith.addf %13, %14 : vector<1x256xf32>
    %16 = math.rsqrt %15 : vector<1x256xf32>
    %17 = vector.broadcast %16 : vector<1x256xf32> to vector<64x256xf32>
    %18 = arith.mulf %8, %17 : vector<64x256xf32>
    %19 = vector.broadcast %2 : vector<64x1xf32> to vector<64x256xf32>
    %20 = arith.mulf %18, %19 : vector<64x256xf32>
    %21 = arith.truncf %20 : vector<64x256xf32> to vector<64x256xbf16>
    %c0_8 = arith.constant 0 : index
    %c0_9 = arith.constant 0 : index
    %22 = vector.load %arg2[%c0_8, %c0_9] : memref<384x64xbf16, #tpu.memory_space<vmem>>, vector<384x64xbf16>
    %cst_10 = arith.constant dense<0.000000e+00> : vector<384x256xf32>
    %23 = tpu.matmul %22, %21, %cst_10 {dimension_numbers = #tpu.dot_dimension_numbers<[1], [0], [0], [1], [0, 0, 1, 1], [], []>} : vector<384x64xbf16>, vector<64x256xbf16>, vector<384x256xf32> -> vector<384x256xf32>
    %24 = vector.extract_strided_slice %23 {offsets = [0, 0], sizes = [32, 256], strides = [1, 1]} : vector<384x256xf32> to vector<32x256xf32>
    %25 = vector.extract_strided_slice %23 {offsets = [128, 0], sizes = [32, 256], strides = [1, 1]} : vector<384x256xf32> to vector<32x256xf32>
    %26 = vector.extract_strided_slice %23 {offsets = [256, 0], sizes = [32, 256], strides = [1, 1]} : vector<384x256xf32> to vector<32x256xf32>
    %cst_11 = arith.constant dense<0xFF800000> : vector<256xf32>
    %27 = vector.multi_reduction <maximumf>, %24, %cst_11 [0] : vector<32x256xf32> to vector<256xf32>
    %28 = vector.shape_cast %27 : vector<256xf32> to vector<1x256xf32>
    %29 = vector.broadcast %28 : vector<1x256xf32> to vector<32x256xf32>
    %30 = arith.subf %24, %29 : vector<32x256xf32>
    %31 = math.exp %30 : vector<32x256xf32>
    %cst_12 = arith.constant dense<0.000000e+00> : vector<256xf32>
    %32 = vector.multi_reduction <add>, %31, %cst_12 [0] : vector<32x256xf32> to vector<256xf32>
    %33 = vector.shape_cast %32 : vector<256xf32> to vector<1x256xf32>
    %34 = tpu.reciprocal %33 {approx = true} : vector<1x256xf32> -> vector<1x256xf32>
    %35 = vector.broadcast %34 : vector<1x256xf32> to vector<32x256xf32>
    %36 = arith.mulf %31, %35 : vector<32x256xf32>
    %cst_13 = arith.constant 0.176776692 : f32
    %37 = vector.broadcast %cst_13 : f32 to vector<32x256xf32>
    %38 = arith.mulf %36, %37 : vector<32x256xf32>
    %cst_14 = arith.constant dense<0xFF800000> : vector<32xf32>
    %39 = vector.multi_reduction <maximumf>, %25, %cst_14 [1] : vector<32x256xf32> to vector<32xf32>
    %40 = vector.shape_cast %39 : vector<32xf32> to vector<32x1xf32>
    %41 = vector.broadcast %40 : vector<32x1xf32> to vector<32x256xf32>
    %42 = arith.subf %25, %41 : vector<32x256xf32>
    %43 = math.exp %42 : vector<32x256xf32>
    %cst_15 = arith.constant dense<0.000000e+00> : vector<32xf32>
    %44 = vector.multi_reduction <add>, %43, %cst_15 [1] : vector<32x256xf32> to vector<32xf32>
    %45 = vector.shape_cast %44 : vector<32xf32> to vector<32x1xf32>
    %46 = tpu.reciprocal %45 {approx = true} : vector<32x1xf32> -> vector<32x1xf32>
    %47 = vector.broadcast %46 : vector<32x1xf32> to vector<32x256xf32>
    %48 = arith.mulf %43, %47 : vector<32x256xf32>
    %cst_16 = arith.constant 3.906250e-03 : f32
    %49 = vector.broadcast %cst_16 : f32 to vector<32x256xf32>
    %50 = arith.mulf %26, %49 : vector<32x256xf32>
    %51 = arith.truncf %50 : vector<32x256xf32> to vector<32x256xbf16>
    %52 = arith.truncf %48 : vector<32x256xf32> to vector<32x256xbf16>
    %cst_17 = arith.constant dense<0.000000e+00> : vector<32x32xf32>
    %53 = tpu.matmul %51, %52, %cst_17 {dimension_numbers = #tpu.dot_dimension_numbers<[1], [1], [0], [0], [0, 0, 1, 0], [], []>} : vector<32x256xbf16>, vector<32x256xbf16>, vector<32x32xf32> -> vector<32x32xf32>
    %54 = arith.truncf %53 : vector<32x32xf32> to vector<32x32xbf16>
    %55 = arith.truncf %38 : vector<32x256xf32> to vector<32x256xbf16>
    %cst_18 = arith.constant dense<0.000000e+00> : vector<32x256xf32>
    %56 = tpu.matmul %54, %55, %cst_18 {dimension_numbers = #tpu.dot_dimension_numbers<[1], [0], [0], [1], [0, 0, 1, 1], [], []>} : vector<32x32xbf16>, vector<32x256xbf16>, vector<32x256xf32> -> vector<32x256xf32>
    %57 = vector.extract_strided_slice %23 {offsets = [32, 0], sizes = [32, 256], strides = [1, 1]} : vector<384x256xf32> to vector<32x256xf32>
    %58 = vector.extract_strided_slice %23 {offsets = [160, 0], sizes = [32, 256], strides = [1, 1]} : vector<384x256xf32> to vector<32x256xf32>
    %59 = vector.extract_strided_slice %23 {offsets = [288, 0], sizes = [32, 256], strides = [1, 1]} : vector<384x256xf32> to vector<32x256xf32>
    %cst_19 = arith.constant dense<0xFF800000> : vector<256xf32>
    %60 = vector.multi_reduction <maximumf>, %57, %cst_19 [0] : vector<32x256xf32> to vector<256xf32>
    %61 = vector.shape_cast %60 : vector<256xf32> to vector<1x256xf32>
    %62 = vector.broadcast %61 : vector<1x256xf32> to vector<32x256xf32>
    %63 = arith.subf %57, %62 : vector<32x256xf32>
    %64 = math.exp %63 : vector<32x256xf32>
    %cst_20 = arith.constant dense<0.000000e+00> : vector<256xf32>
    %65 = vector.multi_reduction <add>, %64, %cst_20 [0] : vector<32x256xf32> to vector<256xf32>
    %66 = vector.shape_cast %65 : vector<256xf32> to vector<1x256xf32>
    %67 = tpu.reciprocal %66 {approx = true} : vector<1x256xf32> -> vector<1x256xf32>
    %68 = vector.broadcast %67 : vector<1x256xf32> to vector<32x256xf32>
    %69 = arith.mulf %64, %68 : vector<32x256xf32>
    %cst_21 = arith.constant 0.176776692 : f32
    %70 = vector.broadcast %cst_21 : f32 to vector<32x256xf32>
    %71 = arith.mulf %69, %70 : vector<32x256xf32>
    %cst_22 = arith.constant dense<0xFF800000> : vector<32xf32>
    %72 = vector.multi_reduction <maximumf>, %58, %cst_22 [1] : vector<32x256xf32> to vector<32xf32>
    %73 = vector.shape_cast %72 : vector<32xf32> to vector<32x1xf32>
    %74 = vector.broadcast %73 : vector<32x1xf32> to vector<32x256xf32>
    %75 = arith.subf %58, %74 : vector<32x256xf32>
    %76 = math.exp %75 : vector<32x256xf32>
    %cst_23 = arith.constant dense<0.000000e+00> : vector<32xf32>
    %77 = vector.multi_reduction <add>, %76, %cst_23 [1] : vector<32x256xf32> to vector<32xf32>
    %78 = vector.shape_cast %77 : vector<32xf32> to vector<32x1xf32>
    %79 = tpu.reciprocal %78 {approx = true} : vector<32x1xf32> -> vector<32x1xf32>
    %80 = vector.broadcast %79 : vector<32x1xf32> to vector<32x256xf32>
    %81 = arith.mulf %76, %80 : vector<32x256xf32>
    %cst_24 = arith.constant 3.906250e-03 : f32
    %82 = vector.broadcast %cst_24 : f32 to vector<32x256xf32>
    %83 = arith.mulf %59, %82 : vector<32x256xf32>
    %84 = arith.truncf %83 : vector<32x256xf32> to vector<32x256xbf16>
    %85 = arith.truncf %81 : vector<32x256xf32> to vector<32x256xbf16>
    %cst_25 = arith.constant dense<0.000000e+00> : vector<32x32xf32>
    %86 = tpu.matmul %84, %85, %cst_25 {dimension_numbers = #tpu.dot_dimension_numbers<[1], [1], [0], [0], [0, 0, 1, 0], [], []>} : vector<32x256xbf16>, vector<32x256xbf16>, vector<32x32xf32> -> vector<32x32xf32>
    %87 = arith.truncf %86 : vector<32x32xf32> to vector<32x32xbf16>
    %88 = arith.truncf %71 : vector<32x256xf32> to vector<32x256xbf16>
    %cst_26 = arith.constant dense<0.000000e+00> : vector<32x256xf32>
    %89 = tpu.matmul %87, %88, %cst_26 {dimension_numbers = #tpu.dot_dimension_numbers<[1], [0], [0], [1], [0, 0, 1, 1], [], []>} : vector<32x32xbf16>, vector<32x256xbf16>, vector<32x256xf32> -> vector<32x256xf32>
    %90 = vector.extract_strided_slice %23 {offsets = [64, 0], sizes = [32, 256], strides = [1, 1]} : vector<384x256xf32> to vector<32x256xf32>
    %91 = vector.extract_strided_slice %23 {offsets = [192, 0], sizes = [32, 256], strides = [1, 1]} : vector<384x256xf32> to vector<32x256xf32>
    %92 = vector.extract_strided_slice %23 {offsets = [320, 0], sizes = [32, 256], strides = [1, 1]} : vector<384x256xf32> to vector<32x256xf32>
    %cst_27 = arith.constant dense<0xFF800000> : vector<256xf32>
    %93 = vector.multi_reduction <maximumf>, %90, %cst_27 [0] : vector<32x256xf32> to vector<256xf32>
    %94 = vector.shape_cast %93 : vector<256xf32> to vector<1x256xf32>
    %95 = vector.broadcast %94 : vector<1x256xf32> to vector<32x256xf32>
    %96 = arith.subf %90, %95 : vector<32x256xf32>
    %97 = math.exp %96 : vector<32x256xf32>
    %cst_28 = arith.constant dense<0.000000e+00> : vector<256xf32>
    %98 = vector.multi_reduction <add>, %97, %cst_28 [0] : vector<32x256xf32> to vector<256xf32>
    %99 = vector.shape_cast %98 : vector<256xf32> to vector<1x256xf32>
    %100 = tpu.reciprocal %99 {approx = true} : vector<1x256xf32> -> vector<1x256xf32>
    %101 = vector.broadcast %100 : vector<1x256xf32> to vector<32x256xf32>
    %102 = arith.mulf %97, %101 : vector<32x256xf32>
    %cst_29 = arith.constant 0.176776692 : f32
    %103 = vector.broadcast %cst_29 : f32 to vector<32x256xf32>
    %104 = arith.mulf %102, %103 : vector<32x256xf32>
    %cst_30 = arith.constant dense<0xFF800000> : vector<32xf32>
    %105 = vector.multi_reduction <maximumf>, %91, %cst_30 [1] : vector<32x256xf32> to vector<32xf32>
    %106 = vector.shape_cast %105 : vector<32xf32> to vector<32x1xf32>
    %107 = vector.broadcast %106 : vector<32x1xf32> to vector<32x256xf32>
    %108 = arith.subf %91, %107 : vector<32x256xf32>
    %109 = math.exp %108 : vector<32x256xf32>
    %cst_31 = arith.constant dense<0.000000e+00> : vector<32xf32>
    %110 = vector.multi_reduction <add>, %109, %cst_31 [1] : vector<32x256xf32> to vector<32xf32>
    %111 = vector.shape_cast %110 : vector<32xf32> to vector<32x1xf32>
    %112 = tpu.reciprocal %111 {approx = true} : vector<32x1xf32> -> vector<32x1xf32>
    %113 = vector.broadcast %112 : vector<32x1xf32> to vector<32x256xf32>
    %114 = arith.mulf %109, %113 : vector<32x256xf32>
    %cst_32 = arith.constant 3.906250e-03 : f32
    %115 = vector.broadcast %cst_32 : f32 to vector<32x256xf32>
    %116 = arith.mulf %92, %115 : vector<32x256xf32>
    %117 = arith.truncf %116 : vector<32x256xf32> to vector<32x256xbf16>
    %118 = arith.truncf %114 : vector<32x256xf32> to vector<32x256xbf16>
    %cst_33 = arith.constant dense<0.000000e+00> : vector<32x32xf32>
    %119 = tpu.matmul %117, %118, %cst_33 {dimension_numbers = #tpu.dot_dimension_numbers<[1], [1], [0], [0], [0, 0, 1, 0], [], []>} : vector<32x256xbf16>, vector<32x256xbf16>, vector<32x32xf32> -> vector<32x32xf32>
    %120 = arith.truncf %119 : vector<32x32xf32> to vector<32x32xbf16>
    %121 = arith.truncf %104 : vector<32x256xf32> to vector<32x256xbf16>
    %cst_34 = arith.constant dense<0.000000e+00> : vector<32x256xf32>
    %122 = tpu.matmul %120, %121, %cst_34 {dimension_numbers = #tpu.dot_dimension_numbers<[1], [0], [0], [1], [0, 0, 1, 1], [], []>} : vector<32x32xbf16>, vector<32x256xbf16>, vector<32x256xf32> -> vector<32x256xf32>
    %123 = vector.extract_strided_slice %23 {offsets = [96, 0], sizes = [32, 256], strides = [1, 1]} : vector<384x256xf32> to vector<32x256xf32>
    %124 = vector.extract_strided_slice %23 {offsets = [224, 0], sizes = [32, 256], strides = [1, 1]} : vector<384x256xf32> to vector<32x256xf32>
    %125 = vector.extract_strided_slice %23 {offsets = [352, 0], sizes = [32, 256], strides = [1, 1]} : vector<384x256xf32> to vector<32x256xf32>
    %cst_35 = arith.constant dense<0xFF800000> : vector<256xf32>
    %126 = vector.multi_reduction <maximumf>, %123, %cst_35 [0] : vector<32x256xf32> to vector<256xf32>
    %127 = vector.shape_cast %126 : vector<256xf32> to vector<1x256xf32>
    %128 = vector.broadcast %127 : vector<1x256xf32> to vector<32x256xf32>
    %129 = arith.subf %123, %128 : vector<32x256xf32>
    %130 = math.exp %129 : vector<32x256xf32>
    %cst_36 = arith.constant dense<0.000000e+00> : vector<256xf32>
    %131 = vector.multi_reduction <add>, %130, %cst_36 [0] : vector<32x256xf32> to vector<256xf32>
    %132 = vector.shape_cast %131 : vector<256xf32> to vector<1x256xf32>
    %133 = tpu.reciprocal %132 {approx = true} : vector<1x256xf32> -> vector<1x256xf32>
    %134 = vector.broadcast %133 : vector<1x256xf32> to vector<32x256xf32>
    %135 = arith.mulf %130, %134 : vector<32x256xf32>
    %cst_37 = arith.constant 0.176776692 : f32
    %136 = vector.broadcast %cst_37 : f32 to vector<32x256xf32>
    %137 = arith.mulf %135, %136 : vector<32x256xf32>
    %cst_38 = arith.constant dense<0xFF800000> : vector<32xf32>
    %138 = vector.multi_reduction <maximumf>, %124, %cst_38 [1] : vector<32x256xf32> to vector<32xf32>
    %139 = vector.shape_cast %138 : vector<32xf32> to vector<32x1xf32>
    %140 = vector.broadcast %139 : vector<32x1xf32> to vector<32x256xf32>
    %141 = arith.subf %124, %140 : vector<32x256xf32>
    %142 = math.exp %141 : vector<32x256xf32>
    %cst_39 = arith.constant dense<0.000000e+00> : vector<32xf32>
    %143 = vector.multi_reduction <add>, %142, %cst_39 [1] : vector<32x256xf32> to vector<32xf32>
    %144 = vector.shape_cast %143 : vector<32xf32> to vector<32x1xf32>
    %145 = tpu.reciprocal %144 {approx = true} : vector<32x1xf32> -> vector<32x1xf32>
    %146 = vector.broadcast %145 : vector<32x1xf32> to vector<32x256xf32>
    %147 = arith.mulf %142, %146 : vector<32x256xf32>
    %cst_40 = arith.constant 3.906250e-03 : f32
    %148 = vector.broadcast %cst_40 : f32 to vector<32x256xf32>
    %149 = arith.mulf %125, %148 : vector<32x256xf32>
    %150 = arith.truncf %149 : vector<32x256xf32> to vector<32x256xbf16>
    %151 = arith.truncf %147 : vector<32x256xf32> to vector<32x256xbf16>
    %cst_41 = arith.constant dense<0.000000e+00> : vector<32x32xf32>
    %152 = tpu.matmul %150, %151, %cst_41 {dimension_numbers = #tpu.dot_dimension_numbers<[1], [1], [0], [0], [0, 0, 1, 0], [], []>} : vector<32x256xbf16>, vector<32x256xbf16>, vector<32x32xf32> -> vector<32x32xf32>
    %153 = arith.truncf %152 : vector<32x32xf32> to vector<32x32xbf16>
    %154 = arith.truncf %137 : vector<32x256xf32> to vector<32x256xbf16>
    %cst_42 = arith.constant dense<0.000000e+00> : vector<32x256xf32>
    %155 = tpu.matmul %153, %154, %cst_42 {dimension_numbers = #tpu.dot_dimension_numbers<[1], [0], [0], [1], [0, 0, 1, 1], [], []>} : vector<32x32xbf16>, vector<32x256xbf16>, vector<32x256xf32> -> vector<32x256xf32>
    %156 = tpu.concatenate %56, %89, %122, %155 in 0 : vector<32x256xf32>, vector<32x256xf32>, vector<32x256xf32>, vector<32x256xf32> -> vector<128x256xf32>
    %157 = arith.truncf %156 : vector<128x256xf32> to vector<128x256xbf16>
    %c0_43 = arith.constant 0 : index
    %c0_44 = arith.constant 0 : index
    %158 = vector.load %arg3[%c0_43, %c0_44] : memref<64x128xbf16, #tpu.memory_space<vmem>>, vector<64x128xbf16>
    %cst_45 = arith.constant dense<0.000000e+00> : vector<64x256xf32>
    %159 = tpu.matmul %158, %157, %cst_45 {dimension_numbers = #tpu.dot_dimension_numbers<[1], [0], [0], [1], [0, 0, 1, 1], [], []>} : vector<64x128xbf16>, vector<128x256xbf16>, vector<64x256xf32> -> vector<64x256xf32>
    %c0_46 = arith.constant 0 : index
    %c0_47 = arith.constant 0 : index
    %160 = vector.load %arg4[%c0_46, %c0_47] : memref<64x1xf32, #tpu.memory_space<vmem>>, vector<64x1xf32>
    %161 = vector.broadcast %160 : vector<64x1xf32> to vector<64x256xf32>
    %162 = arith.addf %159, %161 : vector<64x256xf32>
    %c0_48 = arith.constant 0 : index
    %c0_49 = arith.constant 0 : index
    %163 = vector.load %arg6[%c0_48, %c0_49] : memref<64x1xf32, #tpu.memory_space<vmem>>, vector<64x1xf32>
    %cst_50 = arith.constant dense<0.000000e+00> : vector<256xf32>
    %164 = vector.multi_reduction <add>, %162, %cst_50 [0] : vector<64x256xf32> to vector<256xf32>
    %165 = vector.shape_cast %164 : vector<256xf32> to vector<1x256xf32>
    %cst_51 = arith.constant 6.400000e+01 : f32
    %166 = vector.broadcast %cst_51 : f32 to vector<1x256xf32>
    %167 = arith.divf %165, %166 : vector<1x256xf32>
    %168 = vector.broadcast %167 : vector<1x256xf32> to vector<64x256xf32>
    %169 = arith.subf %162, %168 : vector<64x256xf32>
    %170 = arith.mulf %169, %169 : vector<64x256xf32>
    %cst_52 = arith.constant dense<0.000000e+00> : vector<256xf32>
    %171 = vector.multi_reduction <add>, %170, %cst_52 [0] : vector<64x256xf32> to vector<256xf32>
    %172 = vector.shape_cast %171 : vector<256xf32> to vector<1x256xf32>
    %cst_53 = arith.constant 6.400000e+01 : f32
    %173 = vector.broadcast %cst_53 : f32 to vector<1x256xf32>
    %174 = arith.divf %172, %173 : vector<1x256xf32>
    %cst_54 = arith.constant 9.99999974E-6 : f32
    %175 = vector.broadcast %cst_54 : f32 to vector<1x256xf32>
    %176 = arith.addf %174, %175 : vector<1x256xf32>
    %177 = math.rsqrt %176 : vector<1x256xf32>
    %178 = vector.broadcast %177 : vector<1x256xf32> to vector<64x256xf32>
    %179 = arith.mulf %169, %178 : vector<64x256xf32>
    %180 = vector.broadcast %163 : vector<64x1xf32> to vector<64x256xf32>
    %181 = arith.mulf %179, %180 : vector<64x256xf32>
    %182 = arith.addf %181, %1 : vector<64x256xf32>
    %c0_55 = arith.constant 0 : index
    %c0_56 = arith.constant 0 : index
    %c0_57 = arith.constant 0 : index
    %183 = vector.load %arg7[%c0_55, %c0_56, %c0_57] : memref<1x64x256xf32, #tpu.memory_space<vmem>>, vector<1x64x256xf32>
    %184 = vector.shape_cast %183 : vector<1x64x256xf32> to vector<64x256xf32>
    %185 = vector.shape_cast %182 : vector<64x256xf32> to vector<1x64x256xf32>
    tpu.vector_store %arg7[%c0_55, %c0_56, %c0_57], %185 {strides = array<i32>} : memref<1x64x256xf32, #tpu.memory_space<vmem>>, vector<1x64x256xf32>,
    return
  }
  func.func @transform_0(%arg0: i32) -> (i32, i32, i32) {
    %c0_i32 = arith.constant 0 : i32
    %c0_i32_0 = arith.constant 0 : i32
    %c0_i32_1 = arith.constant 0 : i32
    return %arg0, %c0_i32, %c0_i32_0 : i32, i32, i32
  }
  func.func @transform_1(%arg0: i32) -> (i32, i32) {
    %c0_i32 = arith.constant 0 : i32
    %c0_i32_0 = arith.constant 0 : i32
    %c0_i32_1 = arith.constant 0 : i32
    return %c0_i32, %c0_i32_0 : i32, i32
  }
  func.func @transform_2(%arg0: i32) -> (i32, i32) {
    %c0_i32 = arith.constant 0 : i32
    %c0_i32_0 = arith.constant 0 : i32
    %c0_i32_1 = arith.constant 0 : i32
    return %c0_i32, %c0_i32_0 : i32, i32
  }
  func.func @transform_3(%arg0: i32) -> (i32, i32) {
    %c0_i32 = arith.constant 0 : i32
    %c0_i32_0 = arith.constant 0 : i32
    %c0_i32_1 = arith.constant 0 : i32
    return %c0_i32, %c0_i32_0 : i32, i32
  }
  func.func @transform_4(%arg0: i32) -> (i32, i32) {
    %c0_i32 = arith.constant 0 : i32
    %c0_i32_0 = arith.constant 0 : i32
    %c0_i32_1 = arith.constant 0 : i32
    return %c0_i32, %c0_i32_0 : i32, i32
  }
  func.func @transform_5(%arg0: i32) -> (i32, i32) {
    %c0_i32 = arith.constant 0 : i32
    %c0_i32_0 = arith.constant 0 : i32
    %c0_i32_1 = arith.constant 0 : i32
    return %c0_i32, %c0_i32_0 : i32, i32
  }
  func.func @transform_6(%arg0: i32) -> (i32, i32, i32) {
    %c0_i32 = arith.constant 0 : i32
    %c0_i32_0 = arith.constant 0 : i32
    %c0_i32_1 = arith.constant 0 : i32
    return %arg0, %c0_i32, %c0_i32_0 : i32, i32, i32
  }
}

</mosaic_0001>

<llo_original>
// kernel: forward.2
$region0: #{forward.2}
  #allocation0 [shape = 'u32[]', space=smem, size = 0x4, offset = 0x4, fixed_abs, tag = 'smem constant byte address 0x4 - core index']
  #allocation1 [shape = 'u32[144,128]{1,0:T(1,128)}', space=vmem, size = 0x12000, scoped, tag = 'internal scratch']
  %s0 = inlined_call_operand.vmem [shape: f32[2,64,256], index: 0, kind: input, shape index: {}]
  %s1 = inlined_call_operand.vmem [shape: bf16[384,64], index: 1, kind: input, shape index: {}]
  %s2 = inlined_call_operand.vmem [shape: bf16[64,128], index: 2, kind: input, shape index: {}]
  %s3 = inlined_call_operand.vmem [shape: f32[64,1], index: 3, kind: input, shape index: {}]
  %s4 = inlined_call_operand.vmem [shape: f32[64,1], index: 4, kind: input, shape index: {}]
  %s5 = inlined_call_operand.vmem [shape: f32[64,1], index: 5, kind: input, shape index: {}]
  %s6 = inlined_call_operand.vmem [shape: f32[2,64,256], index: 6, kind: output, shape index: {}]
  %s7 = sld [smem:[#allocation0]]
  $region57: #{forward.2} parent=0
    _
  %s9 = ssub.s32 1, %s7
  %s10 = scalar_select 0, %s9, %s7
  loop: start=0, step=1, limit=4
  $region2: #{forward.2} parent=0 // loop_pre_header
    _
  $region3: #{forward.2} parent=0 // loop_header
    %s12 = sphi 0, %s16
    %p13 = scmp.ge.s32.totalorder %s12, 4
    %s22 = sphi 0, %s24
    %s25 = sphi 0, %s22
    %s26 = sphi 0, %s25
    %s42 = sphi 0, %s26
    %s46 = sphi 0, %s46
    %s48 = sphi 0, %s46
    %s49 = sphi 0, %s48
    %s63 = sphi 0, %s49
    %s67 = sphi 0, %s67
    %s69 = sphi 0, %s67
    %s70 = sphi 0, %s69
    %s84 = sphi 0, %s70
    %s88 = sphi 0, %s88
    %s90 = sphi 0, %s88
    %s91 = sphi 0, %s90
    %s105 = sphi 0, %s91
    %s109 = sphi 0, %s109
    %s111 = sphi 0, %s109
    %s112 = sphi 0, %s111
    %s126 = sphi 0, %s112
    %s130 = sphi 0, %s130
    %s132 = sphi 0, %s130
    %s133 = sphi 0, %s132
    %s147 = sphi 0, %s133
    %s153 = sphi 0, %s155
    %s156 = sphi 0, %s153
    %s157 = sphi 0, %s156
    %s173 = sphi 0, %s157
  $region4: #{forward.2} parent=0 // loop_header_branch
    %15 = sbr.rel (%p13) target = $region8
  $region5: #{forward.2} parent=0 // loop_body
    %s17 = ssub.s32 %s12, 1
    %s18 = ssub.s32 %s12, 2
    %s19 = sadd.s32 %s12, 1
    %s20 = ssub.s32 %s12, %s19
    %p21 = scmp.eq.s32.totalorder %s20, 0
    %s23 = sadd.s32 %s22, 1
    %s24 = scalar_select %p21, %s22, %s23
    %p27 = pneg %p21
    %p28 = scmp.eq.s32.totalorder %s12, 1
    %p29 = por %p27, %p28
    %p30 = scmp.ne.s32.totalorder %s22, %s25
    %p31 = scmp.eq.s32.totalorder %s12, 0
    %p32 = por %p30, %p31
    %p33 = scmp.ne.s32.totalorder %s22, %s25
    %p34 = scmp.eq.s32.totalorder %s17, 1
    %p35 = por %p33, %p34
    %p36 = scmp.ne.s32.totalorder %s25, %s26
    %p37 = scmp.eq.s32.totalorder %s17, 0
    %p38 = por %p36, %p37
    %p39 = scmp.ne.s32.totalorder %s25, %s26
    %p40 = scmp.eq.s32.totalorder %s18, 1
    %p41 = por %p39, %p40
    %p43 = scmp.ne.s32.totalorder %s26, %s42
    %p44 = scmp.eq.s32.totalorder %s18, 0
    %p45 = por %p43, %p44
    %s47 = sadd.s32 %s46, 1
    %p50 = scmp.eq.s32.totalorder %s12, 1
    %p51 = scmp.ne.s32.totalorder %s46, %s48
    %p52 = scmp.eq.s32.totalorder %s12, 0
    %p53 = por %p51, %p52
    %p54 = scmp.ne.s32.totalorder %s46, %s48
    %p55 = scmp.eq.s32.totalorder %s17, 1
    %p56 = por %p54, %p55
    %p57 = scmp.ne.s32.totalorder %s48, %s49
    %p58 = scmp.eq.s32.totalorder %s17, 0
    %p59 = por %p57, %p58
    %p60 = scmp.ne.s32.totalorder %s48, %s49
    %p61 = scmp.eq.s32.totalorder %s18, 1
    %p62 = por %p60, %p61
    %p64 = scmp.ne.s32.totalorder %s49, %s63
    %p65 = scmp.eq.s32.totalorder %s18, 0
    %p66 = por %p64, %p65
    %s68 = sadd.s32 %s67, 1
    %p71 = scmp.eq.s32.totalorder %s12, 1
    %p72 = scmp.ne.s32.totalorder %s67, %s69
    %p73 = scmp.eq.s32.totalorder %s12, 0
    %p74 = por %p72, %p73
    %p75 = scmp.ne.s32.totalorder %s67, %s69
    %p76 = scmp.eq.s32.totalorder %s17, 1
    %p77 = por %p75, %p76
    %p78 = scmp.ne.s32.totalorder %s69, %s70
    %p79 = scmp.eq.s32.totalorder %s17, 0
    %p80 = por %p78, %p79
    %p81 = scmp.ne.s32.totalorder %s69, %s70
    %p82 = scmp.eq.s32.totalorder %s18, 1
    %p83 = por %p81, %p82
    %p85 = scmp.ne.s32.totalorder %s70, %s84
    %p86 = scmp.eq.s32.totalorder %s18, 0
    %p87 = por %p85, %p86
    %s89 = sadd.s32 %s88, 1
    %p92 = scmp.eq.s32.totalorder %s12, 1
    %p93 = scmp.ne.s32.totalorder %s88, %s90
    %p94 = scmp.eq.s32.totalorder %s12, 0
    %p95 = por %p93, %p94
    %p96 = scmp.ne.s32.totalorder %s88, %s90
    %p97 = scmp.eq.s32.totalorder %s17, 1
    %p98 = por %p96, %p97
    %p99 = scmp.ne.s32.totalorder %s90, %s91
    %p100 = scmp.eq.s32.totalorder %s17, 0
    %p101 = por %p99, %p100
    %p102 = scmp.ne.s32.totalorder %s90, %s91
    %p103 = scmp.eq.s32.totalorder %s18, 1
    %p104 = por %p102, %p103
    %p106 = scmp.ne.s32.totalorder %s91, %s105
    %p107 = scmp.eq.s32.totalorder %s18, 0
    %p108 = por %p106, %p107
    %s110 = sadd.s32 %s109, 1
    %p113 = scmp.eq.s32.totalorder %s12, 1
    %p114 = scmp.ne.s32.totalorder %s109, %s111
    %p115 = scmp.eq.s32.totalorder %s12, 0
    %p116 = por %p114, %p115
    %p117 = scmp.ne.s32.totalorder %s109, %s111
    %p118 = scmp.eq.s32.totalorder %s17, 1
    %p119 = por %p117, %p118
    %p120 = scmp.ne.s32.totalorder %s111, %s112
    %p121 = scmp.eq.s32.totalorder %s17, 0
    %p122 = por %p120, %p121
    %p123 = scmp.ne.s32.totalorder %s111, %s112
    %p124 = scmp.eq.s32.totalorder %s18, 1
    %p125 = por %p123, %p124
    %p127 = scmp.ne.s32.totalorder %s112, %s126
    %p128 = scmp.eq.s32.totalorder %s18, 0
    %p129 = por %p127, %p128
    %s131 = sadd.s32 %s130, 1
    %p134 = scmp.eq.s32.totalorder %s12, 1
    %p135 = scmp.ne.s32.totalorder %s130, %s132
    %p136 = scmp.eq.s32.totalorder %s12, 0
    %p137 = por %p135, %p136
    %p138 = scmp.ne.s32.totalorder %s130, %s132
    %p139 = scmp.eq.s32.totalorder %s17, 1
    %p140 = por %p138, %p139
    %p141 = scmp.ne.s32.totalorder %s132, %s133
    %p142 = scmp.eq.s32.totalorder %s17, 0
    %p143 = por %p141, %p142
    %p144 = scmp.ne.s32.totalorder %s132, %s133
    %p145 = scmp.eq.s32.totalorder %s18, 1
    %p146 = por %p144, %p145
    %p148 = scmp.ne.s32.totalorder %s133, %s147
    %p149 = scmp.eq.s32.totalorder %s18, 0
    %p150 = por %p148, %p149
    %s151 = ssub.s32 %s12, %s19
    %p152 = scmp.eq.s32.totalorder %s151, 0
    %s154 = sadd.s32 %s153, 1
    %s155 = scalar_select %p152, %s153, %s154
    %p158 = pneg %p152
    %p159 = scmp.eq.s32.totalorder %s12, 1
    %p160 = por %p158, %p159
    %p161 = scmp.ne.s32.totalorder %s153, %s156
    %p162 = scmp.eq.s32.totalorder %s12, 0
    %p163 = por %p161, %p162
    %p164 = scmp.ne.s32.totalorder %s153, %s156
    %p165 = scmp.eq.s32.totalorder %s17, 1
    %p166 = por %p164, %p165
    %p167 = scmp.ne.s32.totalorder %s156, %s157
    %p168 = scmp.eq.s32.totalorder %s17, 0
    %p169 = por %p167, %p168
    %p170 = scmp.ne.s32.totalorder %s156, %s157
    %p171 = scmp.eq.s32.totalorder %s18, 1
    %p172 = por %p170, %p171
    %p174 = scmp.ne.s32.totalorder %s157, %s173
    %p175 = scmp.eq.s32.totalorder %s18, 0
    %p176 = por %p174, %p175
    %p177 = scmp.le.s32.totalorder 1, %s12
    %p178 = scmp.lt.s32.totalorder %s12, 3
    %p179 = pnand %p177, %p178
    %p180 = pneg %p179
    // Predicated region
    $region9: #{forward.2} parent=5 // pred_check
      _
    $region10: #{forward.2} parent=5 // pred_check_branch
      %182 = sbr.rel (%p179) target = $region12
    $region11: #{forward.2} parent=5 // pred_region
      %s183 = ssub.s32 %s12, 1
      // Predicated region
      $region13: #{forward.2} parent=11 // pred_check
        %p184 = pneg %p59
      $region14: #{forward.2} parent=11 // pred_check_branch
        %186 = sbr.rel (%p184) target = $region16
      $region15: #{forward.2} parent=11 // pred_region
        _
      $region16: #{forward.2} parent=11 // pred_fallthru
        _
      // Predicated region
      $region17: #{forward.2} parent=11 // pred_check
        %p187 = pneg %p80
      $region18: #{forward.2} parent=11 // pred_check_branch
        %189 = sbr.rel (%p187) target = $region20
      $region19: #{forward.2} parent=11 // pred_region
        _
      $region20: #{forward.2} parent=11 // pred_fallthru
        _
      // Predicated region
      $region21: #{forward.2} parent=11 // pred_check
        %p190 = pneg %p101
      $region22: #{forward.2} parent=11 // pred_check_branch
        %192 = sbr.rel (%p190) target = $region24
      $region23: #{forward.2} parent=11 // pred_region
        _
      $region24: #{forward.2} parent=11 // pred_fallthru
        _
      // Predicated region
      $region25: #{forward.2} parent=11 // pred_check
        %p193 = pneg %p122
      $region26: #{forward.2} parent=11 // pred_check_branch
        %195 = sbr.rel (%p193) target = $region28
      $region27: #{forward.2} parent=11 // pred_region
        _
      $region28: #{forward.2} parent=11 // pred_fallthru
        _
      // Predicated region
      $region29: #{forward.2} parent=11 // pred_check
        %p196 = pneg %p143
      $region30: #{forward.2} parent=11 // pred_check_branch
        %198 = sbr.rel (%p196) target = $region32
      $region31: #{forward.2} parent=11 // pred_region
        _
      $region32: #{forward.2} parent=11 // pred_fallthru
        _
    $region12: #{forward.2} parent=5 // pred_fallthru
      _
    %p199 = scmp.lt.s32.totalorder %s12, 2
    // Predicated region
    $region33: #{forward.2} parent=5 // pred_check
      %p200 = pneg %p199
    $region34: #{forward.2} parent=5 // pred_check_branch
      %202 = sbr.rel (%p200) target = $region36
    $region35: #{forward.2} parent=5 // pred_region
      // Predicated region
      $region37: #{forward.2} parent=35 // pred_check
        %p203 = pneg %p32
      $region38: #{forward.2} parent=35 // pred_check_branch
        %205 = sbr.rel (%p203) target = $region40
      $region39: #{forward.2} parent=35 // pred_region
        %p206 = scmp.lt.s32.totalorder %s12, 1
        %s207 = scalar_select %p206, %s12, 1
        %s208 = smul.addr %s207, 16
        %s209 = smul.addr %s208, 8
        %s210 = scalar_lea.vmem %s0, %s209
      $region40: #{forward.2} parent=35 // pred_fallthru
        _
    $region36: #{forward.2} parent=5 // pred_fallthru
      _
    %p211 = scmp.le.s32.totalorder 1, %s12
    %p212 = scmp.lt.s32.totalorder %s12, 3
    %p213 = pnand %p211, %p212
    %p214 = pneg %p213
    // Predicated region
    $region41: #{forward.2} parent=5 // pred_check
      _
    $region42: #{forward.2} parent=5 // pred_check_branch
      %216 = sbr.rel (%p213) target = $region44
    $region43: #{forward.2} parent=5 // pred_region
      %s217 = ssub.s32 %s12, 1
      %p218 = scmp.lt.s32.totalorder %s17, 1
      %s219 = scalar_select %p218, %s17, 1
      %s220 = smul.addr %s219, 16
      %s221 = smul.addr %s220, 8
      %s222 = scalar_lea.vmem %s0, %s221
      %p223 = pneg %p38
      %p224 = pneg %p35
      %p225 = pneg %p59
      %p226 = pneg %p56
      %p227 = pneg %p80
      %p228 = pneg %p77
      %p229 = pneg %p101
      %p230 = pneg %p98
      %p231 = pneg %p122
      %p232 = pneg %p119
      %p233 = pneg %p143
      %p234 = pneg %p140
      %p235 = pneg %p169
      %p236 = pneg %p166
      %p237 = scmp.lt.s32.totalorder %s17, 1
      %s238 = scalar_select %p237, %s17, 1
      %s239 = smul.addr %s238, 16
      %s240 = smul.addr %s239, 8
      %s241 = scalar_lea.vmem %s6, %s240
      %p242 = scmp.lt.s32.totalorder %s17, 1
      %s243 = scalar_select %p242, %s17, 1
      %s244 = smul.addr %s243, 16
      %s245 = smul.addr %s244, 8
      %s246 = scalar_lea.vmem %s0, %s245
      %p247 = scmp.lt.s32.totalorder %s17, 1
      %s248 = scalar_select %p247, %s17, 1
      %s249 = smul.addr %s248, 16
      %s250 = smul.addr %s249, 8
      %s251 = scalar_lea.vmem %s6, %s250
      %v253 = vld [vmem:[%s246] sm:$0xff]
      %v254 = vld [vmem:[%s246 + $0x8] sm:$0xff]
      %v255 = vld [vmem:[%s246 + $0x10] sm:$0xff]
      %v256 = vld [vmem:[%s246 + $0x18] sm:$0xff]
      %v257 = vld [vmem:[%s246 + $0x20] sm:$0xff]
      %v258 = vld [vmem:[%s246 + $0x28] sm:$0xff]
      %v259 = vld [vmem:[%s246 + $0x30] sm:$0xff]
      %v260 = vld [vmem:[%s246 + $0x38] sm:$0xff]
      %v261 = vld [vmem:[%s246 + $0x40] sm:$0xff]
      %v262 = vld [vmem:[%s246 + $0x48] sm:$0xff]
      %v263 = vld [vmem:[%s246 + $0x50] sm:$0xff]
      %v264 = vld [vmem:[%s246 + $0x58] sm:$0xff]
      %v265 = vld [vmem:[%s246 + $0x60] sm:$0xff]
      %v266 = vld [vmem:[%s246 + $0x68] sm:$0xff]
      %v267 = vld [vmem:[%s246 + $0x70] sm:$0xff]
      %v268 = vld [vmem:[%s246 + $0x78] sm:$0xff]
      %v269 = vld [vmem:[%s4] sm:$0xff]
      %v270 = vld [vmem:[%s4 + $0x8] sm:$0xff]
      %v271 = vld [vmem:[%s4 + $0x10] sm:$0xff]
      %v272 = vld [vmem:[%s4 + $0x18] sm:$0xff]
      %v273 = vld [vmem:[%s4 + $0x20] sm:$0xff]
      %v274 = vld [vmem:[%s4 + $0x28] sm:$0xff]
      %v275 = vld [vmem:[%s4 + $0x30] sm:$0xff]
      %v276 = vld [vmem:[%s4 + $0x38] sm:$0xff]
      %v277 = vadd.f32 %v253, %v255
      %v278 = vadd.f32 %v277, %v257
      %v279 = vadd.f32 %v278, %v259
      %v280 = vadd.f32 %v279, %v261
      %v281 = vadd.f32 %v280, %v263
      %v282 = vadd.f32 %v281, %v265
      %v283 = vadd.f32 %v282, %v267
      %v284 = vrot.slane %v283, 4
      %v285 = vadd.f32 %v283, %v284
      %v286 = vrot.slane %v285, 2
      %v287 = vadd.f32 %v285, %v286
      %v288 = vrot.slane %v287, 1
      %v289 = vadd.f32 %v287, %v288
      %v290 = vadd.f32 %v254, %v256
      %v291 = vadd.f32 %v290, %v258
      %v292 = vadd.f32 %v291, %v260
      %v293 = vadd.f32 %v292, %v262
      %v294 = vadd.f32 %v293, %v264
      %v295 = vadd.f32 %v294, %v266
      %v296 = vadd.f32 %v295, %v268
      %v297 = vrot.slane %v296, 4
      %v298 = vadd.f32 %v296, %v297
      %v299 = vrot.slane %v298, 2
      %v300 = vadd.f32 %v298, %v299
      %v301 = vrot.slane %v300, 1
      %v302 = vadd.f32 %v300, %v301
      %v303 = vrcp.pop 64.0
      %v304 = vmul.f32 %v289, %v303
      %v305 = vmul.f32 %v302, %v303
      %v306 = vsub.f32 %v253, %v304
      %v307 = vsub.f32 %v254, %v305
      %v308 = vsub.f32 %v255, %v304
      %v309 = vsub.f32 %v256, %v305
      %v310 = vsub.f32 %v257, %v304
      %v311 = vsub.f32 %v258, %v305
      %v312 = vsub.f32 %v259, %v304
      %v313 = vsub.f32 %v260, %v305
      %v314 = vsub.f32 %v261, %v304
      %v315 = vsub.f32 %v262, %v305
      %v316 = vsub.f32 %v263, %v304
      %v317 = vsub.f32 %v264, %v305
      %v318 = vsub.f32 %v265, %v304
      %v319 = vsub.f32 %v266, %v305
      %v320 = vsub.f32 %v267, %v304
      %v321 = vsub.f32 %v268, %v305
      %v322 = vmul.f32 %v306, %v306
      %v323 = vmul.f32 %v307, %v307
      %v324 = vmul.f32 %v308, %v308
      %v325 = vmul.f32 %v309, %v309
      %v326 = vmul.f32 %v310, %v310
      %v327 = vmul.f32 %v311, %v311
      %v328 = vmul.f32 %v312, %v312
      %v329 = vmul.f32 %v313, %v313
      %v330 = vmul.f32 %v314, %v314
      %v331 = vmul.f32 %v315, %v315
      %v332 = vmul.f32 %v316, %v316
      %v333 = vmul.f32 %v317, %v317
      %v334 = vmul.f32 %v318, %v318
      %v335 = vmul.f32 %v319, %v319
      %v336 = vmul.f32 %v320, %v320
      %v337 = vmul.f32 %v321, %v321
      %v338 = vadd.f32 %v322, %v324
      %v339 = vadd.f32 %v338, %v326
      %v340 = vadd.f32 %v339, %v328
      %v341 = vadd.f32 %v340, %v330
      %v342 = vadd.f32 %v341, %v332
      %v343 = vadd.f32 %v342, %v334
      %v344 = vadd.f32 %v343, %v336
      %v345 = vrot.slane %v344, 4
      %v346 = vadd.f32 %v344, %v345
      %v347 = vrot.slane %v346, 2
      %v348 = vadd.f32 %v346, %v347
      %v349 = vrot.slane %v348, 1
      %v350 = vadd.f32 %v348, %v349
      %v351 = vadd.f32 %v323, %v325
      %v352 = vadd.f32 %v351, %v327
      %v353 = vadd.f32 %v352, %v329
      %v354 = vadd.f32 %v353, %v331
      %v355 = vadd.f32 %v354, %v333
      %v356 = vadd.f32 %v355, %v335
      %v357 = vadd.f32 %v356, %v337
      %v358 = vrot.slane %v357, 4
      %v359 = vadd.f32 %v357, %v358
      %v360 = vrot.slane %v359, 2
      %v361 = vadd.f32 %v359, %v360
      %v362 = vrot.slane %v361, 1
      %v363 = vadd.f32 %v361, %v362
      %v364 = vmul.f32 %v350, %v303
      %v365 = vmul.f32 %v363, %v303
      %v366 = vadd.f32 %v364, 1e-05
      %v367 = vadd.f32 %v365, 1e-05
      %v368 = vrsqrt.pop %v366
      %v369 = vrsqrt.pop %v367
      %v370 = vmul.f32 %v306, %v368
      %v371 = vmul.f32 %v307, %v369
      %v372 = vmul.f32 %v308, %v368
      %v373 = vmul.f32 %v309, %v369
      %v374 = vmul.f32 %v310, %v368
      %v375 = vmul.f32 %v311, %v369
      %v376 = vmul.f32 %v312, %v368
      %v377 = vmul.f32 %v313, %v369
      %v378 = vmul.f32 %v314, %v368
      %v379 = vmul.f32 %v315, %v369
      %v380 = vmul.f32 %v316, %v368
      %v381 = vmul.f32 %v317, %v369
      %v382 = vmul.f32 %v318, %v368
      %v383 = vmul.f32 %v319, %v369
      %v384 = vmul.f32 %v320, %v368
      %v385 = vmul.f32 %v321, %v369
      %387 = vset.pattern.permute.xlu0 0
      %388 = vperm.xlu0 %387, %v269
      %v389 = vpop.permute.xlu0 %388
      %392 = vset.pattern.permute.xlu0 0
      %393 = vperm.xlu0 %392, %v270
      %v394 = vpop.permute.xlu0 %393
      %397 = vset.pattern.permute.xlu0 0
      %398 = vperm.xlu0 %397, %v271
      %v399 = vpop.permute.xlu0 %398
      %402 = vset.pattern.permute.xlu0 0
      %403 = vperm.xlu0 %402, %v272
      %v404 = vpop.permute.xlu0 %403
      %407 = vset.pattern.permute.xlu0 0
      %408 = vperm.xlu0 %407, %v273
      %v409 = vpop.permute.xlu0 %408
      %412 = vset.pattern.permute.xlu0 0
      %413 = vperm.xlu0 %412, %v274
      %v414 = vpop.permute.xlu0 %413
      %417 = vset.pattern.permute.xlu0 0
      %418 = vperm.xlu0 %417, %v275
      %v419 = vpop.permute.xlu0 %418
      %422 = vset.pattern.permute.xlu0 0
      %423 = vperm.xlu0 %422, %v276
      %v424 = vpop.permute.xlu0 %423
      %v426 = vmul.f32 %v370, %v389
      %v427 = vmul.f32 %v371, %v389
      %v428 = vmul.f32 %v372, %v394
      %v429 = vmul.f32 %v373, %v394
      %v430 = vmul.f32 %v374, %v399
      %v431 = vmul.f32 %v375, %v399
      %v432 = vmul.f32 %v376, %v404
      %v433 = vmul.f32 %v377, %v404
      %v434 = vmul.f32 %v378, %v409
      %v435 = vmul.f32 %v379, %v409
      %v436 = vmul.f32 %v380, %v414
      %v437 = vmul.f32 %v381, %v414
      %v438 = vmul.f32 %v382, %v419
      %v439 = vmul.f32 %v383, %v419
      %v440 = vmul.f32 %v384, %v424
      %v441 = vmul.f32 %v385, %v424
      %v442 = vpack.c.bf16 %v428, %v426
      %v443 = vpack.c.bf16 %v429, %v427
      %v444 = vpack.c.bf16 %v432, %v430
      %v445 = vpack.c.bf16 %v433, %v431
      %v446 = vpack.c.bf16 %v436, %v434
      %v447 = vpack.c.bf16 %v437, %v435
      %v448 = vpack.c.bf16 %v440, %v438
      %v449 = vpack.c.bf16 %v441, %v439
      %v450 = vld [vmem:[%s1] sm:$0xf]
      %v451 = vld [vmem:[%s1 + $0x4] sm:$0xf]
      %v452 = vld [vmem:[%s1 + $0x8] sm:$0xf]
      %v453 = vld [vmem:[%s1 + $0xc] sm:$0xf]
      %v454 = vld [vmem:[%s1 + $0x10] sm:$0xf]
      %v455 = vld [vmem:[%s1 + $0x14] sm:$0xf]
      %v456 = vld [vmem:[%s1 + $0x18] sm:$0xf]
      %v457 = vld [vmem:[%s1 + $0x1c] sm:$0xf]
      %v458 = vld [vmem:[%s1 + $0x20] sm:$0xf]
      %v459 = vld [vmem:[%s1 + $0x24] sm:$0xf]
      %v460 = vld [vmem:[%s1 + $0x28] sm:$0xf]
      %v461 = vld [vmem:[%s1 + $0x2c] sm:$0xf]
      %v462 = vld [vmem:[%s1 + $0x30] sm:$0xf]
      %v463 = vld [vmem:[%s1 + $0x34] sm:$0xf]
      %v464 = vld [vmem:[%s1 + $0x38] sm:$0xf]
      %v465 = vld [vmem:[%s1 + $0x3c] sm:$0xf]
      %v466 = vld [vmem:[%s1 + $0x40] sm:$0xf]
      %v467 = vld [vmem:[%s1 + $0x44] sm:$0xf]
      %v468 = vld [vmem:[%s1 + $0x48] sm:$0xf]
      %v469 = vld [vmem:[%s1 + $0x4c] sm:$0xf]
      %v470 = vld [vmem:[%s1 + $0x50] sm:$0xf]
      %v471 = vld [vmem:[%s1 + $0x54] sm:$0xf]
      %v472 = vld [vmem:[%s1 + $0x58] sm:$0xf]
      %v473 = vld [vmem:[%s1 + $0x5c] sm:$0xf]
      %v474 = vld [vmem:[%s1 + $0x60] sm:$0xf]
      %v475 = vld [vmem:[%s1 + $0x64] sm:$0xf]
      %v476 = vld [vmem:[%s1 + $0x68] sm:$0xf]
      %v477 = vld [vmem:[%s1 + $0x6c] sm:$0xf]
      %v478 = vld [vmem:[%s1 + $0x70] sm:$0xf]
      %v479 = vld [vmem:[%s1 + $0x74] sm:$0xf]
      %v480 = vld [vmem:[%s1 + $0x78] sm:$0xf]
      %v481 = vld [vmem:[%s1 + $0x7c] sm:$0xf]
      %v482 = vld [vmem:[%s1 + $0x80] sm:$0xf]
      %v483 = vld [vmem:[%s1 + $0x84] sm:$0xf]
      %v484 = vld [vmem:[%s1 + $0x88] sm:$0xf]
      %v485 = vld [vmem:[%s1 + $0x8c] sm:$0xf]
      %v486 = vld [vmem:[%s1 + $0x90] sm:$0xf]
      %v487 = vld [vmem:[%s1 + $0x94] sm:$0xf]
      %v488 = vld [vmem:[%s1 + $0x98] sm:$0xf]
      %v489 = vld [vmem:[%s1 + $0x9c] sm:$0xf]
      %v490 = vld [vmem:[%s1 + $0xa0] sm:$0xf]
      %v491 = vld [vmem:[%s1 + $0xa4] sm:$0xf]
      %v492 = vld [vmem:[%s1 + $0xa8] sm:$0xf]
      %v493 = vld [vmem:[%s1 + $0xac] sm:$0xf]
      %v494 = vld [vmem:[%s1 + $0xb0] sm:$0xf]
      %v495 = vld [vmem:[%s1 + $0xb4] sm:$0xf]
      %v496 = vld [vmem:[%s1 + $0xb8] sm:$0xf]
      %v497 = vld [vmem:[%s1 + $0xbc] sm:$0xf]
      %v546 = vunpack.c.l.b16 %v450
      %v547 = vunpack.c.l.b16 %v451
      %v548 = vunpack.c.l.b16 %v452
      %v549 = vunpack.c.l.b16 %v453
      %v550 = vunpack.c.l.b16 %v454
      %v551 = vunpack.c.l.b16 %v455
      %v552 = vunpack.c.l.b16 %v456
      %v553 = vunpack.c.l.b16 %v457
      %v554 = vunpack.c.l.b16 %v458
      %v555 = vunpack.c.l.b16 %v459
      %v556 = vunpack.c.l.b16 %v460
      %v557 = vunpack.c.l.b16 %v461
      %v558 = vunpack.c.l.b16 %v462
      %v559 = vunpack.c.l.b16 %v463
      %v560 = vunpack.c.l.b16 %v464
      %v561 = vunpack.c.l.b16 %v465
      %v562 = vunpack.c.l.b16 %v466
      %v563 = vunpack.c.l.b16 %v467
      %v564 = vunpack.c.l.b16 %v468
      %v565 = vunpack.c.l.b16 %v469
      %v566 = vunpack.c.l.b16 %v470
      %v567 = vunpack.c.l.b16 %v471
      %v568 = vunpack.c.l.b16 %v472
      %v569 = vunpack.c.l.b16 %v473
      %v570 = vunpack.c.l.b16 %v474
      %v571 = vunpack.c.l.b16 %v475
      %v572 = vunpack.c.l.b16 %v476
      %v573 = vunpack.c.l.b16 %v477
      %v574 = vunpack.c.l.b16 %v478
      %v575 = vunpack.c.l.b16 %v479
      %v576 = vunpack.c.l.b16 %v480
      %v577 = vunpack.c.l.b16 %v481
      %v578 = vunpack.c.l.b16 %v482
      %v579 = vunpack.c.l.b16 %v483
      %v580 = vunpack.c.l.b16 %v484
      %v581 = vunpack.c.l.b16 %v485
      %v582 = vunpack.c.l.b16 %v486
      %v583 = vunpack.c.l.b16 %v487
      %v584 = vunpack.c.l.b16 %v488
      %v585 = vunpack.c.l.b16 %v489
      %v586 = vunpack.c.l.b16 %v490
      %v587 = vunpack.c.l.b16 %v491
      %v588 = vunpack.c.l.b16 %v492
      %v589 = vunpack.c.l.b16 %v493
      %v590 = vunpack.c.l.b16 %v494
      %v591 = vunpack.c.l.b16 %v495
      %v592 = vunpack.c.l.b16 %v496
      %v593 = vunpack.c.l.b16 %v497
      %v594 = vpack.c.b16 %v547, %v546
      %v595 = vpack.c.b16 %v549, %v548
      %v596 = vpack.c.b16 %v551, %v550
      %v597 = vpack.c.b16 %v553, %v552
      %v598 = vpack.c.b16 %v555, %v554
      %v599 = vpack.c.b16 %v557, %v556
      %v600 = vpack.c.b16 %v559, %v558
      %v601 = vpack.c.b16 %v561, %v560
      %v602 = vpack.c.b16 %v563, %v562
      %v603 = vpack.c.b16 %v565, %v564
      %v604 = vpack.c.b16 %v567, %v566
      %v605 = vpack.c.b16 %v569, %v568
      %v606 = vpack.c.b16 %v571, %v570
      %v607 = vpack.c.b16 %v573, %v572
      %v608 = vpack.c.b16 %v575, %v574
      %v609 = vpack.c.b16 %v577, %v576
      %v610 = vpack.c.b16 %v579, %v578
      %v611 = vpack.c.b16 %v581, %v580
      %v612 = vpack.c.b16 %v583, %v582
      %v613 = vpack.c.b16 %v585, %v584
      %v614 = vpack.c.b16 %v587, %v586
      %v615 = vpack.c.b16 %v589, %v588
      %v616 = vpack.c.b16 %v591, %v590
      %v617 = vpack.c.b16 %v593, %v592
      %vm618 = vcmask 523264
      %v620 = vsel %vm618, %v594, 0
      %v623 = vsel %vm618, %v595, 0
      %v626 = vsel %vm618, %v596, 0
      %v629 = vsel %vm618, %v597, 0
      %v632 = vsel %vm618, %v598, 0
      %v635 = vsel %vm618, %v599, 0
      %v638 = vsel %vm618, %v600, 0
      %v641 = vsel %vm618, %v601, 0
      %v644 = vsel %vm618, %v602, 0
      %v647 = vsel %vm618, %v603, 0
      %v650 = vsel %vm618, %v604, 0
      %v653 = vsel %vm618, %v605, 0
      %v656 = vsel %vm618, %v606, 0
      %v659 = vsel %vm618, %v607, 0
      %v662 = vsel %vm618, %v608, 0
      %v665 = vsel %vm618, %v609, 0
      %v668 = vsel %vm618, %v610, 0
      %v671 = vsel %vm618, %v611, 0
      %v674 = vsel %vm618, %v612, 0
      %v677 = vsel %vm618, %v613, 0
      %v680 = vsel %vm618, %v614, 0
      %v683 = vsel %vm618, %v615, 0
      %v686 = vsel %vm618, %v616, 0
      %v689 = vsel %vm618, %v617, 0
      %691 = vmatprep.subr.bf16.mxu0 %v443
      %692 = vmatpush1.bf16.msra.mxu0 %v442
      %693 = vmatprep.subr.bf16.mxu0 %v445
      %694 = vmatpush1.bf16.msra.mxu0 %v444
      %695 = vmatprep.subr.bf16.mxu0 %v447
      %696 = vmatpush1.bf16.msra.mxu0 %v446
      %697 = vmatprep.subr.bf16.mxu0 %v449
      %698 = vmatpush1.bf16.msra.mxu0 %v448
      %699 = vmatprep.subr.bf16.mxu0 0
      %700 = vmatpush1.bf16.msra.mxu0 0
      %701 = vmatprep.subr.bf16.mxu0 0
      %702 = vmatpush1.bf16.msra.mxu0 0
      %703 = vmatprep.subr.bf16.mxu0 0
      %704 = vmatpush1.bf16.msra.mxu0 0
      %705 = vmatprep.subr.bf16.mxu0 0
      %706 = vmatpush1.bf16.msra.mxu0 0
      %707 = vmatprep.subr.bf16.mxu0 0
      %708 = vmatpush1.bf16.msra.mxu0 0
      %709 = vmatprep.subr.bf16.mxu0 0
      %710 = vmatpush1.bf16.msra.mxu0 0
      %711 = vmatprep.subr.bf16.mxu0 0
      %712 = vmatpush1.bf16.msra.mxu0 0
      %713 = vmatprep.subr.bf16.mxu0 0
      %714 = vmatpush1.bf16.msra.mxu0 0
      %715 = vmatprep.subr.bf16.mxu0 0
      %716 = vmatpush1.bf16.msra.mxu0 0
      %717 = vmatprep.subr.bf16.mxu0 0
      %718 = vmatpush1.bf16.msra.mxu0 0
      %719 = vmatprep.subr.bf16.mxu0 0
      %720 = vmatpush1.bf16.msra.mxu0 0
      %721 = vmatprep.subr.bf16.mxu0 0
      %722 = vmatpush1.bf16.msra.mxu0 0
      %723 = vmatprep.mubr.bf16.mxu0 0
      %724 = vmatmul.mubr.bf16.gmra.mrb[0].mxu0 %v620
      %v725 = vpop.f32.mrb[0].mxu0
      %v726 = vadd.f32 0.0, %v725
      %v727 = vpop.f32.mrb[0].mxu0
      %v728 = vadd.f32 0.0, %v727
      %v729 = vpop.f32.mrb[0].mxu0
      %v730 = vadd.f32 0.0, %v729
      %v731 = vpop.f32.mrb[0].mxu0
      %v732 = vadd.f32 0.0, %v731
      %733 = vmatprep.mubr.bf16.mxu0 0
      %734 = vmatmul.mubr.bf16.gmra.mrb[0].mxu0 %v623
      %v735 = vpop.f32.mrb[0].mxu0
      %v736 = vadd.f32 0.0, %v735
      %v737 = vpop.f32.mrb[0].mxu0
      %v738 = vadd.f32 0.0, %v737
      %v739 = vpop.f32.mrb[0].mxu0
      %v740 = vadd.f32 0.0, %v739
      %v741 = vpop.f32.mrb[0].mxu0
      %v742 = vadd.f32 0.0, %v741
      %743 = vmatprep.mubr.bf16.mxu0 0
      %744 = vmatmul.mubr.bf16.gmra.mrb[0].mxu0 %v626
      %v745 = vpop.f32.mrb[0].mxu0
      %v746 = vadd.f32 0.0, %v745
      %v747 = vpop.f32.mrb[0].mxu0
      %v748 = vadd.f32 0.0, %v747
      %v749 = vpop.f32.mrb[0].mxu0
      %v750 = vadd.f32 0.0, %v749
      %v751 = vpop.f32.mrb[0].mxu0
      %v752 = vadd.f32 0.0, %v751
      %753 = vmatprep.mubr.bf16.mxu0 0
      %754 = vmatmul.mubr.bf16.gmra.mrb[0].mxu0 %v629
      %v755 = vpop.f32.mrb[0].mxu0
      %v756 = vadd.f32 0.0, %v755
      %v757 = vpop.f32.mrb[0].mxu0
      %v758 = vadd.f32 0.0, %v757
      %v759 = vpop.f32.mrb[0].mxu0
      %v760 = vadd.f32 0.0, %v759
      %v761 = vpop.f32.mrb[0].mxu0
      %v762 = vadd.f32 0.0, %v761
      %763 = vmatprep.mubr.bf16.mxu0 0
      %764 = vmatmul.mubr.bf16.gmra.mrb[0].mxu0 %v632
      %v765 = vpop.f32.mrb[0].mxu0
      %v766 = vadd.f32 0.0, %v765
      %v767 = vpop.f32.mrb[0].mxu0
      %v768 = vadd.f32 0.0, %v767
      %v769 = vpop.f32.mrb[0].mxu0
      %v770 = vadd.f32 0.0, %v769
      %v771 = vpop.f32.mrb[0].mxu0
      %v772 = vadd.f32 0.0, %v771
      %773 = vmatprep.mubr.bf16.mxu0 0
      %774 = vmatmul.mubr.bf16.gmra.mrb[0].mxu0 %v635
      %v775 = vpop.f32.mrb[0].mxu0
      %v776 = vadd.f32 0.0, %v775
      %v777 = vpop.f32.mrb[0].mxu0
      %v778 = vadd.f32 0.0, %v777
      %v779 = vpop.f32.mrb[0].mxu0
      %v780 = vadd.f32 0.0, %v779
      %v781 = vpop.f32.mrb[0].mxu0
      %v782 = vadd.f32 0.0, %v781
      %783 = vmatprep.mubr.bf16.mxu0 0
      %784 = vmatmul.mubr.bf16.gmra.mrb[0].mxu0 %v638
      %v785 = vpop.f32.mrb[0].mxu0
      %v786 = vadd.f32 0.0, %v785
      %v787 = vpop.f32.mrb[0].mxu0
      %v788 = vadd.f32 0.0, %v787
      %v789 = vpop.f32.mrb[0].mxu0
      %v790 = vadd.f32 0.0, %v789
      %v791 = vpop.f32.mrb[0].mxu0
      %v792 = vadd.f32 0.0, %v791
      %793 = vmatprep.mubr.bf16.mxu0 0
      %794 = vmatmul.mubr.bf16.gmra.mrb[0].mxu0 %v641
      %v795 = vpop.f32.mrb[0].mxu0
      %v796 = vadd.f32 0.0, %v795
      %v797 = vpop.f32.mrb[0].mxu0
      %v798 = vadd.f32 0.0, %v797
      %v799 = vpop.f32.mrb[0].mxu0
      %v800 = vadd.f32 0.0, %v799
      %v801 = vpop.f32.mrb[0].mxu0
      %v802 = vadd.f32 0.0, %v801
      %803 = vmatprep.mubr.bf16.mxu0 0
      %804 = vmatmul.mubr.bf16.gmra.mrb[0].mxu0 %v644
      %v805 = vpop.f32.mrb[0].mxu0
      %v806 = vadd.f32 0.0, %v805
      %v807 = vpop.f32.mrb[0].mxu0
      %v808 = vadd.f32 0.0, %v807
      %v809 = vpop.f32.mrb[0].mxu0
      %v810 = vadd.f32 0.0, %v809
      %v811 = vpop.f32.mrb[0].mxu0
      %v812 = vadd.f32 0.0, %v811
      %813 = vmatprep.mubr.bf16.mxu0 0
      %814 = vmatmul.mubr.bf16.gmra.mrb[0].mxu0 %v647
      %v815 = vpop.f32.mrb[0].mxu0
      %v816 = vadd.f32 0.0, %v815
      %v817 = vpop.f32.mrb[0].mxu0
      %v818 = vadd.f32 0.0, %v817
      %v819 = vpop.f32.mrb[0].mxu0
      %v820 = vadd.f32 0.0, %v819
      %v821 = vpop.f32.mrb[0].mxu0
      %v822 = vadd.f32 0.0, %v821
      %823 = vmatprep.mubr.bf16.mxu0 0
      %824 = vmatmul.mubr.bf16.gmra.mrb[0].mxu0 %v650
      %v825 = vpop.f32.mrb[0].mxu0
      %v826 = vadd.f32 0.0, %v825
      %v827 = vpop.f32.mrb[0].mxu0
      %v828 = vadd.f32 0.0, %v827
      %v829 = vpop.f32.mrb[0].mxu0
      %v830 = vadd.f32 0.0, %v829
      %v831 = vpop.f32.mrb[0].mxu0
      %v832 = vadd.f32 0.0, %v831
      %833 = vmatprep.mubr.bf16.mxu0 0
      %834 = vmatmul.mubr.bf16.gmra.mrb[0].mxu0 %v653
      %v835 = vpop.f32.mrb[0].mxu0
      %v836 = vadd.f32 0.0, %v835
      %v837 = vpop.f32.mrb[0].mxu0
      %v838 = vadd.f32 0.0, %v837
      %v839 = vpop.f32.mrb[0].mxu0
      %v840 = vadd.f32 0.0, %v839
      %v841 = vpop.f32.mrb[0].mxu0
      %v842 = vadd.f32 0.0, %v841
      %843 = vmatprep.mubr.bf16.mxu0 0
      %844 = vmatmul.mubr.bf16.gmra.mrb[0].mxu0 %v656
      %v845 = vpop.f32.mrb[0].mxu0
      %v846 = vadd.f32 0.0, %v845
      %v847 = vpop.f32.mrb[0].mxu0
      %v848 = vadd.f32 0.0, %v847
      %v849 = vpop.f32.mrb[0].mxu0
      %v850 = vadd.f32 0.0, %v849
      %v851 = vpop.f32.mrb[0].mxu0
      %v852 = vadd.f32 0.0, %v851
      %853 = vmatprep.mubr.bf16.mxu0 0
      %854 = vmatmul.mubr.bf16.gmra.mrb[0].mxu0 %v659
      %v855 = vpop.f32.mrb[0].mxu0
      %v856 = vadd.f32 0.0, %v855
      %v857 = vpop.f32.mrb[0].mxu0
      %v858 = vadd.f32 0.0, %v857
      %v859 = vpop.f32.mrb[0].mxu0
      %v860 = vadd.f32 0.0, %v859
      %v861 = vpop.f32.mrb[0].mxu0
      %v862 = vadd.f32 0.0, %v861
      %863 = vmatprep.mubr.bf16.mxu0 0
      %864 = vmatmul.mubr.bf16.gmra.mrb[0].mxu0 %v662
      %v865 = vpop.f32.mrb[0].mxu0
      %v866 = vadd.f32 0.0, %v865
      %v867 = vpop.f32.mrb[0].mxu0
      %v868 = vadd.f32 0.0, %v867
      %v869 = vpop.f32.mrb[0].mxu0
      %v870 = vadd.f32 0.0, %v869
      %v871 = vpop.f32.mrb[0].mxu0
      %v872 = vadd.f32 0.0, %v871
      %873 = vmatprep.mubr.bf16.mxu0 0
      %874 = vmatmul.mubr.bf16.gmra.mrb[0].mxu0 %v665
      %v875 = vpop.f32.mrb[0].mxu0
      %v876 = vadd.f32 0.0, %v875
      %v877 = vpop.f32.mrb[0].mxu0
      %v878 = vadd.f32 0.0, %v877
      %v879 = vpop.f32.mrb[0].mxu0
      %v880 = vadd.f32 0.0, %v879
      %v881 = vpop.f32.mrb[0].mxu0
      %v882 = vadd.f32 0.0, %v881
      %883 = vmatprep.mubr.bf16.mxu0 0
      %884 = vmatmul.mubr.bf16.gmra.mrb[0].mxu0 %v668
      %v885 = vpop.f32.mrb[0].mxu0
      %v886 = vadd.f32 0.0, %v885
      %v887 = vpop.f32.mrb[0].mxu0
      %v888 = vadd.f32 0.0, %v887
      %v889 = vpop.f32.mrb[0].mxu0
      %v890 = vadd.f32 0.0, %v889
      %v891 = vpop.f32.mrb[0].mxu0
      %v892 = vadd.f32 0.0, %v891
      %893 = vmatprep.mubr.bf16.mxu0 0
      %894 = vmatmul.mubr.bf16.gmra.mrb[0].mxu0 %v671
      %v895 = vpop.f32.mrb[0].mxu0
      %v896 = vadd.f32 0.0, %v895
      %v897 = vpop.f32.mrb[0].mxu0
      %v898 = vadd.f32 0.0, %v897
      %v899 = vpop.f32.mrb[0].mxu0
      %v900 = vadd.f32 0.0, %v899
      %v901 = vpop.f32.mrb[0].mxu0
      %v902 = vadd.f32 0.0, %v901
      %903 = vmatprep.mubr.bf16.mxu0 0
      %904 = vmatmul.mubr.bf16.gmra.mrb[0].mxu0 %v674
      %v905 = vpop.f32.mrb[0].mxu0
      %v906 = vadd.f32 0.0, %v905
      %v907 = vpop.f32.mrb[0].mxu0
      %v908 = vadd.f32 0.0, %v907
      %v909 = vpop.f32.mrb[0].mxu0
      %v910 = vadd.f32 0.0, %v909
      %v911 = vpop.f32.mrb[0].mxu0
      %v912 = vadd.f32 0.0, %v911
      %913 = vmatprep.mubr.bf16.mxu0 0
      %914 = vmatmul.mubr.bf16.gmra.mrb[0].mxu0 %v677
      %v915 = vpop.f32.mrb[0].mxu0
      %v916 = vadd.f32 0.0, %v915
      %v917 = vpop.f32.mrb[0].mxu0
      %v918 = vadd.f32 0.0, %v917
      %v919 = vpop.f32.mrb[0].mxu0
      %v920 = vadd.f32 0.0, %v919
      %v921 = vpop.f32.mrb[0].mxu0
      %v922 = vadd.f32 0.0, %v921
      %923 = vmatprep.mubr.bf16.mxu0 0
      %924 = vmatmul.mubr.bf16.gmra.mrb[0].mxu0 %v680
      %v925 = vpop.f32.mrb[0].mxu0
      %v926 = vadd.f32 0.0, %v925
      %v927 = vpop.f32.mrb[0].mxu0
      %v928 = vadd.f32 0.0, %v927
      %v929 = vpop.f32.mrb[0].mxu0
      %v930 = vadd.f32 0.0, %v929
      %v931 = vpop.f32.mrb[0].mxu0
      %v932 = vadd.f32 0.0, %v931
      %933 = vmatprep.mubr.bf16.mxu0 0
      %934 = vmatmul.mubr.bf16.gmra.mrb[0].mxu0 %v683
      %v935 = vpop.f32.mrb[0].mxu0
      %v936 = vadd.f32 0.0, %v935
      %v937 = vpop.f32.mrb[0].mxu0
      %v938 = vadd.f32 0.0, %v937
      %v939 = vpop.f32.mrb[0].mxu0
      %v940 = vadd.f32 0.0, %v939
      %v941 = vpop.f32.mrb[0].mxu0
      %v942 = vadd.f32 0.0, %v941
      %943 = vmatprep.mubr.bf16.mxu0 0
      %944 = vmatmul.mubr.bf16.gmra.mrb[0].mxu0 %v686
      %v945 = vpop.f32.mrb[0].mxu0
      %v946 = vadd.f32 0.0, %v945
      %v947 = vpop.f32.mrb[0].mxu0
      %v948 = vadd.f32 0.0, %v947
      %v949 = vpop.f32.mrb[0].mxu0
      %v950 = vadd.f32 0.0, %v949
      %v951 = vpop.f32.mrb[0].mxu0
      %v952 = vadd.f32 0.0, %v951
      %953 = vmatprep.mubr.bf16.mxu0 0
      %954 = vmatmul.mubr.bf16.gmra.mrb[0].mxu0 %v689
      %v955 = vpop.f32.mrb[0].mxu0
      %v956 = vadd.f32 0.0, %v955
      %v957 = vpop.f32.mrb[0].mxu0
      %v958 = vadd.f32 0.0, %v957
      %v959 = vpop.f32.mrb[0].mxu0
      %v960 = vadd.f32 0.0, %v959
      %v961 = vpop.f32.mrb[0].mxu0
      %v962 = vadd.f32 0.0, %v961
      %963 = vdwg.mxu0
      %v964 = vmax.f32 %v726, %v736
      %v965 = vmax.f32 %v730, %v740
      %v966 = vmax.f32 %v964, %v965
      %v967 = vrot.slane %v966, 4
      %v968 = vmax.f32 %v966, %v967
      %v969 = vrot.slane %v968, 2
      %v970 = vmax.f32 %v968, %v969
      %v971 = vrot.slane %v970, 1
      %v972 = vmax.f32 %v970, %v971
      %v973 = vmax.f32 %v728, %v738
      %v974 = vmax.f32 %v732, %v742
      %v975 = vmax.f32 %v973, %v974
      %v976 = vrot.slane %v975, 4
      %v977 = vmax.f32 %v975, %v976
      %v978 = vrot.slane %v977, 2
      %v979 = vmax.f32 %v977, %v978
      %v980 = vrot.slane %v979, 1
      %v981 = vmax.f32 %v979, %v980
      %v982 = vsub.f32 %v726, %v972
      %v983 = vsub.f32 %v728, %v981
      %v984 = vsub.f32 %v730, %v972
      %v985 = vsub.f32 %v732, %v981
      %v986 = vsub.f32 %v736, %v972
      %v987 = vsub.f32 %v738, %v981
      %v988 = vsub.f32 %v740, %v972
      %v989 = vsub.f32 %v742, %v981
      %v990 = vmul.f32 %v982, 1.442695
      %v991 = vpow.pop %v990
      %v992 = vmul.f32 %v983, 1.442695
      %v993 = vpow.pop %v992
      %v994 = vmul.f32 %v984, 1.442695
      %v995 = vpow.pop %v994
      %v996 = vmul.f32 %v985, 1.442695
      %v997 = vpow.pop %v996
      %v998 = vmul.f32 %v986, 1.442695
      %v999 = vpow.pop %v998
      %v1000 = vmul.f32 %v987, 1.442695
      %v1001 = vpow.pop %v1000
      %v1002 = vmul.f32 %v988, 1.442695
      %v1003 = vpow.pop %v1002
      %v1004 = vmul.f32 %v989, 1.442695
      %v1005 = vpow.pop %v1004
      %v1006 = vadd.f32 %v991, %v995
      %v1007 = vadd.f32 %v1006, %v999
      %v1008 = vadd.f32 %v1007, %v1003
      %v1009 = vrot.slane %v1008, 4
      %v1010 = vadd.f32 %v1008, %v1009
      %v1011 = vrot.slane %v1010, 2
      %v1012 = vadd.f32 %v1010, %v1011
      %v1013 = vrot.slane %v1012, 1
      %v1014 = vadd.f32 %v1012, %v1013
      %v1015 = vadd.f32 %v993, %v997
      %v1016 = vadd.f32 %v1015, %v1001
      %v1017 = vadd.f32 %v1016, %v1005
      %v1018 = vrot.slane %v1017, 4
      %v1019 = vadd.f32 %v1017, %v1018
      %v1020 = vrot.slane %v1019, 2
      %v1021 = vadd.f32 %v1019, %v1020
      %v1022 = vrot.slane %v1021, 1
      %v1023 = vadd.f32 %v1021, %v1022
      %v1024 = vrcp.pop %v1014
      %v1025 = vrcp.pop %v1023
      %v1026 = vmul.f32 %v991, %v1024
      %v1027 = vmul.f32 %v993, %v1025
      %v1028 = vmul.f32 %v995, %v1024
      %v1029 = vmul.f32 %v997, %v1025
      %v1030 = vmul.f32 %v999, %v1024
      %v1031 = vmul.f32 %v1001, %v1025
      %v1032 = vmul.f32 %v1003, %v1024
      %v1033 = vmul.f32 %v1005, %v1025
      %v1034 = vmul.f32 %v1026, 0.17677669
      %v1035 = vmul.f32 %v1027, 0.17677669
      %v1036 = vmul.f32 %v1028, 0.17677669
      %v1037 = vmul.f32 %v1029, 0.17677669
      %v1038 = vmul.f32 %v1030, 0.17677669
      %v1039 = vmul.f32 %v1031, 0.17677669
      %v1040 = vmul.f32 %v1032, 0.17677669
      %v1041 = vmul.f32 %v1033, 0.17677669
      %v1042 = vmax.f32 %v806, %v808
      %1043 = vmax.xlane.f32.xlu0 %v1042
      %v1044 = vpop.xlane.xlu0 %1043
      %v1045 = vmax.f32 %v810, %v812
      %1046 = vmax.xlane.f32.xlu0 %v1045
      %v1047 = vpop.xlane.xlu0 %1046
      %v1048 = vmax.f32 %v816, %v818
      %1049 = vmax.xlane.f32.xlu0 %v1048
      %v1050 = vpop.xlane.xlu0 %1049
      %v1051 = vmax.f32 %v820, %v822
      %1052 = vmax.xlane.f32.xlu0 %v1051
      %v1053 = vpop.xlane.xlu0 %1052
      %v1054 = vsub.f32 %v806, %v1044
      %v1055 = vsub.f32 %v808, %v1044
      %v1056 = vsub.f32 %v810, %v1047
      %v1057 = vsub.f32 %v812, %v1047
      %v1058 = vsub.f32 %v816, %v1050
      %v1059 = vsub.f32 %v818, %v1050
      %v1060 = vsub.f32 %v820, %v1053
      %v1061 = vsub.f32 %v822, %v1053
      %v1062 = vmul.f32 %v1054, 1.442695
      %v1063 = vpow.pop %v1062
      %v1064 = vmul.f32 %v1055, 1.442695
      %v1065 = vpow.pop %v1064
      %v1066 = vmul.f32 %v1056, 1.442695
      %v1067 = vpow.pop %v1066
      %v1068 = vmul.f32 %v1057, 1.442695
      %v1069 = vpow.pop %v1068
      %v1070 = vmul.f32 %v1058, 1.442695
      %v1071 = vpow.pop %v1070
      %v1072 = vmul.f32 %v1059, 1.442695
      %v1073 = vpow.pop %v1072
      %v1074 = vmul.f32 %v1060, 1.442695
      %v1075 = vpow.pop %v1074
      %v1076 = vmul.f32 %v1061, 1.442695
      %v1077 = vpow.pop %v1076
      %v1078 = vadd.f32 %v1063, %v1065
      %1079 = vadd.xlane.f32.xlu0 %v1078
      %v1080 = vpop.xlane.xlu0 %1079
      %v1081 = vadd.f32 %v1067, %v1069
      %1082 = vadd.xlane.f32.xlu0 %v1081
      %v1083 = vpop.xlane.xlu0 %1082
      %v1084 = vadd.f32 %v1071, %v1073
      %1085 = vadd.xlane.f32.xlu0 %v1084
      %v1086 = vpop.xlane.xlu0 %1085
      %v1087 = vadd.f32 %v1075, %v1077
      %1088 = vadd.xlane.f32.xlu0 %v1087
      %v1089 = vpop.xlane.xlu0 %1088
      %v1090 = vrcp.pop %v1080
      %v1091 = vrcp.pop %v1083
      %v1092 = vrcp.pop %v1086
      %v1093 = vrcp.pop %v1089
      %v1094 = vmul.f32 %v1063, %v1090
      %v1095 = vmul.f32 %v1065, %v1090
      %v1096 = vmul.f32 %v1067, %v1091
      %v1097 = vmul.f32 %v1069, %v1091
      %v1098 = vmul.f32 %v1071, %v1092
      %v1099 = vmul.f32 %v1073, %v1092
      %v1100 = vmul.f32 %v1075, %v1093
      %v1101 = vmul.f32 %v1077, %v1093
      %v1102 = vmul.f32 %v886, 0.00390625
      %v1103 = vmul.f32 %v888, 0.00390625
      %v1104 = vmul.f32 %v890, 0.00390625
      %v1105 = vmul.f32 %v892, 0.00390625
      %v1106 = vmul.f32 %v896, 0.00390625
      %v1107 = vmul.f32 %v898, 0.00390625
      %v1108 = vmul.f32 %v900, 0.00390625
      %v1109 = vmul.f32 %v902, 0.00390625
      %v1110 = vpack.c.bf16 %v1104, %v1102
      %v1111 = vpack.c.bf16 %v1105, %v1103
      %v1112 = vpack.c.bf16 %v1108, %v1106
      %v1113 = vpack.c.bf16 %v1109, %v1107
      %v1114 = vpack.c.bf16 %v1096, %v1094
      %v1115 = vpack.c.bf16 %v1097, %v1095
      %v1116 = vpack.c.bf16 %v1100, %v1098
      %v1117 = vpack.c.bf16 %v1101, %v1099
      %1118 = vmatprep.subr.bf16.mxu0 %v1115
      %1119 = vmatpush1.bf16.xpose.msra.mxu0 %v1114
      %1120 = vmatprep.subr.bf16.mxu0 %v1117
      %1121 = vmatpush1.bf16.xpose.msra.mxu0 %v1116
      %1122 = vmatprep.subr.bf16.mxu0 0
      %1123 = vmatpush1.bf16.xpose.msra.mxu0 0
      %1124 = vmatprep.subr.bf16.mxu0 0
      %1125 = vmatpush1.bf16.xpose.msra.mxu0 0
      %1126 = vmatprep.subr.bf16.mxu0 0
      %1127 = vmatpush1.bf16.xpose.msra.mxu0 0
      %1128 = vmatprep.subr.bf16.mxu0 0
      %1129 = vmatpush1.bf16.xpose.msra.mxu0 0
      %1130 = vmatprep.subr.bf16.mxu0 0
      %1131 = vmatpush1.bf16.xpose.msra.mxu0 0
      %1132 = vmatprep.subr.bf16.mxu0 0
      %1133 = vmatpush1.bf16.xpose.msra.mxu0 0
      %1134 = vmatprep.subr.bf16.mxu0 0
      %1135 = vmatpush1.bf16.xpose.msra.mxu0 0
      %1136 = vmatprep.subr.bf16.mxu0 0
      %1137 = vmatpush1.bf16.xpose.msra.mxu0 0
      %1138 = vmatprep.subr.bf16.mxu0 0
      %1139 = vmatpush1.bf16.xpose.msra.mxu0 0
      %1140 = vmatprep.subr.bf16.mxu0 0
      %1141 = vmatpush1.bf16.xpose.msra.mxu0 0
      %1142 = vmatprep.subr.bf16.mxu0 0
      %1143 = vmatpush1.bf16.xpose.msra.mxu0 0
      %1144 = vmatprep.subr.bf16.mxu0 0
      %1145 = vmatpush1.bf16.xpose.msra.mxu0 0
      %1146 = vmatprep.subr.bf16.mxu0 0
      %1147 = vmatpush1.bf16.xpose.msra.mxu0 0
      %1148 = vmatprep.subr.bf16.mxu0 0
      %1149 = vmatpush1.bf16.xpose.msra.mxu0 0
      %1150 = vmatprep.mubr.bf16.mxu0 %v1111
      %1151 = vmatmul.mubr.bf16.gmra.mrb[0].mxu0 %v1110
      %v1152 = vpop.f32.mrb[0].mxu0
      %v1153 = vadd.f32 0.0, %v1152
      %v1154 = vpop.f32.mrb[0].mxu0
      %v1155 = vpop.f32.mrb[0].mxu0
      %v1156 = vadd.f32 0.0, %v1155
      %v1157 = vpop.f32.mrb[0].mxu0
      %1158 = vmatprep.mubr.bf16.mxu0 %v1113
      %1159 = vmatmul.mubr.bf16.gmra.mrb[0].mxu0 %v1112
      %v1160 = vpop.f32.mrb[0].mxu0
      %v1161 = vadd.f32 0.0, %v1160
      %v1162 = vpop.f32.mrb[0].mxu0
      %v1163 = vpop.f32.mrb[0].mxu0
      %v1164 = vadd.f32 0.0, %v1163
      %v1165 = vpop.f32.mrb[0].mxu0
      %1166 = vdwg.mxu0
      %v1167 = vpack.c.bf16 %v1156, %v1153
      %v1168 = vpack.c.bf16 %v1164, %v1161
      %v1169 = vpack.c.bf16 %v1036, %v1034
      %v1170 = vpack.c.bf16 %v1037, %v1035
      %v1171 = vpack.c.bf16 %v1040, %v1038
      %v1172 = vpack.c.bf16 %v1041, %v1039
      %vm1173 = vcmask 261120
      %v1175 = vsel %vm1173, %v1167, 0
      %v1178 = vsel %vm1173, %v1168, 0
      %1180 = vmatprep.subr.bf16.mxu0 %v1170
      %1181 = vmatpush1.bf16.msra.mxu0 %v1169
      %1182 = vmatprep.subr.bf16.mxu0 %v1172
      %1183 = vmatpush1.bf16.msra.mxu0 %v1171
      %1184 = vmatprep.subr.bf16.mxu0 0
      %1185 = vmatpush1.bf16.msra.mxu0 0
      %1186 = vmatprep.subr.bf16.mxu0 0
      %1187 = vmatpush1.bf16.msra.mxu0 0
      %1188 = vmatprep.subr.bf16.mxu0 0
      %1189 = vmatpush1.bf16.msra.mxu0 0
      %1190 = vmatprep.subr.bf16.mxu0 0
      %1191 = vmatpush1.bf16.msra.mxu0 0
      %1192 = vmatprep.subr.bf16.mxu0 0
      %1193 = vmatpush1.bf16.msra.mxu0 0
      %1194 = vmatprep.subr.bf16.mxu0 0
      %1195 = vmatpush1.bf16.msra.mxu0 0
      %1196 = vmatprep.subr.bf16.mxu0 0
      %1197 = vmatpush1.bf16.msra.mxu0 0
      %1198 = vmatprep.subr.bf16.mxu0 0
      %1199 = vmatpush1.bf16.msra.mxu0 0
      %1200 = vmatprep.subr.bf16.mxu0 0
      %1201 = vmatpush1.bf16.msra.mxu0 0
      %1202 = vmatprep.subr.bf16.mxu0 0
      %1203 = vmatpush1.bf16.msra.mxu0 0
      %1204 = vmatprep.subr.bf16.mxu0 0
      %1205 = vmatpush1.bf16.msra.mxu0 0
      %1206 = vmatprep.subr.bf16.mxu0 0
      %1207 = vmatpush1.bf16.msra.mxu0 0
      %1208 = vmatprep.subr.bf16.mxu0 0
      %1209 = vmatpush1.bf16.msra.mxu0 0
      %1210 = vmatprep.subr.bf16.mxu0 0
      %1211 = vmatpush1.bf16.msra.mxu0 0
      %1212 = vmatprep.mubr.bf16.mxu0 0
      %1213 = vmatmul.mubr.bf16.gmra.mrb[0].mxu0 %v1175
      %v1214 = vpop.f32.mrb[0].mxu0
      %v1215 = vadd.f32 0.0, %v1214
      %v1216 = vpop.f32.mrb[0].mxu0
      %v1217 = vadd.f32 0.0, %v1216
      %v1218 = vpop.f32.mrb[0].mxu0
      %v1219 = vadd.f32 0.0, %v1218
      %v1220 = vpop.f32.mrb[0].mxu0
      %v1221 = vadd.f32 0.0, %v1220
      %1222 = vmatprep.mubr.bf16.mxu0 0
      %1223 = vmatmul.mubr.bf16.gmra.mrb[0].mxu0 %v1178
      %v1224 = vpop.f32.mrb[0].mxu0
      %v1225 = vadd.f32 0.0, %v1224
      %v1226 = vpop.f32.mrb[0].mxu0
      %v1227 = vadd.f32 0.0, %v1226
      %v1228 = vpop.f32.mrb[0].mxu0
      %v1229 = vadd.f32 0.0, %v1228
      %v1230 = vpop.f32.mrb[0].mxu0
      %v1231 = vadd.f32 0.0, %v1230
      %1232 = vdwg.mxu0
      %v1233 = vmax.f32 %v746, %v756
      %v1234 = vmax.f32 %v750, %v760
      %v1235 = vmax.f32 %v1233, %v1234
      %v1236 = vrot.slane %v1235, 4
      %v1237 = vmax.f32 %v1235, %v1236
      %v1238 = vrot.slane %v1237, 2
      %v1239 = vmax.f32 %v1237, %v1238
      %v1240 = vrot.slane %v1239, 1
      %v1241 = vmax.f32 %v1239, %v1240
      %v1242 = vmax.f32 %v748, %v758
      %v1243 = vmax.f32 %v752, %v762
      %v1244 = vmax.f32 %v1242, %v1243
      %v1245 = vrot.slane %v1244, 4
      %v1246 = vmax.f32 %v1244, %v1245
      %v1247 = vrot.slane %v1246, 2
      %v1248 = vmax.f32 %v1246, %v1247
      %v1249 = vrot.slane %v1248, 1
      %v1250 = vmax.f32 %v1248, %v1249
      %v1251 = vsub.f32 %v746, %v1241
      %v1252 = vsub.f32 %v748, %v1250
      %v1253 = vsub.f32 %v750, %v1241
      %v1254 = vsub.f32 %v752, %v1250
      %v1255 = vsub.f32 %v756, %v1241
      %v1256 = vsub.f32 %v758, %v1250
      %v1257 = vsub.f32 %v760, %v1241
      %v1258 = vsub.f32 %v762, %v1250
      %v1259 = vmul.f32 %v1251, 1.442695
      %v1260 = vpow.pop %v1259
      %v1261 = vmul.f32 %v1252, 1.442695
      %v1262 = vpow.pop %v1261
      %v1263 = vmul.f32 %v1253, 1.442695
      %v1264 = vpow.pop %v1263
      %v1265 = vmul.f32 %v1254, 1.442695
      %v1266 = vpow.pop %v1265
      %v1267 = vmul.f32 %v1255, 1.442695
      %v1268 = vpow.pop %v1267
      %v1269 = vmul.f32 %v1256, 1.442695
      %v1270 = vpow.pop %v1269
      %v1271 = vmul.f32 %v1257, 1.442695
      %v1272 = vpow.pop %v1271
      %v1273 = vmul.f32 %v1258, 1.442695
      %v1274 = vpow.pop %v1273
      %v1275 = vadd.f32 %v1260, %v1264
      %v1276 = vadd.f32 %v1275, %v1268
      %v1277 = vadd.f32 %v1276, %v1272
      %v1278 = vrot.slane %v1277, 4
      %v1279 = vadd.f32 %v1277, %v1278
      %v1280 = vrot.slane %v1279, 2
      %v1281 = vadd.f32 %v1279, %v1280
      %v1282 = vrot.slane %v1281, 1
      %v1283 = vadd.f32 %v1281, %v1282
      %v1284 = vadd.f32 %v1262, %v1266
      %v1285 = vadd.f32 %v1284, %v1270
      %v1286 = vadd.f32 %v1285, %v1274
      %v1287 = vrot.slane %v1286, 4
      %v1288 = vadd.f32 %v1286, %v1287
      %v1289 = vrot.slane %v1288, 2
      %v1290 = vadd.f32 %v1288, %v1289
      %v1291 = vrot.slane %v1290, 1
      %v1292 = vadd.f32 %v1290, %v1291
      %v1293 = vrcp.pop %v1283
      %v1294 = vrcp.pop %v1292
      %v1295 = vmul.f32 %v1260, %v1293
      %v1296 = vmul.f32 %v1262, %v1294
      %v1297 = vmul.f32 %v1264, %v1293
      %v1298 = vmul.f32 %v1266, %v1294
      %v1299 = vmul.f32 %v1268, %v1293
      %v1300 = vmul.f32 %v1270, %v1294
      %v1301 = vmul.f32 %v1272, %v1293
      %v1302 = vmul.f32 %v1274, %v1294
      %v1303 = vmul.f32 %v1295, 0.17677669
      %v1304 = vmul.f32 %v1296, 0.17677669
      %v1305 = vmul.f32 %v1297, 0.17677669
      %v1306 = vmul.f32 %v1298, 0.17677669
      %v1307 = vmul.f32 %v1299, 0.17677669
      %v1308 = vmul.f32 %v1300, 0.17677669
      %v1309 = vmul.f32 %v1301, 0.17677669
      %v1310 = vmul.f32 %v1302, 0.17677669
      %v1311 = vmax.f32 %v826, %v828
      %1312 = vmax.xlane.f32.xlu0 %v1311
      %v1313 = vpop.xlane.xlu0 %1312
      %v1314 = vmax.f32 %v830, %v832
      %1315 = vmax.xlane.f32.xlu0 %v1314
      %v1316 = vpop.xlane.xlu0 %1315
      %v1317 = vmax.f32 %v836, %v838
      %1318 = vmax.xlane.f32.xlu0 %v1317
      %v1319 = vpop.xlane.xlu0 %1318
      %v1320 = vmax.f32 %v840, %v842
      %1321 = vmax.xlane.f32.xlu0 %v1320
      %v1322 = vpop.xlane.xlu0 %1321
      %v1323 = vsub.f32 %v826, %v1313
      %v1324 = vsub.f32 %v828, %v1313
      %v1325 = vsub.f32 %v830, %v1316
      %v1326 = vsub.f32 %v832, %v1316
      %v1327 = vsub.f32 %v836, %v1319
      %v1328 = vsub.f32 %v838, %v1319
      %v1329 = vsub.f32 %v840, %v1322
      %v1330 = vsub.f32 %v842, %v1322
      %v1331 = vmul.f32 %v1323, 1.442695
      %v1332 = vpow.pop %v1331
      %v1333 = vmul.f32 %v1324, 1.442695
      %v1334 = vpow.pop %v1333
      %v1335 = vmul.f32 %v1325, 1.442695
      %v1336 = vpow.pop %v1335
      %v1337 = vmul.f32 %v1326, 1.442695
      %v1338 = vpow.pop %v1337
      %v1339 = vmul.f32 %v1327, 1.442695
      %v1340 = vpow.pop %v1339
      %v1341 = vmul.f32 %v1328, 1.442695
      %v1342 = vpow.pop %v1341
      %v1343 = vmul.f32 %v1329, 1.442695
      %v1344 = vpow.pop %v1343
      %v1345 = vmul.f32 %v1330, 1.442695
      %v1346 = vpow.pop %v1345
      %v1347 = vadd.f32 %v1332, %v1334
      %1348 = vadd.xlane.f32.xlu0 %v1347
      %v1349 = vpop.xlane.xlu0 %1348
      %v1350 = vadd.f32 %v1336, %v1338
      %1351 = vadd.xlane.f32.xlu0 %v1350
      %v1352 = vpop.xlane.xlu0 %1351
      %v1353 = vadd.f32 %v1340, %v1342
      %1354 = vadd.xlane.f32.xlu0 %v1353
      %v1355 = vpop.xlane.xlu0 %1354
      %v1356 = vadd.f32 %v1344, %v1346
      %1357 = vadd.xlane.f32.xlu0 %v1356
      %v1358 = vpop.xlane.xlu0 %1357
      %v1359 = vrcp.pop %v1349
      %v1360 = vrcp.pop %v1352
      %v1361 = vrcp.pop %v1355
      %v1362 = vrcp.pop %v1358
      %v1363 = vmul.f32 %v1332, %v1359
      %v1364 = vmul.f32 %v1334, %v1359
      %v1365 = vmul.f32 %v1336, %v1360
      %v1366 = vmul.f32 %v1338, %v1360
      %v1367 = vmul.f32 %v1340, %v1361
      %v1368 = vmul.f32 %v1342, %v1361
      %v1369 = vmul.f32 %v1344, %v1362
      %v1370 = vmul.f32 %v1346, %v1362
      %v1371 = vmul.f32 %v906, 0.00390625
      %v1372 = vmul.f32 %v908, 0.00390625
      %v1373 = vmul.f32 %v910, 0.00390625
      %v1374 = vmul.f32 %v912, 0.00390625
      %v1375 = vmul.f32 %v916, 0.00390625
      %v1376 = vmul.f32 %v918, 0.00390625
      %v1377 = vmul.f32 %v920, 0.00390625
      %v1378 = vmul.f32 %v922, 0.00390625
      %v1379 = vpack.c.bf16 %v1373, %v1371
      %v1380 = vpack.c.bf16 %v1374, %v1372
      %v1381 = vpack.c.bf16 %v1377, %v1375
      %v1382 = vpack.c.bf16 %v1378, %v1376
      %v1383 = vpack.c.bf16 %v1365, %v1363
      %v1384 = vpack.c.bf16 %v1366, %v1364
      %v1385 = vpack.c.bf16 %v1369, %v1367
      %v1386 = vpack.c.bf16 %v1370, %v1368
      %1387 = vmatprep.subr.bf16.mxu0 %v1384
      %1388 = vmatpush1.bf16.xpose.msra.mxu0 %v1383
      %1389 = vmatprep.subr.bf16.mxu0 %v1386
      %1390 = vmatpush1.bf16.xpose.msra.mxu0 %v1385
      %1391 = vmatprep.subr.bf16.mxu0 0
      %1392 = vmatpush1.bf16.xpose.msra.mxu0 0
      %1393 = vmatprep.subr.bf16.mxu0 0
      %1394 = vmatpush1.bf16.xpose.msra.mxu0 0
      %1395 = vmatprep.subr.bf16.mxu0 0
      %1396 = vmatpush1.bf16.xpose.msra.mxu0 0
      %1397 = vmatprep.subr.bf16.mxu0 0
      %1398 = vmatpush1.bf16.xpose.msra.mxu0 0
      %1399 = vmatprep.subr.bf16.mxu0 0
      %1400 = vmatpush1.bf16.xpose.msra.mxu0 0
      %1401 = vmatprep.subr.bf16.mxu0 0
      %1402 = vmatpush1.bf16.xpose.msra.mxu0 0
      %1403 = vmatprep.subr.bf16.mxu0 0
      %1404 = vmatpush1.bf16.xpose.msra.mxu0 0
      %1405 = vmatprep.subr.bf16.mxu0 0
      %1406 = vmatpush1.bf16.xpose.msra.mxu0 0
      %1407 = vmatprep.subr.bf16.mxu0 0
      %1408 = vmatpush1.bf16.xpose.msra.mxu0 0
      %1409 = vmatprep.subr.bf16.mxu0 0
      %1410 = vmatpush1.bf16.xpose.msra.mxu0 0
      %1411 = vmatprep.subr.bf16.mxu0 0
      %1412 = vmatpush1.bf16.xpose.msra.mxu0 0
      %1413 = vmatprep.subr.bf16.mxu0 0
      %1414 = vmatpush1.bf16.xpose.msra.mxu0 0
      %1415 = vmatprep.subr.bf16.mxu0 0
      %1416 = vmatpush1.bf16.xpose.msra.mxu0 0
      %1417 = vmatprep.subr.bf16.mxu0 0
      %1418 = vmatpush1.bf16.xpose.msra.mxu0 0
      %1419 = vmatprep.mubr.bf16.mxu0 %v1380
      %1420 = vmatmul.mubr.bf16.gmra.mrb[0].mxu0 %v1379
      %v1421 = vpop.f32.mrb[0].mxu0
      %v1422 = vadd.f32 0.0, %v1421
      %v1423 = vpop.f32.mrb[0].mxu0
      %v1424 = vpop.f32.mrb[0].mxu0
      %v1425 = vadd.f32 0.0, %v1424
      %v1426 = vpop.f32.mrb[0].mxu0
      %1427 = vmatprep.mubr.bf16.mxu0 %v1382
      %1428 = vmatmul.mubr.bf16.gmra.mrb[0].mxu0 %v1381
      %v1429 = vpop.f32.mrb[0].mxu0
      %v1430 = vadd.f32 0.0, %v1429
      %v1431 = vpop.f32.mrb[0].mxu0
      %v1432 = vpop.f32.mrb[0].mxu0
      %v1433 = vadd.f32 0.0, %v1432
      %v1434 = vpop.f32.mrb[0].mxu0
      %1435 = vdwg.mxu0
      %v1436 = vpack.c.bf16 %v1425, %v1422
      %v1437 = vpack.c.bf16 %v1433, %v1430
      %v1438 = vpack.c.bf16 %v1305, %v1303
      %v1439 = vpack.c.bf16 %v1306, %v1304
      %v1440 = vpack.c.bf16 %v1309, %v1307
      %v1441 = vpack.c.bf16 %v1310, %v1308
      %v1443 = vsel %vm1173, %v1436, 0
      %v1446 = vsel %vm1173, %v1437, 0
      %1448 = vmatprep.subr.bf16.mxu0 %v1439
      %1449 = vmatpush1.bf16.msra.mxu0 %v1438
      %1450 = vmatprep.subr.bf16.mxu0 %v1441
      %1451 = vmatpush1.bf16.msra.mxu0 %v1440
      %1452 = vmatprep.subr.bf16.mxu0 0
      %1453 = vmatpush1.bf16.msra.mxu0 0
      %1454 = vmatprep.subr.bf16.mxu0 0
      %1455 = vmatpush1.bf16.msra.mxu0 0
      %1456 = vmatprep.subr.bf16.mxu0 0
      %1457 = vmatpush1.bf16.msra.mxu0 0
      %1458 = vmatprep.subr.bf16.mxu0 0
      %1459 = vmatpush1.bf16.msra.mxu0 0
      %1460 = vmatprep.subr.bf16.mxu0 0
      %1461 = vmatpush1.bf16.msra.mxu0 0
      %1462 = vmatprep.subr.bf16.mxu0 0
      %1463 = vmatpush1.bf16.msra.mxu0 0
      %1464 = vmatprep.subr.bf16.mxu0 0
      %1465 = vmatpush1.bf16.msra.mxu0 0
      %1466 = vmatprep.subr.bf16.mxu0 0
      %1467 = vmatpush1.bf16.msra.mxu0 0
      %1468 = vmatprep.subr.bf16.mxu0 0
      %1469 = vmatpush1.bf16.msra.mxu0 0
      %1470 = vmatprep.subr.bf16.mxu0 0
      %1471 = vmatpush1.bf16.msra.mxu0 0
      %1472 = vmatprep.subr.bf16.mxu0 0
      %1473 = vmatpush1.bf16.msra.mxu0 0
      %1474 = vmatprep.subr.bf16.mxu0 0
      %1475 = vmatpush1.bf16.msra.mxu0 0
      %1476 = vmatprep.subr.bf16.mxu0 0
      %1477 = vmatpush1.bf16.msra.mxu0 0
      %1478 = vmatprep.subr.bf16.mxu0 0
      %1479 = vmatpush1.bf16.msra.mxu0 0
      %1480 = vmatprep.mubr.bf16.mxu0 0
      %1481 = vmatmul.mubr.bf16.gmra.mrb[0].mxu0 %v1443
      %v1482 = vpop.f32.mrb[0].mxu0
      %v1483 = vadd.f32 0.0, %v1482
      %v1484 = vpop.f32.mrb[0].mxu0
      %v1485 = vadd.f32 0.0, %v1484
      %v1486 = vpop.f32.mrb[0].mxu0
      %v1487 = vadd.f32 0.0, %v1486
      %v1488 = vpop.f32.mrb[0].mxu0
      %v1489 = vadd.f32 0.0, %v1488
      %1490 = vmatprep.mubr.bf16.mxu0 0
      %1491 = vmatmul.mubr.bf16.gmra.mrb[0].mxu0 %v1446
      %v1492 = vpop.f32.mrb[0].mxu0
      %v1493 = vadd.f32 0.0, %v1492
      %v1494 = vpop.f32.mrb[0].mxu0
      %v1495 = vadd.f32 0.0, %v1494
      %v1496 = vpop.f32.mrb[0].mxu0
      %v1497 = vadd.f32 0.0, %v1496
      %v1498 = vpop.f32.mrb[0].mxu0
      %v1499 = vadd.f32 0.0, %v1498
      %1500 = vdwg.mxu0
      %v1501 = vmax.f32 %v766, %v776
      %v1502 = vmax.f32 %v770, %v780
      %v1503 = vmax.f32 %v1501, %v1502
      %v1504 = vrot.slane %v1503, 4
      %v1505 = vmax.f32 %v1503, %v1504
      %v1506 = vrot.slane %v1505, 2
      %v1507 = vmax.f32 %v1505, %v1506
      %v1508 = vrot.slane %v1507, 1
      %v1509 = vmax.f32 %v1507, %v1508
      %v1510 = vmax.f32 %v768, %v778
      %v1511 = vmax.f32 %v772, %v782
      %v1512 = vmax.f32 %v1510, %v1511
      %v1513 = vrot.slane %v1512, 4
      %v1514 = vmax.f32 %v1512, %v1513
      %v1515 = vrot.slane %v1514, 2
      %v1516 = vmax.f32 %v1514, %v1515
      %v1517 = vrot.slane %v1516, 1
      %v1518 = vmax.f32 %v1516, %v1517
      %v1519 = vsub.f32 %v766, %v1509
      %v1520 = vsub.f32 %v768, %v1518
      %v1521 = vsub.f32 %v770, %v1509
      %v1522 = vsub.f32 %v772, %v1518
      %v1523 = vsub.f32 %v776, %v1509
      %v1524 = vsub.f32 %v778, %v1518
      %v1525 = vsub.f32 %v780, %v1509
      %v1526 = vsub.f32 %v782, %v1518
      %v1527 = vmul.f32 %v1519, 1.442695
      %v1528 = vpow.pop %v1527
      %v1529 = vmul.f32 %v1520, 1.442695
      %v1530 = vpow.pop %v1529
      %v1531 = vmul.f32 %v1521, 1.442695
      %v1532 = vpow.pop %v1531
      %v1533 = vmul.f32 %v1522, 1.442695
      %v1534 = vpow.pop %v1533
      %v1535 = vmul.f32 %v1523, 1.442695
      %v1536 = vpow.pop %v1535
      %v1537 = vmul.f32 %v1524, 1.442695
      %v1538 = vpow.pop %v1537
      %v1539 = vmul.f32 %v1525, 1.442695
      %v1540 = vpow.pop %v1539
      %v1541 = vmul.f32 %v1526, 1.442695
      %v1542 = vpow.pop %v1541
      %v1543 = vadd.f32 %v1528, %v1532
      %v1544 = vadd.f32 %v1543, %v1536
      %v1545 = vadd.f32 %v1544, %v1540
      %v1546 = vrot.slane %v1545, 4
      %v1547 = vadd.f32 %v1545, %v1546
      %v1548 = vrot.slane %v1547, 2
      %v1549 = vadd.f32 %v1547, %v1548
      %v1550 = vrot.slane %v1549, 1
      %v1551 = vadd.f32 %v1549, %v1550
      %v1552 = vadd.f32 %v1530, %v1534
      %v1553 = vadd.f32 %v1552, %v1538
      %v1554 = vadd.f32 %v1553, %v1542
      %v1555 = vrot.slane %v1554, 4
      %v1556 = vadd.f32 %v1554, %v1555
      %v1557 = vrot.slane %v1556, 2
      %v1558 = vadd.f32 %v1556, %v1557
      %v1559 = vrot.slane %v1558, 1
      %v1560 = vadd.f32 %v1558, %v1559
      %v1561 = vrcp.pop %v1551
      %v1562 = vrcp.pop %v1560
      %v1563 = vmul.f32 %v1528, %v1561
      %v1564 = vmul.f32 %v1530, %v1562
      %v1565 = vmul.f32 %v1532, %v1561
      %v1566 = vmul.f32 %v1534, %v1562
      %v1567 = vmul.f32 %v1536, %v1561
      %v1568 = vmul.f32 %v1538, %v1562
      %v1569 = vmul.f32 %v1540, %v1561
      %v1570 = vmul.f32 %v1542, %v1562
      %v1571 = vmul.f32 %v1563, 0.17677669
      %v1572 = vmul.f32 %v1564, 0.17677669
      %v1573 = vmul.f32 %v1565, 0.17677669
      %v1574 = vmul.f32 %v1566, 0.17677669
      %v1575 = vmul.f32 %v1567, 0.17677669
      %v1576 = vmul.f32 %v1568, 0.17677669
      %v1577 = vmul.f32 %v1569, 0.17677669
      %v1578 = vmul.f32 %v1570, 0.17677669
      %v1579 = vmax.f32 %v846, %v848
      %1580 = vmax.xlane.f32.xlu0 %v1579
      %v1581 = vpop.xlane.xlu0 %1580
      %v1582 = vmax.f32 %v850, %v852
      %1583 = vmax.xlane.f32.xlu0 %v1582
      %v1584 = vpop.xlane.xlu0 %1583
      %v1585 = vmax.f32 %v856, %v858
      %1586 = vmax.xlane.f32.xlu0 %v1585
      %v1587 = vpop.xlane.xlu0 %1586
      %v1588 = vmax.f32 %v860, %v862
      %1589 = vmax.xlane.f32.xlu0 %v1588
      %v1590 = vpop.xlane.xlu0 %1589
      %v1591 = vsub.f32 %v846, %v1581
      %v1592 = vsub.f32 %v848, %v1581
      %v1593 = vsub.f32 %v850, %v1584
      %v1594 = vsub.f32 %v852, %v1584
      %v1595 = vsub.f32 %v856, %v1587
      %v1596 = vsub.f32 %v858, %v1587
      %v1597 = vsub.f32 %v860, %v1590
      %v1598 = vsub.f32 %v862, %v1590
      %v1599 = vmul.f32 %v1591, 1.442695
      %v1600 = vpow.pop %v1599
      %v1601 = vmul.f32 %v1592, 1.442695
      %v1602 = vpow.pop %v1601
      %v1603 = vmul.f32 %v1593, 1.442695
      %v1604 = vpow.pop %v1603
      %v1605 = vmul.f32 %v1594, 1.442695
      %v1606 = vpow.pop %v1605
      %v1607 = vmul.f32 %v1595, 1.442695
      %v1608 = vpow.pop %v1607
      %v1609 = vmul.f32 %v1596, 1.442695
      %v1610 = vpow.pop %v1609
      %v1611 = vmul.f32 %v1597, 1.442695
      %v1612 = vpow.pop %v1611
      %v1613 = vmul.f32 %v1598, 1.442695
      %v1614 = vpow.pop %v1613
      %v1615 = vadd.f32 %v1600, %v1602
      %1616 = vadd.xlane.f32.xlu0 %v1615
      %v1617 = vpop.xlane.xlu0 %1616
      %v1618 = vadd.f32 %v1604, %v1606
      %1619 = vadd.xlane.f32.xlu0 %v1618
      %v1620 = vpop.xlane.xlu0 %1619
      %v1621 = vadd.f32 %v1608, %v1610
      %1622 = vadd.xlane.f32.xlu0 %v1621
      %v1623 = vpop.xlane.xlu0 %1622
      %v1624 = vadd.f32 %v1612, %v1614
      %1625 = vadd.xlane.f32.xlu0 %v1624
      %v1626 = vpop.xlane.xlu0 %1625
      %v1627 = vrcp.pop %v1617
      %v1628 = vrcp.pop %v1620
      %v1629 = vrcp.pop %v1623
      %v1630 = vrcp.pop %v1626
      %v1631 = vmul.f32 %v1600, %v1627
      %v1632 = vmul.f32 %v1602, %v1627
      %v1633 = vmul.f32 %v1604, %v1628
      %v1634 = vmul.f32 %v1606, %v1628
      %v1635 = vmul.f32 %v1608, %v1629
      %v1636 = vmul.f32 %v1610, %v1629
      %v1637 = vmul.f32 %v1612, %v1630
      %v1638 = vmul.f32 %v1614, %v1630
      %v1639 = vmul.f32 %v926, 0.00390625
      %v1640 = vmul.f32 %v928, 0.00390625
      %v1641 = vmul.f32 %v930, 0.00390625
      %v1642 = vmul.f32 %v932, 0.00390625
      %v1643 = vmul.f32 %v936, 0.00390625
      %v1644 = vmul.f32 %v938, 0.00390625
      %v1645 = vmul.f32 %v940, 0.00390625
      %v1646 = vmul.f32 %v942, 0.00390625
      %v1647 = vpack.c.bf16 %v1641, %v1639
      %v1648 = vpack.c.bf16 %v1642, %v1640
      %v1649 = vpack.c.bf16 %v1645, %v1643
      %v1650 = vpack.c.bf16 %v1646, %v1644
      %v1651 = vpack.c.bf16 %v1633, %v1631
      %v1652 = vpack.c.bf16 %v1634, %v1632
      %v1653 = vpack.c.bf16 %v1637, %v1635
      %v1654 = vpack.c.bf16 %v1638, %v1636
      %1655 = vmatprep.subr.bf16.mxu0 %v1652
      %1656 = vmatpush1.bf16.xpose.msra.mxu0 %v1651
      %1657 = vmatprep.subr.bf16.mxu0 %v1654
      %1658 = vmatpush1.bf16.xpose.msra.mxu0 %v1653
      %1659 = vmatprep.subr.bf16.mxu0 0
      %1660 = vmatpush1.bf16.xpose.msra.mxu0 0
      %1661 = vmatprep.subr.bf16.mxu0 0
      %1662 = vmatpush1.bf16.xpose.msra.mxu0 0
      %1663 = vmatprep.subr.bf16.mxu0 0
      %1664 = vmatpush1.bf16.xpose.msra.mxu0 0
      %1665 = vmatprep.subr.bf16.mxu0 0
      %1666 = vmatpush1.bf16.xpose.msra.mxu0 0
      %1667 = vmatprep.subr.bf16.mxu0 0
      %1668 = vmatpush1.bf16.xpose.msra.mxu0 0
      %1669 = vmatprep.subr.bf16.mxu0 0
      %1670 = vmatpush1.bf16.xpose.msra.mxu0 0
      %1671 = vmatprep.subr.bf16.mxu0 0
      %1672 = vmatpush1.bf16.xpose.msra.mxu0 0
      %1673 = vmatprep.subr.bf16.mxu0 0
      %1674 = vmatpush1.bf16.xpose.msra.mxu0 0
      %1675 = vmatprep.subr.bf16.mxu0 0
      %1676 = vmatpush1.bf16.xpose.msra.mxu0 0
      %1677 = vmatprep.subr.bf16.mxu0 0
      %1678 = vmatpush1.bf16.xpose.msra.mxu0 0
      %1679 = vmatprep.subr.bf16.mxu0 0
      %1680 = vmatpush1.bf16.xpose.msra.mxu0 0
      %1681 = vmatprep.subr.bf16.mxu0 0
      %1682 = vmatpush1.bf16.xpose.msra.mxu0 0
      %1683 = vmatprep.subr.bf16.mxu0 0
      %1684 = vmatpush1.bf16.xpose.msra.mxu0 0
      %1685 = vmatprep.subr.bf16.mxu0 0
      %1686 = vmatpush1.bf16.xpose.msra.mxu0 0
      %1687 = vmatprep.mubr.bf16.mxu0 %v1648
      %1688 = vmatmul.mubr.bf16.gmra.mrb[0].mxu0 %v1647
      %v1689 = vpop.f32.mrb[0].mxu0
      %v1690 = vadd.f32 0.0, %v1689
      %v1691 = vpop.f32.mrb[0].mxu0
      %v1692 = vpop.f32.mrb[0].mxu0
      %v1693 = vadd.f32 0.0, %v1692
      %v1694 = vpop.f32.mrb[0].mxu0
      %1695 = vmatprep.mubr.bf16.mxu0 %v1650
      %1696 = vmatmul.mubr.bf16.gmra.mrb[0].mxu0 %v1649
      %v1697 = vpop.f32.mrb[0].mxu0
      %v1698 = vadd.f32 0.0, %v1697
      %v1699 = vpop.f32.mrb[0].mxu0
      %v1700 = vpop.f32.mrb[0].mxu0
      %v1701 = vadd.f32 0.0, %v1700
      %v1702 = vpop.f32.mrb[0].mxu0
      %1703 = vdwg.mxu0
      %v1704 = vpack.c.bf16 %v1693, %v1690
      %v1705 = vpack.c.bf16 %v1701, %v1698
      %v1706 = vpack.c.bf16 %v1573, %v1571
      %v1707 = vpack.c.bf16 %v1574, %v1572
      %v1708 = vpack.c.bf16 %v1577, %v1575
      %v1709 = vpack.c.bf16 %v1578, %v1576
      %v1711 = vsel %vm1173, %v1704, 0
      %v1714 = vsel %vm1173, %v1705, 0
      %1716 = vmatprep.subr.bf16.mxu0 %v1707
      %1717 = vmatpush1.bf16.msra.mxu0 %v1706
      %1718 = vmatprep.subr.bf16.mxu0 %v1709
      %1719 = vmatpush1.bf16.msra.mxu0 %v1708
      %1720 = vmatprep.subr.bf16.mxu0 0
      %1721 = vmatpush1.bf16.msra.mxu0 0
      %1722 = vmatprep.subr.bf16.mxu0 0
      %1723 = vmatpush1.bf16.msra.mxu0 0
      %1724 = vmatprep.subr.bf16.mxu0 0
      %1725 = vmatpush1.bf16.msra.mxu0 0
      %1726 = vmatprep.subr.bf16.mxu0 0
      %1727 = vmatpush1.bf16.msra.mxu0 0
      %1728 = vmatprep.subr.bf16.mxu0 0
      %1729 = vmatpush1.bf16.msra.mxu0 0
      %1730 = vmatprep.subr.bf16.mxu0 0
      %1731 = vmatpush1.bf16.msra.mxu0 0
      %1732 = vmatprep.subr.bf16.mxu0 0
      %1733 = vmatpush1.bf16.msra.mxu0 0
      %1734 = vmatprep.subr.bf16.mxu0 0
      %1735 = vmatpush1.bf16.msra.mxu0 0
      %1736 = vmatprep.subr.bf16.mxu0 0
      %1737 = vmatpush1.bf16.msra.mxu0 0
      %1738 = vmatprep.subr.bf16.mxu0 0
      %1739 = vmatpush1.bf16.msra.mxu0 0
      %1740 = vmatprep.subr.bf16.mxu0 0
      %1741 = vmatpush1.bf16.msra.mxu0 0
      %1742 = vmatprep.subr.bf16.mxu0 0
      %1743 = vmatpush1.bf16.msra.mxu0 0
      %1744 = vmatprep.subr.bf16.mxu0 0
      %1745 = vmatpush1.bf16.msra.mxu0 0
      %1746 = vmatprep.subr.bf16.mxu0 0
      %1747 = vmatpush1.bf16.msra.mxu0 0
      %1748 = vmatprep.mubr.bf16.mxu0 0
      %1749 = vmatmul.mubr.bf16.gmra.mrb[0].mxu0 %v1711
      %v1750 = vpop.f32.mrb[0].mxu0
      %v1751 = vadd.f32 0.0, %v1750
      %v1752 = vpop.f32.mrb[0].mxu0
      %v1753 = vadd.f32 0.0, %v1752
      %v1754 = vpop.f32.mrb[0].mxu0
      %v1755 = vadd.f32 0.0, %v1754
      %v1756 = vpop.f32.mrb[0].mxu0
      %v1757 = vadd.f32 0.0, %v1756
      %1758 = vmatprep.mubr.bf16.mxu0 0
      %1759 = vmatmul.mubr.bf16.gmra.mrb[0].mxu0 %v1714
      %v1760 = vpop.f32.mrb[0].mxu0
      %v1761 = vadd.f32 0.0, %v1760
      %v1762 = vpop.f32.mrb[0].mxu0
      %v1763 = vadd.f32 0.0, %v1762
      %v1764 = vpop.f32.mrb[0].mxu0
      %v1765 = vadd.f32 0.0, %v1764
      %v1766 = vpop.f32.mrb[0].mxu0
      %v1767 = vadd.f32 0.0, %v1766
      %1768 = vdwg.mxu0
      %v1769 = vmax.f32 %v786, %v796
      %v1770 = vmax.f32 %v790, %v800
      %v1771 = vmax.f32 %v1769, %v1770
      %v1772 = vrot.slane %v1771, 4
      %v1773 = vmax.f32 %v1771, %v1772
      %v1774 = vrot.slane %v1773, 2
      %v1775 = vmax.f32 %v1773, %v1774
      %v1776 = vrot.slane %v1775, 1
      %v1777 = vmax.f32 %v1775, %v1776
      %v1778 = vmax.f32 %v788, %v798
      %v1779 = vmax.f32 %v792, %v802
      %v1780 = vmax.f32 %v1778, %v1779
      %v1781 = vrot.slane %v1780, 4
      %v1782 = vmax.f32 %v1780, %v1781
      %v1783 = vrot.slane %v1782, 2
      %v1784 = vmax.f32 %v1782, %v1783
      %v1785 = vrot.slane %v1784, 1
      %v1786 = vmax.f32 %v1784, %v1785
      %v1787 = vsub.f32 %v786, %v1777
      %v1788 = vsub.f32 %v788, %v1786
      %v1789 = vsub.f32 %v790, %v1777
      %v1790 = vsub.f32 %v792, %v1786
      %v1791 = vsub.f32 %v796, %v1777
      %v1792 = vsub.f32 %v798, %v1786
      %v1793 = vsub.f32 %v800, %v1777
      %v1794 = vsub.f32 %v802, %v1786
      %v1795 = vmul.f32 %v1787, 1.442695
      %v1796 = vpow.pop %v1795
      %v1797 = vmul.f32 %v1788, 1.442695
      %v1798 = vpow.pop %v1797
      %v1799 = vmul.f32 %v1789, 1.442695
      %v1800 = vpow.pop %v1799
      %v1801 = vmul.f32 %v1790, 1.442695
      %v1802 = vpow.pop %v1801
      %v1803 = vmul.f32 %v1791, 1.442695
      %v1804 = vpow.pop %v1803
      %v1805 = vmul.f32 %v1792, 1.442695
      %v1806 = vpow.pop %v1805
      %v1807 = vmul.f32 %v1793, 1.442695
      %v1808 = vpow.pop %v1807
      %v1809 = vmul.f32 %v1794, 1.442695
      %v1810 = vpow.pop %v1809
      %v1811 = vadd.f32 %v1796, %v1800
      %v1812 = vadd.f32 %v1811, %v1804
      %v1813 = vadd.f32 %v1812, %v1808
      %v1814 = vrot.slane %v1813, 4
      %v1815 = vadd.f32 %v1813, %v1814
      %v1816 = vrot.slane %v1815, 2
      %v1817 = vadd.f32 %v1815, %v1816
      %v1818 = vrot.slane %v1817, 1
      %v1819 = vadd.f32 %v1817, %v1818
      %v1820 = vadd.f32 %v1798, %v1802
      %v1821 = vadd.f32 %v1820, %v1806
      %v1822 = vadd.f32 %v1821, %v1810
      %v1823 = vrot.slane %v1822, 4
      %v1824 = vadd.f32 %v1822, %v1823
      %v1825 = vrot.slane %v1824, 2
      %v1826 = vadd.f32 %v1824, %v1825
      %v1827 = vrot.slane %v1826, 1
      %v1828 = vadd.f32 %v1826, %v1827
      %v1829 = vrcp.pop %v1819
      %v1830 = vrcp.pop %v1828
      %v1831 = vmul.f32 %v1796, %v1829
      %v1832 = vmul.f32 %v1798, %v1830
      %v1833 = vmul.f32 %v1800, %v1829
      %v1834 = vmul.f32 %v1802, %v1830
      %v1835 = vmul.f32 %v1804, %v1829
      %v1836 = vmul.f32 %v1806, %v1830
      %v1837 = vmul.f32 %v1808, %v1829
      %v1838 = vmul.f32 %v1810, %v1830
      %v1839 = vmul.f32 %v1831, 0.17677669
      %v1840 = vmul.f32 %v1832, 0.17677669
      %v1841 = vmul.f32 %v1833, 0.17677669
      %v1842 = vmul.f32 %v1834, 0.17677669
      %v1843 = vmul.f32 %v1835, 0.17677669
      %v1844 = vmul.f32 %v1836, 0.17677669
      %v1845 = vmul.f32 %v1837, 0.17677669
      %v1846 = vmul.f32 %v1838, 0.17677669
      %v1847 = vmax.f32 %v866, %v868
      %1848 = vmax.xlane.f32.xlu0 %v1847
      %v1849 = vpop.xlane.xlu0 %1848
      %v1850 = vmax.f32 %v870, %v872
      %1851 = vmax.xlane.f32.xlu0 %v1850
      %v1852 = vpop.xlane.xlu0 %1851
      %v1853 = vmax.f32 %v876, %v878
      %1854 = vmax.xlane.f32.xlu0 %v1853
      %v1855 = vpop.xlane.xlu0 %1854
      %v1856 = vmax.f32 %v880, %v882
      %1857 = vmax.xlane.f32.xlu0 %v1856
      %v1858 = vpop.xlane.xlu0 %1857
      %v1859 = vsub.f32 %v866, %v1849
      %v1860 = vsub.f32 %v868, %v1849
      %v1861 = vsub.f32 %v870, %v1852
      %v1862 = vsub.f32 %v872, %v1852
      %v1863 = vsub.f32 %v876, %v1855
      %v1864 = vsub.f32 %v878, %v1855
      %v1865 = vsub.f32 %v880, %v1858
      %v1866 = vsub.f32 %v882, %v1858
      %v1867 = vmul.f32 %v1859, 1.442695
      %v1868 = vpow.pop %v1867
      %v1869 = vmul.f32 %v1860, 1.442695
      %v1870 = vpow.pop %v1869
      %v1871 = vmul.f32 %v1861, 1.442695
      %v1872 = vpow.pop %v1871
      %v1873 = vmul.f32 %v1862, 1.442695
      %v1874 = vpow.pop %v1873
      %v1875 = vmul.f32 %v1863, 1.442695
      %v1876 = vpow.pop %v1875
      %v1877 = vmul.f32 %v1864, 1.442695
      %v1878 = vpow.pop %v1877
      %v1879 = vmul.f32 %v1865, 1.442695
      %v1880 = vpow.pop %v1879
      %v1881 = vmul.f32 %v1866, 1.442695
      %v1882 = vpow.pop %v1881
      %v1883 = vadd.f32 %v1868, %v1870
      %1884 = vadd.xlane.f32.xlu0 %v1883
      %v1885 = vpop.xlane.xlu0 %1884
      %v1886 = vadd.f32 %v1872, %v1874
      %1887 = vadd.xlane.f32.xlu0 %v1886
      %v1888 = vpop.xlane.xlu0 %1887
      %v1889 = vadd.f32 %v1876, %v1878
      %1890 = vadd.xlane.f32.xlu0 %v1889
      %v1891 = vpop.xlane.xlu0 %1890
      %v1892 = vadd.f32 %v1880, %v1882
      %1893 = vadd.xlane.f32.xlu0 %v1892
      %v1894 = vpop.xlane.xlu0 %1893
      %v1895 = vrcp.pop %v1885
      %v1896 = vrcp.pop %v1888
      %v1897 = vrcp.pop %v1891
      %v1898 = vrcp.pop %v1894
      %v1899 = vmul.f32 %v1868, %v1895
      %v1900 = vmul.f32 %v1870, %v1895
      %v1901 = vmul.f32 %v1872, %v1896
      %v1902 = vmul.f32 %v1874, %v1896
      %v1903 = vmul.f32 %v1876, %v1897
      %v1904 = vmul.f32 %v1878, %v1897
      %v1905 = vmul.f32 %v1880, %v1898
      %v1906 = vmul.f32 %v1882, %v1898
      %v1907 = vmul.f32 %v946, 0.00390625
      %v1908 = vmul.f32 %v948, 0.00390625
      %v1909 = vmul.f32 %v950, 0.00390625
      %v1910 = vmul.f32 %v952, 0.00390625
      %v1911 = vmul.f32 %v956, 0.00390625
      %v1912 = vmul.f32 %v958, 0.00390625
      %v1913 = vmul.f32 %v960, 0.00390625
      %v1914 = vmul.f32 %v962, 0.00390625
      %v1915 = vpack.c.bf16 %v1909, %v1907
      %v1916 = vpack.c.bf16 %v1910, %v1908
      %v1917 = vpack.c.bf16 %v1913, %v1911
      %v1918 = vpack.c.bf16 %v1914, %v1912
      %v1919 = vpack.c.bf16 %v1901, %v1899
      %v1920 = vpack.c.bf16 %v1902, %v1900
      %v1921 = vpack.c.bf16 %v1905, %v1903
      %v1922 = vpack.c.bf16 %v1906, %v1904
      %1923 = vmatprep.subr.bf16.mxu0 %v1920
      %1924 = vmatpush1.bf16.xpose.msra.mxu0 %v1919
      %1925 = vmatprep.subr.bf16.mxu0 %v1922
      %1926 = vmatpush1.bf16.xpose.msra.mxu0 %v1921
      %1927 = vmatprep.subr.bf16.mxu0 0
      %1928 = vmatpush1.bf16.xpose.msra.mxu0 0
      %1929 = vmatprep.subr.bf16.mxu0 0
      %1930 = vmatpush1.bf16.xpose.msra.mxu0 0
      %1931 = vmatprep.subr.bf16.mxu0 0
      %1932 = vmatpush1.bf16.xpose.msra.mxu0 0
      %1933 = vmatprep.subr.bf16.mxu0 0
      %1934 = vmatpush1.bf16.xpose.msra.mxu0 0
      %1935 = vmatprep.subr.bf16.mxu0 0
      %1936 = vmatpush1.bf16.xpose.msra.mxu0 0
      %1937 = vmatprep.subr.bf16.mxu0 0
      %1938 = vmatpush1.bf16.xpose.msra.mxu0 0
      %1939 = vmatprep.subr.bf16.mxu0 0
      %1940 = vmatpush1.bf16.xpose.msra.mxu0 0
      %1941 = vmatprep.subr.bf16.mxu0 0
      %1942 = vmatpush1.bf16.xpose.msra.mxu0 0
      %1943 = vmatprep.subr.bf16.mxu0 0
      %1944 = vmatpush1.bf16.xpose.msra.mxu0 0
      %1945 = vmatprep.subr.bf16.mxu0 0
      %1946 = vmatpush1.bf16.xpose.msra.mxu0 0
      %1947 = vmatprep.subr.bf16.mxu0 0
      %1948 = vmatpush1.bf16.xpose.msra.mxu0 0
      %1949 = vmatprep.subr.bf16.mxu0 0
      %1950 = vmatpush1.bf16.xpose.msra.mxu0 0
      %1951 = vmatprep.subr.bf16.mxu0 0
      %1952 = vmatpush1.bf16.xpose.msra.mxu0 0
      %1953 = vmatprep.subr.bf16.mxu0 0
      %1954 = vmatpush1.bf16.xpose.msra.mxu0 0
      %1955 = vmatprep.mubr.bf16.mxu0 %v1916
      %1956 = vmatmul.mubr.bf16.gmra.mrb[0].mxu0 %v1915
      %v1957 = vpop.f32.mrb[0].mxu0
      %v1958 = vadd.f32 0.0, %v1957
      %v1959 = vpop.f32.mrb[0].mxu0
      %v1960 = vpop.f32.mrb[0].mxu0
      %v1961 = vadd.f32 0.0, %v1960
      %v1962 = vpop.f32.mrb[0].mxu0
      %1963 = vmatprep.mubr.bf16.mxu0 %v1918
      %1964 = vmatmul.mubr.bf16.gmra.mrb[0].mxu0 %v1917
      %v1965 = vpop.f32.mrb[0].mxu0
      %v1966 = vadd.f32 0.0, %v1965
      %v1967 = vpop.f32.mrb[0].mxu0
      %v1968 = vpop.f32.mrb[0].mxu0
      %v1969 = vadd.f32 0.0, %v1968
      %v1970 = vpop.f32.mrb[0].mxu0
      %1971 = vdwg.mxu0
      %v1972 = vpack.c.bf16 %v1961, %v1958
      %v1973 = vpack.c.bf16 %v1969, %v1966
      %v1974 = vpack.c.bf16 %v1841, %v1839
      %v1975 = vpack.c.bf16 %v1842, %v1840
      %v1976 = vpack.c.bf16 %v1845, %v1843
      %v1977 = vpack.c.bf16 %v1846, %v1844
      %v1979 = vsel %vm1173, %v1972, 0
      %v1982 = vsel %vm1173, %v1973, 0
      %1984 = vmatprep.subr.bf16.mxu0 %v1975
      %1985 = vmatpush1.bf16.msra.mxu0 %v1974
      %1986 = vmatprep.subr.bf16.mxu0 %v1977
      %1987 = vmatpush1.bf16.msra.mxu0 %v1976
      %1988 = vmatprep.subr.bf16.mxu0 0
      %1989 = vmatpush1.bf16.msra.mxu0 0
      %1990 = vmatprep.subr.bf16.mxu0 0
      %1991 = vmatpush1.bf16.msra.mxu0 0
      %1992 = vmatprep.subr.bf16.mxu0 0
      %1993 = vmatpush1.bf16.msra.mxu0 0
      %1994 = vmatprep.subr.bf16.mxu0 0
      %1995 = vmatpush1.bf16.msra.mxu0 0
      %1996 = vmatprep.subr.bf16.mxu0 0
      %1997 = vmatpush1.bf16.msra.mxu0 0
      %1998 = vmatprep.subr.bf16.mxu0 0
      %1999 = vmatpush1.bf16.msra.mxu0 0
      %2000 = vmatprep.subr.bf16.mxu0 0
      %2001 = vmatpush1.bf16.msra.mxu0 0
      %2002 = vmatprep.subr.bf16.mxu0 0
      %2003 = vmatpush1.bf16.msra.mxu0 0
      %2004 = vmatprep.subr.bf16.mxu0 0
      %2005 = vmatpush1.bf16.msra.mxu0 0
      %2006 = vmatprep.subr.bf16.mxu0 0
      %2007 = vmatpush1.bf16.msra.mxu0 0
      %2008 = vmatprep.subr.bf16.mxu0 0
      %2009 = vmatpush1.bf16.msra.mxu0 0
      %2010 = vmatprep.subr.bf16.mxu0 0
      %2011 = vmatpush1.bf16.msra.mxu0 0
      %2012 = vmatprep.subr.bf16.mxu0 0
      %2013 = vmatpush1.bf16.msra.mxu0 0
      %2014 = vmatprep.subr.bf16.mxu0 0
      %2015 = vmatpush1.bf16.msra.mxu0 0
      %2016 = vmatprep.mubr.bf16.mxu0 0
      %2017 = vmatmul.mubr.bf16.gmra.mrb[0].mxu0 %v1979
      %v2018 = vpop.f32.mrb[0].mxu0
      %v2019 = vadd.f32 0.0, %v2018
      %v2020 = vpop.f32.mrb[0].mxu0
      %v2021 = vadd.f32 0.0, %v2020
      %v2022 = vpop.f32.mrb[0].mxu0
      %v2023 = vadd.f32 0.0, %v2022
      %v2024 = vpop.f32.mrb[0].mxu0
      %v2025 = vadd.f32 0.0, %v2024
      %2026 = vmatprep.mubr.bf16.mxu0 0
      %2027 = vmatmul.mubr.bf16.gmra.mrb[0].mxu0 %v1982
      %v2028 = vpop.f32.mrb[0].mxu0
      %v2029 = vadd.f32 0.0, %v2028
      %v2030 = vpop.f32.mrb[0].mxu0
      %v2031 = vadd.f32 0.0, %v2030
      %v2032 = vpop.f32.mrb[0].mxu0
      %v2033 = vadd.f32 0.0, %v2032
      %v2034 = vpop.f32.mrb[0].mxu0
      %v2035 = vadd.f32 0.0, %v2034
      %2036 = vdwg.mxu0
      %v2037 = vpack.c.bf16 %v1219, %v1215
      %v2038 = vpack.c.bf16 %v1221, %v1217
      %v2039 = vpack.c.bf16 %v1229, %v1225
      %v2040 = vpack.c.bf16 %v1231, %v1227
      %v2041 = vpack.c.bf16 %v1487, %v1483
      %v2042 = vpack.c.bf16 %v1489, %v1485
      %v2043 = vpack.c.bf16 %v1497, %v1493
      %v2044 = vpack.c.bf16 %v1499, %v1495
      %v2045 = vpack.c.bf16 %v1755, %v1751
      %v2046 = vpack.c.bf16 %v1757, %v1753
      %v2047 = vpack.c.bf16 %v1765, %v1761
      %v2048 = vpack.c.bf16 %v1767, %v1763
      %v2049 = vpack.c.bf16 %v2023, %v2019
      %v2050 = vpack.c.bf16 %v2025, %v2021
      %v2051 = vpack.c.bf16 %v2033, %v2029
      %v2052 = vpack.c.bf16 %v2035, %v2031
      %v2053 = vld [vmem:[%s2] sm:$0xf]
      %v2054 = vld [vmem:[%s2 + $0x4] sm:$0xf]
      %v2055 = vld [vmem:[%s2 + $0x8] sm:$0xf]
      %v2056 = vld [vmem:[%s2 + $0xc] sm:$0xf]
      %v2057 = vld [vmem:[%s2 + $0x10] sm:$0xf]
      %v2058 = vld [vmem:[%s2 + $0x14] sm:$0xf]
      %v2059 = vld [vmem:[%s2 + $0x18] sm:$0xf]
      %v2060 = vld [vmem:[%s2 + $0x1c] sm:$0xf]
      %v2061 = vld [vmem:[%s3] sm:$0xff]
      %v2062 = vld [vmem:[%s3 + $0x8] sm:$0xff]
      %v2063 = vld [vmem:[%s3 + $0x10] sm:$0xff]
      %v2064 = vld [vmem:[%s3 + $0x18] sm:$0xff]
      %v2065 = vld [vmem:[%s3 + $0x20] sm:$0xff]
      %v2066 = vld [vmem:[%s3 + $0x28] sm:$0xff]
      %v2067 = vld [vmem:[%s3 + $0x30] sm:$0xff]
      %v2068 = vld [vmem:[%s3 + $0x38] sm:$0xff]
      %2070 = vset.pattern.permute.xlu0 0
      %2071 = vperm.xlu0 %2070, %v2061
      %v2072 = vpop.permute.xlu0 %2071
      %2075 = vset.pattern.permute.xlu0 0
      %2076 = vperm.xlu0 %2075, %v2062
      %v2077 = vpop.permute.xlu0 %2076
      %2080 = vset.pattern.permute.xlu0 0
      %2081 = vperm.xlu0 %2080, %v2063
      %v2082 = vpop.permute.xlu0 %2081
      %2085 = vset.pattern.permute.xlu0 0
      %2086 = vperm.xlu0 %2085, %v2064
      %v2087 = vpop.permute.xlu0 %2086
      %2090 = vset.pattern.permute.xlu0 0
      %2091 = vperm.xlu0 %2090, %v2065
      %v2092 = vpop.permute.xlu0 %2091
      %2095 = vset.pattern.permute.xlu0 0
      %2096 = vperm.xlu0 %2095, %v2066
      %v2097 = vpop.permute.xlu0 %2096
      %2100 = vset.pattern.permute.xlu0 0
      %2101 = vperm.xlu0 %2100, %v2067
      %v2102 = vpop.permute.xlu0 %2101
      %2105 = vset.pattern.permute.xlu0 0
      %2106 = vperm.xlu0 %2105, %v2068
      %v2107 = vpop.permute.xlu0 %2106
      %v2117 = vunpack.c.l.b16 %v2053
      %v2118 = vunpack.c.l.b16 %v2054
      %v2119 = vunpack.c.l.b16 %v2055
      %v2120 = vunpack.c.l.b16 %v2056
      %v2121 = vunpack.c.l.b16 %v2057
      %v2122 = vunpack.c.l.b16 %v2058
      %v2123 = vunpack.c.l.b16 %v2059
      %v2124 = vunpack.c.l.b16 %v2060
      %v2125 = vpack.c.b16 %v2118, %v2117
      %v2126 = vpack.c.b16 %v2120, %v2119
      %v2127 = vpack.c.b16 %v2122, %v2121
      %v2128 = vpack.c.b16 %v2124, %v2123
      %2133 = vmatprep.subr.bf16.mxu0 %v2038
      %2134 = vmatpush1.bf16.msra.mxu0 %v2037
      %2135 = vmatprep.subr.bf16.mxu0 %v2040
      %2136 = vmatpush1.bf16.msra.mxu0 %v2039
      %2137 = vmatprep.subr.bf16.mxu0 %v2042
      %2138 = vmatpush1.bf16.msra.mxu0 %v2041
      %2139 = vmatprep.subr.bf16.mxu0 %v2044
      %2140 = vmatpush1.bf16.msra.mxu0 %v2043
      %2141 = vmatprep.subr.bf16.mxu0 %v2046
      %2142 = vmatpush1.bf16.msra.mxu0 %v2045
      %2143 = vmatprep.subr.bf16.mxu0 %v2048
      %2144 = vmatpush1.bf16.msra.mxu0 %v2047
      %2145 = vmatprep.subr.bf16.mxu0 %v2050
      %2146 = vmatpush1.bf16.msra.mxu0 %v2049
      %2147 = vmatprep.subr.bf16.mxu0 %v2052
      %2148 = vmatpush1.bf16.msra.mxu0 %v2051
      %2149 = vmatprep.subr.bf16.mxu0 0
      %2150 = vmatpush1.bf16.msra.mxu0 0
      %2151 = vmatprep.subr.bf16.mxu0 0
      %2152 = vmatpush1.bf16.msra.mxu0 0
      %2153 = vmatprep.subr.bf16.mxu0 0
      %2154 = vmatpush1.bf16.msra.mxu0 0
      %2155 = vmatprep.subr.bf16.mxu0 0
      %2156 = vmatpush1.bf16.msra.mxu0 0
      %2157 = vmatprep.subr.bf16.mxu0 0
      %2158 = vmatpush1.bf16.msra.mxu0 0
      %2159 = vmatprep.subr.bf16.mxu0 0
      %2160 = vmatpush1.bf16.msra.mxu0 0
      %2161 = vmatprep.subr.bf16.mxu0 0
      %2162 = vmatpush1.bf16.msra.mxu0 0
      %2163 = vmatprep.subr.bf16.mxu0 0
      %2164 = vmatpush1.bf16.msra.mxu0 0
      %2165 = vmatprep.mubr.bf16.mxu0 0
      %2166 = vmatmul.mubr.bf16.gmra.mrb[0].mxu0 %v2125
      %v2167 = vpop.f32.mrb[0].mxu0
      %v2168 = vadd.f32 %v2072, %v2167
      %v2169 = vpop.f32.mrb[0].mxu0
      %v2170 = vadd.f32 %v2072, %v2169
      %v2171 = vpop.f32.mrb[0].mxu0
      %v2172 = vadd.f32 %v2077, %v2171
      %v2173 = vpop.f32.mrb[0].mxu0
      %v2174 = vadd.f32 %v2077, %v2173
      %2175 = vmatprep.mubr.bf16.mxu0 0
      %2176 = vmatmul.mubr.bf16.gmra.mrb[0].mxu0 %v2126
      %v2177 = vpop.f32.mrb[0].mxu0
      %v2178 = vadd.f32 %v2082, %v2177
      %v2179 = vpop.f32.mrb[0].mxu0
      %v2180 = vadd.f32 %v2082, %v2179
      %v2181 = vpop.f32.mrb[0].mxu0
      %v2182 = vadd.f32 %v2087, %v2181
      %v2183 = vpop.f32.mrb[0].mxu0
      %v2184 = vadd.f32 %v2087, %v2183
      %2185 = vmatprep.mubr.bf16.mxu0 0
      %2186 = vmatmul.mubr.bf16.gmra.mrb[0].mxu0 %v2127
      %v2187 = vpop.f32.mrb[0].mxu0
      %v2188 = vadd.f32 %v2092, %v2187
      %v2189 = vpop.f32.mrb[0].mxu0
      %v2190 = vadd.f32 %v2092, %v2189
      %v2191 = vpop.f32.mrb[0].mxu0
      %v2192 = vadd.f32 %v2097, %v2191
      %v2193 = vpop.f32.mrb[0].mxu0
      %v2194 = vadd.f32 %v2097, %v2193
      %2195 = vmatprep.mubr.bf16.mxu0 0
      %2196 = vmatmul.mubr.bf16.gmra.mrb[0].mxu0 %v2128
      %v2197 = vpop.f32.mrb[0].mxu0
      %v2198 = vadd.f32 %v2102, %v2197
      %v2199 = vpop.f32.mrb[0].mxu0
      %v2200 = vadd.f32 %v2102, %v2199
      %v2201 = vpop.f32.mrb[0].mxu0
      %v2202 = vadd.f32 %v2107, %v2201
      %v2203 = vpop.f32.mrb[0].mxu0
      %v2204 = vadd.f32 %v2107, %v2203
      %2205 = vdwg.mxu0
      %v2206 = vld [vmem:[%s5] sm:$0xff]
      %v2207 = vld [vmem:[%s5 + $0x8] sm:$0xff]
      %v2208 = vld [vmem:[%s5 + $0x10] sm:$0xff]
      %v2209 = vld [vmem:[%s5 + $0x18] sm:$0xff]
      %v2210 = vld [vmem:[%s5 + $0x20] sm:$0xff]
      %v2211 = vld [vmem:[%s5 + $0x28] sm:$0xff]
      %v2212 = vld [vmem:[%s5 + $0x30] sm:$0xff]
      %v2213 = vld [vmem:[%s5 + $0x38] sm:$0xff]
      %v2214 = vadd.f32 %v2168, %v2172
      %v2215 = vadd.f32 %v2214, %v2178
      %v2216 = vadd.f32 %v2215, %v2182
      %v2217 = vadd.f32 %v2216, %v2188
      %v2218 = vadd.f32 %v2217, %v2192
      %v2219 = vadd.f32 %v2218, %v2198
      %v2220 = vadd.f32 %v2219, %v2202
      %v2221 = vrot.slane %v2220, 4
      %v2222 = vadd.f32 %v2220, %v2221
      %v2223 = vrot.slane %v2222, 2
      %v2224 = vadd.f32 %v2222, %v2223
      %v2225 = vrot.slane %v2224, 1
      %v2226 = vadd.f32 %v2224, %v2225
      %v2227 = vadd.f32 %v2170, %v2174
      %v2228 = vadd.f32 %v2227, %v2180
      %v2229 = vadd.f32 %v2228, %v2184
      %v2230 = vadd.f32 %v2229, %v2190
      %v2231 = vadd.f32 %v2230, %v2194
      %v2232 = vadd.f32 %v2231, %v2200
      %v2233 = vadd.f32 %v2232, %v2204
      %v2234 = vrot.slane %v2233, 4
      %v2235 = vadd.f32 %v2233, %v2234
      %v2236 = vrot.slane %v2235, 2
      %v2237 = vadd.f32 %v2235, %v2236
      %v2238 = vrot.slane %v2237, 1
      %v2239 = vadd.f32 %v2237, %v2238
      %v2240 = vmul.f32 %v2226, %v303
      %v2241 = vmul.f32 %v2239, %v303
      %v2242 = vsub.f32 %v2168, %v2240
      %v2243 = vsub.f32 %v2170, %v2241
      %v2244 = vsub.f32 %v2172, %v2240
      %v2245 = vsub.f32 %v2174, %v2241
      %v2246 = vsub.f32 %v2178, %v2240
      %v2247 = vsub.f32 %v2180, %v2241
      %v2248 = vsub.f32 %v2182, %v2240
      %v2249 = vsub.f32 %v2184, %v2241
      %v2250 = vsub.f32 %v2188, %v2240
      %v2251 = vsub.f32 %v2190, %v2241
      %v2252 = vsub.f32 %v2192, %v2240
      %v2253 = vsub.f32 %v2194, %v2241
      %v2254 = vsub.f32 %v2198, %v2240
      %v2255 = vsub.f32 %v2200, %v2241
      %v2256 = vsub.f32 %v2202, %v2240
      %v2257 = vsub.f32 %v2204, %v2241
      %v2258 = vmul.f32 %v2242, %v2242
      %v2259 = vmul.f32 %v2243, %v2243
      %v2260 = vmul.f32 %v2244, %v2244
      %v2261 = vmul.f32 %v2245, %v2245
      %v2262 = vmul.f32 %v2246, %v2246
      %v2263 = vmul.f32 %v2247, %v2247
      %v2264 = vmul.f32 %v2248, %v2248
      %v2265 = vmul.f32 %v2249, %v2249
      %v2266 = vmul.f32 %v2250, %v2250
      %v2267 = vmul.f32 %v2251, %v2251
      %v2268 = vmul.f32 %v2252, %v2252
      %v2269 = vmul.f32 %v2253, %v2253
      %v2270 = vmul.f32 %v2254, %v2254
      %v2271 = vmul.f32 %v2255, %v2255
      %v2272 = vmul.f32 %v2256, %v2256
      %v2273 = vmul.f32 %v2257, %v2257
      %v2274 = vadd.f32 %v2258, %v2260
      %v2275 = vadd.f32 %v2274, %v2262
      %v2276 = vadd.f32 %v2275, %v2264
      %v2277 = vadd.f32 %v2276, %v2266
      %v2278 = vadd.f32 %v2277, %v2268
      %v2279 = vadd.f32 %v2278, %v2270
      %v2280 = vadd.f32 %v2279, %v2272
      %v2281 = vrot.slane %v2280, 4
      %v2282 = vadd.f32 %v2280, %v2281
      %v2283 = vrot.slane %v2282, 2
      %v2284 = vadd.f32 %v2282, %v2283
      %v2285 = vrot.slane %v2284, 1
      %v2286 = vadd.f32 %v2284, %v2285
      %v2287 = vadd.f32 %v2259, %v2261
      %v2288 = vadd.f32 %v2287, %v2263
      %v2289 = vadd.f32 %v2288, %v2265
      %v2290 = vadd.f32 %v2289, %v2267
      %v2291 = vadd.f32 %v2290, %v2269
      %v2292 = vadd.f32 %v2291, %v2271
      %v2293 = vadd.f32 %v2292, %v2273
      %v2294 = vrot.slane %v2293, 4
      %v2295 = vadd.f32 %v2293, %v2294
      %v2296 = vrot.slane %v2295, 2
      %v2297 = vadd.f32 %v2295, %v2296
      %v2298 = vrot.slane %v2297, 1
      %v2299 = vadd.f32 %v2297, %v2298
      %v2300 = vmul.f32 %v2286, %v303
      %v2301 = vmul.f32 %v2299, %v303
      %v2302 = vadd.f32 %v2300, 1e-05
      %v2303 = vadd.f32 %v2301, 1e-05
      %v2304 = vrsqrt.pop %v2302
      %v2305 = vrsqrt.pop %v2303
      %v2306 = vmul.f32 %v2242, %v2304
      %v2307 = vmul.f32 %v2243, %v2305
      %v2308 = vmul.f32 %v2244, %v2304
      %v2309 = vmul.f32 %v2245, %v2305
      %v2310 = vmul.f32 %v2246, %v2304
      %v2311 = vmul.f32 %v2247, %v2305
      %v2312 = vmul.f32 %v2248, %v2304
      %v2313 = vmul.f32 %v2249, %v2305
      %v2314 = vmul.f32 %v2250, %v2304
      %v2315 = vmul.f32 %v2251, %v2305
      %v2316 = vmul.f32 %v2252, %v2304
      %v2317 = vmul.f32 %v2253, %v2305
      %v2318 = vmul.f32 %v2254, %v2304
      %v2319 = vmul.f32 %v2255, %v2305
      %v2320 = vmul.f32 %v2256, %v2304
      %v2321 = vmul.f32 %v2257, %v2305
      %2323 = vset.pattern.permute.xlu0 0
      %2324 = vperm.xlu0 %2323, %v2206
      %v2325 = vpop.permute.xlu0 %2324
      %2328 = vset.pattern.permute.xlu0 0
      %2329 = vperm.xlu0 %2328, %v2207
      %v2330 = vpop.permute.xlu0 %2329
      %2333 = vset.pattern.permute.xlu0 0
      %2334 = vperm.xlu0 %2333, %v2208
      %v2335 = vpop.permute.xlu0 %2334
      %2338 = vset.pattern.permute.xlu0 0
      %2339 = vperm.xlu0 %2338, %v2209
      %v2340 = vpop.permute.xlu0 %2339
      %2343 = vset.pattern.permute.xlu0 0
      %2344 = vperm.xlu0 %2343, %v2210
      %v2345 = vpop.permute.xlu0 %2344
      %2348 = vset.pattern.permute.xlu0 0
      %2349 = vperm.xlu0 %2348, %v2211
      %v2350 = vpop.permute.xlu0 %2349
      %2353 = vset.pattern.permute.xlu0 0
      %2354 = vperm.xlu0 %2353, %v2212
      %v2355 = vpop.permute.xlu0 %2354
      %2358 = vset.pattern.permute.xlu0 0
      %2359 = vperm.xlu0 %2358, %v2213
      %v2360 = vpop.permute.xlu0 %2359
      %v2362 = vmul.f32 %v2306, %v2325
      %v2363 = vmul.f32 %v2307, %v2325
      %v2364 = vmul.f32 %v2308, %v2330
      %v2365 = vmul.f32 %v2309, %v2330
      %v2366 = vmul.f32 %v2310, %v2335
      %v2367 = vmul.f32 %v2311, %v2335
      %v2368 = vmul.f32 %v2312, %v2340
      %v2369 = vmul.f32 %v2313, %v2340
      %v2370 = vmul.f32 %v2314, %v2345
      %v2371 = vmul.f32 %v2315, %v2345
      %v2372 = vmul.f32 %v2316, %v2350
      %v2373 = vmul.f32 %v2317, %v2350
      %v2374 = vmul.f32 %v2318, %v2355
      %v2375 = vmul.f32 %v2319, %v2355
      %v2376 = vmul.f32 %v2320, %v2360
      %v2377 = vmul.f32 %v2321, %v2360
      %v2378 = vadd.f32 %v2362, %v253
      %v2379 = vadd.f32 %v2363, %v254
      %v2380 = vadd.f32 %v2364, %v255
      %v2381 = vadd.f32 %v2365, %v256
      %v2382 = vadd.f32 %v2366, %v257
      %v2383 = vadd.f32 %v2367, %v258
      %v2384 = vadd.f32 %v2368, %v259
      %v2385 = vadd.f32 %v2369, %v260
      %v2386 = vadd.f32 %v2370, %v261
      %v2387 = vadd.f32 %v2371, %v262
      %v2388 = vadd.f32 %v2372, %v263
      %v2389 = vadd.f32 %v2373, %v264
      %v2390 = vadd.f32 %v2374, %v265
      %v2391 = vadd.f32 %v2375, %v266
      %v2392 = vadd.f32 %v2376, %v267
      %v2393 = vadd.f32 %v2377, %v268
      %2394 = vst [vmem:[%s251] sm:$0xff] %v2378
      %2395 = vst [vmem:[%s251 + $0x8] sm:$0xff] %v2379
      %2396 = vst [vmem:[%s251 + $0x10] sm:$0xff] %v2380
      %2397 = vst [vmem:[%s251 + $0x18] sm:$0xff] %v2381
      %2398 = vst [vmem:[%s251 + $0x20] sm:$0xff] %v2382
      %2399 = vst [vmem:[%s251 + $0x28] sm:$0xff] %v2383
      %2400 = vst [vmem:[%s251 + $0x30] sm:$0xff] %v2384
      %2401 = vst [vmem:[%s251 + $0x38] sm:$0xff] %v2385
      %2402 = vst [vmem:[%s251 + $0x40] sm:$0xff] %v2386
      %2403 = vst [vmem:[%s251 + $0x48] sm:$0xff] %v2387
      %2404 = vst [vmem:[%s251 + $0x50] sm:$0xff] %v2388
      %2405 = vst [vmem:[%s251 + $0x58] sm:$0xff] %v2389
      %2406 = vst [vmem:[%s251 + $0x60] sm:$0xff] %v2390
      %2407 = vst [vmem:[%s251 + $0x68] sm:$0xff] %v2391
      %2408 = vst [vmem:[%s251 + $0x70] sm:$0xff] %v2392
      %2409 = vst [vmem:[%s251 + $0x78] sm:$0xff] %v2393
      %p2410 = scmp.lt.s32.totalorder %s17, 1
      %s2411 = scalar_select %p2410, %s17, 1
      %s2412 = smul.addr %s2411, 16
      %s2413 = smul.addr %s2412, 8
      %s2414 = scalar_lea.vmem %s6, %s2413
      // Predicated region
      $region45: #{forward.2} parent=43 // pred_check
        %p2415 = pneg %p166
      $region46: #{forward.2} parent=43 // pred_check_branch
        %2417 = sbr.rel (%p2415) target = $region48
      $region47: #{forward.2} parent=43 // pred_region
        _
      $region48: #{forward.2} parent=43 // pred_fallthru
        _
    $region44: #{forward.2} parent=5 // pred_fallthru
      _
    %p2418 = scmp.le.s32.totalorder 2, %s12
    // Predicated region
    $region49: #{forward.2} parent=5 // pred_check
      %p2419 = pneg %p2418
    $region50: #{forward.2} parent=5 // pred_check_branch
      %2421 = sbr.rel (%p2419) target = $region52
    $region51: #{forward.2} parent=5 // pred_region
      %s2422 = ssub.s32 %s12, 2
      // Predicated region
      $region53: #{forward.2} parent=51 // pred_check
        %p2423 = pneg %p172
      $region54: #{forward.2} parent=51 // pred_check_branch
        %2425 = sbr.rel (%p2423) target = $region56
      $region55: #{forward.2} parent=51 // pred_region
        %p2426 = scmp.lt.s32.totalorder %s18, 1
        %s2427 = scalar_select %p2426, %s18, 1
        %s2428 = smul.addr %s2427, 16
        %s2429 = smul.addr %s2428, 8
        %s2430 = scalar_lea.vmem %s6, %s2429
      $region56: #{forward.2} parent=51 // pred_fallthru
        _
    $region52: #{forward.2} parent=5 // pred_fallthru
      _
  $region6: #{forward.2} parent=0 // loop_footer
    %s16 = sadd.s32 1, %s12
  $region7: #{forward.2} parent=0 // loop_footer_branch
    %11 = sbr.rel target = $region3
  $region8: #{forward.2} parent=0 // loop_exit
    _

// kernel: forward.3
$region0: #{forward.3}
  #allocation0 [shape = 'u32[]', space=smem, size = 0x4, offset = 0x4, fixed_abs, tag = 'smem constant byte address 0x4 - core index']
  #allocation1 [shape = 'u32[144,128]{1,0:T(1,128)}', space=vmem, size = 0x12000, scoped, tag = 'internal scratch']
  %s0 = inlined_call_operand.vmem [shape: f32[2,64,256], index: 0, kind: input, shape index: {}]
  %s1 = inlined_call_operand.vmem [shape: bf16[384,64], index: 1, kind: input, shape index: {}]
  %s2 = inlined_call_operand.vmem [shape: bf16[64,128], index: 2, kind: input, shape index: {}]
  %s3 = inlined_call_operand.vmem [shape: f32[64,1], index: 3, kind: input, shape index: {}]
  %s4 = inlined_call_operand.vmem [shape: f32[64,1], index: 4, kind: input, shape index: {}]
  %s5 = inlined_call_operand.vmem [shape: f32[2,64,256], index: 5, kind: output, shape index: {}]
  %s6 = sld [smem:[#allocation0]]
  $region53: #{forward.3} parent=0
    _
  %s8 = ssub.s32 1, %s6
  %s9 = scalar_select 0, %s8, %s6
  loop: start=0, step=1, limit=4
  $region2: #{forward.3} parent=0 // loop_pre_header
    _
  $region3: #{forward.3} parent=0 // loop_header
    %s11 = sphi 0, %s15
    %p12 = scmp.ge.s32.totalorder %s11, 4
    %s21 = sphi 0, %s23
    %s24 = sphi 0, %s21
    %s25 = sphi 0, %s24
    %s41 = sphi 0, %s25
    %s45 = sphi 0, %s45
    %s47 = sphi 0, %s45
    %s48 = sphi 0, %s47
    %s62 = sphi 0, %s48
    %s66 = sphi 0, %s66
    %s68 = sphi 0, %s66
    %s69 = sphi 0, %s68
    %s83 = sphi 0, %s69
    %s87 = sphi 0, %s87
    %s89 = sphi 0, %s87
    %s90 = sphi 0, %s89
    %s104 = sphi 0, %s90
    %s108 = sphi 0, %s108
    %s110 = sphi 0, %s108
    %s111 = sphi 0, %s110
    %s125 = sphi 0, %s111
    %s131 = sphi 0, %s133
    %s134 = sphi 0, %s131
    %s135 = sphi 0, %s134
    %s151 = sphi 0, %s135
  $region4: #{forward.3} parent=0 // loop_header_branch
    %14 = sbr.rel (%p12) target = $region8
  $region5: #{forward.3} parent=0 // loop_body
    %s16 = ssub.s32 %s11, 1
    %s17 = ssub.s32 %s11, 2
    %s18 = sadd.s32 %s11, 1
    %s19 = ssub.s32 %s11, %s18
    %p20 = scmp.eq.s32.totalorder %s19, 0
    %s22 = sadd.s32 %s21, 1
    %s23 = scalar_select %p20, %s21, %s22
    %p26 = pneg %p20
    %p27 = scmp.eq.s32.totalorder %s11, 1
    %p28 = por %p26, %p27
    %p29 = scmp.ne.s32.totalorder %s21, %s24
    %p30 = scmp.eq.s32.totalorder %s11, 0
    %p31 = por %p29, %p30
    %p32 = scmp.ne.s32.totalorder %s21, %s24
    %p33 = scmp.eq.s32.totalorder %s16, 1
    %p34 = por %p32, %p33
    %p35 = scmp.ne.s32.totalorder %s24, %s25
    %p36 = scmp.eq.s32.totalorder %s16, 0
    %p37 = por %p35, %p36
    %p38 = scmp.ne.s32.totalorder %s24, %s25
    %p39 = scmp.eq.s32.totalorder %s17, 1
    %p40 = por %p38, %p39
    %p42 = scmp.ne.s32.totalorder %s25, %s41
    %p43 = scmp.eq.s32.totalorder %s17, 0
    %p44 = por %p42, %p43
    %s46 = sadd.s32 %s45, 1
    %p49 = scmp.eq.s32.totalorder %s11, 1
    %p50 = scmp.ne.s32.totalorder %s45, %s47
    %p51 = scmp.eq.s32.totalorder %s11, 0
    %p52 = por %p50, %p51
    %p53 = scmp.ne.s32.totalorder %s45, %s47
    %p54 = scmp.eq.s32.totalorder %s16, 1
    %p55 = por %p53, %p54
    %p56 = scmp.ne.s32.totalorder %s47, %s48
    %p57 = scmp.eq.s32.totalorder %s16, 0
    %p58 = por %p56, %p57
    %p59 = scmp.ne.s32.totalorder %s47, %s48
    %p60 = scmp.eq.s32.totalorder %s17, 1
    %p61 = por %p59, %p60
    %p63 = scmp.ne.s32.totalorder %s48, %s62
    %p64 = scmp.eq.s32.totalorder %s17, 0
    %p65 = por %p63, %p64
    %s67 = sadd.s32 %s66, 1
    %p70 = scmp.eq.s32.totalorder %s11, 1
    %p71 = scmp.ne.s32.totalorder %s66, %s68
    %p72 = scmp.eq.s32.totalorder %s11, 0
    %p73 = por %p71, %p72
    %p74 = scmp.ne.s32.totalorder %s66, %s68
    %p75 = scmp.eq.s32.totalorder %s16, 1
    %p76 = por %p74, %p75
    %p77 = scmp.ne.s32.totalorder %s68, %s69
    %p78 = scmp.eq.s32.totalorder %s16, 0
    %p79 = por %p77, %p78
    %p80 = scmp.ne.s32.totalorder %s68, %s69
    %p81 = scmp.eq.s32.totalorder %s17, 1
    %p82 = por %p80, %p81
    %p84 = scmp.ne.s32.totalorder %s69, %s83
    %p85 = scmp.eq.s32.totalorder %s17, 0
    %p86 = por %p84, %p85
    %s88 = sadd.s32 %s87, 1
    %p91 = scmp.eq.s32.totalorder %s11, 1
    %p92 = scmp.ne.s32.totalorder %s87, %s89
    %p93 = scmp.eq.s32.totalorder %s11, 0
    %p94 = por %p92, %p93
    %p95 = scmp.ne.s32.totalorder %s87, %s89
    %p96 = scmp.eq.s32.totalorder %s16, 1
    %p97 = por %p95, %p96
    %p98 = scmp.ne.s32.totalorder %s89, %s90
    %p99 = scmp.eq.s32.totalorder %s16, 0
    %p100 = por %p98, %p99
    %p101 = scmp.ne.s32.totalorder %s89, %s90
    %p102 = scmp.eq.s32.totalorder %s17, 1
    %p103 = por %p101, %p102
    %p105 = scmp.ne.s32.totalorder %s90, %s104
    %p106 = scmp.eq.s32.totalorder %s17, 0
    %p107 = por %p105, %p106
    %s109 = sadd.s32 %s108, 1
    %p112 = scmp.eq.s32.totalorder %s11, 1
    %p113 = scmp.ne.s32.totalorder %s108, %s110
    %p114 = scmp.eq.s32.totalorder %s11, 0
    %p115 = por %p113, %p114
    %p116 = scmp.ne.s32.totalorder %s108, %s110
    %p117 = scmp.eq.s32.totalorder %s16, 1
    %p118 = por %p116, %p117
    %p119 = scmp.ne.s32.totalorder %s110, %s111
    %p120 = scmp.eq.s32.totalorder %s16, 0
    %p121 = por %p119, %p120
    %p122 = scmp.ne.s32.totalorder %s110, %s111
    %p123 = scmp.eq.s32.totalorder %s17, 1
    %p124 = por %p122, %p123
    %p126 = scmp.ne.s32.totalorder %s111, %s125
    %p127 = scmp.eq.s32.totalorder %s17, 0
    %p128 = por %p126, %p127
    %s129 = ssub.s32 %s11, %s18
    %p130 = scmp.eq.s32.totalorder %s129, 0
    %s132 = sadd.s32 %s131, 1
    %s133 = scalar_select %p130, %s131, %s132
    %p136 = pneg %p130
    %p137 = scmp.eq.s32.totalorder %s11, 1
    %p138 = por %p136, %p137
    %p139 = scmp.ne.s32.totalorder %s131, %s134
    %p140 = scmp.eq.s32.totalorder %s11, 0
    %p141 = por %p139, %p140
    %p142 = scmp.ne.s32.totalorder %s131, %s134
    %p143 = scmp.eq.s32.totalorder %s16, 1
    %p144 = por %p142, %p143
    %p145 = scmp.ne.s32.totalorder %s134, %s135
    %p146 = scmp.eq.s32.totalorder %s16, 0
    %p147 = por %p145, %p146
    %p148 = scmp.ne.s32.totalorder %s134, %s135
    %p149 = scmp.eq.s32.totalorder %s17, 1
    %p150 = por %p148, %p149
    %p152 = scmp.ne.s32.totalorder %s135, %s151
    %p153 = scmp.eq.s32.totalorder %s17, 0
    %p154 = por %p152, %p153
    %p155 = scmp.le.s32.totalorder 1, %s11
    %p156 = scmp.lt.s32.totalorder %s11, 3
    %p157 = pnand %p155, %p156
    %p158 = pneg %p157
    // Predicated region
    $region9: #{forward.3} parent=5 // pred_check
      _
    $region10: #{forward.3} parent=5 // pred_check_branch
      %160 = sbr.rel (%p157) target = $region12
    $region11: #{forward.3} parent=5 // pred_region
      %s161 = ssub.s32 %s11, 1
      // Predicated region
      $region13: #{forward.3} parent=11 // pred_check
        %p162 = pneg %p58
      $region14: #{forward.3} parent=11 // pred_check_branch
        %164 = sbr.rel (%p162) target = $region16
      $region15: #{forward.3} parent=11 // pred_region
        _
      $region16: #{forward.3} parent=11 // pred_fallthru
        _
      // Predicated region
      $region17: #{forward.3} parent=11 // pred_check
        %p165 = pneg %p79
      $region18: #{forward.3} parent=11 // pred_check_branch
        %167 = sbr.rel (%p165) target = $region20
      $region19: #{forward.3} parent=11 // pred_region
        _
      $region20: #{forward.3} parent=11 // pred_fallthru
        _
      // Predicated region
      $region21: #{forward.3} parent=11 // pred_check
        %p168 = pneg %p100
      $region22: #{forward.3} parent=11 // pred_check_branch
        %170 = sbr.rel (%p168) target = $region24
      $region23: #{forward.3} parent=11 // pred_region
        _
      $region24: #{forward.3} parent=11 // pred_fallthru
        _
      // Predicated region
      $region25: #{forward.3} parent=11 // pred_check
        %p171 = pneg %p121
      $region26: #{forward.3} parent=11 // pred_check_branch
        %173 = sbr.rel (%p171) target = $region28
      $region27: #{forward.3} parent=11 // pred_region
        _
      $region28: #{forward.3} parent=11 // pred_fallthru
        _
    $region12: #{forward.3} parent=5 // pred_fallthru
      _
    %p174 = scmp.lt.s32.totalorder %s11, 2
    // Predicated region
    $region29: #{forward.3} parent=5 // pred_check
      %p175 = pneg %p174
    $region30: #{forward.3} parent=5 // pred_check_branch
      %177 = sbr.rel (%p175) target = $region32
    $region31: #{forward.3} parent=5 // pred_region
      // Predicated region
      $region33: #{forward.3} parent=31 // pred_check
        %p178 = pneg %p31
      $region34: #{forward.3} parent=31 // pred_check_branch
        %180 = sbr.rel (%p178) target = $region36
      $region35: #{forward.3} parent=31 // pred_region
        %p181 = scmp.lt.s32.totalorder %s11, 1
        %s182 = scalar_select %p181, %s11, 1
        %s183 = smul.addr %s182, 16
        %s184 = smul.addr %s183, 8
        %s185 = scalar_lea.vmem %s0, %s184
      $region36: #{forward.3} parent=31 // pred_fallthru
        _
    $region32: #{forward.3} parent=5 // pred_fallthru
      _
    %p186 = scmp.le.s32.totalorder 1, %s11
    %p187 = scmp.lt.s32.totalorder %s11, 3
    %p188 = pnand %p186, %p187
    %p189 = pneg %p188
    // Predicated region
    $region37: #{forward.3} parent=5 // pred_check
      _
    $region38: #{forward.3} parent=5 // pred_check_branch
      %191 = sbr.rel (%p188) target = $region40
    $region39: #{forward.3} parent=5 // pred_region
      %s192 = ssub.s32 %s11, 1
      %p193 = scmp.lt.s32.totalorder %s16, 1
      %s194 = scalar_select %p193, %s16, 1
      %s195 = smul.addr %s194, 16
      %s196 = smul.addr %s195, 8
      %s197 = scalar_lea.vmem %s0, %s196
      %p198 = pneg %p37
      %p199 = pneg %p34
      %p200 = pneg %p58
      %p201 = pneg %p55
      %p202 = pneg %p79
      %p203 = pneg %p76
      %p204 = pneg %p100
      %p205 = pneg %p97
      %p206 = pneg %p121
      %p207 = pneg %p118
      %p208 = pneg %p147
      %p209 = pneg %p144
      %p210 = scmp.lt.s32.totalorder %s16, 1
      %s211 = scalar_select %p210, %s16, 1
      %s212 = smul.addr %s211, 16
      %s213 = smul.addr %s212, 8
      %s214 = scalar_lea.vmem %s5, %s213
      %p215 = scmp.lt.s32.totalorder %s16, 1
      %s216 = scalar_select %p215, %s16, 1
      %s217 = smul.addr %s216, 16
      %s218 = smul.addr %s217, 8
      %s219 = scalar_lea.vmem %s0, %s218
      %p220 = scmp.lt.s32.totalorder %s16, 1
      %s221 = scalar_select %p220, %s16, 1
      %s222 = smul.addr %s221, 16
      %s223 = smul.addr %s222, 8
      %s224 = scalar_lea.vmem %s5, %s223
      %v226 = vld [vmem:[%s219] sm:$0xff]
      %v227 = vld [vmem:[%s219 + $0x8] sm:$0xff]
      %v228 = vld [vmem:[%s219 + $0x10] sm:$0xff]
      %v229 = vld [vmem:[%s219 + $0x18] sm:$0xff]
      %v230 = vld [vmem:[%s219 + $0x20] sm:$0xff]
      %v231 = vld [vmem:[%s219 + $0x28] sm:$0xff]
      %v232 = vld [vmem:[%s219 + $0x30] sm:$0xff]
      %v233 = vld [vmem:[%s219 + $0x38] sm:$0xff]
      %v234 = vld [vmem:[%s219 + $0x40] sm:$0xff]
      %v235 = vld [vmem:[%s219 + $0x48] sm:$0xff]
      %v236 = vld [vmem:[%s219 + $0x50] sm:$0xff]
      %v237 = vld [vmem:[%s219 + $0x58] sm:$0xff]
      %v238 = vld [vmem:[%s219 + $0x60] sm:$0xff]
      %v239 = vld [vmem:[%s219 + $0x68] sm:$0xff]
      %v240 = vld [vmem:[%s219 + $0x70] sm:$0xff]
      %v241 = vld [vmem:[%s219 + $0x78] sm:$0xff]
      %v242 = vld [vmem:[%s4] sm:$0xff]
      %v243 = vld [vmem:[%s4 + $0x8] sm:$0xff]
      %v244 = vld [vmem:[%s4 + $0x10] sm:$0xff]
      %v245 = vld [vmem:[%s4 + $0x18] sm:$0xff]
      %v246 = vld [vmem:[%s4 + $0x20] sm:$0xff]
      %v247 = vld [vmem:[%s4 + $0x28] sm:$0xff]
      %v248 = vld [vmem:[%s4 + $0x30] sm:$0xff]
      %v249 = vld [vmem:[%s4 + $0x38] sm:$0xff]
      %v250 = vadd.f32 %v226, %v228
      %v251 = vadd.f32 %v250, %v230
      %v252 = vadd.f32 %v251, %v232
      %v253 = vadd.f32 %v252, %v234
      %v254 = vadd.f32 %v253, %v236
      %v255 = vadd.f32 %v254, %v238
      %v256 = vadd.f32 %v255, %v240
      %v257 = vrot.slane %v256, 4
      %v258 = vadd.f32 %v256, %v257
      %v259 = vrot.slane %v258, 2
      %v260 = vadd.f32 %v258, %v259
      %v261 = vrot.slane %v260, 1
      %v262 = vadd.f32 %v260, %v261
      %v263 = vadd.f32 %v227, %v229
      %v264 = vadd.f32 %v263, %v231
      %v265 = vadd.f32 %v264, %v233
      %v266 = vadd.f32 %v265, %v235
      %v267 = vadd.f32 %v266, %v237
      %v268 = vadd.f32 %v267, %v239
      %v269 = vadd.f32 %v268, %v241
      %v270 = vrot.slane %v269, 4
      %v271 = vadd.f32 %v269, %v270
      %v272 = vrot.slane %v271, 2
      %v273 = vadd.f32 %v271, %v272
      %v274 = vrot.slane %v273, 1
      %v275 = vadd.f32 %v273, %v274
      %v276 = vrcp.pop 64.0
      %v277 = vmul.f32 %v262, %v276
      %v278 = vmul.f32 %v275, %v276
      %v279 = vsub.f32 %v226, %v277
      %v280 = vsub.f32 %v227, %v278
      %v281 = vsub.f32 %v228, %v277
      %v282 = vsub.f32 %v229, %v278
      %v283 = vsub.f32 %v230, %v277
      %v284 = vsub.f32 %v231, %v278
      %v285 = vsub.f32 %v232, %v277
      %v286 = vsub.f32 %v233, %v278
      %v287 = vsub.f32 %v234, %v277
      %v288 = vsub.f32 %v235, %v278
      %v289 = vsub.f32 %v236, %v277
      %v290 = vsub.f32 %v237, %v278
      %v291 = vsub.f32 %v238, %v277
      %v292 = vsub.f32 %v239, %v278
      %v293 = vsub.f32 %v240, %v277
      %v294 = vsub.f32 %v241, %v278
      %v295 = vmul.f32 %v279, %v279
      %v296 = vmul.f32 %v280, %v280
      %v297 = vmul.f32 %v281, %v281
      %v298 = vmul.f32 %v282, %v282
      %v299 = vmul.f32 %v283, %v283
      %v300 = vmul.f32 %v284, %v284
      %v301 = vmul.f32 %v285, %v285
      %v302 = vmul.f32 %v286, %v286
      %v303 = vmul.f32 %v287, %v287
      %v304 = vmul.f32 %v288, %v288
      %v305 = vmul.f32 %v289, %v289
      %v306 = vmul.f32 %v290, %v290
      %v307 = vmul.f32 %v291, %v291
      %v308 = vmul.f32 %v292, %v292
      %v309 = vmul.f32 %v293, %v293
      %v310 = vmul.f32 %v294, %v294
      %v311 = vadd.f32 %v295, %v297
      %v312 = vadd.f32 %v311, %v299
      %v313 = vadd.f32 %v312, %v301
      %v314 = vadd.f32 %v313, %v303
      %v315 = vadd.f32 %v314, %v305
      %v316 = vadd.f32 %v315, %v307
      %v317 = vadd.f32 %v316, %v309
      %v318 = vrot.slane %v317, 4
      %v319 = vadd.f32 %v317, %v318
      %v320 = vrot.slane %v319, 2
      %v321 = vadd.f32 %v319, %v320
      %v322 = vrot.slane %v321, 1
      %v323 = vadd.f32 %v321, %v322
      %v324 = vadd.f32 %v296, %v298
      %v325 = vadd.f32 %v324, %v300
      %v326 = vadd.f32 %v325, %v302
      %v327 = vadd.f32 %v326, %v304
      %v328 = vadd.f32 %v327, %v306
      %v329 = vadd.f32 %v328, %v308
      %v330 = vadd.f32 %v329, %v310
      %v331 = vrot.slane %v330, 4
      %v332 = vadd.f32 %v330, %v331
      %v333 = vrot.slane %v332, 2
      %v334 = vadd.f32 %v332, %v333
      %v335 = vrot.slane %v334, 1
      %v336 = vadd.f32 %v334, %v335
      %v337 = vmul.f32 %v323, %v276
      %v338 = vmul.f32 %v336, %v276
      %v339 = vadd.f32 %v337, 1e-05
      %v340 = vadd.f32 %v338, 1e-05
      %v341 = vrsqrt.pop %v339
      %v342 = vrsqrt.pop %v340
      %v343 = vmul.f32 %v279, %v341
      %v344 = vmul.f32 %v280, %v342
      %v345 = vmul.f32 %v281, %v341
      %v346 = vmul.f32 %v282, %v342
      %v347 = vmul.f32 %v283, %v341
      %v348 = vmul.f32 %v284, %v342
      %v349 = vmul.f32 %v285, %v341
      %v350 = vmul.f32 %v286, %v342
      %v351 = vmul.f32 %v287, %v341
      %v352 = vmul.f32 %v288, %v342
      %v353 = vmul.f32 %v289, %v341
      %v354 = vmul.f32 %v290, %v342
      %v355 = vmul.f32 %v291, %v341
      %v356 = vmul.f32 %v292, %v342
      %v357 = vmul.f32 %v293, %v341
      %v358 = vmul.f32 %v294, %v342
      %360 = vset.pattern.permute.xlu0 0
      %361 = vperm.xlu0 %360, %v242
      %v362 = vpop.permute.xlu0 %361
      %365 = vset.pattern.permute.xlu0 0
      %366 = vperm.xlu0 %365, %v243
      %v367 = vpop.permute.xlu0 %366
      %370 = vset.pattern.permute.xlu0 0
      %371 = vperm.xlu0 %370, %v244
      %v372 = vpop.permute.xlu0 %371
      %375 = vset.pattern.permute.xlu0 0
      %376 = vperm.xlu0 %375, %v245
      %v377 = vpop.permute.xlu0 %376
      %380 = vset.pattern.permute.xlu0 0
      %381 = vperm.xlu0 %380, %v246
      %v382 = vpop.permute.xlu0 %381
      %385 = vset.pattern.permute.xlu0 0
      %386 = vperm.xlu0 %385, %v247
      %v387 = vpop.permute.xlu0 %386
      %390 = vset.pattern.permute.xlu0 0
      %391 = vperm.xlu0 %390, %v248
      %v392 = vpop.permute.xlu0 %391
      %395 = vset.pattern.permute.xlu0 0
      %396 = vperm.xlu0 %395, %v249
      %v397 = vpop.permute.xlu0 %396
      %v399 = vmul.f32 %v343, %v362
      %v400 = vmul.f32 %v344, %v362
      %v401 = vmul.f32 %v345, %v367
      %v402 = vmul.f32 %v346, %v367
      %v403 = vmul.f32 %v347, %v372
      %v404 = vmul.f32 %v348, %v372
      %v405 = vmul.f32 %v349, %v377
      %v406 = vmul.f32 %v350, %v377
      %v407 = vmul.f32 %v351, %v382
      %v408 = vmul.f32 %v352, %v382
      %v409 = vmul.f32 %v353, %v387
      %v410 = vmul.f32 %v354, %v387
      %v411 = vmul.f32 %v355, %v392
      %v412 = vmul.f32 %v356, %v392
      %v413 = vmul.f32 %v357, %v397
      %v414 = vmul.f32 %v358, %v397
      %v415 = vpack.c.bf16 %v401, %v399
      %v416 = vpack.c.bf16 %v402, %v400
      %v417 = vpack.c.bf16 %v405, %v403
      %v418 = vpack.c.bf16 %v406, %v404
      %v419 = vpack.c.bf16 %v409, %v407
      %v420 = vpack.c.bf16 %v410, %v408
      %v421 = vpack.c.bf16 %v413, %v411
      %v422 = vpack.c.bf16 %v414, %v412
      %v423 = vld [vmem:[%s1] sm:$0xf]
      %v424 = vld [vmem:[%s1 + $0x4] sm:$0xf]
      %v425 = vld [vmem:[%s1 + $0x8] sm:$0xf]
      %v426 = vld [vmem:[%s1 + $0xc] sm:$0xf]
      %v427 = vld [vmem:[%s1 + $0x10] sm:$0xf]
      %v428 = vld [vmem:[%s1 + $0x14] sm:$0xf]
      %v429 = vld [vmem:[%s1 + $0x18] sm:$0xf]
      %v430 = vld [vmem:[%s1 + $0x1c] sm:$0xf]
      %v431 = vld [vmem:[%s1 + $0x20] sm:$0xf]
      %v432 = vld [vmem:[%s1 + $0x24] sm:$0xf]
      %v433 = vld [vmem:[%s1 + $0x28] sm:$0xf]
      %v434 = vld [vmem:[%s1 + $0x2c] sm:$0xf]
      %v435 = vld [vmem:[%s1 + $0x30] sm:$0xf]
      %v436 = vld [vmem:[%s1 + $0x34] sm:$0xf]
      %v437 = vld [vmem:[%s1 + $0x38] sm:$0xf]
      %v438 = vld [vmem:[%s1 + $0x3c] sm:$0xf]
      %v439 = vld [vmem:[%s1 + $0x40] sm:$0xf]
      %v440 = vld [vmem:[%s1 + $0x44] sm:$0xf]
      %v441 = vld [vmem:[%s1 + $0x48] sm:$0xf]
      %v442 = vld [vmem:[%s1 + $0x4c] sm:$0xf]
      %v443 = vld [vmem:[%s1 + $0x50] sm:$0xf]
      %v444 = vld [vmem:[%s1 + $0x54] sm:$0xf]
      %v445 = vld [vmem:[%s1 + $0x58] sm:$0xf]
      %v446 = vld [vmem:[%s1 + $0x5c] sm:$0xf]
      %v447 = vld [vmem:[%s1 + $0x60] sm:$0xf]
      %v448 = vld [vmem:[%s1 + $0x64] sm:$0xf]
      %v449 = vld [vmem:[%s1 + $0x68] sm:$0xf]
      %v450 = vld [vmem:[%s1 + $0x6c] sm:$0xf]
      %v451 = vld [vmem:[%s1 + $0x70] sm:$0xf]
      %v452 = vld [vmem:[%s1 + $0x74] sm:$0xf]
      %v453 = vld [vmem:[%s1 + $0x78] sm:$0xf]
      %v454 = vld [vmem:[%s1 + $0x7c] sm:$0xf]
      %v455 = vld [vmem:[%s1 + $0x80] sm:$0xf]
      %v456 = vld [vmem:[%s1 + $0x84] sm:$0xf]
      %v457 = vld [vmem:[%s1 + $0x88] sm:$0xf]
      %v458 = vld [vmem:[%s1 + $0x8c] sm:$0xf]
      %v459 = vld [vmem:[%s1 + $0x90] sm:$0xf]
      %v460 = vld [vmem:[%s1 + $0x94] sm:$0xf]
      %v461 = vld [vmem:[%s1 + $0x98] sm:$0xf]
      %v462 = vld [vmem:[%s1 + $0x9c] sm:$0xf]
      %v463 = vld [vmem:[%s1 + $0xa0] sm:$0xf]
      %v464 = vld [vmem:[%s1 + $0xa4] sm:$0xf]
      %v465 = vld [vmem:[%s1 + $0xa8] sm:$0xf]
      %v466 = vld [vmem:[%s1 + $0xac] sm:$0xf]
      %v467 = vld [vmem:[%s1 + $0xb0] sm:$0xf]
      %v468 = vld [vmem:[%s1 + $0xb4] sm:$0xf]
      %v469 = vld [vmem:[%s1 + $0xb8] sm:$0xf]
      %v470 = vld [vmem:[%s1 + $0xbc] sm:$0xf]
      %v519 = vunpack.c.l.b16 %v423
      %v520 = vunpack.c.l.b16 %v424
      %v521 = vunpack.c.l.b16 %v425
      %v522 = vunpack.c.l.b16 %v426
      %v523 = vunpack.c.l.b16 %v427
      %v524 = vunpack.c.l.b16 %v428
      %v525 = vunpack.c.l.b16 %v429
      %v526 = vunpack.c.l.b16 %v430
      %v527 = vunpack.c.l.b16 %v431
      %v528 = vunpack.c.l.b16 %v432
      %v529 = vunpack.c.l.b16 %v433
      %v530 = vunpack.c.l.b16 %v434
      %v531 = vunpack.c.l.b16 %v435
      %v532 = vunpack.c.l.b16 %v436
      %v533 = vunpack.c.l.b16 %v437
      %v534 = vunpack.c.l.b16 %v438
      %v535 = vunpack.c.l.b16 %v439
      %v536 = vunpack.c.l.b16 %v440
      %v537 = vunpack.c.l.b16 %v441
      %v538 = vunpack.c.l.b16 %v442
      %v539 = vunpack.c.l.b16 %v443
      %v540 = vunpack.c.l.b16 %v444
      %v541 = vunpack.c.l.b16 %v445
      %v542 = vunpack.c.l.b16 %v446
      %v543 = vunpack.c.l.b16 %v447
      %v544 = vunpack.c.l.b16 %v448
      %v545 = vunpack.c.l.b16 %v449
      %v546 = vunpack.c.l.b16 %v450
      %v547 = vunpack.c.l.b16 %v451
      %v548 = vunpack.c.l.b16 %v452
      %v549 = vunpack.c.l.b16 %v453
      %v550 = vunpack.c.l.b16 %v454
      %v551 = vunpack.c.l.b16 %v455
      %v552 = vunpack.c.l.b16 %v456
      %v553 = vunpack.c.l.b16 %v457
      %v554 = vunpack.c.l.b16 %v458
      %v555 = vunpack.c.l.b16 %v459
      %v556 = vunpack.c.l.b16 %v460
      %v557 = vunpack.c.l.b16 %v461
      %v558 = vunpack.c.l.b16 %v462
      %v559 = vunpack.c.l.b16 %v463
      %v560 = vunpack.c.l.b16 %v464
      %v561 = vunpack.c.l.b16 %v465
      %v562 = vunpack.c.l.b16 %v466
      %v563 = vunpack.c.l.b16 %v467
      %v564 = vunpack.c.l.b16 %v468
      %v565 = vunpack.c.l.b16 %v469
      %v566 = vunpack.c.l.b16 %v470
      %v567 = vpack.c.b16 %v520, %v519
      %v568 = vpack.c.b16 %v522, %v521
      %v569 = vpack.c.b16 %v524, %v523
      %v570 = vpack.c.b16 %v526, %v525
      %v571 = vpack.c.b16 %v528, %v527
      %v572 = vpack.c.b16 %v530, %v529
      %v573 = vpack.c.b16 %v532, %v531
      %v574 = vpack.c.b16 %v534, %v533
      %v575 = vpack.c.b16 %v536, %v535
      %v576 = vpack.c.b16 %v538, %v537
      %v577 = vpack.c.b16 %v540, %v539
      %v578 = vpack.c.b16 %v542, %v541
      %v579 = vpack.c.b16 %v544, %v543
      %v580 = vpack.c.b16 %v546, %v545
      %v581 = vpack.c.b16 %v548, %v547
      %v582 = vpack.c.b16 %v550, %v549
      %v583 = vpack.c.b16 %v552, %v551
      %v584 = vpack.c.b16 %v554, %v553
      %v585 = vpack.c.b16 %v556, %v555
      %v586 = vpack.c.b16 %v558, %v557
      %v587 = vpack.c.b16 %v560, %v559
      %v588 = vpack.c.b16 %v562, %v561
      %v589 = vpack.c.b16 %v564, %v563
      %v590 = vpack.c.b16 %v566, %v565
      %vm591 = vcmask 523264
      %v593 = vsel %vm591, %v567, 0
      %v596 = vsel %vm591, %v568, 0
      %v599 = vsel %vm591, %v569, 0
      %v602 = vsel %vm591, %v570, 0
      %v605 = vsel %vm591, %v571, 0
      %v608 = vsel %vm591, %v572, 0
      %v611 = vsel %vm591, %v573, 0
      %v614 = vsel %vm591, %v574, 0
      %v617 = vsel %vm591, %v575, 0
      %v620 = vsel %vm591, %v576, 0
      %v623 = vsel %vm591, %v577, 0
      %v626 = vsel %vm591, %v578, 0
      %v629 = vsel %vm591, %v579, 0
      %v632 = vsel %vm591, %v580, 0
      %v635 = vsel %vm591, %v581, 0
      %v638 = vsel %vm591, %v582, 0
      %v641 = vsel %vm591, %v583, 0
      %v644 = vsel %vm591, %v584, 0
      %v647 = vsel %vm591, %v585, 0
      %v650 = vsel %vm591, %v586, 0
      %v653 = vsel %vm591, %v587, 0
      %v656 = vsel %vm591, %v588, 0
      %v659 = vsel %vm591, %v589, 0
      %v662 = vsel %vm591, %v590, 0
      %664 = vmatprep.subr.bf16.mxu0 %v416
      %665 = vmatpush1.bf16.msra.mxu0 %v415
      %666 = vmatprep.subr.bf16.mxu0 %v418
      %667 = vmatpush1.bf16.msra.mxu0 %v417
      %668 = vmatprep.subr.bf16.mxu0 %v420
      %669 = vmatpush1.bf16.msra.mxu0 %v419
      %670 = vmatprep.subr.bf16.mxu0 %v422
      %671 = vmatpush1.bf16.msra.mxu0 %v421
      %672 = vmatprep.subr.bf16.mxu0 0
      %673 = vmatpush1.bf16.msra.mxu0 0
      %674 = vmatprep.subr.bf16.mxu0 0
      %675 = vmatpush1.bf16.msra.mxu0 0
      %676 = vmatprep.subr.bf16.mxu0 0
      %677 = vmatpush1.bf16.msra.mxu0 0
      %678 = vmatprep.subr.bf16.mxu0 0
      %679 = vmatpush1.bf16.msra.mxu0 0
      %680 = vmatprep.subr.bf16.mxu0 0
      %681 = vmatpush1.bf16.msra.mxu0 0
      %682 = vmatprep.subr.bf16.mxu0 0
      %683 = vmatpush1.bf16.msra.mxu0 0
      %684 = vmatprep.subr.bf16.mxu0 0
      %685 = vmatpush1.bf16.msra.mxu0 0
      %686 = vmatprep.subr.bf16.mxu0 0
      %687 = vmatpush1.bf16.msra.mxu0 0
      %688 = vmatprep.subr.bf16.mxu0 0
      %689 = vmatpush1.bf16.msra.mxu0 0
      %690 = vmatprep.subr.bf16.mxu0 0
      %691 = vmatpush1.bf16.msra.mxu0 0
      %692 = vmatprep.subr.bf16.mxu0 0
      %693 = vmatpush1.bf16.msra.mxu0 0
      %694 = vmatprep.subr.bf16.mxu0 0
      %695 = vmatpush1.bf16.msra.mxu0 0
      %696 = vmatprep.mubr.bf16.mxu0 0
      %697 = vmatmul.mubr.bf16.gmra.mrb[0].mxu0 %v593
      %v698 = vpop.f32.mrb[0].mxu0
      %v699 = vadd.f32 0.0, %v698
      %v700 = vpop.f32.mrb[0].mxu0
      %v701 = vadd.f32 0.0, %v700
      %v702 = vpop.f32.mrb[0].mxu0
      %v703 = vadd.f32 0.0, %v702
      %v704 = vpop.f32.mrb[0].mxu0
      %v705 = vadd.f32 0.0, %v704
      %706 = vmatprep.mubr.bf16.mxu0 0
      %707 = vmatmul.mubr.bf16.gmra.mrb[0].mxu0 %v596
      %v708 = vpop.f32.mrb[0].mxu0
      %v709 = vadd.f32 0.0, %v708
      %v710 = vpop.f32.mrb[0].mxu0
      %v711 = vadd.f32 0.0, %v710
      %v712 = vpop.f32.mrb[0].mxu0
      %v713 = vadd.f32 0.0, %v712
      %v714 = vpop.f32.mrb[0].mxu0
      %v715 = vadd.f32 0.0, %v714
      %716 = vmatprep.mubr.bf16.mxu0 0
      %717 = vmatmul.mubr.bf16.gmra.mrb[0].mxu0 %v599
      %v718 = vpop.f32.mrb[0].mxu0
      %v719 = vadd.f32 0.0, %v718
      %v720 = vpop.f32.mrb[0].mxu0
      %v721 = vadd.f32 0.0, %v720
      %v722 = vpop.f32.mrb[0].mxu0
      %v723 = vadd.f32 0.0, %v722
      %v724 = vpop.f32.mrb[0].mxu0
      %v725 = vadd.f32 0.0, %v724
      %726 = vmatprep.mubr.bf16.mxu0 0
      %727 = vmatmul.mubr.bf16.gmra.mrb[0].mxu0 %v602
      %v728 = vpop.f32.mrb[0].mxu0
      %v729 = vadd.f32 0.0, %v728
      %v730 = vpop.f32.mrb[0].mxu0
      %v731 = vadd.f32 0.0, %v730
      %v732 = vpop.f32.mrb[0].mxu0
      %v733 = vadd.f32 0.0, %v732
      %v734 = vpop.f32.mrb[0].mxu0
      %v735 = vadd.f32 0.0, %v734
      %736 = vmatprep.mubr.bf16.mxu0 0
      %737 = vmatmul.mubr.bf16.gmra.mrb[0].mxu0 %v605
      %v738 = vpop.f32.mrb[0].mxu0
      %v739 = vadd.f32 0.0, %v738
      %v740 = vpop.f32.mrb[0].mxu0
      %v741 = vadd.f32 0.0, %v740
      %v742 = vpop.f32.mrb[0].mxu0
      %v743 = vadd.f32 0.0, %v742
      %v744 = vpop.f32.mrb[0].mxu0
      %v745 = vadd.f32 0.0, %v744
      %746 = vmatprep.mubr.bf16.mxu0 0
      %747 = vmatmul.mubr.bf16.gmra.mrb[0].mxu0 %v608
      %v748 = vpop.f32.mrb[0].mxu0
      %v749 = vadd.f32 0.0, %v748
      %v750 = vpop.f32.mrb[0].mxu0
      %v751 = vadd.f32 0.0, %v750
      %v752 = vpop.f32.mrb[0].mxu0
      %v753 = vadd.f32 0.0, %v752
      %v754 = vpop.f32.mrb[0].mxu0
      %v755 = vadd.f32 0.0, %v754
      %756 = vmatprep.mubr.bf16.mxu0 0
      %757 = vmatmul.mubr.bf16.gmra.mrb[0].mxu0 %v611
      %v758 = vpop.f32.mrb[0].mxu0
      %v759 = vadd.f32 0.0, %v758
      %v760 = vpop.f32.mrb[0].mxu0
      %v761 = vadd.f32 0.0, %v760
      %v762 = vpop.f32.mrb[0].mxu0
      %v763 = vadd.f32 0.0, %v762
      %v764 = vpop.f32.mrb[0].mxu0
      %v765 = vadd.f32 0.0, %v764
      %766 = vmatprep.mubr.bf16.mxu0 0
      %767 = vmatmul.mubr.bf16.gmra.mrb[0].mxu0 %v614
      %v768 = vpop.f32.mrb[0].mxu0
      %v769 = vadd.f32 0.0, %v768
      %v770 = vpop.f32.mrb[0].mxu0
      %v771 = vadd.f32 0.0, %v770
      %v772 = vpop.f32.mrb[0].mxu0
      %v773 = vadd.f32 0.0, %v772
      %v774 = vpop.f32.mrb[0].mxu0
      %v775 = vadd.f32 0.0, %v774
      %776 = vmatprep.mubr.bf16.mxu0 0
      %777 = vmatmul.mubr.bf16.gmra.mrb[0].mxu0 %v617
      %v778 = vpop.f32.mrb[0].mxu0
      %v779 = vadd.f32 0.0, %v778
      %v780 = vpop.f32.mrb[0].mxu0
      %v781 = vadd.f32 0.0, %v780
      %v782 = vpop.f32.mrb[0].mxu0
      %v783 = vadd.f32 0.0, %v782
      %v784 = vpop.f32.mrb[0].mxu0
      %v785 = vadd.f32 0.0, %v784
      %786 = vmatprep.mubr.bf16.mxu0 0
      %787 = vmatmul.mubr.bf16.gmra.mrb[0].mxu0 %v620
      %v788 = vpop.f32.mrb[0].mxu0
      %v789 = vadd.f32 0.0, %v788
      %v790 = vpop.f32.mrb[0].mxu0
      %v791 = vadd.f32 0.0, %v790
      %v792 = vpop.f32.mrb[0].mxu0
      %v793 = vadd.f32 0.0, %v792
      %v794 = vpop.f32.mrb[0].mxu0
      %v795 = vadd.f32 0.0, %v794
      %796 = vmatprep.mubr.bf16.mxu0 0
      %797 = vmatmul.mubr.bf16.gmra.mrb[0].mxu0 %v623
      %v798 = vpop.f32.mrb[0].mxu0
      %v799 = vadd.f32 0.0, %v798
      %v800 = vpop.f32.mrb[0].mxu0
      %v801 = vadd.f32 0.0, %v800
      %v802 = vpop.f32.mrb[0].mxu0
      %v803 = vadd.f32 0.0, %v802
      %v804 = vpop.f32.mrb[0].mxu0
      %v805 = vadd.f32 0.0, %v804
      %806 = vmatprep.mubr.bf16.mxu0 0
      %807 = vmatmul.mubr.bf16.gmra.mrb[0].mxu0 %v626
      %v808 = vpop.f32.mrb[0].mxu0
      %v809 = vadd.f32 0.0, %v808
      %v810 = vpop.f32.mrb[0].mxu0
      %v811 = vadd.f32 0.0, %v810
      %v812 = vpop.f32.mrb[0].mxu0
      %v813 = vadd.f32 0.0, %v812
      %v814 = vpop.f32.mrb[0].mxu0
      %v815 = vadd.f32 0.0, %v814
      %816 = vmatprep.mubr.bf16.mxu0 0
      %817 = vmatmul.mubr.bf16.gmra.mrb[0].mxu0 %v629
      %v818 = vpop.f32.mrb[0].mxu0
      %v819 = vadd.f32 0.0, %v818
      %v820 = vpop.f32.mrb[0].mxu0
      %v821 = vadd.f32 0.0, %v820
      %v822 = vpop.f32.mrb[0].mxu0
      %v823 = vadd.f32 0.0, %v822
      %v824 = vpop.f32.mrb[0].mxu0
      %v825 = vadd.f32 0.0, %v824
      %826 = vmatprep.mubr.bf16.mxu0 0
      %827 = vmatmul.mubr.bf16.gmra.mrb[0].mxu0 %v632
      %v828 = vpop.f32.mrb[0].mxu0
      %v829 = vadd.f32 0.0, %v828
      %v830 = vpop.f32.mrb[0].mxu0
      %v831 = vadd.f32 0.0, %v830
      %v832 = vpop.f32.mrb[0].mxu0
      %v833 = vadd.f32 0.0, %v832
      %v834 = vpop.f32.mrb[0].mxu0
      %v835 = vadd.f32 0.0, %v834
      %836 = vmatprep.mubr.bf16.mxu0 0
      %837 = vmatmul.mubr.bf16.gmra.mrb[0].mxu0 %v635
      %v838 = vpop.f32.mrb[0].mxu0
      %v839 = vadd.f32 0.0, %v838
      %v840 = vpop.f32.mrb[0].mxu0
      %v841 = vadd.f32 0.0, %v840
      %v842 = vpop.f32.mrb[0].mxu0
      %v843 = vadd.f32 0.0, %v842
      %v844 = vpop.f32.mrb[0].mxu0
      %v845 = vadd.f32 0.0, %v844
      %846 = vmatprep.mubr.bf16.mxu0 0
      %847 = vmatmul.mubr.bf16.gmra.mrb[0].mxu0 %v638
      %v848 = vpop.f32.mrb[0].mxu0
      %v849 = vadd.f32 0.0, %v848
      %v850 = vpop.f32.mrb[0].mxu0
      %v851 = vadd.f32 0.0, %v850
      %v852 = vpop.f32.mrb[0].mxu0
      %v853 = vadd.f32 0.0, %v852
      %v854 = vpop.f32.mrb[0].mxu0
      %v855 = vadd.f32 0.0, %v854
      %856 = vmatprep.mubr.bf16.mxu0 0
      %857 = vmatmul.mubr.bf16.gmra.mrb[0].mxu0 %v641
      %v858 = vpop.f32.mrb[0].mxu0
      %v859 = vadd.f32 0.0, %v858
      %v860 = vpop.f32.mrb[0].mxu0
      %v861 = vadd.f32 0.0, %v860
      %v862 = vpop.f32.mrb[0].mxu0
      %v863 = vadd.f32 0.0, %v862
      %v864 = vpop.f32.mrb[0].mxu0
      %v865 = vadd.f32 0.0, %v864
      %866 = vmatprep.mubr.bf16.mxu0 0
      %867 = vmatmul.mubr.bf16.gmra.mrb[0].mxu0 %v644
      %v868 = vpop.f32.mrb[0].mxu0
      %v869 = vadd.f32 0.0, %v868
      %v870 = vpop.f32.mrb[0].mxu0
      %v871 = vadd.f32 0.0, %v870
      %v872 = vpop.f32.mrb[0].mxu0
      %v873 = vadd.f32 0.0, %v872
      %v874 = vpop.f32.mrb[0].mxu0
      %v875 = vadd.f32 0.0, %v874
      %876 = vmatprep.mubr.bf16.mxu0 0
      %877 = vmatmul.mubr.bf16.gmra.mrb[0].mxu0 %v647
      %v878 = vpop.f32.mrb[0].mxu0
      %v879 = vadd.f32 0.0, %v878
      %v880 = vpop.f32.mrb[0].mxu0
      %v881 = vadd.f32 0.0, %v880
      %v882 = vpop.f32.mrb[0].mxu0
      %v883 = vadd.f32 0.0, %v882
      %v884 = vpop.f32.mrb[0].mxu0
      %v885 = vadd.f32 0.0, %v884
      %886 = vmatprep.mubr.bf16.mxu0 0
      %887 = vmatmul.mubr.bf16.gmra.mrb[0].mxu0 %v650
      %v888 = vpop.f32.mrb[0].mxu0
      %v889 = vadd.f32 0.0, %v888
      %v890 = vpop.f32.mrb[0].mxu0
      %v891 = vadd.f32 0.0, %v890
      %v892 = vpop.f32.mrb[0].mxu0
      %v893 = vadd.f32 0.0, %v892
      %v894 = vpop.f32.mrb[0].mxu0
      %v895 = vadd.f32 0.0, %v894
      %896 = vmatprep.mubr.bf16.mxu0 0
      %897 = vmatmul.mubr.bf16.gmra.mrb[0].mxu0 %v653
      %v898 = vpop.f32.mrb[0].mxu0
      %v899 = vadd.f32 0.0, %v898
      %v900 = vpop.f32.mrb[0].mxu0
      %v901 = vadd.f32 0.0, %v900
      %v902 = vpop.f32.mrb[0].mxu0
      %v903 = vadd.f32 0.0, %v902
      %v904 = vpop.f32.mrb[0].mxu0
      %v905 = vadd.f32 0.0, %v904
      %906 = vmatprep.mubr.bf16.mxu0 0
      %907 = vmatmul.mubr.bf16.gmra.mrb[0].mxu0 %v656
      %v908 = vpop.f32.mrb[0].mxu0
      %v909 = vadd.f32 0.0, %v908
      %v910 = vpop.f32.mrb[0].mxu0
      %v911 = vadd.f32 0.0, %v910
      %v912 = vpop.f32.mrb[0].mxu0
      %v913 = vadd.f32 0.0, %v912
      %v914 = vpop.f32.mrb[0].mxu0
      %v915 = vadd.f32 0.0, %v914
      %916 = vmatprep.mubr.bf16.mxu0 0
      %917 = vmatmul.mubr.bf16.gmra.mrb[0].mxu0 %v659
      %v918 = vpop.f32.mrb[0].mxu0
      %v919 = vadd.f32 0.0, %v918
      %v920 = vpop.f32.mrb[0].mxu0
      %v921 = vadd.f32 0.0, %v920
      %v922 = vpop.f32.mrb[0].mxu0
      %v923 = vadd.f32 0.0, %v922
      %v924 = vpop.f32.mrb[0].mxu0
      %v925 = vadd.f32 0.0, %v924
      %926 = vmatprep.mubr.bf16.mxu0 0
      %927 = vmatmul.mubr.bf16.gmra.mrb[0].mxu0 %v662
      %v928 = vpop.f32.mrb[0].mxu0
      %v929 = vadd.f32 0.0, %v928
      %v930 = vpop.f32.mrb[0].mxu0
      %v931 = vadd.f32 0.0, %v930
      %v932 = vpop.f32.mrb[0].mxu0
      %v933 = vadd.f32 0.0, %v932
      %v934 = vpop.f32.mrb[0].mxu0
      %v935 = vadd.f32 0.0, %v934
      %936 = vdwg.mxu0
      %v937 = vmul.f32 %v699, 0.17677669
      %v938 = vmul.f32 %v701, 0.17677669
      %v939 = vmul.f32 %v703, 0.17677669
      %v940 = vmul.f32 %v705, 0.17677669
      %v941 = vmul.f32 %v709, 0.17677669
      %v942 = vmul.f32 %v711, 0.17677669
      %v943 = vmul.f32 %v713, 0.17677669
      %v944 = vmul.f32 %v715, 0.17677669
      %v945 = vpack.c.bf16 %v939, %v937
      %v946 = vpack.c.bf16 %v940, %v938
      %v947 = vpack.c.bf16 %v943, %v941
      %v948 = vpack.c.bf16 %v944, %v942
      %v949 = vpack.c.bf16 %v783, %v779
      %v950 = vpack.c.bf16 %v785, %v781
      %v951 = vpack.c.bf16 %v793, %v789
      %v952 = vpack.c.bf16 %v795, %v791
      %v953 = vpack.c.bf16 %v863, %v859
      %v954 = vpack.c.bf16 %v865, %v861
      %v955 = vpack.c.bf16 %v873, %v869
      %v956 = vpack.c.bf16 %v875, %v871
      %957 = vxpose.xlu0.c.b16.start [1/8] %v945, 128
      %958 = vxpose.xlu0.c.b16.cont [2/8] %v947, 128
      %959 = vxpose.xlu0.c.b16.cont [3/8] 0, 128
      %960 = vxpose.xlu0.c.b16.cont [4/8] 0, 128
      %961 = vxpose.xlu0.c.b16.cont [5/8] 0, 128
      %962 = vxpose.xlu0.c.b16.cont [6/8] 0, 128
      %963 = vxpose.xlu0.c.b16.cont [7/8] 0, 128
      %964 = vxpose.xlu0.c.b16.end [8/8] 0, 128
      %v965 = vpop.trf.xlu0
      %v966 = vpop.trf.xlu0
      %v967 = vpop.trf.xlu0
      %v968 = vpop.trf.xlu0
      %v969 = vpop.trf.xlu0
      %v970 = vpop.trf.xlu0
      %v971 = vpop.trf.xlu0
      %v972 = vpop.trf.xlu0
      %973 = vxpose.xlu0.c.b16.start [1/8] %v946, 128
      %974 = vxpose.xlu0.c.b16.cont [2/8] %v948, 128
      %975 = vxpose.xlu0.c.b16.cont [3/8] 0, 128
      %976 = vxpose.xlu0.c.b16.cont [4/8] 0, 128
      %977 = vxpose.xlu0.c.b16.cont [5/8] 0, 128
      %978 = vxpose.xlu0.c.b16.cont [6/8] 0, 128
      %979 = vxpose.xlu0.c.b16.cont [7/8] 0, 128
      %980 = vxpose.xlu0.c.b16.end [8/8] 0, 128
      %v981 = vpop.trf.xlu0
      %v982 = vpop.trf.xlu0
      %v983 = vpop.trf.xlu0
      %v984 = vpop.trf.xlu0
      %v985 = vpop.trf.xlu0
      %v986 = vpop.trf.xlu0
      %v987 = vpop.trf.xlu0
      %v988 = vpop.trf.xlu0
      %vm989 = vcmask 261120
      %v991 = vsel %vm989, %v965, 0
      %v994 = vsel %vm989, %v966, 0
      %v997 = vsel %vm989, %v967, 0
      %v1000 = vsel %vm989, %v968, 0
      %v1003 = vsel %vm989, %v969, 0
      %v1006 = vsel %vm989, %v970, 0
      %v1009 = vsel %vm989, %v971, 0
      %v1012 = vsel %vm989, %v972, 0
      %v1015 = vsel %vm989, %v981, 0
      %v1018 = vsel %vm989, %v982, 0
      %v1021 = vsel %vm989, %v983, 0
      %v1024 = vsel %vm989, %v984, 0
      %v1027 = vsel %vm989, %v985, 0
      %v1030 = vsel %vm989, %v986, 0
      %v1033 = vsel %vm989, %v987, 0
      %v1036 = vsel %vm989, %v988, 0
      %1038 = vmatprep.subr.bf16.mxu0 %v950
      %1039 = vmatpush1.bf16.msra.mxu0 %v949
      %1040 = vmatprep.subr.bf16.mxu0 %v952
      %1041 = vmatpush1.bf16.msra.mxu0 %v951
      %1042 = vmatprep.subr.bf16.mxu0 0
      %1043 = vmatpush1.bf16.msra.mxu0 0
      %1044 = vmatprep.subr.bf16.mxu0 0
      %1045 = vmatpush1.bf16.msra.mxu0 0
      %1046 = vmatprep.subr.bf16.mxu0 0
      %1047 = vmatpush1.bf16.msra.mxu0 0
      %1048 = vmatprep.subr.bf16.mxu0 0
      %1049 = vmatpush1.bf16.msra.mxu0 0
      %1050 = vmatprep.subr.bf16.mxu0 0
      %1051 = vmatpush1.bf16.msra.mxu0 0
      %1052 = vmatprep.subr.bf16.mxu0 0
      %1053 = vmatpush1.bf16.msra.mxu0 0
      %1054 = vmatprep.subr.bf16.mxu0 0
      %1055 = vmatpush1.bf16.msra.mxu0 0
      %1056 = vmatprep.subr.bf16.mxu0 0
      %1057 = vmatpush1.bf16.msra.mxu0 0
      %1058 = vmatprep.subr.bf16.mxu0 0
      %1059 = vmatpush1.bf16.msra.mxu0 0
      %1060 = vmatprep.subr.bf16.mxu0 0
      %1061 = vmatpush1.bf16.msra.mxu0 0
      %1062 = vmatprep.subr.bf16.mxu0 0
      %1063 = vmatpush1.bf16.msra.mxu0 0
      %1064 = vmatprep.subr.bf16.mxu0 0
      %1065 = vmatpush1.bf16.msra.mxu0 0
      %1066 = vmatprep.subr.bf16.mxu0 0
      %1067 = vmatpush1.bf16.msra.mxu0 0
      %1068 = vmatprep.subr.bf16.mxu0 0
      %1069 = vmatpush1.bf16.msra.mxu0 0
      %1070 = vmatprep.mubr.bf16.mxu0 0
      %1071 = vmatmul.mubr.bf16.gmra.mrb[0].mxu0 %v991
      %v1072 = vpop.f32.mrb[0].mxu0
      %v1073 = vadd.f32 0.0, %v1072
      %v1074 = vpop.f32.mrb[0].mxu0
      %v1075 = vadd.f32 0.0, %v1074
      %v1076 = vpop.f32.mrb[0].mxu0
      %v1077 = vadd.f32 0.0, %v1076
      %v1078 = vpop.f32.mrb[0].mxu0
      %v1079 = vadd.f32 0.0, %v1078
      %1080 = vmatprep.mubr.bf16.mxu0 0
      %1081 = vmatmul.mubr.bf16.gmra.mrb[0].mxu0 %v994
      %v1082 = vpop.f32.mrb[0].mxu0
      %v1083 = vadd.f32 0.0, %v1082
      %v1084 = vpop.f32.mrb[0].mxu0
      %v1085 = vadd.f32 0.0, %v1084
      %v1086 = vpop.f32.mrb[0].mxu0
      %v1087 = vadd.f32 0.0, %v1086
      %v1088 = vpop.f32.mrb[0].mxu0
      %v1089 = vadd.f32 0.0, %v1088
      %1090 = vmatprep.mubr.bf16.mxu0 0
      %1091 = vmatmul.mubr.bf16.gmra.mrb[0].mxu0 %v997
      %v1092 = vpop.f32.mrb[0].mxu0
      %v1093 = vadd.f32 0.0, %v1092
      %v1094 = vpop.f32.mrb[0].mxu0
      %v1095 = vadd.f32 0.0, %v1094
      %v1096 = vpop.f32.mrb[0].mxu0
      %v1097 = vadd.f32 0.0, %v1096
      %v1098 = vpop.f32.mrb[0].mxu0
      %v1099 = vadd.f32 0.0, %v1098
      %1100 = vmatprep.mubr.bf16.mxu0 0
      %1101 = vmatmul.mubr.bf16.gmra.mrb[0].mxu0 %v1000
      %v1102 = vpop.f32.mrb[0].mxu0
      %v1103 = vadd.f32 0.0, %v1102
      %v1104 = vpop.f32.mrb[0].mxu0
      %v1105 = vadd.f32 0.0, %v1104
      %v1106 = vpop.f32.mrb[0].mxu0
      %v1107 = vadd.f32 0.0, %v1106
      %v1108 = vpop.f32.mrb[0].mxu0
      %v1109 = vadd.f32 0.0, %v1108
      %1110 = vmatprep.mubr.bf16.mxu0 0
      %1111 = vmatmul.mubr.bf16.gmra.mrb[0].mxu0 %v1003
      %v1112 = vpop.f32.mrb[0].mxu0
      %v1113 = vadd.f32 0.0, %v1112
      %v1114 = vpop.f32.mrb[0].mxu0
      %v1115 = vadd.f32 0.0, %v1114
      %v1116 = vpop.f32.mrb[0].mxu0
      %v1117 = vadd.f32 0.0, %v1116
      %v1118 = vpop.f32.mrb[0].mxu0
      %v1119 = vadd.f32 0.0, %v1118
      %1120 = vmatprep.mubr.bf16.mxu0 0
      %1121 = vmatmul.mubr.bf16.gmra.mrb[0].mxu0 %v1006
      %v1122 = vpop.f32.mrb[0].mxu0
      %v1123 = vadd.f32 0.0, %v1122
      %v1124 = vpop.f32.mrb[0].mxu0
      %v1125 = vadd.f32 0.0, %v1124
      %v1126 = vpop.f32.mrb[0].mxu0
      %v1127 = vadd.f32 0.0, %v1126
      %v1128 = vpop.f32.mrb[0].mxu0
      %v1129 = vadd.f32 0.0, %v1128
      %1130 = vmatprep.mubr.bf16.mxu0 0
      %1131 = vmatmul.mubr.bf16.gmra.mrb[0].mxu0 %v1009
      %v1132 = vpop.f32.mrb[0].mxu0
      %v1133 = vadd.f32 0.0, %v1132
      %v1134 = vpop.f32.mrb[0].mxu0
      %v1135 = vadd.f32 0.0, %v1134
      %v1136 = vpop.f32.mrb[0].mxu0
      %v1137 = vadd.f32 0.0, %v1136
      %v1138 = vpop.f32.mrb[0].mxu0
      %v1139 = vadd.f32 0.0, %v1138
      %1140 = vmatprep.mubr.bf16.mxu0 0
      %1141 = vmatmul.mubr.bf16.gmra.mrb[0].mxu0 %v1012
      %v1142 = vpop.f32.mrb[0].mxu0
      %v1143 = vadd.f32 0.0, %v1142
      %v1144 = vpop.f32.mrb[0].mxu0
      %v1145 = vadd.f32 0.0, %v1144
      %v1146 = vpop.f32.mrb[0].mxu0
      %v1147 = vadd.f32 0.0, %v1146
      %v1148 = vpop.f32.mrb[0].mxu0
      %v1149 = vadd.f32 0.0, %v1148
      %1150 = vmatprep.mubr.bf16.mxu0 0
      %1151 = vmatmul.mubr.bf16.gmra.mrb[0].mxu0 %v1015
      %v1152 = vpop.f32.mrb[0].mxu0
      %v1153 = vadd.f32 0.0, %v1152
      %v1154 = vpop.f32.mrb[0].mxu0
      %v1155 = vadd.f32 0.0, %v1154
      %v1156 = vpop.f32.mrb[0].mxu0
      %v1157 = vadd.f32 0.0, %v1156
      %v1158 = vpop.f32.mrb[0].mxu0
      %v1159 = vadd.f32 0.0, %v1158
      %1160 = vmatprep.mubr.bf16.mxu0 0
      %1161 = vmatmul.mubr.bf16.gmra.mrb[0].mxu0 %v1018
      %v1162 = vpop.f32.mrb[0].mxu0
      %v1163 = vadd.f32 0.0, %v1162
      %v1164 = vpop.f32.mrb[0].mxu0
      %v1165 = vadd.f32 0.0, %v1164
      %v1166 = vpop.f32.mrb[0].mxu0
      %v1167 = vadd.f32 0.0, %v1166
      %v1168 = vpop.f32.mrb[0].mxu0
      %v1169 = vadd.f32 0.0, %v1168
      %1170 = vmatprep.mubr.bf16.mxu0 0
      %1171 = vmatmul.mubr.bf16.gmra.mrb[0].mxu0 %v1021
      %v1172 = vpop.f32.mrb[0].mxu0
      %v1173 = vadd.f32 0.0, %v1172
      %v1174 = vpop.f32.mrb[0].mxu0
      %v1175 = vadd.f32 0.0, %v1174
      %v1176 = vpop.f32.mrb[0].mxu0
      %v1177 = vadd.f32 0.0, %v1176
      %v1178 = vpop.f32.mrb[0].mxu0
      %v1179 = vadd.f32 0.0, %v1178
      %1180 = vmatprep.mubr.bf16.mxu0 0
      %1181 = vmatmul.mubr.bf16.gmra.mrb[0].mxu0 %v1024
      %v1182 = vpop.f32.mrb[0].mxu0
      %v1183 = vadd.f32 0.0, %v1182
      %v1184 = vpop.f32.mrb[0].mxu0
      %v1185 = vadd.f32 0.0, %v1184
      %v1186 = vpop.f32.mrb[0].mxu0
      %v1187 = vadd.f32 0.0, %v1186
      %v1188 = vpop.f32.mrb[0].mxu0
      %v1189 = vadd.f32 0.0, %v1188
      %1190 = vmatprep.mubr.bf16.mxu0 0
      %1191 = vmatmul.mubr.bf16.gmra.mrb[0].mxu0 %v1027
      %v1192 = vpop.f32.mrb[0].mxu0
      %v1193 = vadd.f32 0.0, %v1192
      %v1194 = vpop.f32.mrb[0].mxu0
      %v1195 = vadd.f32 0.0, %v1194
      %v1196 = vpop.f32.mrb[0].mxu0
      %v1197 = vadd.f32 0.0, %v1196
      %v1198 = vpop.f32.mrb[0].mxu0
      %v1199 = vadd.f32 0.0, %v1198
      %1200 = vmatprep.mubr.bf16.mxu0 0
      %1201 = vmatmul.mubr.bf16.gmra.mrb[0].mxu0 %v1030
      %v1202 = vpop.f32.mrb[0].mxu0
      %v1203 = vadd.f32 0.0, %v1202
      %v1204 = vpop.f32.mrb[0].mxu0
      %v1205 = vadd.f32 0.0, %v1204
      %v1206 = vpop.f32.mrb[0].mxu0
      %v1207 = vadd.f32 0.0, %v1206
      %v1208 = vpop.f32.mrb[0].mxu0
      %v1209 = vadd.f32 0.0, %v1208
      %1210 = vmatprep.mubr.bf16.mxu0 0
      %1211 = vmatmul.mubr.bf16.gmra.mrb[0].mxu0 %v1033
      %v1212 = vpop.f32.mrb[0].mxu0
      %v1213 = vadd.f32 0.0, %v1212
      %v1214 = vpop.f32.mrb[0].mxu0
      %v1215 = vadd.f32 0.0, %v1214
      %v1216 = vpop.f32.mrb[0].mxu0
      %v1217 = vadd.f32 0.0, %v1216
      %v1218 = vpop.f32.mrb[0].mxu0
      %v1219 = vadd.f32 0.0, %v1218
      %1220 = vmatprep.mubr.bf16.mxu0 0
      %1221 = vmatmul.mubr.bf16.gmra.mrb[0].mxu0 %v1036
      %v1222 = vpop.f32.mrb[0].mxu0
      %v1223 = vadd.f32 0.0, %v1222
      %v1224 = vpop.f32.mrb[0].mxu0
      %v1225 = vadd.f32 0.0, %v1224
      %v1226 = vpop.f32.mrb[0].mxu0
      %v1227 = vadd.f32 0.0, %v1226
      %v1228 = vpop.f32.mrb[0].mxu0
      %v1229 = vadd.f32 0.0, %v1228
      %1230 = vdwg.mxu0
      %v1231 = vmax.f32 %v1073, %v1075
      %1232 = vmax.xlane.f32.xlu0 %v1231
      %v1233 = vpop.xlane.xlu0 %1232
      %v1234 = vmax.f32 %v1077, %v1079
      %1235 = vmax.xlane.f32.xlu0 %v1234
      %v1236 = vpop.xlane.xlu0 %1235
      %v1237 = vmax.f32 %v1083, %v1085
      %1238 = vmax.xlane.f32.xlu0 %v1237
      %v1239 = vpop.xlane.xlu0 %1238
      %v1240 = vmax.f32 %v1087, %v1089
      %1241 = vmax.xlane.f32.xlu0 %v1240
      %v1242 = vpop.xlane.xlu0 %1241
      %v1243 = vmax.f32 %v1093, %v1095
      %1244 = vmax.xlane.f32.xlu0 %v1243
      %v1245 = vpop.xlane.xlu0 %1244
      %v1246 = vmax.f32 %v1097, %v1099
      %1247 = vmax.xlane.f32.xlu0 %v1246
      %v1248 = vpop.xlane.xlu0 %1247
      %v1249 = vmax.f32 %v1103, %v1105
      %1250 = vmax.xlane.f32.xlu0 %v1249
      %v1251 = vpop.xlane.xlu0 %1250
      %v1252 = vmax.f32 %v1107, %v1109
      %1253 = vmax.xlane.f32.xlu0 %v1252
      %v1254 = vpop.xlane.xlu0 %1253
      %v1255 = vmax.f32 %v1113, %v1115
      %1256 = vmax.xlane.f32.xlu0 %v1255
      %v1257 = vpop.xlane.xlu0 %1256
      %v1258 = vmax.f32 %v1117, %v1119
      %1259 = vmax.xlane.f32.xlu0 %v1258
      %v1260 = vpop.xlane.xlu0 %1259
      %v1261 = vmax.f32 %v1123, %v1125
      %1262 = vmax.xlane.f32.xlu0 %v1261
      %v1263 = vpop.xlane.xlu0 %1262
      %v1264 = vmax.f32 %v1127, %v1129
      %1265 = vmax.xlane.f32.xlu0 %v1264
      %v1266 = vpop.xlane.xlu0 %1265
      %v1267 = vmax.f32 %v1133, %v1135
      %1268 = vmax.xlane.f32.xlu0 %v1267
      %v1269 = vpop.xlane.xlu0 %1268
      %v1270 = vmax.f32 %v1137, %v1139
      %1271 = vmax.xlane.f32.xlu0 %v1270
      %v1272 = vpop.xlane.xlu0 %1271
      %v1273 = vmax.f32 %v1143, %v1145
      %1274 = vmax.xlane.f32.xlu0 %v1273
      %v1275 = vpop.xlane.xlu0 %1274
      %v1276 = vmax.f32 %v1147, %v1149
      %1277 = vmax.xlane.f32.xlu0 %v1276
      %v1278 = vpop.xlane.xlu0 %1277
      %v1279 = vmax.f32 %v1153, %v1155
      %1280 = vmax.xlane.f32.xlu0 %v1279
      %v1281 = vpop.xlane.xlu0 %1280
      %v1282 = vmax.f32 %v1157, %v1159
      %1283 = vmax.xlane.f32.xlu0 %v1282
      %v1284 = vpop.xlane.xlu0 %1283
      %v1285 = vmax.f32 %v1163, %v1165
      %1286 = vmax.xlane.f32.xlu0 %v1285
      %v1287 = vpop.xlane.xlu0 %1286
      %v1288 = vmax.f32 %v1167, %v1169
      %1289 = vmax.xlane.f32.xlu0 %v1288
      %v1290 = vpop.xlane.xlu0 %1289
      %v1291 = vmax.f32 %v1173, %v1175
      %1292 = vmax.xlane.f32.xlu0 %v1291
      %v1293 = vpop.xlane.xlu0 %1292
      %v1294 = vmax.f32 %v1177, %v1179
      %1295 = vmax.xlane.f32.xlu0 %v1294
      %v1296 = vpop.xlane.xlu0 %1295
      %v1297 = vmax.f32 %v1183, %v1185
      %1298 = vmax.xlane.f32.xlu0 %v1297
      %v1299 = vpop.xlane.xlu0 %1298
      %v1300 = vmax.f32 %v1187, %v1189
      %1301 = vmax.xlane.f32.xlu0 %v1300
      %v1302 = vpop.xlane.xlu0 %1301
      %v1303 = vmax.f32 %v1193, %v1195
      %1304 = vmax.xlane.f32.xlu0 %v1303
      %v1305 = vpop.xlane.xlu0 %1304
      %v1306 = vmax.f32 %v1197, %v1199
      %1307 = vmax.xlane.f32.xlu0 %v1306
      %v1308 = vpop.xlane.xlu0 %1307
      %v1309 = vmax.f32 %v1203, %v1205
      %1310 = vmax.xlane.f32.xlu0 %v1309
      %v1311 = vpop.xlane.xlu0 %1310
      %v1312 = vmax.f32 %v1207, %v1209
      %1313 = vmax.xlane.f32.xlu0 %v1312
      %v1314 = vpop.xlane.xlu0 %1313
      %v1315 = vmax.f32 %v1213, %v1215
      %1316 = vmax.xlane.f32.xlu0 %v1315
      %v1317 = vpop.xlane.xlu0 %1316
      %v1318 = vmax.f32 %v1217, %v1219
      %1319 = vmax.xlane.f32.xlu0 %v1318
      %v1320 = vpop.xlane.xlu0 %1319
      %v1321 = vmax.f32 %v1223, %v1225
      %1322 = vmax.xlane.f32.xlu0 %v1321
      %v1323 = vpop.xlane.xlu0 %1322
      %v1324 = vmax.f32 %v1227, %v1229
      %1325 = vmax.xlane.f32.xlu0 %v1324
      %v1326 = vpop.xlane.xlu0 %1325
      %v1327 = vsub.f32 %v1073, %v1233
      %v1328 = vsub.f32 %v1075, %v1233
      %v1329 = vsub.f32 %v1077, %v1236
      %v1330 = vsub.f32 %v1079, %v1236
      %v1331 = vsub.f32 %v1083, %v1239
      %v1332 = vsub.f32 %v1085, %v1239
      %v1333 = vsub.f32 %v1087, %v1242
      %v1334 = vsub.f32 %v1089, %v1242
      %v1335 = vsub.f32 %v1093, %v1245
      %v1336 = vsub.f32 %v1095, %v1245
      %v1337 = vsub.f32 %v1097, %v1248
      %v1338 = vsub.f32 %v1099, %v1248
      %v1339 = vsub.f32 %v1103, %v1251
      %v1340 = vsub.f32 %v1105, %v1251
      %v1341 = vsub.f32 %v1107, %v1254
      %v1342 = vsub.f32 %v1109, %v1254
      %v1343 = vsub.f32 %v1113, %v1257
      %v1344 = vsub.f32 %v1115, %v1257
      %v1345 = vsub.f32 %v1117, %v1260
      %v1346 = vsub.f32 %v1119, %v1260
      %v1347 = vsub.f32 %v1123, %v1263
      %v1348 = vsub.f32 %v1125, %v1263
      %v1349 = vsub.f32 %v1127, %v1266
      %v1350 = vsub.f32 %v1129, %v1266
      %v1351 = vsub.f32 %v1133, %v1269
      %v1352 = vsub.f32 %v1135, %v1269
      %v1353 = vsub.f32 %v1137, %v1272
      %v1354 = vsub.f32 %v1139, %v1272
      %v1355 = vsub.f32 %v1143, %v1275
      %v1356 = vsub.f32 %v1145, %v1275
      %v1357 = vsub.f32 %v1147, %v1278
      %v1358 = vsub.f32 %v1149, %v1278
      %v1359 = vsub.f32 %v1153, %v1281
      %v1360 = vsub.f32 %v1155, %v1281
      %v1361 = vsub.f32 %v1157, %v1284
      %v1362 = vsub.f32 %v1159, %v1284
      %v1363 = vsub.f32 %v1163, %v1287
      %v1364 = vsub.f32 %v1165, %v1287
      %v1365 = vsub.f32 %v1167, %v1290
      %v1366 = vsub.f32 %v1169, %v1290
      %v1367 = vsub.f32 %v1173, %v1293
      %v1368 = vsub.f32 %v1175, %v1293
      %v1369 = vsub.f32 %v1177, %v1296
      %v1370 = vsub.f32 %v1179, %v1296
      %v1371 = vsub.f32 %v1183, %v1299
      %v1372 = vsub.f32 %v1185, %v1299
      %v1373 = vsub.f32 %v1187, %v1302
      %v1374 = vsub.f32 %v1189, %v1302
      %v1375 = vsub.f32 %v1193, %v1305
      %v1376 = vsub.f32 %v1195, %v1305
      %v1377 = vsub.f32 %v1197, %v1308
      %v1378 = vsub.f32 %v1199, %v1308
      %v1379 = vsub.f32 %v1203, %v1311
      %v1380 = vsub.f32 %v1205, %v1311
      %v1381 = vsub.f32 %v1207, %v1314
      %v1382 = vsub.f32 %v1209, %v1314
      %v1383 = vsub.f32 %v1213, %v1317
      %v1384 = vsub.f32 %v1215, %v1317
      %v1385 = vsub.f32 %v1217, %v1320
      %v1386 = vsub.f32 %v1219, %v1320
      %v1387 = vsub.f32 %v1223, %v1323
      %v1388 = vsub.f32 %v1225, %v1323
      %v1389 = vsub.f32 %v1227, %v1326
      %v1390 = vsub.f32 %v1229, %v1326
      %v1391 = vmul.f32 %v1327, 1.442695
      %v1392 = vpow.pop %v1391
      %v1393 = vmul.f32 %v1328, 1.442695
      %v1394 = vpow.pop %v1393
      %v1395 = vmul.f32 %v1329, 1.442695
      %v1396 = vpow.pop %v1395
      %v1397 = vmul.f32 %v1330, 1.442695
      %v1398 = vpow.pop %v1397
      %v1399 = vmul.f32 %v1331, 1.442695
      %v1400 = vpow.pop %v1399
      %v1401 = vmul.f32 %v1332, 1.442695
      %v1402 = vpow.pop %v1401
      %v1403 = vmul.f32 %v1333, 1.442695
      %v1404 = vpow.pop %v1403
      %v1405 = vmul.f32 %v1334, 1.442695
      %v1406 = vpow.pop %v1405
      %v1407 = vmul.f32 %v1335, 1.442695
      %v1408 = vpow.pop %v1407
      %v1409 = vmul.f32 %v1336, 1.442695
      %v1410 = vpow.pop %v1409
      %v1411 = vmul.f32 %v1337, 1.442695
      %v1412 = vpow.pop %v1411
      %v1413 = vmul.f32 %v1338, 1.442695
      %v1414 = vpow.pop %v1413
      %v1415 = vmul.f32 %v1339, 1.442695
      %v1416 = vpow.pop %v1415
      %v1417 = vmul.f32 %v1340, 1.442695
      %v1418 = vpow.pop %v1417
      %v1419 = vmul.f32 %v1341, 1.442695
      %v1420 = vpow.pop %v1419
      %v1421 = vmul.f32 %v1342, 1.442695
      %v1422 = vpow.pop %v1421
      %v1423 = vmul.f32 %v1343, 1.442695
      %v1424 = vpow.pop %v1423
      %v1425 = vmul.f32 %v1344, 1.442695
      %v1426 = vpow.pop %v1425
      %v1427 = vmul.f32 %v1345, 1.442695
      %v1428 = vpow.pop %v1427
      %v1429 = vmul.f32 %v1346, 1.442695
      %v1430 = vpow.pop %v1429
      %v1431 = vmul.f32 %v1347, 1.442695
      %v1432 = vpow.pop %v1431
      %v1433 = vmul.f32 %v1348, 1.442695
      %v1434 = vpow.pop %v1433
      %v1435 = vmul.f32 %v1349, 1.442695
      %v1436 = vpow.pop %v1435
      %v1437 = vmul.f32 %v1350, 1.442695
      %v1438 = vpow.pop %v1437
      %v1439 = vmul.f32 %v1351, 1.442695
      %v1440 = vpow.pop %v1439
      %v1441 = vmul.f32 %v1352, 1.442695
      %v1442 = vpow.pop %v1441
      %v1443 = vmul.f32 %v1353, 1.442695
      %v1444 = vpow.pop %v1443
      %v1445 = vmul.f32 %v1354, 1.442695
      %v1446 = vpow.pop %v1445
      %v1447 = vmul.f32 %v1355, 1.442695
      %v1448 = vpow.pop %v1447
      %v1449 = vmul.f32 %v1356, 1.442695
      %v1450 = vpow.pop %v1449
      %v1451 = vmul.f32 %v1357, 1.442695
      %v1452 = vpow.pop %v1451
      %v1453 = vmul.f32 %v1358, 1.442695
      %v1454 = vpow.pop %v1453
      %v1455 = vmul.f32 %v1359, 1.442695
      %v1456 = vpow.pop %v1455
      %v1457 = vmul.f32 %v1360, 1.442695
      %v1458 = vpow.pop %v1457
      %v1459 = vmul.f32 %v1361, 1.442695
      %v1460 = vpow.pop %v1459
      %v1461 = vmul.f32 %v1362, 1.442695
      %v1462 = vpow.pop %v1461
      %v1463 = vmul.f32 %v1363, 1.442695
      %v1464 = vpow.pop %v1463
      %v1465 = vmul.f32 %v1364, 1.442695
      %v1466 = vpow.pop %v1465
      %v1467 = vmul.f32 %v1365, 1.442695
      %v1468 = vpow.pop %v1467
      %v1469 = vmul.f32 %v1366, 1.442695
      %v1470 = vpow.pop %v1469
      %v1471 = vmul.f32 %v1367, 1.442695
      %v1472 = vpow.pop %v1471
      %v1473 = vmul.f32 %v1368, 1.442695
      %v1474 = vpow.pop %v1473
      %v1475 = vmul.f32 %v1369, 1.442695
      %v1476 = vpow.pop %v1475
      %v1477 = vmul.f32 %v1370, 1.442695
      %v1478 = vpow.pop %v1477
      %v1479 = vmul.f32 %v1371, 1.442695
      %v1480 = vpow.pop %v1479
      %v1481 = vmul.f32 %v1372, 1.442695
      %v1482 = vpow.pop %v1481
      %v1483 = vmul.f32 %v1373, 1.442695
      %v1484 = vpow.pop %v1483
      %v1485 = vmul.f32 %v1374, 1.442695
      %v1486 = vpow.pop %v1485
      %v1487 = vmul.f32 %v1375, 1.442695
      %v1488 = vpow.pop %v1487
      %v1489 = vmul.f32 %v1376, 1.442695
      %v1490 = vpow.pop %v1489
      %v1491 = vmul.f32 %v1377, 1.442695
      %v1492 = vpow.pop %v1491
      %v1493 = vmul.f32 %v1378, 1.442695
      %v1494 = vpow.pop %v1493
      %v1495 = vmul.f32 %v1379, 1.442695
      %v1496 = vpow.pop %v1495
      %v1497 = vmul.f32 %v1380, 1.442695
      %v1498 = vpow.pop %v1497
      %v1499 = vmul.f32 %v1381, 1.442695
      %v1500 = vpow.pop %v1499
      %v1501 = vmul.f32 %v1382, 1.442695
      %v1502 = vpow.pop %v1501
      %v1503 = vmul.f32 %v1383, 1.442695
      %v1504 = vpow.pop %v1503
      %v1505 = vmul.f32 %v1384, 1.442695
      %v1506 = vpow.pop %v1505
      %v1507 = vmul.f32 %v1385, 1.442695
      %v1508 = vpow.pop %v1507
      %v1509 = vmul.f32 %v1386, 1.442695
      %v1510 = vpow.pop %v1509
      %v1511 = vmul.f32 %v1387, 1.442695
      %v1512 = vpow.pop %v1511
      %v1513 = vmul.f32 %v1388, 1.442695
      %v1514 = vpow.pop %v1513
      %v1515 = vmul.f32 %v1389, 1.442695
      %v1516 = vpow.pop %v1515
      %v1517 = vmul.f32 %v1390, 1.442695
      %v1518 = vpow.pop %v1517
      %v1519 = vadd.f32 %v1392, %v1394
      %1520 = vadd.xlane.f32.xlu0 %v1519
      %v1521 = vpop.xlane.xlu0 %1520
      %v1522 = vadd.f32 %v1396, %v1398
      %1523 = vadd.xlane.f32.xlu0 %v1522
      %v1524 = vpop.xlane.xlu0 %1523
      %v1525 = vadd.f32 %v1400, %v1402
      %1526 = vadd.xlane.f32.xlu0 %v1525
      %v1527 = vpop.xlane.xlu0 %1526
      %v1528 = vadd.f32 %v1404, %v1406
      %1529 = vadd.xlane.f32.xlu0 %v1528
      %v1530 = vpop.xlane.xlu0 %1529
      %v1531 = vadd.f32 %v1408, %v1410
      %1532 = vadd.xlane.f32.xlu0 %v1531
      %v1533 = vpop.xlane.xlu0 %1532
      %v1534 = vadd.f32 %v1412, %v1414
      %1535 = vadd.xlane.f32.xlu0 %v1534
      %v1536 = vpop.xlane.xlu0 %1535
      %v1537 = vadd.f32 %v1416, %v1418
      %1538 = vadd.xlane.f32.xlu0 %v1537
      %v1539 = vpop.xlane.xlu0 %1538
      %v1540 = vadd.f32 %v1420, %v1422
      %1541 = vadd.xlane.f32.xlu0 %v1540
      %v1542 = vpop.xlane.xlu0 %1541
      %v1543 = vadd.f32 %v1424, %v1426
      %1544 = vadd.xlane.f32.xlu0 %v1543
      %v1545 = vpop.xlane.xlu0 %1544
      %v1546 = vadd.f32 %v1428, %v1430
      %1547 = vadd.xlane.f32.xlu0 %v1546
      %v1548 = vpop.xlane.xlu0 %1547
      %v1549 = vadd.f32 %v1432, %v1434
      %1550 = vadd.xlane.f32.xlu0 %v1549
      %v1551 = vpop.xlane.xlu0 %1550
      %v1552 = vadd.f32 %v1436, %v1438
      %1553 = vadd.xlane.f32.xlu0 %v1552
      %v1554 = vpop.xlane.xlu0 %1553
      %v1555 = vadd.f32 %v1440, %v1442
      %1556 = vadd.xlane.f32.xlu0 %v1555
      %v1557 = vpop.xlane.xlu0 %1556
      %v1558 = vadd.f32 %v1444, %v1446
      %1559 = vadd.xlane.f32.xlu0 %v1558
      %v1560 = vpop.xlane.xlu0 %1559
      %v1561 = vadd.f32 %v1448, %v1450
      %1562 = vadd.xlane.f32.xlu0 %v1561
      %v1563 = vpop.xlane.xlu0 %1562
      %v1564 = vadd.f32 %v1452, %v1454
      %1565 = vadd.xlane.f32.xlu0 %v1564
      %v1566 = vpop.xlane.xlu0 %1565
      %v1567 = vadd.f32 %v1456, %v1458
      %1568 = vadd.xlane.f32.xlu0 %v1567
      %v1569 = vpop.xlane.xlu0 %1568
      %v1570 = vadd.f32 %v1460, %v1462
      %1571 = vadd.xlane.f32.xlu0 %v1570
      %v1572 = vpop.xlane.xlu0 %1571
      %v1573 = vadd.f32 %v1464, %v1466
      %1574 = vadd.xlane.f32.xlu0 %v1573
      %v1575 = vpop.xlane.xlu0 %1574
      %v1576 = vadd.f32 %v1468, %v1470
      %1577 = vadd.xlane.f32.xlu0 %v1576
      %v1578 = vpop.xlane.xlu0 %1577
      %v1579 = vadd.f32 %v1472, %v1474
      %1580 = vadd.xlane.f32.xlu0 %v1579
      %v1581 = vpop.xlane.xlu0 %1580
      %v1582 = vadd.f32 %v1476, %v1478
      %1583 = vadd.xlane.f32.xlu0 %v1582
      %v1584 = vpop.xlane.xlu0 %1583
      %v1585 = vadd.f32 %v1480, %v1482
      %1586 = vadd.xlane.f32.xlu0 %v1585
      %v1587 = vpop.xlane.xlu0 %1586
      %v1588 = vadd.f32 %v1484, %v1486
      %1589 = vadd.xlane.f32.xlu0 %v1588
      %v1590 = vpop.xlane.xlu0 %1589
      %v1591 = vadd.f32 %v1488, %v1490
      %1592 = vadd.xlane.f32.xlu0 %v1591
      %v1593 = vpop.xlane.xlu0 %1592
      %v1594 = vadd.f32 %v1492, %v1494
      %1595 = vadd.xlane.f32.xlu0 %v1594
      %v1596 = vpop.xlane.xlu0 %1595
      %v1597 = vadd.f32 %v1496, %v1498
      %1598 = vadd.xlane.f32.xlu0 %v1597
      %v1599 = vpop.xlane.xlu0 %1598
      %v1600 = vadd.f32 %v1500, %v1502
      %1601 = vadd.xlane.f32.xlu0 %v1600
      %v1602 = vpop.xlane.xlu0 %1601
      %v1603 = vadd.f32 %v1504, %v1506
      %1604 = vadd.xlane.f32.xlu0 %v1603
      %v1605 = vpop.xlane.xlu0 %1604
      %v1606 = vadd.f32 %v1508, %v1510
      %1607 = vadd.xlane.f32.xlu0 %v1606
      %v1608 = vpop.xlane.xlu0 %1607
      %v1609 = vadd.f32 %v1512, %v1514
      %1610 = vadd.xlane.f32.xlu0 %v1609
      %v1611 = vpop.xlane.xlu0 %1610
      %v1612 = vadd.f32 %v1516, %v1518
      %1613 = vadd.xlane.f32.xlu0 %v1612
      %v1614 = vpop.xlane.xlu0 %1613
      %v1615 = vrcp.pop %v1521
      %v1616 = vrcp.pop %v1524
      %v1617 = vrcp.pop %v1527
      %v1618 = vrcp.pop %v1530
      %v1619 = vrcp.pop %v1533
      %v1620 = vrcp.pop %v1536
      %v1621 = vrcp.pop %v1539
      %v1622 = vrcp.pop %v1542
      %v1623 = vrcp.pop %v1545
      %v1624 = vrcp.pop %v1548
      %v1625 = vrcp.pop %v1551
      %v1626 = vrcp.pop %v1554
      %v1627 = vrcp.pop %v1557
      %v1628 = vrcp.pop %v1560
      %v1629 = vrcp.pop %v1563
      %v1630 = vrcp.pop %v1566
      %v1631 = vrcp.pop %v1569
      %v1632 = vrcp.pop %v1572
      %v1633 = vrcp.pop %v1575
      %v1634 = vrcp.pop %v1578
      %v1635 = vrcp.pop %v1581
      %v1636 = vrcp.pop %v1584
      %v1637 = vrcp.pop %v1587
      %v1638 = vrcp.pop %v1590
      %v1639 = vrcp.pop %v1593
      %v1640 = vrcp.pop %v1596
      %v1641 = vrcp.pop %v1599
      %v1642 = vrcp.pop %v1602
      %v1643 = vrcp.pop %v1605
      %v1644 = vrcp.pop %v1608
      %v1645 = vrcp.pop %v1611
      %v1646 = vrcp.pop %v1614
      %v1647 = vmul.f32 %v1392, %v1615
      %v1648 = vmul.f32 %v1394, %v1615
      %v1649 = vmul.f32 %v1396, %v1616
      %v1650 = vmul.f32 %v1398, %v1616
      %v1651 = vmul.f32 %v1400, %v1617
      %v1652 = vmul.f32 %v1402, %v1617
      %v1653 = vmul.f32 %v1404, %v1618
      %v1654 = vmul.f32 %v1406, %v1618
      %v1655 = vmul.f32 %v1408, %v1619
      %v1656 = vmul.f32 %v1410, %v1619
      %v1657 = vmul.f32 %v1412, %v1620
      %v1658 = vmul.f32 %v1414, %v1620
      %v1659 = vmul.f32 %v1416, %v1621
      %v1660 = vmul.f32 %v1418, %v1621
      %v1661 = vmul.f32 %v1420, %v1622
      %v1662 = vmul.f32 %v1422, %v1622
      %v1663 = vmul.f32 %v1424, %v1623
      %v1664 = vmul.f32 %v1426, %v1623
      %v1665 = vmul.f32 %v1428, %v1624
      %v1666 = vmul.f32 %v1430, %v1624
      %v1667 = vmul.f32 %v1432, %v1625
      %v1668 = vmul.f32 %v1434, %v1625
      %v1669 = vmul.f32 %v1436, %v1626
      %v1670 = vmul.f32 %v1438, %v1626
      %v1671 = vmul.f32 %v1440, %v1627
      %v1672 = vmul.f32 %v1442, %v1627
      %v1673 = vmul.f32 %v1444, %v1628
      %v1674 = vmul.f32 %v1446, %v1628
      %v1675 = vmul.f32 %v1448, %v1629
      %v1676 = vmul.f32 %v1450, %v1629
      %v1677 = vmul.f32 %v1452, %v1630
      %v1678 = vmul.f32 %v1454, %v1630
      %v1679 = vmul.f32 %v1456, %v1631
      %v1680 = vmul.f32 %v1458, %v1631
      %v1681 = vmul.f32 %v1460, %v1632
      %v1682 = vmul.f32 %v1462, %v1632
      %v1683 = vmul.f32 %v1464, %v1633
      %v1684 = vmul.f32 %v1466, %v1633
      %v1685 = vmul.f32 %v1468, %v1634
      %v1686 = vmul.f32 %v1470, %v1634
      %v1687 = vmul.f32 %v1472, %v1635
      %v1688 = vmul.f32 %v1474, %v1635
      %v1689 = vmul.f32 %v1476, %v1636
      %v1690 = vmul.f32 %v1478, %v1636
      %v1691 = vmul.f32 %v1480, %v1637
      %v1692 = vmul.f32 %v1482, %v1637
      %v1693 = vmul.f32 %v1484, %v1638
      %v1694 = vmul.f32 %v1486, %v1638
      %v1695 = vmul.f32 %v1488, %v1639
      %v1696 = vmul.f32 %v1490, %v1639
      %v1697 = vmul.f32 %v1492, %v1640
      %v1698 = vmul.f32 %v1494, %v1640
      %v1699 = vmul.f32 %v1496, %v1641
      %v1700 = vmul.f32 %v1498, %v1641
      %v1701 = vmul.f32 %v1500, %v1642
      %v1702 = vmul.f32 %v1502, %v1642
      %v1703 = vmul.f32 %v1504, %v1643
      %v1704 = vmul.f32 %v1506, %v1643
      %v1705 = vmul.f32 %v1508, %v1644
      %v1706 = vmul.f32 %v1510, %v1644
      %v1707 = vmul.f32 %v1512, %v1645
      %v1708 = vmul.f32 %v1514, %v1645
      %v1709 = vmul.f32 %v1516, %v1646
      %v1710 = vmul.f32 %v1518, %v1646
      %v1711 = vpack.c.bf16 %v1649, %v1647
      %v1712 = vpack.c.bf16 %v1650, %v1648
      %v1713 = vpack.c.bf16 %v1653, %v1651
      %v1714 = vpack.c.bf16 %v1654, %v1652
      %v1715 = vpack.c.bf16 %v1657, %v1655
      %v1716 = vpack.c.bf16 %v1658, %v1656
      %v1717 = vpack.c.bf16 %v1661, %v1659
      %v1718 = vpack.c.bf16 %v1662, %v1660
      %v1719 = vpack.c.bf16 %v1665, %v1663
      %v1720 = vpack.c.bf16 %v1666, %v1664
      %v1721 = vpack.c.bf16 %v1669, %v1667
      %v1722 = vpack.c.bf16 %v1670, %v1668
      %v1723 = vpack.c.bf16 %v1673, %v1671
      %v1724 = vpack.c.bf16 %v1674, %v1672
      %v1725 = vpack.c.bf16 %v1677, %v1675
      %v1726 = vpack.c.bf16 %v1678, %v1676
      %v1727 = vpack.c.bf16 %v1681, %v1679
      %v1728 = vpack.c.bf16 %v1682, %v1680
      %v1729 = vpack.c.bf16 %v1685, %v1683
      %v1730 = vpack.c.bf16 %v1686, %v1684
      %v1731 = vpack.c.bf16 %v1689, %v1687
      %v1732 = vpack.c.bf16 %v1690, %v1688
      %v1733 = vpack.c.bf16 %v1693, %v1691
      %v1734 = vpack.c.bf16 %v1694, %v1692
      %v1735 = vpack.c.bf16 %v1697, %v1695
      %v1736 = vpack.c.bf16 %v1698, %v1696
      %v1737 = vpack.c.bf16 %v1701, %v1699
      %v1738 = vpack.c.bf16 %v1702, %v1700
      %v1739 = vpack.c.bf16 %v1705, %v1703
      %v1740 = vpack.c.bf16 %v1706, %v1704
      %v1741 = vpack.c.bf16 %v1709, %v1707
      %v1742 = vpack.c.bf16 %v1710, %v1708
      %1743 = vmatprep.subr.bf16.mxu0 %v1712
      %1744 = vmatpush1.bf16.xpose.msra.mxu0 %v1711
      %1745 = vmatprep.subr.bf16.mxu0 %v1714
      %1746 = vmatpush1.bf16.xpose.msra.mxu0 %v1713
      %1747 = vmatprep.subr.bf16.mxu0 %v1716
      %1748 = vmatpush1.bf16.xpose.msra.mxu0 %v1715
      %1749 = vmatprep.subr.bf16.mxu0 %v1718
      %1750 = vmatpush1.bf16.xpose.msra.mxu0 %v1717
      %1751 = vmatprep.subr.bf16.mxu0 %v1720
      %1752 = vmatpush1.bf16.xpose.msra.mxu0 %v1719
      %1753 = vmatprep.subr.bf16.mxu0 %v1722
      %1754 = vmatpush1.bf16.xpose.msra.mxu0 %v1721
      %1755 = vmatprep.subr.bf16.mxu0 %v1724
      %1756 = vmatpush1.bf16.xpose.msra.mxu0 %v1723
      %1757 = vmatprep.subr.bf16.mxu0 %v1726
      %1758 = vmatpush1.bf16.xpose.msra.mxu0 %v1725
      %1759 = vmatprep.subr.bf16.mxu0 %v1728
      %1760 = vmatpush1.bf16.xpose.msra.mxu0 %v1727
      %1761 = vmatprep.subr.bf16.mxu0 %v1730
      %1762 = vmatpush1.bf16.xpose.msra.mxu0 %v1729
      %1763 = vmatprep.subr.bf16.mxu0 %v1732
      %1764 = vmatpush1.bf16.xpose.msra.mxu0 %v1731
      %1765 = vmatprep.subr.bf16.mxu0 %v1734
      %1766 = vmatpush1.bf16.xpose.msra.mxu0 %v1733
      %1767 = vmatprep.subr.bf16.mxu0 %v1736
      %1768 = vmatpush1.bf16.xpose.msra.mxu0 %v1735
      %1769 = vmatprep.subr.bf16.mxu0 %v1738
      %1770 = vmatpush1.bf16.xpose.msra.mxu0 %v1737
      %1771 = vmatprep.subr.bf16.mxu0 %v1740
      %1772 = vmatpush1.bf16.xpose.msra.mxu0 %v1739
      %1773 = vmatprep.subr.bf16.mxu0 %v1742
      %1774 = vmatpush1.bf16.xpose.msra.mxu0 %v1741
      %1775 = vmatprep.mubr.bf16.mxu0 %v954
      %1776 = vmatmul.mubr.bf16.gmra.mrb[0].mxu0 %v953
      %v1777 = vpop.f32.mrb[0].mxu0
      %v1778 = vadd.f32 0.0, %v1777
      %v1779 = vpop.f32.mrb[0].mxu0
      %v1780 = vadd.f32 0.0, %v1779
      %v1781 = vpop.f32.mrb[0].mxu0
      %v1782 = vadd.f32 0.0, %v1781
      %v1783 = vpop.f32.mrb[0].mxu0
      %v1784 = vadd.f32 0.0, %v1783
      %1785 = vmatprep.mubr.bf16.mxu0 %v956
      %1786 = vmatmul.mubr.bf16.gmra.mrb[0].mxu0 %v955
      %v1787 = vpop.f32.mrb[0].mxu0
      %v1788 = vadd.f32 0.0, %v1787
      %v1789 = vpop.f32.mrb[0].mxu0
      %v1790 = vadd.f32 0.0, %v1789
      %v1791 = vpop.f32.mrb[0].mxu0
      %v1792 = vadd.f32 0.0, %v1791
      %v1793 = vpop.f32.mrb[0].mxu0
      %v1794 = vadd.f32 0.0, %v1793
      %1795 = vdwg.mxu0
      %v1796 = vmul.f32 %v719, 0.17677669
      %v1797 = vmul.f32 %v721, 0.17677669
      %v1798 = vmul.f32 %v723, 0.17677669
      %v1799 = vmul.f32 %v725, 0.17677669
      %v1800 = vmul.f32 %v729, 0.17677669
      %v1801 = vmul.f32 %v731, 0.17677669
      %v1802 = vmul.f32 %v733, 0.17677669
      %v1803 = vmul.f32 %v735, 0.17677669
      %v1804 = vpack.c.bf16 %v1798, %v1796
      %v1805 = vpack.c.bf16 %v1799, %v1797
      %v1806 = vpack.c.bf16 %v1802, %v1800
      %v1807 = vpack.c.bf16 %v1803, %v1801
      %v1808 = vpack.c.bf16 %v803, %v799
      %v1809 = vpack.c.bf16 %v805, %v801
      %v1810 = vpack.c.bf16 %v813, %v809
      %v1811 = vpack.c.bf16 %v815, %v811
      %v1812 = vpack.c.bf16 %v883, %v879
      %v1813 = vpack.c.bf16 %v885, %v881
      %v1814 = vpack.c.bf16 %v893, %v889
      %v1815 = vpack.c.bf16 %v895, %v891
      %1816 = vxpose.xlu0.c.b16.start [1/8] %v1804, 128
      %1817 = vxpose.xlu0.c.b16.cont [2/8] %v1806, 128
      %1818 = vxpose.xlu0.c.b16.cont [3/8] 0, 128
      %1819 = vxpose.xlu0.c.b16.cont [4/8] 0, 128
      %1820 = vxpose.xlu0.c.b16.cont [5/8] 0, 128
      %1821 = vxpose.xlu0.c.b16.cont [6/8] 0, 128
      %1822 = vxpose.xlu0.c.b16.cont [7/8] 0, 128
      %1823 = vxpose.xlu0.c.b16.end [8/8] 0, 128
      %v1824 = vpop.trf.xlu0
      %v1825 = vpop.trf.xlu0
      %v1826 = vpop.trf.xlu0
      %v1827 = vpop.trf.xlu0
      %v1828 = vpop.trf.xlu0
      %v1829 = vpop.trf.xlu0
      %v1830 = vpop.trf.xlu0
      %v1831 = vpop.trf.xlu0
      %1832 = vxpose.xlu0.c.b16.start [1/8] %v1805, 128
      %1833 = vxpose.xlu0.c.b16.cont [2/8] %v1807, 128
      %1834 = vxpose.xlu0.c.b16.cont [3/8] 0, 128
      %1835 = vxpose.xlu0.c.b16.cont [4/8] 0, 128
      %1836 = vxpose.xlu0.c.b16.cont [5/8] 0, 128
      %1837 = vxpose.xlu0.c.b16.cont [6/8] 0, 128
      %1838 = vxpose.xlu0.c.b16.cont [7/8] 0, 128
      %1839 = vxpose.xlu0.c.b16.end [8/8] 0, 128
      %v1840 = vpop.trf.xlu0
      %v1841 = vpop.trf.xlu0
      %v1842 = vpop.trf.xlu0
      %v1843 = vpop.trf.xlu0
      %v1844 = vpop.trf.xlu0
      %v1845 = vpop.trf.xlu0
      %v1846 = vpop.trf.xlu0
      %v1847 = vpop.trf.xlu0
      %v1849 = vsel %vm989, %v1824, 0
      %v1852 = vsel %vm989, %v1825, 0
      %v1855 = vsel %vm989, %v1826, 0
      %v1858 = vsel %vm989, %v1827, 0
      %v1861 = vsel %vm989, %v1828, 0
      %v1864 = vsel %vm989, %v1829, 0
      %v1867 = vsel %vm989, %v1830, 0
      %v1870 = vsel %vm989, %v1831, 0
      %v1873 = vsel %vm989, %v1840, 0
      %v1876 = vsel %vm989, %v1841, 0
      %v1879 = vsel %vm989, %v1842, 0
      %v1882 = vsel %vm989, %v1843, 0
      %v1885 = vsel %vm989, %v1844, 0
      %v1888 = vsel %vm989, %v1845, 0
      %v1891 = vsel %vm989, %v1846, 0
      %v1894 = vsel %vm989, %v1847, 0
      %1896 = vmatprep.subr.bf16.mxu0 %v1809
      %1897 = vmatpush1.bf16.msra.mxu0 %v1808
      %1898 = vmatprep.subr.bf16.mxu0 %v1811
      %1899 = vmatpush1.bf16.msra.mxu0 %v1810
      %1900 = vmatprep.subr.bf16.mxu0 0
      %1901 = vmatpush1.bf16.msra.mxu0 0
      %1902 = vmatprep.subr.bf16.mxu0 0
      %1903 = vmatpush1.bf16.msra.mxu0 0
      %1904 = vmatprep.subr.bf16.mxu0 0
      %1905 = vmatpush1.bf16.msra.mxu0 0
      %1906 = vmatprep.subr.bf16.mxu0 0
      %1907 = vmatpush1.bf16.msra.mxu0 0
      %1908 = vmatprep.subr.bf16.mxu0 0
      %1909 = vmatpush1.bf16.msra.mxu0 0
      %1910 = vmatprep.subr.bf16.mxu0 0
      %1911 = vmatpush1.bf16.msra.mxu0 0
      %1912 = vmatprep.subr.bf16.mxu0 0
      %1913 = vmatpush1.bf16.msra.mxu0 0
      %1914 = vmatprep.subr.bf16.mxu0 0
      %1915 = vmatpush1.bf16.msra.mxu0 0
      %1916 = vmatprep.subr.bf16.mxu0 0
      %1917 = vmatpush1.bf16.msra.mxu0 0
      %1918 = vmatprep.subr.bf16.mxu0 0
      %1919 = vmatpush1.bf16.msra.mxu0 0
      %1920 = vmatprep.subr.bf16.mxu0 0
      %1921 = vmatpush1.bf16.msra.mxu0 0
      %1922 = vmatprep.subr.bf16.mxu0 0
      %1923 = vmatpush1.bf16.msra.mxu0 0
      %1924 = vmatprep.subr.bf16.mxu0 0
      %1925 = vmatpush1.bf16.msra.mxu0 0
      %1926 = vmatprep.subr.bf16.mxu0 0
      %1927 = vmatpush1.bf16.msra.mxu0 0
      %1928 = vmatprep.mubr.bf16.mxu0 0
      %1929 = vmatmul.mubr.bf16.gmra.mrb[0].mxu0 %v1849
      %v1930 = vpop.f32.mrb[0].mxu0
      %v1931 = vadd.f32 0.0, %v1930
      %v1932 = vpop.f32.mrb[0].mxu0
      %v1933 = vadd.f32 0.0, %v1932
      %v1934 = vpop.f32.mrb[0].mxu0
      %v1935 = vadd.f32 0.0, %v1934
      %v1936 = vpop.f32.mrb[0].mxu0
      %v1937 = vadd.f32 0.0, %v1936
      %1938 = vmatprep.mubr.bf16.mxu0 0
      %1939 = vmatmul.mubr.bf16.gmra.mrb[0].mxu0 %v1852
      %v1940 = vpop.f32.mrb[0].mxu0
      %v1941 = vadd.f32 0.0, %v1940
      %v1942 = vpop.f32.mrb[0].mxu0
      %v1943 = vadd.f32 0.0, %v1942
      %v1944 = vpop.f32.mrb[0].mxu0
      %v1945 = vadd.f32 0.0, %v1944
      %v1946 = vpop.f32.mrb[0].mxu0
      %v1947 = vadd.f32 0.0, %v1946
      %1948 = vmatprep.mubr.bf16.mxu0 0
      %1949 = vmatmul.mubr.bf16.gmra.mrb[0].mxu0 %v1855
      %v1950 = vpop.f32.mrb[0].mxu0
      %v1951 = vadd.f32 0.0, %v1950
      %v1952 = vpop.f32.mrb[0].mxu0
      %v1953 = vadd.f32 0.0, %v1952
      %v1954 = vpop.f32.mrb[0].mxu0
      %v1955 = vadd.f32 0.0, %v1954
      %v1956 = vpop.f32.mrb[0].mxu0
      %v1957 = vadd.f32 0.0, %v1956
      %1958 = vmatprep.mubr.bf16.mxu0 0
      %1959 = vmatmul.mubr.bf16.gmra.mrb[0].mxu0 %v1858
      %v1960 = vpop.f32.mrb[0].mxu0
      %v1961 = vadd.f32 0.0, %v1960
      %v1962 = vpop.f32.mrb[0].mxu0
      %v1963 = vadd.f32 0.0, %v1962
      %v1964 = vpop.f32.mrb[0].mxu0
      %v1965 = vadd.f32 0.0, %v1964
      %v1966 = vpop.f32.mrb[0].mxu0
      %v1967 = vadd.f32 0.0, %v1966
      %1968 = vmatprep.mubr.bf16.mxu0 0
      %1969 = vmatmul.mubr.bf16.gmra.mrb[0].mxu0 %v1861
      %v1970 = vpop.f32.mrb[0].mxu0
      %v1971 = vadd.f32 0.0, %v1970
      %v1972 = vpop.f32.mrb[0].mxu0
      %v1973 = vadd.f32 0.0, %v1972
      %v1974 = vpop.f32.mrb[0].mxu0
      %v1975 = vadd.f32 0.0, %v1974
      %v1976 = vpop.f32.mrb[0].mxu0
      %v1977 = vadd.f32 0.0, %v1976
      %1978 = vmatprep.mubr.bf16.mxu0 0
      %1979 = vmatmul.mubr.bf16.gmra.mrb[0].mxu0 %v1864
      %v1980 = vpop.f32.mrb[0].mxu0
      %v1981 = vadd.f32 0.0, %v1980
      %v1982 = vpop.f32.mrb[0].mxu0
      %v1983 = vadd.f32 0.0, %v1982
      %v1984 = vpop.f32.mrb[0].mxu0
      %v1985 = vadd.f32 0.0, %v1984
      %v1986 = vpop.f32.mrb[0].mxu0
      %v1987 = vadd.f32 0.0, %v1986
      %1988 = vmatprep.mubr.bf16.mxu0 0
      %1989 = vmatmul.mubr.bf16.gmra.mrb[0].mxu0 %v1867
      %v1990 = vpop.f32.mrb[0].mxu0
      %v1991 = vadd.f32 0.0, %v1990
      %v1992 = vpop.f32.mrb[0].mxu0
      %v1993 = vadd.f32 0.0, %v1992
      %v1994 = vpop.f32.mrb[0].mxu0
      %v1995 = vadd.f32 0.0, %v1994
      %v1996 = vpop.f32.mrb[0].mxu0
      %v1997 = vadd.f32 0.0, %v1996
      %1998 = vmatprep.mubr.bf16.mxu0 0
      %1999 = vmatmul.mubr.bf16.gmra.mrb[0].mxu0 %v1870
      %v2000 = vpop.f32.mrb[0].mxu0
      %v2001 = vadd.f32 0.0, %v2000
      %v2002 = vpop.f32.mrb[0].mxu0
      %v2003 = vadd.f32 0.0, %v2002
      %v2004 = vpop.f32.mrb[0].mxu0
      %v2005 = vadd.f32 0.0, %v2004
      %v2006 = vpop.f32.mrb[0].mxu0
      %v2007 = vadd.f32 0.0, %v2006
      %2008 = vmatprep.mubr.bf16.mxu0 0
      %2009 = vmatmul.mubr.bf16.gmra.mrb[0].mxu0 %v1873
      %v2010 = vpop.f32.mrb[0].mxu0
      %v2011 = vadd.f32 0.0, %v2010
      %v2012 = vpop.f32.mrb[0].mxu0
      %v2013 = vadd.f32 0.0, %v2012
      %v2014 = vpop.f32.mrb[0].mxu0
      %v2015 = vadd.f32 0.0, %v2014
      %v2016 = vpop.f32.mrb[0].mxu0
      %v2017 = vadd.f32 0.0, %v2016
      %2018 = vmatprep.mubr.bf16.mxu0 0
      %2019 = vmatmul.mubr.bf16.gmra.mrb[0].mxu0 %v1876
      %v2020 = vpop.f32.mrb[0].mxu0
      %v2021 = vadd.f32 0.0, %v2020
      %v2022 = vpop.f32.mrb[0].mxu0
      %v2023 = vadd.f32 0.0, %v2022
      %v2024 = vpop.f32.mrb[0].mxu0
      %v2025 = vadd.f32 0.0, %v2024
      %v2026 = vpop.f32.mrb[0].mxu0
      %v2027 = vadd.f32 0.0, %v2026
      %2028 = vmatprep.mubr.bf16.mxu0 0
      %2029 = vmatmul.mubr.bf16.gmra.mrb[0].mxu0 %v1879
      %v2030 = vpop.f32.mrb[0].mxu0
      %v2031 = vadd.f32 0.0, %v2030
      %v2032 = vpop.f32.mrb[0].mxu0
      %v2033 = vadd.f32 0.0, %v2032
      %v2034 = vpop.f32.mrb[0].mxu0
      %v2035 = vadd.f32 0.0, %v2034
      %v2036 = vpop.f32.mrb[0].mxu0
      %v2037 = vadd.f32 0.0, %v2036
      %2038 = vmatprep.mubr.bf16.mxu0 0
      %2039 = vmatmul.mubr.bf16.gmra.mrb[0].mxu0 %v1882
      %v2040 = vpop.f32.mrb[0].mxu0
      %v2041 = vadd.f32 0.0, %v2040
      %v2042 = vpop.f32.mrb[0].mxu0
      %v2043 = vadd.f32 0.0, %v2042
      %v2044 = vpop.f32.mrb[0].mxu0
      %v2045 = vadd.f32 0.0, %v2044
      %v2046 = vpop.f32.mrb[0].mxu0
      %v2047 = vadd.f32 0.0, %v2046
      %2048 = vmatprep.mubr.bf16.mxu0 0
      %2049 = vmatmul.mubr.bf16.gmra.mrb[0].mxu0 %v1885
      %v2050 = vpop.f32.mrb[0].mxu0
      %v2051 = vadd.f32 0.0, %v2050
      %v2052 = vpop.f32.mrb[0].mxu0
      %v2053 = vadd.f32 0.0, %v2052
      %v2054 = vpop.f32.mrb[0].mxu0
      %v2055 = vadd.f32 0.0, %v2054
      %v2056 = vpop.f32.mrb[0].mxu0
      %v2057 = vadd.f32 0.0, %v2056
      %2058 = vmatprep.mubr.bf16.mxu0 0
      %2059 = vmatmul.mubr.bf16.gmra.mrb[0].mxu0 %v1888
      %v2060 = vpop.f32.mrb[0].mxu0
      %v2061 = vadd.f32 0.0, %v2060
      %v2062 = vpop.f32.mrb[0].mxu0
      %v2063 = vadd.f32 0.0, %v2062
      %v2064 = vpop.f32.mrb[0].mxu0
      %v2065 = vadd.f32 0.0, %v2064
      %v2066 = vpop.f32.mrb[0].mxu0
      %v2067 = vadd.f32 0.0, %v2066
      %2068 = vmatprep.mubr.bf16.mxu0 0
      %2069 = vmatmul.mubr.bf16.gmra.mrb[0].mxu0 %v1891
      %v2070 = vpop.f32.mrb[0].mxu0
      %v2071 = vadd.f32 0.0, %v2070
      %v2072 = vpop.f32.mrb[0].mxu0
      %v2073 = vadd.f32 0.0, %v2072
      %v2074 = vpop.f32.mrb[0].mxu0
      %v2075 = vadd.f32 0.0, %v2074
      %v2076 = vpop.f32.mrb[0].mxu0
      %v2077 = vadd.f32 0.0, %v2076
      %2078 = vmatprep.mubr.bf16.mxu0 0
      %2079 = vmatmul.mubr.bf16.gmra.mrb[0].mxu0 %v1894
      %v2080 = vpop.f32.mrb[0].mxu0
      %v2081 = vadd.f32 0.0, %v2080
      %v2082 = vpop.f32.mrb[0].mxu0
      %v2083 = vadd.f32 0.0, %v2082
      %v2084 = vpop.f32.mrb[0].mxu0
      %v2085 = vadd.f32 0.0, %v2084
      %v2086 = vpop.f32.mrb[0].mxu0
      %v2087 = vadd.f32 0.0, %v2086
      %2088 = vdwg.mxu0
      %v2089 = vmax.f32 %v1931, %v1933
      %2090 = vmax.xlane.f32.xlu0 %v2089
      %v2091 = vpop.xlane.xlu0 %2090
      %v2092 = vmax.f32 %v1935, %v1937
      %2093 = vmax.xlane.f32.xlu0 %v2092
      %v2094 = vpop.xlane.xlu0 %2093
      %v2095 = vmax.f32 %v1941, %v1943
      %2096 = vmax.xlane.f32.xlu0 %v2095
      %v2097 = vpop.xlane.xlu0 %2096
      %v2098 = vmax.f32 %v1945, %v1947
      %2099 = vmax.xlane.f32.xlu0 %v2098
      %v2100 = vpop.xlane.xlu0 %2099
      %v2101 = vmax.f32 %v1951, %v1953
      %2102 = vmax.xlane.f32.xlu0 %v2101
      %v2103 = vpop.xlane.xlu0 %2102
      %v2104 = vmax.f32 %v1955, %v1957
      %2105 = vmax.xlane.f32.xlu0 %v2104
      %v2106 = vpop.xlane.xlu0 %2105
      %v2107 = vmax.f32 %v1961, %v1963
      %2108 = vmax.xlane.f32.xlu0 %v2107
      %v2109 = vpop.xlane.xlu0 %2108
      %v2110 = vmax.f32 %v1965, %v1967
      %2111 = vmax.xlane.f32.xlu0 %v2110
      %v2112 = vpop.xlane.xlu0 %2111
      %v2113 = vmax.f32 %v1971, %v1973
      %2114 = vmax.xlane.f32.xlu0 %v2113
      %v2115 = vpop.xlane.xlu0 %2114
      %v2116 = vmax.f32 %v1975, %v1977
      %2117 = vmax.xlane.f32.xlu0 %v2116
      %v2118 = vpop.xlane.xlu0 %2117
      %v2119 = vmax.f32 %v1981, %v1983
      %2120 = vmax.xlane.f32.xlu0 %v2119
      %v2121 = vpop.xlane.xlu0 %2120
      %v2122 = vmax.f32 %v1985, %v1987
      %2123 = vmax.xlane.f32.xlu0 %v2122
      %v2124 = vpop.xlane.xlu0 %2123
      %v2125 = vmax.f32 %v1991, %v1993
      %2126 = vmax.xlane.f32.xlu0 %v2125
      %v2127 = vpop.xlane.xlu0 %2126
      %v2128 = vmax.f32 %v1995, %v1997
      %2129 = vmax.xlane.f32.xlu0 %v2128
      %v2130 = vpop.xlane.xlu0 %2129
      %v2131 = vmax.f32 %v2001, %v2003
      %2132 = vmax.xlane.f32.xlu0 %v2131
      %v2133 = vpop.xlane.xlu0 %2132
      %v2134 = vmax.f32 %v2005, %v2007
      %2135 = vmax.xlane.f32.xlu0 %v2134
      %v2136 = vpop.xlane.xlu0 %2135
      %v2137 = vmax.f32 %v2011, %v2013
      %2138 = vmax.xlane.f32.xlu0 %v2137
      %v2139 = vpop.xlane.xlu0 %2138
      %v2140 = vmax.f32 %v2015, %v2017
      %2141 = vmax.xlane.f32.xlu0 %v2140
      %v2142 = vpop.xlane.xlu0 %2141
      %v2143 = vmax.f32 %v2021, %v2023
      %2144 = vmax.xlane.f32.xlu0 %v2143
      %v2145 = vpop.xlane.xlu0 %2144
      %v2146 = vmax.f32 %v2025, %v2027
      %2147 = vmax.xlane.f32.xlu0 %v2146
      %v2148 = vpop.xlane.xlu0 %2147
      %v2149 = vmax.f32 %v2031, %v2033
      %2150 = vmax.xlane.f32.xlu0 %v2149
      %v2151 = vpop.xlane.xlu0 %2150
      %v2152 = vmax.f32 %v2035, %v2037
      %2153 = vmax.xlane.f32.xlu0 %v2152
      %v2154 = vpop.xlane.xlu0 %2153
      %v2155 = vmax.f32 %v2041, %v2043
      %2156 = vmax.xlane.f32.xlu0 %v2155
      %v2157 = vpop.xlane.xlu0 %2156
      %v2158 = vmax.f32 %v2045, %v2047
      %2159 = vmax.xlane.f32.xlu0 %v2158
      %v2160 = vpop.xlane.xlu0 %2159
      %v2161 = vmax.f32 %v2051, %v2053
      %2162 = vmax.xlane.f32.xlu0 %v2161
      %v2163 = vpop.xlane.xlu0 %2162
      %v2164 = vmax.f32 %v2055, %v2057
      %2165 = vmax.xlane.f32.xlu0 %v2164
      %v2166 = vpop.xlane.xlu0 %2165
      %v2167 = vmax.f32 %v2061, %v2063
      %2168 = vmax.xlane.f32.xlu0 %v2167
      %v2169 = vpop.xlane.xlu0 %2168
      %v2170 = vmax.f32 %v2065, %v2067
      %2171 = vmax.xlane.f32.xlu0 %v2170
      %v2172 = vpop.xlane.xlu0 %2171
      %v2173 = vmax.f32 %v2071, %v2073
      %2174 = vmax.xlane.f32.xlu0 %v2173
      %v2175 = vpop.xlane.xlu0 %2174
      %v2176 = vmax.f32 %v2075, %v2077
      %2177 = vmax.xlane.f32.xlu0 %v2176
      %v2178 = vpop.xlane.xlu0 %2177
      %v2179 = vmax.f32 %v2081, %v2083
      %2180 = vmax.xlane.f32.xlu0 %v2179
      %v2181 = vpop.xlane.xlu0 %2180
      %v2182 = vmax.f32 %v2085, %v2087
      %2183 = vmax.xlane.f32.xlu0 %v2182
      %v2184 = vpop.xlane.xlu0 %2183
      %v2185 = vsub.f32 %v1931, %v2091
      %v2186 = vsub.f32 %v1933, %v2091
      %v2187 = vsub.f32 %v1935, %v2094
      %v2188 = vsub.f32 %v1937, %v2094
      %v2189 = vsub.f32 %v1941, %v2097
      %v2190 = vsub.f32 %v1943, %v2097
      %v2191 = vsub.f32 %v1945, %v2100
      %v2192 = vsub.f32 %v1947, %v2100
      %v2193 = vsub.f32 %v1951, %v2103
      %v2194 = vsub.f32 %v1953, %v2103
      %v2195 = vsub.f32 %v1955, %v2106
      %v2196 = vsub.f32 %v1957, %v2106
      %v2197 = vsub.f32 %v1961, %v2109
      %v2198 = vsub.f32 %v1963, %v2109
      %v2199 = vsub.f32 %v1965, %v2112
      %v2200 = vsub.f32 %v1967, %v2112
      %v2201 = vsub.f32 %v1971, %v2115
      %v2202 = vsub.f32 %v1973, %v2115
      %v2203 = vsub.f32 %v1975, %v2118
      %v2204 = vsub.f32 %v1977, %v2118
      %v2205 = vsub.f32 %v1981, %v2121
      %v2206 = vsub.f32 %v1983, %v2121
      %v2207 = vsub.f32 %v1985, %v2124
      %v2208 = vsub.f32 %v1987, %v2124
      %v2209 = vsub.f32 %v1991, %v2127
      %v2210 = vsub.f32 %v1993, %v2127
      %v2211 = vsub.f32 %v1995, %v2130
      %v2212 = vsub.f32 %v1997, %v2130
      %v2213 = vsub.f32 %v2001, %v2133
      %v2214 = vsub.f32 %v2003, %v2133
      %v2215 = vsub.f32 %v2005, %v2136
      %v2216 = vsub.f32 %v2007, %v2136
      %v2217 = vsub.f32 %v2011, %v2139
      %v2218 = vsub.f32 %v2013, %v2139
      %v2219 = vsub.f32 %v2015, %v2142
      %v2220 = vsub.f32 %v2017, %v2142
      %v2221 = vsub.f32 %v2021, %v2145
      %v2222 = vsub.f32 %v2023, %v2145
      %v2223 = vsub.f32 %v2025, %v2148
      %v2224 = vsub.f32 %v2027, %v2148
      %v2225 = vsub.f32 %v2031, %v2151
      %v2226 = vsub.f32 %v2033, %v2151
      %v2227 = vsub.f32 %v2035, %v2154
      %v2228 = vsub.f32 %v2037, %v2154
      %v2229 = vsub.f32 %v2041, %v2157
      %v2230 = vsub.f32 %v2043, %v2157
      %v2231 = vsub.f32 %v2045, %v2160
      %v2232 = vsub.f32 %v2047, %v2160
      %v2233 = vsub.f32 %v2051, %v2163
      %v2234 = vsub.f32 %v2053, %v2163
      %v2235 = vsub.f32 %v2055, %v2166
      %v2236 = vsub.f32 %v2057, %v2166
      %v2237 = vsub.f32 %v2061, %v2169
      %v2238 = vsub.f32 %v2063, %v2169
      %v2239 = vsub.f32 %v2065, %v2172
      %v2240 = vsub.f32 %v2067, %v2172
      %v2241 = vsub.f32 %v2071, %v2175
      %v2242 = vsub.f32 %v2073, %v2175
      %v2243 = vsub.f32 %v2075, %v2178
      %v2244 = vsub.f32 %v2077, %v2178
      %v2245 = vsub.f32 %v2081, %v2181
      %v2246 = vsub.f32 %v2083, %v2181
      %v2247 = vsub.f32 %v2085, %v2184
      %v2248 = vsub.f32 %v2087, %v2184
      %v2249 = vmul.f32 %v2185, 1.442695
      %v2250 = vpow.pop %v2249
      %v2251 = vmul.f32 %v2186, 1.442695
      %v2252 = vpow.pop %v2251
      %v2253 = vmul.f32 %v2187, 1.442695
      %v2254 = vpow.pop %v2253
      %v2255 = vmul.f32 %v2188, 1.442695
      %v2256 = vpow.pop %v2255
      %v2257 = vmul.f32 %v2189, 1.442695
      %v2258 = vpow.pop %v2257
      %v2259 = vmul.f32 %v2190, 1.442695
      %v2260 = vpow.pop %v2259
      %v2261 = vmul.f32 %v2191, 1.442695
      %v2262 = vpow.pop %v2261
      %v2263 = vmul.f32 %v2192, 1.442695
      %v2264 = vpow.pop %v2263
      %v2265 = vmul.f32 %v2193, 1.442695
      %v2266 = vpow.pop %v2265
      %v2267 = vmul.f32 %v2194, 1.442695
      %v2268 = vpow.pop %v2267
      %v2269 = vmul.f32 %v2195, 1.442695
      %v2270 = vpow.pop %v2269
      %v2271 = vmul.f32 %v2196, 1.442695
      %v2272 = vpow.pop %v2271
      %v2273 = vmul.f32 %v2197, 1.442695
      %v2274 = vpow.pop %v2273
      %v2275 = vmul.f32 %v2198, 1.442695
      %v2276 = vpow.pop %v2275
      %v2277 = vmul.f32 %v2199, 1.442695
      %v2278 = vpow.pop %v2277
      %v2279 = vmul.f32 %v2200, 1.442695
      %v2280 = vpow.pop %v2279
      %v2281 = vmul.f32 %v2201, 1.442695
      %v2282 = vpow.pop %v2281
      %v2283 = vmul.f32 %v2202, 1.442695
      %v2284 = vpow.pop %v2283
      %v2285 = vmul.f32 %v2203, 1.442695
      %v2286 = vpow.pop %v2285
      %v2287 = vmul.f32 %v2204, 1.442695
      %v2288 = vpow.pop %v2287
      %v2289 = vmul.f32 %v2205, 1.442695
      %v2290 = vpow.pop %v2289
      %v2291 = vmul.f32 %v2206, 1.442695
      %v2292 = vpow.pop %v2291
      %v2293 = vmul.f32 %v2207, 1.442695
      %v2294 = vpow.pop %v2293
      %v2295 = vmul.f32 %v2208, 1.442695
      %v2296 = vpow.pop %v2295
      %v2297 = vmul.f32 %v2209, 1.442695
      %v2298 = vpow.pop %v2297
      %v2299 = vmul.f32 %v2210, 1.442695
      %v2300 = vpow.pop %v2299
      %v2301 = vmul.f32 %v2211, 1.442695
      %v2302 = vpow.pop %v2301
      %v2303 = vmul.f32 %v2212, 1.442695
      %v2304 = vpow.pop %v2303
      %v2305 = vmul.f32 %v2213, 1.442695
      %v2306 = vpow.pop %v2305
      %v2307 = vmul.f32 %v2214, 1.442695
      %v2308 = vpow.pop %v2307
      %v2309 = vmul.f32 %v2215, 1.442695
      %v2310 = vpow.pop %v2309
      %v2311 = vmul.f32 %v2216, 1.442695
      %v2312 = vpow.pop %v2311
      %v2313 = vmul.f32 %v2217, 1.442695
      %v2314 = vpow.pop %v2313
      %v2315 = vmul.f32 %v2218, 1.442695
      %v2316 = vpow.pop %v2315
      %v2317 = vmul.f32 %v2219, 1.442695
      %v2318 = vpow.pop %v2317
      %v2319 = vmul.f32 %v2220, 1.442695
      %v2320 = vpow.pop %v2319
      %v2321 = vmul.f32 %v2221, 1.442695
      %v2322 = vpow.pop %v2321
      %v2323 = vmul.f32 %v2222, 1.442695
      %v2324 = vpow.pop %v2323
      %v2325 = vmul.f32 %v2223, 1.442695
      %v2326 = vpow.pop %v2325
      %v2327 = vmul.f32 %v2224, 1.442695
      %v2328 = vpow.pop %v2327
      %v2329 = vmul.f32 %v2225, 1.442695
      %v2330 = vpow.pop %v2329
      %v2331 = vmul.f32 %v2226, 1.442695
      %v2332 = vpow.pop %v2331
      %v2333 = vmul.f32 %v2227, 1.442695
      %v2334 = vpow.pop %v2333
      %v2335 = vmul.f32 %v2228, 1.442695
      %v2336 = vpow.pop %v2335
      %v2337 = vmul.f32 %v2229, 1.442695
      %v2338 = vpow.pop %v2337
      %v2339 = vmul.f32 %v2230, 1.442695
      %v2340 = vpow.pop %v2339
      %v2341 = vmul.f32 %v2231, 1.442695
      %v2342 = vpow.pop %v2341
      %v2343 = vmul.f32 %v2232, 1.442695
      %v2344 = vpow.pop %v2343
      %v2345 = vmul.f32 %v2233, 1.442695
      %v2346 = vpow.pop %v2345
      %v2347 = vmul.f32 %v2234, 1.442695
      %v2348 = vpow.pop %v2347
      %v2349 = vmul.f32 %v2235, 1.442695
      %v2350 = vpow.pop %v2349
      %v2351 = vmul.f32 %v2236, 1.442695
      %v2352 = vpow.pop %v2351
      %v2353 = vmul.f32 %v2237, 1.442695
      %v2354 = vpow.pop %v2353
      %v2355 = vmul.f32 %v2238, 1.442695
      %v2356 = vpow.pop %v2355
      %v2357 = vmul.f32 %v2239, 1.442695
      %v2358 = vpow.pop %v2357
      %v2359 = vmul.f32 %v2240, 1.442695
      %v2360 = vpow.pop %v2359
      %v2361 = vmul.f32 %v2241, 1.442695
      %v2362 = vpow.pop %v2361
      %v2363 = vmul.f32 %v2242, 1.442695
      %v2364 = vpow.pop %v2363
      %v2365 = vmul.f32 %v2243, 1.442695
      %v2366 = vpow.pop %v2365
      %v2367 = vmul.f32 %v2244, 1.442695
      %v2368 = vpow.pop %v2367
      %v2369 = vmul.f32 %v2245, 1.442695
      %v2370 = vpow.pop %v2369
      %v2371 = vmul.f32 %v2246, 1.442695
      %v2372 = vpow.pop %v2371
      %v2373 = vmul.f32 %v2247, 1.442695
      %v2374 = vpow.pop %v2373
      %v2375 = vmul.f32 %v2248, 1.442695
      %v2376 = vpow.pop %v2375
      %v2377 = vadd.f32 %v2250, %v2252
      %2378 = vadd.xlane.f32.xlu0 %v2377
      %v2379 = vpop.xlane.xlu0 %2378
      %v2380 = vadd.f32 %v2254, %v2256
      %2381 = vadd.xlane.f32.xlu0 %v2380
      %v2382 = vpop.xlane.xlu0 %2381
      %v2383 = vadd.f32 %v2258, %v2260
      %2384 = vadd.xlane.f32.xlu0 %v2383
      %v2385 = vpop.xlane.xlu0 %2384
      %v2386 = vadd.f32 %v2262, %v2264
      %2387 = vadd.xlane.f32.xlu0 %v2386
      %v2388 = vpop.xlane.xlu0 %2387
      %v2389 = vadd.f32 %v2266, %v2268
      %2390 = vadd.xlane.f32.xlu0 %v2389
      %v2391 = vpop.xlane.xlu0 %2390
      %v2392 = vadd.f32 %v2270, %v2272
      %2393 = vadd.xlane.f32.xlu0 %v2392
      %v2394 = vpop.xlane.xlu0 %2393
      %v2395 = vadd.f32 %v2274, %v2276
      %2396 = vadd.xlane.f32.xlu0 %v2395
      %v2397 = vpop.xlane.xlu0 %2396
      %v2398 = vadd.f32 %v2278, %v2280
      %2399 = vadd.xlane.f32.xlu0 %v2398
      %v2400 = vpop.xlane.xlu0 %2399
      %v2401 = vadd.f32 %v2282, %v2284
      %2402 = vadd.xlane.f32.xlu0 %v2401
      %v2403 = vpop.xlane.xlu0 %2402
      %v2404 = vadd.f32 %v2286, %v2288
      %2405 = vadd.xlane.f32.xlu0 %v2404
      %v2406 = vpop.xlane.xlu0 %2405
      %v2407 = vadd.f32 %v2290, %v2292
      %2408 = vadd.xlane.f32.xlu0 %v2407
      %v2409 = vpop.xlane.xlu0 %2408
      %v2410 = vadd.f32 %v2294, %v2296
      %2411 = vadd.xlane.f32.xlu0 %v2410
      %v2412 = vpop.xlane.xlu0 %2411
      %v2413 = vadd.f32 %v2298, %v2300
      %2414 = vadd.xlane.f32.xlu0 %v2413
      %v2415 = vpop.xlane.xlu0 %2414
      %v2416 = vadd.f32 %v2302, %v2304
      %2417 = vadd.xlane.f32.xlu0 %v2416
      %v2418 = vpop.xlane.xlu0 %2417
      %v2419 = vadd.f32 %v2306, %v2308
      %2420 = vadd.xlane.f32.xlu0 %v2419
      %v2421 = vpop.xlane.xlu0 %2420
      %v2422 = vadd.f32 %v2310, %v2312
      %2423 = vadd.xlane.f32.xlu0 %v2422
      %v2424 = vpop.xlane.xlu0 %2423
      %v2425 = vadd.f32 %v2314, %v2316
      %2426 = vadd.xlane.f32.xlu0 %v2425
      %v2427 = vpop.xlane.xlu0 %2426
      %v2428 = vadd.f32 %v2318, %v2320
      %2429 = vadd.xlane.f32.xlu0 %v2428
      %v2430 = vpop.xlane.xlu0 %2429
      %v2431 = vadd.f32 %v2322, %v2324
      %2432 = vadd.xlane.f32.xlu0 %v2431
      %v2433 = vpop.xlane.xlu0 %2432
      %v2434 = vadd.f32 %v2326, %v2328
      %2435 = vadd.xlane.f32.xlu0 %v2434
      %v2436 = vpop.xlane.xlu0 %2435
      %v2437 = vadd.f32 %v2330, %v2332
      %2438 = vadd.xlane.f32.xlu0 %v2437
      %v2439 = vpop.xlane.xlu0 %2438
      %v2440 = vadd.f32 %v2334, %v2336
      %2441 = vadd.xlane.f32.xlu0 %v2440
      %v2442 = vpop.xlane.xlu0 %2441
      %v2443 = vadd.f32 %v2338, %v2340
      %2444 = vadd.xlane.f32.xlu0 %v2443
      %v2445 = vpop.xlane.xlu0 %2444
      %v2446 = vadd.f32 %v2342, %v2344
      %2447 = vadd.xlane.f32.xlu0 %v2446
      %v2448 = vpop.xlane.xlu0 %2447
      %v2449 = vadd.f32 %v2346, %v2348
      %2450 = vadd.xlane.f32.xlu0 %v2449
      %v2451 = vpop.xlane.xlu0 %2450
      %v2452 = vadd.f32 %v2350, %v2352
      %2453 = vadd.xlane.f32.xlu0 %v2452
      %v2454 = vpop.xlane.xlu0 %2453
      %v2455 = vadd.f32 %v2354, %v2356
      %2456 = vadd.xlane.f32.xlu0 %v2455
      %v2457 = vpop.xlane.xlu0 %2456
      %v2458 = vadd.f32 %v2358, %v2360
      %2459 = vadd.xlane.f32.xlu0 %v2458
      %v2460 = vpop.xlane.xlu0 %2459
      %v2461 = vadd.f32 %v2362, %v2364
      %2462 = vadd.xlane.f32.xlu0 %v2461
      %v2463 = vpop.xlane.xlu0 %2462
      %v2464 = vadd.f32 %v2366, %v2368
      %2465 = vadd.xlane.f32.xlu0 %v2464
      %v2466 = vpop.xlane.xlu0 %2465
      %v2467 = vadd.f32 %v2370, %v2372
      %2468 = vadd.xlane.f32.xlu0 %v2467
      %v2469 = vpop.xlane.xlu0 %2468
      %v2470 = vadd.f32 %v2374, %v2376
      %2471 = vadd.xlane.f32.xlu0 %v2470
      %v2472 = vpop.xlane.xlu0 %2471
      %v2473 = vrcp.pop %v2379
      %v2474 = vrcp.pop %v2382
      %v2475 = vrcp.pop %v2385
      %v2476 = vrcp.pop %v2388
      %v2477 = vrcp.pop %v2391
      %v2478 = vrcp.pop %v2394
      %v2479 = vrcp.pop %v2397
      %v2480 = vrcp.pop %v2400
      %v2481 = vrcp.pop %v2403
      %v2482 = vrcp.pop %v2406
      %v2483 = vrcp.pop %v2409
      %v2484 = vrcp.pop %v2412
      %v2485 = vrcp.pop %v2415
      %v2486 = vrcp.pop %v2418
      %v2487 = vrcp.pop %v2421
      %v2488 = vrcp.pop %v2424
      %v2489 = vrcp.pop %v2427
      %v2490 = vrcp.pop %v2430
      %v2491 = vrcp.pop %v2433
      %v2492 = vrcp.pop %v2436
      %v2493 = vrcp.pop %v2439
      %v2494 = vrcp.pop %v2442
      %v2495 = vrcp.pop %v2445
      %v2496 = vrcp.pop %v2448
      %v2497 = vrcp.pop %v2451
      %v2498 = vrcp.pop %v2454
      %v2499 = vrcp.pop %v2457
      %v2500 = vrcp.pop %v2460
      %v2501 = vrcp.pop %v2463
      %v2502 = vrcp.pop %v2466
      %v2503 = vrcp.pop %v2469
      %v2504 = vrcp.pop %v2472
      %v2505 = vmul.f32 %v2250, %v2473
      %v2506 = vmul.f32 %v2252, %v2473
      %v2507 = vmul.f32 %v2254, %v2474
      %v2508 = vmul.f32 %v2256, %v2474
      %v2509 = vmul.f32 %v2258, %v2475
      %v2510 = vmul.f32 %v2260, %v2475
      %v2511 = vmul.f32 %v2262, %v2476
      %v2512 = vmul.f32 %v2264, %v2476
      %v2513 = vmul.f32 %v2266, %v2477
      %v2514 = vmul.f32 %v2268, %v2477
      %v2515 = vmul.f32 %v2270, %v2478
      %v2516 = vmul.f32 %v2272, %v2478
      %v2517 = vmul.f32 %v2274, %v2479
      %v2518 = vmul.f32 %v2276, %v2479
      %v2519 = vmul.f32 %v2278, %v2480
      %v2520 = vmul.f32 %v2280, %v2480
      %v2521 = vmul.f32 %v2282, %v2481
      %v2522 = vmul.f32 %v2284, %v2481
      %v2523 = vmul.f32 %v2286, %v2482
      %v2524 = vmul.f32 %v2288, %v2482
      %v2525 = vmul.f32 %v2290, %v2483
      %v2526 = vmul.f32 %v2292, %v2483
      %v2527 = vmul.f32 %v2294, %v2484
      %v2528 = vmul.f32 %v2296, %v2484
      %v2529 = vmul.f32 %v2298, %v2485
      %v2530 = vmul.f32 %v2300, %v2485
      %v2531 = vmul.f32 %v2302, %v2486
      %v2532 = vmul.f32 %v2304, %v2486
      %v2533 = vmul.f32 %v2306, %v2487
      %v2534 = vmul.f32 %v2308, %v2487
      %v2535 = vmul.f32 %v2310, %v2488
      %v2536 = vmul.f32 %v2312, %v2488
      %v2537 = vmul.f32 %v2314, %v2489
      %v2538 = vmul.f32 %v2316, %v2489
      %v2539 = vmul.f32 %v2318, %v2490
      %v2540 = vmul.f32 %v2320, %v2490
      %v2541 = vmul.f32 %v2322, %v2491
      %v2542 = vmul.f32 %v2324, %v2491
      %v2543 = vmul.f32 %v2326, %v2492
      %v2544 = vmul.f32 %v2328, %v2492
      %v2545 = vmul.f32 %v2330, %v2493
      %v2546 = vmul.f32 %v2332, %v2493
      %v2547 = vmul.f32 %v2334, %v2494
      %v2548 = vmul.f32 %v2336, %v2494
      %v2549 = vmul.f32 %v2338, %v2495
      %v2550 = vmul.f32 %v2340, %v2495
      %v2551 = vmul.f32 %v2342, %v2496
      %v2552 = vmul.f32 %v2344, %v2496
      %v2553 = vmul.f32 %v2346, %v2497
      %v2554 = vmul.f32 %v2348, %v2497
      %v2555 = vmul.f32 %v2350, %v2498
      %v2556 = vmul.f32 %v2352, %v2498
      %v2557 = vmul.f32 %v2354, %v2499
      %v2558 = vmul.f32 %v2356, %v2499
      %v2559 = vmul.f32 %v2358, %v2500
      %v2560 = vmul.f32 %v2360, %v2500
      %v2561 = vmul.f32 %v2362, %v2501
      %v2562 = vmul.f32 %v2364, %v2501
      %v2563 = vmul.f32 %v2366, %v2502
      %v2564 = vmul.f32 %v2368, %v2502
      %v2565 = vmul.f32 %v2370, %v2503
      %v2566 = vmul.f32 %v2372, %v2503
      %v2567 = vmul.f32 %v2374, %v2504
      %v2568 = vmul.f32 %v2376, %v2504
      %v2569 = vpack.c.bf16 %v2507, %v2505
      %v2570 = vpack.c.bf16 %v2508, %v2506
      %v2571 = vpack.c.bf16 %v2511, %v2509
      %v2572 = vpack.c.bf16 %v2512, %v2510
      %v2573 = vpack.c.bf16 %v2515, %v2513
      %v2574 = vpack.c.bf16 %v2516, %v2514
      %v2575 = vpack.c.bf16 %v2519, %v2517
      %v2576 = vpack.c.bf16 %v2520, %v2518
      %v2577 = vpack.c.bf16 %v2523, %v2521
      %v2578 = vpack.c.bf16 %v2524, %v2522
      %v2579 = vpack.c.bf16 %v2527, %v2525
      %v2580 = vpack.c.bf16 %v2528, %v2526
      %v2581 = vpack.c.bf16 %v2531, %v2529
      %v2582 = vpack.c.bf16 %v2532, %v2530
      %v2583 = vpack.c.bf16 %v2535, %v2533
      %v2584 = vpack.c.bf16 %v2536, %v2534
      %v2585 = vpack.c.bf16 %v2539, %v2537
      %v2586 = vpack.c.bf16 %v2540, %v2538
      %v2587 = vpack.c.bf16 %v2543, %v2541
      %v2588 = vpack.c.bf16 %v2544, %v2542
      %v2589 = vpack.c.bf16 %v2547, %v2545
      %v2590 = vpack.c.bf16 %v2548, %v2546
      %v2591 = vpack.c.bf16 %v2551, %v2549
      %v2592 = vpack.c.bf16 %v2552, %v2550
      %v2593 = vpack.c.bf16 %v2555, %v2553
      %v2594 = vpack.c.bf16 %v2556, %v2554
      %v2595 = vpack.c.bf16 %v2559, %v2557
      %v2596 = vpack.c.bf16 %v2560, %v2558
      %v2597 = vpack.c.bf16 %v2563, %v2561
      %v2598 = vpack.c.bf16 %v2564, %v2562
      %v2599 = vpack.c.bf16 %v2567, %v2565
      %v2600 = vpack.c.bf16 %v2568, %v2566
      %2601 = vmatprep.subr.bf16.mxu0 %v2570
      %2602 = vmatpush1.bf16.xpose.msra.mxu0 %v2569
      %2603 = vmatprep.subr.bf16.mxu0 %v2572
      %2604 = vmatpush1.bf16.xpose.msra.mxu0 %v2571
      %2605 = vmatprep.subr.bf16.mxu0 %v2574
      %2606 = vmatpush1.bf16.xpose.msra.mxu0 %v2573
      %2607 = vmatprep.subr.bf16.mxu0 %v2576
      %2608 = vmatpush1.bf16.xpose.msra.mxu0 %v2575
      %2609 = vmatprep.subr.bf16.mxu0 %v2578
      %2610 = vmatpush1.bf16.xpose.msra.mxu0 %v2577
      %2611 = vmatprep.subr.bf16.mxu0 %v2580
      %2612 = vmatpush1.bf16.xpose.msra.mxu0 %v2579
      %2613 = vmatprep.subr.bf16.mxu0 %v2582
      %2614 = vmatpush1.bf16.xpose.msra.mxu0 %v2581
      %2615 = vmatprep.subr.bf16.mxu0 %v2584
      %2616 = vmatpush1.bf16.xpose.msra.mxu0 %v2583
      %2617 = vmatprep.subr.bf16.mxu0 %v2586
      %2618 = vmatpush1.bf16.xpose.msra.mxu0 %v2585
      %2619 = vmatprep.subr.bf16.mxu0 %v2588
      %2620 = vmatpush1.bf16.xpose.msra.mxu0 %v2587
      %2621 = vmatprep.subr.bf16.mxu0 %v2590
      %2622 = vmatpush1.bf16.xpose.msra.mxu0 %v2589
      %2623 = vmatprep.subr.bf16.mxu0 %v2592
      %2624 = vmatpush1.bf16.xpose.msra.mxu0 %v2591
      %2625 = vmatprep.subr.bf16.mxu0 %v2594
      %2626 = vmatpush1.bf16.xpose.msra.mxu0 %v2593
      %2627 = vmatprep.subr.bf16.mxu0 %v2596
      %2628 = vmatpush1.bf16.xpose.msra.mxu0 %v2595
      %2629 = vmatprep.subr.bf16.mxu0 %v2598
      %2630 = vmatpush1.bf16.xpose.msra.mxu0 %v2597
      %2631 = vmatprep.subr.bf16.mxu0 %v2600
      %2632 = vmatpush1.bf16.xpose.msra.mxu0 %v2599
      %2633 = vmatprep.mubr.bf16.mxu0 %v1813
      %2634 = vmatmul.mubr.bf16.gmra.mrb[0].mxu0 %v1812
      %v2635 = vpop.f32.mrb[0].mxu0
      %v2636 = vadd.f32 0.0, %v2635
      %v2637 = vpop.f32.mrb[0].mxu0
      %v2638 = vadd.f32 0.0, %v2637
      %v2639 = vpop.f32.mrb[0].mxu0
      %v2640 = vadd.f32 0.0, %v2639
      %v2641 = vpop.f32.mrb[0].mxu0
      %v2642 = vadd.f32 0.0, %v2641
      %2643 = vmatprep.mubr.bf16.mxu0 %v1815
      %2644 = vmatmul.mubr.bf16.gmra.mrb[0].mxu0 %v1814
      %v2645 = vpop.f32.mrb[0].mxu0
      %v2646 = vadd.f32 0.0, %v2645
      %v2647 = vpop.f32.mrb[0].mxu0
      %v2648 = vadd.f32 0.0, %v2647
      %v2649 = vpop.f32.mrb[0].mxu0
      %v2650 = vadd.f32 0.0, %v2649
      %v2651 = vpop.f32.mrb[0].mxu0
      %v2652 = vadd.f32 0.0, %v2651
      %2653 = vdwg.mxu0
      %v2654 = vmul.f32 %v739, 0.17677669
      %v2655 = vmul.f32 %v741, 0.17677669
      %v2656 = vmul.f32 %v743, 0.17677669
      %v2657 = vmul.f32 %v745, 0.17677669
      %v2658 = vmul.f32 %v749, 0.17677669
      %v2659 = vmul.f32 %v751, 0.17677669
      %v2660 = vmul.f32 %v753, 0.17677669
      %v2661 = vmul.f32 %v755, 0.17677669
      %v2662 = vpack.c.bf16 %v2656, %v2654
      %v2663 = vpack.c.bf16 %v2657, %v2655
      %v2664 = vpack.c.bf16 %v2660, %v2658
      %v2665 = vpack.c.bf16 %v2661, %v2659
      %v2666 = vpack.c.bf16 %v823, %v819
      %v2667 = vpack.c.bf16 %v825, %v821
      %v2668 = vpack.c.bf16 %v833, %v829
      %v2669 = vpack.c.bf16 %v835, %v831
      %v2670 = vpack.c.bf16 %v903, %v899
      %v2671 = vpack.c.bf16 %v905, %v901
      %v2672 = vpack.c.bf16 %v913, %v909
      %v2673 = vpack.c.bf16 %v915, %v911
      %2674 = vxpose.xlu0.c.b16.start [1/8] %v2662, 128
      %2675 = vxpose.xlu0.c.b16.cont [2/8] %v2664, 128
      %2676 = vxpose.xlu0.c.b16.cont [3/8] 0, 128
      %2677 = vxpose.xlu0.c.b16.cont [4/8] 0, 128
      %2678 = vxpose.xlu0.c.b16.cont [5/8] 0, 128
      %2679 = vxpose.xlu0.c.b16.cont [6/8] 0, 128
      %2680 = vxpose.xlu0.c.b16.cont [7/8] 0, 128
      %2681 = vxpose.xlu0.c.b16.end [8/8] 0, 128
      %v2682 = vpop.trf.xlu0
      %v2683 = vpop.trf.xlu0
      %v2684 = vpop.trf.xlu0
      %v2685 = vpop.trf.xlu0
      %v2686 = vpop.trf.xlu0
      %v2687 = vpop.trf.xlu0
      %v2688 = vpop.trf.xlu0
      %v2689 = vpop.trf.xlu0
      %2690 = vxpose.xlu0.c.b16.start [1/8] %v2663, 128
      %2691 = vxpose.xlu0.c.b16.cont [2/8] %v2665, 128
      %2692 = vxpose.xlu0.c.b16.cont [3/8] 0, 128
      %2693 = vxpose.xlu0.c.b16.cont [4/8] 0, 128
      %2694 = vxpose.xlu0.c.b16.cont [5/8] 0, 128
      %2695 = vxpose.xlu0.c.b16.cont [6/8] 0, 128
      %2696 = vxpose.xlu0.c.b16.cont [7/8] 0, 128
      %2697 = vxpose.xlu0.c.b16.end [8/8] 0, 128
      %v2698 = vpop.trf.xlu0
      %v2699 = vpop.trf.xlu0
      %v2700 = vpop.trf.xlu0
      %v2701 = vpop.trf.xlu0
      %v2702 = vpop.trf.xlu0
      %v2703 = vpop.trf.xlu0
      %v2704 = vpop.trf.xlu0
      %v2705 = vpop.trf.xlu0
      %v2707 = vsel %vm989, %v2682, 0
      %v2710 = vsel %vm989, %v2683, 0
      %v2713 = vsel %vm989, %v2684, 0
      %v2716 = vsel %vm989, %v2685, 0
      %v2719 = vsel %vm989, %v2686, 0
      %v2722 = vsel %vm989, %v2687, 0
      %v2725 = vsel %vm989, %v2688, 0
      %v2728 = vsel %vm989, %v2689, 0
      %v2731 = vsel %vm989, %v2698, 0
      %v2734 = vsel %vm989, %v2699, 0
      %v2737 = vsel %vm989, %v2700, 0
      %v2740 = vsel %vm989, %v2701, 0
      %v2743 = vsel %vm989, %v2702, 0
      %v2746 = vsel %vm989, %v2703, 0
      %v2749 = vsel %vm989, %v2704, 0
      %v2752 = vsel %vm989, %v2705, 0
      %2754 = vmatprep.subr.bf16.mxu0 %v2667
      %2755 = vmatpush1.bf16.msra.mxu0 %v2666
      %2756 = vmatprep.subr.bf16.mxu0 %v2669
      %2757 = vmatpush1.bf16.msra.mxu0 %v2668
      %2758 = vmatprep.subr.bf16.mxu0 0
      %2759 = vmatpush1.bf16.msra.mxu0 0
      %2760 = vmatprep.subr.bf16.mxu0 0
      %2761 = vmatpush1.bf16.msra.mxu0 0
      %2762 = vmatprep.subr.bf16.mxu0 0
      %2763 = vmatpush1.bf16.msra.mxu0 0
      %2764 = vmatprep.subr.bf16.mxu0 0
      %2765 = vmatpush1.bf16.msra.mxu0 0
      %2766 = vmatprep.subr.bf16.mxu0 0
      %2767 = vmatpush1.bf16.msra.mxu0 0
      %2768 = vmatprep.subr.bf16.mxu0 0
      %2769 = vmatpush1.bf16.msra.mxu0 0
      %2770 = vmatprep.subr.bf16.mxu0 0
      %2771 = vmatpush1.bf16.msra.mxu0 0
      %2772 = vmatprep.subr.bf16.mxu0 0
      %2773 = vmatpush1.bf16.msra.mxu0 0
      %2774 = vmatprep.subr.bf16.mxu0 0
      %2775 = vmatpush1.bf16.msra.mxu0 0
      %2776 = vmatprep.subr.bf16.mxu0 0
      %2777 = vmatpush1.bf16.msra.mxu0 0
      %2778 = vmatprep.subr.bf16.mxu0 0
      %2779 = vmatpush1.bf16.msra.mxu0 0
      %2780 = vmatprep.subr.bf16.mxu0 0
      %2781 = vmatpush1.bf16.msra.mxu0 0
      %2782 = vmatprep.subr.bf16.mxu0 0
      %2783 = vmatpush1.bf16.msra.mxu0 0
      %2784 = vmatprep.subr.bf16.mxu0 0
      %2785 = vmatpush1.bf16.msra.mxu0 0
      %2786 = vmatprep.mubr.bf16.mxu0 0
      %2787 = vmatmul.mubr.bf16.gmra.mrb[0].mxu0 %v2707
      %v2788 = vpop.f32.mrb[0].mxu0
      %v2789 = vadd.f32 0.0, %v2788
      %v2790 = vpop.f32.mrb[0].mxu0
      %v2791 = vadd.f32 0.0, %v2790
      %v2792 = vpop.f32.mrb[0].mxu0
      %v2793 = vadd.f32 0.0, %v2792
      %v2794 = vpop.f32.mrb[0].mxu0
      %v2795 = vadd.f32 0.0, %v2794
      %2796 = vmatprep.mubr.bf16.mxu0 0
      %2797 = vmatmul.mubr.bf16.gmra.mrb[0].mxu0 %v2710
      %v2798 = vpop.f32.mrb[0].mxu0
      %v2799 = vadd.f32 0.0, %v2798
      %v2800 = vpop.f32.mrb[0].mxu0
      %v2801 = vadd.f32 0.0, %v2800
      %v2802 = vpop.f32.mrb[0].mxu0
      %v2803 = vadd.f32 0.0, %v2802
      %v2804 = vpop.f32.mrb[0].mxu0
      %v2805 = vadd.f32 0.0, %v2804
      %2806 = vmatprep.mubr.bf16.mxu0 0
      %2807 = vmatmul.mubr.bf16.gmra.mrb[0].mxu0 %v2713
      %v2808 = vpop.f32.mrb[0].mxu0
      %v2809 = vadd.f32 0.0, %v2808
      %v2810 = vpop.f32.mrb[0].mxu0
      %v2811 = vadd.f32 0.0, %v2810
      %v2812 = vpop.f32.mrb[0].mxu0
      %v2813 = vadd.f32 0.0, %v2812
      %v2814 = vpop.f32.mrb[0].mxu0
      %v2815 = vadd.f32 0.0, %v2814
      %2816 = vmatprep.mubr.bf16.mxu0 0
      %2817 = vmatmul.mubr.bf16.gmra.mrb[0].mxu0 %v2716
      %v2818 = vpop.f32.mrb[0].mxu0
      %v2819 = vadd.f32 0.0, %v2818
      %v2820 = vpop.f32.mrb[0].mxu0
      %v2821 = vadd.f32 0.0, %v2820
      %v2822 = vpop.f32.mrb[0].mxu0
      %v2823 = vadd.f32 0.0, %v2822
      %v2824 = vpop.f32.mrb[0].mxu0
      %v2825 = vadd.f32 0.0, %v2824
      %2826 = vmatprep.mubr.bf16.mxu0 0
      %2827 = vmatmul.mubr.bf16.gmra.mrb[0].mxu0 %v2719
      %v2828 = vpop.f32.mrb[0].mxu0
      %v2829 = vadd.f32 0.0, %v2828
      %v2830 = vpop.f32.mrb[0].mxu0
      %v2831 = vadd.f32 0.0, %v2830
      %v2832 = vpop.f32.mrb[0].mxu0
      %v2833 = vadd.f32 0.0, %v2832
      %v2834 = vpop.f32.mrb[0].mxu0
      %v2835 = vadd.f32 0.0, %v2834
      %2836 = vmatprep.mubr.bf16.mxu0 0
      %2837 = vmatmul.mubr.bf16.gmra.mrb[0].mxu0 %v2722
      %v2838 = vpop.f32.mrb[0].mxu0
      %v2839 = vadd.f32 0.0, %v2838
      %v2840 = vpop.f32.mrb[0].mxu0
      %v2841 = vadd.f32 0.0, %v2840
      %v2842 = vpop.f32.mrb[0].mxu0
      %v2843 = vadd.f32 0.0, %v2842
      %v2844 = vpop.f32.mrb[0].mxu0
      %v2845 = vadd.f32 0.0, %v2844
      %2846 = vmatprep.mubr.bf16.mxu0 0
      %2847 = vmatmul.mubr.bf16.gmra.mrb[0].mxu0 %v2725
      %v2848 = vpop.f32.mrb[0].mxu0
      %v2849 = vadd.f32 0.0, %v2848
      %v2850 = vpop.f32.mrb[0].mxu0
      %v2851 = vadd.f32 0.0, %v2850
      %v2852 = vpop.f32.mrb[0].mxu0
      %v2853 = vadd.f32 0.0, %v2852
      %v2854 = vpop.f32.mrb[0].mxu0
      %v2855 = vadd.f32 0.0, %v2854
      %2856 = vmatprep.mubr.bf16.mxu0 0
      %2857 = vmatmul.mubr.bf16.gmra.mrb[0].mxu0 %v2728
      %v2858 = vpop.f32.mrb[0].mxu0
      %v2859 = vadd.f32 0.0, %v2858
      %v2860 = vpop.f32.mrb[0].mxu0
      %v2861 = vadd.f32 0.0, %v2860
      %v2862 = vpop.f32.mrb[0].mxu0
      %v2863 = vadd.f32 0.0, %v2862
      %v2864 = vpop.f32.mrb[0].mxu0
      %v2865 = vadd.f32 0.0, %v2864
      %2866 = vmatprep.mubr.bf16.mxu0 0
      %2867 = vmatmul.mubr.bf16.gmra.mrb[0].mxu0 %v2731
      %v2868 = vpop.f32.mrb[0].mxu0
      %v2869 = vadd.f32 0.0, %v2868
      %v2870 = vpop.f32.mrb[0].mxu0
      %v2871 = vadd.f32 0.0, %v2870
      %v2872 = vpop.f32.mrb[0].mxu0
      %v2873 = vadd.f32 0.0, %v2872
      %v2874 = vpop.f32.mrb[0].mxu0
      %v2875 = vadd.f32 0.0, %v2874
      %2876 = vmatprep.mubr.bf16.mxu0 0
      %2877 = vmatmul.mubr.bf16.gmra.mrb[0].mxu0 %v2734
      %v2878 = vpop.f32.mrb[0].mxu0
      %v2879 = vadd.f32 0.0, %v2878
      %v2880 = vpop.f32.mrb[0].mxu0
      %v2881 = vadd.f32 0.0, %v2880
      %v2882 = vpop.f32.mrb[0].mxu0
      %v2883 = vadd.f32 0.0, %v2882
      %v2884 = vpop.f32.mrb[0].mxu0
      %v2885 = vadd.f32 0.0, %v2884
      %2886 = vmatprep.mubr.bf16.mxu0 0
      %2887 = vmatmul.mubr.bf16.gmra.mrb[0].mxu0 %v2737
      %v2888 = vpop.f32.mrb[0].mxu0
      %v2889 = vadd.f32 0.0, %v2888
      %v2890 = vpop.f32.mrb[0].mxu0
      %v2891 = vadd.f32 0.0, %v2890
      %v2892 = vpop.f32.mrb[0].mxu0
      %v2893 = vadd.f32 0.0, %v2892
      %v2894 = vpop.f32.mrb[0].mxu0
      %v2895 = vadd.f32 0.0, %v2894
      %2896 = vmatprep.mubr.bf16.mxu0 0
      %2897 = vmatmul.mubr.bf16.gmra.mrb[0].mxu0 %v2740
      %v2898 = vpop.f32.mrb[0].mxu0
      %v2899 = vadd.f32 0.0, %v2898
      %v2900 = vpop.f32.mrb[0].mxu0
      %v2901 = vadd.f32 0.0, %v2900
      %v2902 = vpop.f32.mrb[0].mxu0
      %v2903 = vadd.f32 0.0, %v2902
      %v2904 = vpop.f32.mrb[0].mxu0
      %v2905 = vadd.f32 0.0, %v2904
      %2906 = vmatprep.mubr.bf16.mxu0 0
      %2907 = vmatmul.mubr.bf16.gmra.mrb[0].mxu0 %v2743
      %v2908 = vpop.f32.mrb[0].mxu0
      %v2909 = vadd.f32 0.0, %v2908
      %v2910 = vpop.f32.mrb[0].mxu0
      %v2911 = vadd.f32 0.0, %v2910
      %v2912 = vpop.f32.mrb[0].mxu0
      %v2913 = vadd.f32 0.0, %v2912
      %v2914 = vpop.f32.mrb[0].mxu0
      %v2915 = vadd.f32 0.0, %v2914
      %2916 = vmatprep.mubr.bf16.mxu0 0
      %2917 = vmatmul.mubr.bf16.gmra.mrb[0].mxu0 %v2746
      %v2918 = vpop.f32.mrb[0].mxu0
      %v2919 = vadd.f32 0.0, %v2918
      %v2920 = vpop.f32.mrb[0].mxu0
      %v2921 = vadd.f32 0.0, %v2920
      %v2922 = vpop.f32.mrb[0].mxu0
      %v2923 = vadd.f32 0.0, %v2922
      %v2924 = vpop.f32.mrb[0].mxu0
      %v2925 = vadd.f32 0.0, %v2924
      %2926 = vmatprep.mubr.bf16.mxu0 0
      %2927 = vmatmul.mubr.bf16.gmra.mrb[0].mxu0 %v2749
      %v2928 = vpop.f32.mrb[0].mxu0
      %v2929 = vadd.f32 0.0, %v2928
      %v2930 = vpop.f32.mrb[0].mxu0
      %v2931 = vadd.f32 0.0, %v2930
      %v2932 = vpop.f32.mrb[0].mxu0
      %v2933 = vadd.f32 0.0, %v2932
      %v2934 = vpop.f32.mrb[0].mxu0
      %v2935 = vadd.f32 0.0, %v2934
      %2936 = vmatprep.mubr.bf16.mxu0 0
      %2937 = vmatmul.mubr.bf16.gmra.mrb[0].mxu0 %v2752
      %v2938 = vpop.f32.mrb[0].mxu0
      %v2939 = vadd.f32 0.0, %v2938
      %v2940 = vpop.f32.mrb[0].mxu0
      %v2941 = vadd.f32 0.0, %v2940
      %v2942 = vpop.f32.mrb[0].mxu0
      %v2943 = vadd.f32 0.0, %v2942
      %v2944 = vpop.f32.mrb[0].mxu0
      %v2945 = vadd.f32 0.0, %v2944
      %2946 = vdwg.mxu0
      %v2947 = vmax.f32 %v2789, %v2791
      %2948 = vmax.xlane.f32.xlu0 %v2947
      %v2949 = vpop.xlane.xlu0 %2948
      %v2950 = vmax.f32 %v2793, %v2795
      %2951 = vmax.xlane.f32.xlu0 %v2950
      %v2952 = vpop.xlane.xlu0 %2951
      %v2953 = vmax.f32 %v2799, %v2801
      %2954 = vmax.xlane.f32.xlu0 %v2953
      %v2955 = vpop.xlane.xlu0 %2954
      %v2956 = vmax.f32 %v2803, %v2805
      %2957 = vmax.xlane.f32.xlu0 %v2956
      %v2958 = vpop.xlane.xlu0 %2957
      %v2959 = vmax.f32 %v2809, %v2811
      %2960 = vmax.xlane.f32.xlu0 %v2959
      %v2961 = vpop.xlane.xlu0 %2960
      %v2962 = vmax.f32 %v2813, %v2815
      %2963 = vmax.xlane.f32.xlu0 %v2962
      %v2964 = vpop.xlane.xlu0 %2963
      %v2965 = vmax.f32 %v2819, %v2821
      %2966 = vmax.xlane.f32.xlu0 %v2965
      %v2967 = vpop.xlane.xlu0 %2966
      %v2968 = vmax.f32 %v2823, %v2825
      %2969 = vmax.xlane.f32.xlu0 %v2968
      %v2970 = vpop.xlane.xlu0 %2969
      %v2971 = vmax.f32 %v2829, %v2831
      %2972 = vmax.xlane.f32.xlu0 %v2971
      %v2973 = vpop.xlane.xlu0 %2972
      %v2974 = vmax.f32 %v2833, %v2835
      %2975 = vmax.xlane.f32.xlu0 %v2974
      %v2976 = vpop.xlane.xlu0 %2975
      %v2977 = vmax.f32 %v2839, %v2841
      %2978 = vmax.xlane.f32.xlu0 %v2977
      %v2979 = vpop.xlane.xlu0 %2978
      %v2980 = vmax.f32 %v2843, %v2845
      %2981 = vmax.xlane.f32.xlu0 %v2980
      %v2982 = vpop.xlane.xlu0 %2981
      %v2983 = vmax.f32 %v2849, %v2851
      %2984 = vmax.xlane.f32.xlu0 %v2983
      %v2985 = vpop.xlane.xlu0 %2984
      %v2986 = vmax.f32 %v2853, %v2855
      %2987 = vmax.xlane.f32.xlu0 %v2986
      %v2988 = vpop.xlane.xlu0 %2987
      %v2989 = vmax.f32 %v2859, %v2861
      %2990 = vmax.xlane.f32.xlu0 %v2989
      %v2991 = vpop.xlane.xlu0 %2990
      %v2992 = vmax.f32 %v2863, %v2865
      %2993 = vmax.xlane.f32.xlu0 %v2992
      %v2994 = vpop.xlane.xlu0 %2993
      %v2995 = vmax.f32 %v2869, %v2871
      %2996 = vmax.xlane.f32.xlu0 %v2995
      %v2997 = vpop.xlane.xlu0 %2996
      %v2998 = vmax.f32 %v2873, %v2875
      %2999 = vmax.xlane.f32.xlu0 %v2998
      %v3000 = vpop.xlane.xlu0 %2999
      %v3001 = vmax.f32 %v2879, %v2881
      %3002 = vmax.xlane.f32.xlu0 %v3001
      %v3003 = vpop.xlane.xlu0 %3002
      %v3004 = vmax.f32 %v2883, %v2885
      %3005 = vmax.xlane.f32.xlu0 %v3004
      %v3006 = vpop.xlane.xlu0 %3005
      %v3007 = vmax.f32 %v2889, %v2891
      %3008 = vmax.xlane.f32.xlu0 %v3007
      %v3009 = vpop.xlane.xlu0 %3008
      %v3010 = vmax.f32 %v2893, %v2895
      %3011 = vmax.xlane.f32.xlu0 %v3010
      %v3012 = vpop.xlane.xlu0 %3011
      %v3013 = vmax.f32 %v2899, %v2901
      %3014 = vmax.xlane.f32.xlu0 %v3013
      %v3015 = vpop.xlane.xlu0 %3014
      %v3016 = vmax.f32 %v2903, %v2905
      %3017 = vmax.xlane.f32.xlu0 %v3016
      %v3018 = vpop.xlane.xlu0 %3017
      %v3019 = vmax.f32 %v2909, %v2911
      %3020 = vmax.xlane.f32.xlu0 %v3019
      %v3021 = vpop.xlane.xlu0 %3020
      %v3022 = vmax.f32 %v2913, %v2915
      %3023 = vmax.xlane.f32.xlu0 %v3022
      %v3024 = vpop.xlane.xlu0 %3023
      %v3025 = vmax.f32 %v2919, %v2921
      %3026 = vmax.xlane.f32.xlu0 %v3025
      %v3027 = vpop.xlane.xlu0 %3026
      %v3028 = vmax.f32 %v2923, %v2925
      %3029 = vmax.xlane.f32.xlu0 %v3028
      %v3030 = vpop.xlane.xlu0 %3029
      %v3031 = vmax.f32 %v2929, %v2931
      %3032 = vmax.xlane.f32.xlu0 %v3031
      %v3033 = vpop.xlane.xlu0 %3032
      %v3034 = vmax.f32 %v2933, %v2935
      %3035 = vmax.xlane.f32.xlu0 %v3034
      %v3036 = vpop.xlane.xlu0 %3035
      %v3037 = vmax.f32 %v2939, %v2941
      %3038 = vmax.xlane.f32.xlu0 %v3037
      %v3039 = vpop.xlane.xlu0 %3038
      %v3040 = vmax.f32 %v2943, %v2945
      %3041 = vmax.xlane.f32.xlu0 %v3040
      %v3042 = vpop.xlane.xlu0 %3041
      %v3043 = vsub.f32 %v2789, %v2949
      %v3044 = vsub.f32 %v2791, %v2949
      %v3045 = vsub.f32 %v2793, %v2952
      %v3046 = vsub.f32 %v2795, %v2952
      %v3047 = vsub.f32 %v2799, %v2955
      %v3048 = vsub.f32 %v2801, %v2955
      %v3049 = vsub.f32 %v2803, %v2958
      %v3050 = vsub.f32 %v2805, %v2958
      %v3051 = vsub.f32 %v2809, %v2961
      %v3052 = vsub.f32 %v2811, %v2961
      %v3053 = vsub.f32 %v2813, %v2964
      %v3054 = vsub.f32 %v2815, %v2964
      %v3055 = vsub.f32 %v2819, %v2967
      %v3056 = vsub.f32 %v2821, %v2967
      %v3057 = vsub.f32 %v2823, %v2970
      %v3058 = vsub.f32 %v2825, %v2970
      %v3059 = vsub.f32 %v2829, %v2973
      %v3060 = vsub.f32 %v2831, %v2973
      %v3061 = vsub.f32 %v2833, %v2976
      %v3062 = vsub.f32 %v2835, %v2976
      %v3063 = vsub.f32 %v2839, %v2979
      %v3064 = vsub.f32 %v2841, %v2979
      %v3065 = vsub.f32 %v2843, %v2982
      %v3066 = vsub.f32 %v2845, %v2982
      %v3067 = vsub.f32 %v2849, %v2985
      %v3068 = vsub.f32 %v2851, %v2985
      %v3069 = vsub.f32 %v2853, %v2988
      %v3070 = vsub.f32 %v2855, %v2988
      %v3071 = vsub.f32 %v2859, %v2991
      %v3072 = vsub.f32 %v2861, %v2991
      %v3073 = vsub.f32 %v2863, %v2994
      %v3074 = vsub.f32 %v2865, %v2994
      %v3075 = vsub.f32 %v2869, %v2997
      %v3076 = vsub.f32 %v2871, %v2997
      %v3077 = vsub.f32 %v2873, %v3000
      %v3078 = vsub.f32 %v2875, %v3000
      %v3079 = vsub.f32 %v2879, %v3003
      %v3080 = vsub.f32 %v2881, %v3003
      %v3081 = vsub.f32 %v2883, %v3006
      %v3082 = vsub.f32 %v2885, %v3006
      %v3083 = vsub.f32 %v2889, %v3009
      %v3084 = vsub.f32 %v2891, %v3009
      %v3085 = vsub.f32 %v2893, %v3012
      %v3086 = vsub.f32 %v2895, %v3012
      %v3087 = vsub.f32 %v2899, %v3015
      %v3088 = vsub.f32 %v2901, %v3015
      %v3089 = vsub.f32 %v2903, %v3018
      %v3090 = vsub.f32 %v2905, %v3018
      %v3091 = vsub.f32 %v2909, %v3021
      %v3092 = vsub.f32 %v2911, %v3021
      %v3093 = vsub.f32 %v2913, %v3024
      %v3094 = vsub.f32 %v2915, %v3024
      %v3095 = vsub.f32 %v2919, %v3027
      %v3096 = vsub.f32 %v2921, %v3027
      %v3097 = vsub.f32 %v2923, %v3030
      %v3098 = vsub.f32 %v2925, %v3030
      %v3099 = vsub.f32 %v2929, %v3033
      %v3100 = vsub.f32 %v2931, %v3033
      %v3101 = vsub.f32 %v2933, %v3036
      %v3102 = vsub.f32 %v2935, %v3036
      %v3103 = vsub.f32 %v2939, %v3039
      %v3104 = vsub.f32 %v2941, %v3039
      %v3105 = vsub.f32 %v2943, %v3042
      %v3106 = vsub.f32 %v2945, %v3042
      %v3107 = vmul.f32 %v3043, 1.442695
      %v3108 = vpow.pop %v3107
      %v3109 = vmul.f32 %v3044, 1.442695
      %v3110 = vpow.pop %v3109
      %v3111 = vmul.f32 %v3045, 1.442695
      %v3112 = vpow.pop %v3111
      %v3113 = vmul.f32 %v3046, 1.442695
      %v3114 = vpow.pop %v3113
      %v3115 = vmul.f32 %v3047, 1.442695
      %v3116 = vpow.pop %v3115
      %v3117 = vmul.f32 %v3048, 1.442695
      %v3118 = vpow.pop %v3117
      %v3119 = vmul.f32 %v3049, 1.442695
      %v3120 = vpow.pop %v3119
      %v3121 = vmul.f32 %v3050, 1.442695
      %v3122 = vpow.pop %v3121
      %v3123 = vmul.f32 %v3051, 1.442695
      %v3124 = vpow.pop %v3123
      %v3125 = vmul.f32 %v3052, 1.442695
      %v3126 = vpow.pop %v3125
      %v3127 = vmul.f32 %v3053, 1.442695
      %v3128 = vpow.pop %v3127
      %v3129 = vmul.f32 %v3054, 1.442695
      %v3130 = vpow.pop %v3129
      %v3131 = vmul.f32 %v3055, 1.442695
      %v3132 = vpow.pop %v3131
      %v3133 = vmul.f32 %v3056, 1.442695
      %v3134 = vpow.pop %v3133
      %v3135 = vmul.f32 %v3057, 1.442695
      %v3136 = vpow.pop %v3135
      %v3137 = vmul.f32 %v3058, 1.442695
      %v3138 = vpow.pop %v3137
      %v3139 = vmul.f32 %v3059, 1.442695
      %v3140 = vpow.pop %v3139
      %v3141 = vmul.f32 %v3060, 1.442695
      %v3142 = vpow.pop %v3141
      %v3143 = vmul.f32 %v3061, 1.442695
      %v3144 = vpow.pop %v3143
      %v3145 = vmul.f32 %v3062, 1.442695
      %v3146 = vpow.pop %v3145
      %v3147 = vmul.f32 %v3063, 1.442695
      %v3148 = vpow.pop %v3147
      %v3149 = vmul.f32 %v3064, 1.442695
      %v3150 = vpow.pop %v3149
      %v3151 = vmul.f32 %v3065, 1.442695
      %v3152 = vpow.pop %v3151
      %v3153 = vmul.f32 %v3066, 1.442695
      %v3154 = vpow.pop %v3153
      %v3155 = vmul.f32 %v3067, 1.442695
      %v3156 = vpow.pop %v3155
      %v3157 = vmul.f32 %v3068, 1.442695
      %v3158 = vpow.pop %v3157
      %v3159 = vmul.f32 %v3069, 1.442695
      %v3160 = vpow.pop %v3159
      %v3161 = vmul.f32 %v3070, 1.442695
      %v3162 = vpow.pop %v3161
      %v3163 = vmul.f32 %v3071, 1.442695
      %v3164 = vpow.pop %v3163
      %v3165 = vmul.f32 %v3072, 1.442695
      %v3166 = vpow.pop %v3165
      %v3167 = vmul.f32 %v3073, 1.442695
      %v3168 = vpow.pop %v3167
      %v3169 = vmul.f32 %v3074, 1.442695
      %v3170 = vpow.pop %v3169
      %v3171 = vmul.f32 %v3075, 1.442695
      %v3172 = vpow.pop %v3171
      %v3173 = vmul.f32 %v3076, 1.442695
      %v3174 = vpow.pop %v3173
      %v3175 = vmul.f32 %v3077, 1.442695
      %v3176 = vpow.pop %v3175
      %v3177 = vmul.f32 %v3078, 1.442695
      %v3178 = vpow.pop %v3177
      %v3179 = vmul.f32 %v3079, 1.442695
      %v3180 = vpow.pop %v3179
      %v3181 = vmul.f32 %v3080, 1.442695
      %v3182 = vpow.pop %v3181
      %v3183 = vmul.f32 %v3081, 1.442695
      %v3184 = vpow.pop %v3183
      %v3185 = vmul.f32 %v3082, 1.442695
      %v3186 = vpow.pop %v3185
      %v3187 = vmul.f32 %v3083, 1.442695
      %v3188 = vpow.pop %v3187
      %v3189 = vmul.f32 %v3084, 1.442695
      %v3190 = vpow.pop %v3189
      %v3191 = vmul.f32 %v3085, 1.442695
      %v3192 = vpow.pop %v3191
      %v3193 = vmul.f32 %v3086, 1.442695
      %v3194 = vpow.pop %v3193
      %v3195 = vmul.f32 %v3087, 1.442695
      %v3196 = vpow.pop %v3195
      %v3197 = vmul.f32 %v3088, 1.442695
      %v3198 = vpow.pop %v3197
      %v3199 = vmul.f32 %v3089, 1.442695
      %v3200 = vpow.pop %v3199
      %v3201 = vmul.f32 %v3090, 1.442695
      %v3202 = vpow.pop %v3201
      %v3203 = vmul.f32 %v3091, 1.442695
      %v3204 = vpow.pop %v3203
      %v3205 = vmul.f32 %v3092, 1.442695
      %v3206 = vpow.pop %v3205
      %v3207 = vmul.f32 %v3093, 1.442695
      %v3208 = vpow.pop %v3207
      %v3209 = vmul.f32 %v3094, 1.442695
      %v3210 = vpow.pop %v3209
      %v3211 = vmul.f32 %v3095, 1.442695
      %v3212 = vpow.pop %v3211
      %v3213 = vmul.f32 %v3096, 1.442695
      %v3214 = vpow.pop %v3213
      %v3215 = vmul.f32 %v3097, 1.442695
      %v3216 = vpow.pop %v3215
      %v3217 = vmul.f32 %v3098, 1.442695
      %v3218 = vpow.pop %v3217
      %v3219 = vmul.f32 %v3099, 1.442695
      %v3220 = vpow.pop %v3219
      %v3221 = vmul.f32 %v3100, 1.442695
      %v3222 = vpow.pop %v3221
      %v3223 = vmul.f32 %v3101, 1.442695
      %v3224 = vpow.pop %v3223
      %v3225 = vmul.f32 %v3102, 1.442695
      %v3226 = vpow.pop %v3225
      %v3227 = vmul.f32 %v3103, 1.442695
      %v3228 = vpow.pop %v3227
      %v3229 = vmul.f32 %v3104, 1.442695
      %v3230 = vpow.pop %v3229
      %v3231 = vmul.f32 %v3105, 1.442695
      %v3232 = vpow.pop %v3231
      %v3233 = vmul.f32 %v3106, 1.442695
      %v3234 = vpow.pop %v3233
      %v3235 = vadd.f32 %v3108, %v3110
      %3236 = vadd.xlane.f32.xlu0 %v3235
      %v3237 = vpop.xlane.xlu0 %3236
      %v3238 = vadd.f32 %v3112, %v3114
      %3239 = vadd.xlane.f32.xlu0 %v3238
      %v3240 = vpop.xlane.xlu0 %3239
      %v3241 = vadd.f32 %v3116, %v3118
      %3242 = vadd.xlane.f32.xlu0 %v3241
      %v3243 = vpop.xlane.xlu0 %3242
      %v3244 = vadd.f32 %v3120, %v3122
      %3245 = vadd.xlane.f32.xlu0 %v3244
      %v3246 = vpop.xlane.xlu0 %3245
      %v3247 = vadd.f32 %v3124, %v3126
      %3248 = vadd.xlane.f32.xlu0 %v3247
      %v3249 = vpop.xlane.xlu0 %3248
      %v3250 = vadd.f32 %v3128, %v3130
      %3251 = vadd.xlane.f32.xlu0 %v3250
      %v3252 = vpop.xlane.xlu0 %3251
      %v3253 = vadd.f32 %v3132, %v3134
      %3254 = vadd.xlane.f32.xlu0 %v3253
      %v3255 = vpop.xlane.xlu0 %3254
      %v3256 = vadd.f32 %v3136, %v3138
      %3257 = vadd.xlane.f32.xlu0 %v3256
      %v3258 = vpop.xlane.xlu0 %3257
      %v3259 = vadd.f32 %v3140, %v3142
      %3260 = vadd.xlane.f32.xlu0 %v3259
      %v3261 = vpop.xlane.xlu0 %3260
      %v3262 = vadd.f32 %v3144, %v3146
      %3263 = vadd.xlane.f32.xlu0 %v3262
      %v3264 = vpop.xlane.xlu0 %3263
      %v3265 = vadd.f32 %v3148, %v3150
      %3266 = vadd.xlane.f32.xlu0 %v3265
      %v3267 = vpop.xlane.xlu0 %3266
      %v3268 = vadd.f32 %v3152, %v3154
      %3269 = vadd.xlane.f32.xlu0 %v3268
      %v3270 = vpop.xlane.xlu0 %3269
      %v3271 = vadd.f32 %v3156, %v3158
      %3272 = vadd.xlane.f32.xlu0 %v3271
      %v3273 = vpop.xlane.xlu0 %3272
      %v3274 = vadd.f32 %v3160, %v3162
      %3275 = vadd.xlane.f32.xlu0 %v3274
      %v3276 = vpop.xlane.xlu0 %3275
      %v3277 = vadd.f32 %v3164, %v3166
      %3278 = vadd.xlane.f32.xlu0 %v3277
      %v3279 = vpop.xlane.xlu0 %3278
      %v3280 = vadd.f32 %v3168, %v3170
      %3281 = vadd.xlane.f32.xlu0 %v3280
      %v3282 = vpop.xlane.xlu0 %3281
      %v3283 = vadd.f32 %v3172, %v3174
      %3284 = vadd.xlane.f32.xlu0 %v3283
      %v3285 = vpop.xlane.xlu0 %3284
      %v3286 = vadd.f32 %v3176, %v3178
      %3287 = vadd.xlane.f32.xlu0 %v3286
      %v3288 = vpop.xlane.xlu0 %3287
      %v3289 = vadd.f32 %v3180, %v3182
      %3290 = vadd.xlane.f32.xlu0 %v3289
      %v3291 = vpop.xlane.xlu0 %3290
      %v3292 = vadd.f32 %v3184, %v3186
      %3293 = vadd.xlane.f32.xlu0 %v3292
      %v3294 = vpop.xlane.xlu0 %3293
      %v3295 = vadd.f32 %v3188, %v3190
      %3296 = vadd.xlane.f32.xlu0 %v3295
      %v3297 = vpop.xlane.xlu0 %3296
      %v3298 = vadd.f32 %v3192, %v3194
      %3299 = vadd.xlane.f32.xlu0 %v3298
      %v3300 = vpop.xlane.xlu0 %3299
      %v3301 = vadd.f32 %v3196, %v3198
      %3302 = vadd.xlane.f32.xlu0 %v3301
      %v3303 = vpop.xlane.xlu0 %3302
      %v3304 = vadd.f32 %v3200, %v3202
      %3305 = vadd.xlane.f32.xlu0 %v3304
      %v3306 = vpop.xlane.xlu0 %3305
      %v3307 = vadd.f32 %v3204, %v3206
      %3308 = vadd.xlane.f32.xlu0 %v3307
      %v3309 = vpop.xlane.xlu0 %3308
      %v3310 = vadd.f32 %v3208, %v3210
      %3311 = vadd.xlane.f32.xlu0 %v3310
      %v3312 = vpop.xlane.xlu0 %3311
      %v3313 = vadd.f32 %v3212, %v3214
      %3314 = vadd.xlane.f32.xlu0 %v3313
      %v3315 = vpop.xlane.xlu0 %3314
      %v3316 = vadd.f32 %v3216, %v3218
      %3317 = vadd.xlane.f32.xlu0 %v3316
      %v3318 = vpop.xlane.xlu0 %3317
      %v3319 = vadd.f32 %v3220, %v3222
      %3320 = vadd.xlane.f32.xlu0 %v3319
      %v3321 = vpop.xlane.xlu0 %3320
      %v3322 = vadd.f32 %v3224, %v3226
      %3323 = vadd.xlane.f32.xlu0 %v3322
      %v3324 = vpop.xlane.xlu0 %3323
      %v3325 = vadd.f32 %v3228, %v3230
      %3326 = vadd.xlane.f32.xlu0 %v3325
      %v3327 = vpop.xlane.xlu0 %3326
      %v3328 = vadd.f32 %v3232, %v3234
      %3329 = vadd.xlane.f32.xlu0 %v3328
      %v3330 = vpop.xlane.xlu0 %3329
      %v3331 = vrcp.pop %v3237
      %v3332 = vrcp.pop %v3240
      %v3333 = vrcp.pop %v3243
      %v3334 = vrcp.pop %v3246
      %v3335 = vrcp.pop %v3249
      %v3336 = vrcp.pop %v3252
      %v3337 = vrcp.pop %v3255
      %v3338 = vrcp.pop %v3258
      %v3339 = vrcp.pop %v3261
      %v3340 = vrcp.pop %v3264
      %v3341 = vrcp.pop %v3267
      %v3342 = vrcp.pop %v3270
      %v3343 = vrcp.pop %v3273
      %v3344 = vrcp.pop %v3276
      %v3345 = vrcp.pop %v3279
      %v3346 = vrcp.pop %v3282
      %v3347 = vrcp.pop %v3285
      %v3348 = vrcp.pop %v3288
      %v3349 = vrcp.pop %v3291
      %v3350 = vrcp.pop %v3294
      %v3351 = vrcp.pop %v3297
      %v3352 = vrcp.pop %v3300
      %v3353 = vrcp.pop %v3303
      %v3354 = vrcp.pop %v3306
      %v3355 = vrcp.pop %v3309
      %v3356 = vrcp.pop %v3312
      %v3357 = vrcp.pop %v3315
      %v3358 = vrcp.pop %v3318
      %v3359 = vrcp.pop %v3321
      %v3360 = vrcp.pop %v3324
      %v3361 = vrcp.pop %v3327
      %v3362 = vrcp.pop %v3330
      %v3363 = vmul.f32 %v3108, %v3331
      %v3364 = vmul.f32 %v3110, %v3331
      %v3365 = vmul.f32 %v3112, %v3332
      %v3366 = vmul.f32 %v3114, %v3332
      %v3367 = vmul.f32 %v3116, %v3333
      %v3368 = vmul.f32 %v3118, %v3333
      %v3369 = vmul.f32 %v3120, %v3334
      %v3370 = vmul.f32 %v3122, %v3334
      %v3371 = vmul.f32 %v3124, %v3335
      %v3372 = vmul.f32 %v3126, %v3335
      %v3373 = vmul.f32 %v3128, %v3336
      %v3374 = vmul.f32 %v3130, %v3336
      %v3375 = vmul.f32 %v3132, %v3337
      %v3376 = vmul.f32 %v3134, %v3337
      %v3377 = vmul.f32 %v3136, %v3338
      %v3378 = vmul.f32 %v3138, %v3338
      %v3379 = vmul.f32 %v3140, %v3339
      %v3380 = vmul.f32 %v3142, %v3339
      %v3381 = vmul.f32 %v3144, %v3340
      %v3382 = vmul.f32 %v3146, %v3340
      %v3383 = vmul.f32 %v3148, %v3341
      %v3384 = vmul.f32 %v3150, %v3341
      %v3385 = vmul.f32 %v3152, %v3342
      %v3386 = vmul.f32 %v3154, %v3342
      %v3387 = vmul.f32 %v3156, %v3343
      %v3388 = vmul.f32 %v3158, %v3343
      %v3389 = vmul.f32 %v3160, %v3344
      %v3390 = vmul.f32 %v3162, %v3344
      %v3391 = vmul.f32 %v3164, %v3345
      %v3392 = vmul.f32 %v3166, %v3345
      %v3393 = vmul.f32 %v3168, %v3346
      %v3394 = vmul.f32 %v3170, %v3346
      %v3395 = vmul.f32 %v3172, %v3347
      %v3396 = vmul.f32 %v3174, %v3347
      %v3397 = vmul.f32 %v3176, %v3348
      %v3398 = vmul.f32 %v3178, %v3348
      %v3399 = vmul.f32 %v3180, %v3349
      %v3400 = vmul.f32 %v3182, %v3349
      %v3401 = vmul.f32 %v3184, %v3350
      %v3402 = vmul.f32 %v3186, %v3350
      %v3403 = vmul.f32 %v3188, %v3351
      %v3404 = vmul.f32 %v3190, %v3351
      %v3405 = vmul.f32 %v3192, %v3352
      %v3406 = vmul.f32 %v3194, %v3352
      %v3407 = vmul.f32 %v3196, %v3353
      %v3408 = vmul.f32 %v3198, %v3353
      %v3409 = vmul.f32 %v3200, %v3354
      %v3410 = vmul.f32 %v3202, %v3354
      %v3411 = vmul.f32 %v3204, %v3355
      %v3412 = vmul.f32 %v3206, %v3355
      %v3413 = vmul.f32 %v3208, %v3356
      %v3414 = vmul.f32 %v3210, %v3356
      %v3415 = vmul.f32 %v3212, %v3357
      %v3416 = vmul.f32 %v3214, %v3357
      %v3417 = vmul.f32 %v3216, %v3358
      %v3418 = vmul.f32 %v3218, %v3358
      %v3419 = vmul.f32 %v3220, %v3359
      %v3420 = vmul.f32 %v3222, %v3359
      %v3421 = vmul.f32 %v3224, %v3360
      %v3422 = vmul.f32 %v3226, %v3360
      %v3423 = vmul.f32 %v3228, %v3361
      %v3424 = vmul.f32 %v3230, %v3361
      %v3425 = vmul.f32 %v3232, %v3362
      %v3426 = vmul.f32 %v3234, %v3362
      %v3427 = vpack.c.bf16 %v3365, %v3363
      %v3428 = vpack.c.bf16 %v3366, %v3364
      %v3429 = vpack.c.bf16 %v3369, %v3367
      %v3430 = vpack.c.bf16 %v3370, %v3368
      %v3431 = vpack.c.bf16 %v3373, %v3371
      %v3432 = vpack.c.bf16 %v3374, %v3372
      %v3433 = vpack.c.bf16 %v3377, %v3375
      %v3434 = vpack.c.bf16 %v3378, %v3376
      %v3435 = vpack.c.bf16 %v3381, %v3379
      %v3436 = vpack.c.bf16 %v3382, %v3380
      %v3437 = vpack.c.bf16 %v3385, %v3383
      %v3438 = vpack.c.bf16 %v3386, %v3384
      %v3439 = vpack.c.bf16 %v3389, %v3387
      %v3440 = vpack.c.bf16 %v3390, %v3388
      %v3441 = vpack.c.bf16 %v3393, %v3391
      %v3442 = vpack.c.bf16 %v3394, %v3392
      %v3443 = vpack.c.bf16 %v3397, %v3395
      %v3444 = vpack.c.bf16 %v3398, %v3396
      %v3445 = vpack.c.bf16 %v3401, %v3399
      %v3446 = vpack.c.bf16 %v3402, %v3400
      %v3447 = vpack.c.bf16 %v3405, %v3403
      %v3448 = vpack.c.bf16 %v3406, %v3404
      %v3449 = vpack.c.bf16 %v3409, %v3407
      %v3450 = vpack.c.bf16 %v3410, %v3408
      %v3451 = vpack.c.bf16 %v3413, %v3411
      %v3452 = vpack.c.bf16 %v3414, %v3412
      %v3453 = vpack.c.bf16 %v3417, %v3415
      %v3454 = vpack.c.bf16 %v3418, %v3416
      %v3455 = vpack.c.bf16 %v3421, %v3419
      %v3456 = vpack.c.bf16 %v3422, %v3420
      %v3457 = vpack.c.bf16 %v3425, %v3423
      %v3458 = vpack.c.bf16 %v3426, %v3424
      %3459 = vmatprep.subr.bf16.mxu0 %v3428
      %3460 = vmatpush1.bf16.xpose.msra.mxu0 %v3427
      %3461 = vmatprep.subr.bf16.mxu0 %v3430
      %3462 = vmatpush1.bf16.xpose.msra.mxu0 %v3429
      %3463 = vmatprep.subr.bf16.mxu0 %v3432
      %3464 = vmatpush1.bf16.xpose.msra.mxu0 %v3431
      %3465 = vmatprep.subr.bf16.mxu0 %v3434
      %3466 = vmatpush1.bf16.xpose.msra.mxu0 %v3433
      %3467 = vmatprep.subr.bf16.mxu0 %v3436
      %3468 = vmatpush1.bf16.xpose.msra.mxu0 %v3435
      %3469 = vmatprep.subr.bf16.mxu0 %v3438
      %3470 = vmatpush1.bf16.xpose.msra.mxu0 %v3437
      %3471 = vmatprep.subr.bf16.mxu0 %v3440
      %3472 = vmatpush1.bf16.xpose.msra.mxu0 %v3439
      %3473 = vmatprep.subr.bf16.mxu0 %v3442
      %3474 = vmatpush1.bf16.xpose.msra.mxu0 %v3441
      %3475 = vmatprep.subr.bf16.mxu0 %v3444
      %3476 = vmatpush1.bf16.xpose.msra.mxu0 %v3443
      %3477 = vmatprep.subr.bf16.mxu0 %v3446
      %3478 = vmatpush1.bf16.xpose.msra.mxu0 %v3445
      %3479 = vmatprep.subr.bf16.mxu0 %v3448
      %3480 = vmatpush1.bf16.xpose.msra.mxu0 %v3447
      %3481 = vmatprep.subr.bf16.mxu0 %v3450
      %3482 = vmatpush1.bf16.xpose.msra.mxu0 %v3449
      %3483 = vmatprep.subr.bf16.mxu0 %v3452
      %3484 = vmatpush1.bf16.xpose.msra.mxu0 %v3451
      %3485 = vmatprep.subr.bf16.mxu0 %v3454
      %3486 = vmatpush1.bf16.xpose.msra.mxu0 %v3453
      %3487 = vmatprep.subr.bf16.mxu0 %v3456
      %3488 = vmatpush1.bf16.xpose.msra.mxu0 %v3455
      %3489 = vmatprep.subr.bf16.mxu0 %v3458
      %3490 = vmatpush1.bf16.xpose.msra.mxu0 %v3457
      %3491 = vmatprep.mubr.bf16.mxu0 %v2671
      %3492 = vmatmul.mubr.bf16.gmra.mrb[0].mxu0 %v2670
      %v3493 = vpop.f32.mrb[0].mxu0
      %v3494 = vadd.f32 0.0, %v3493
      %v3495 = vpop.f32.mrb[0].mxu0
      %v3496 = vadd.f32 0.0, %v3495
      %v3497 = vpop.f32.mrb[0].mxu0
      %v3498 = vadd.f32 0.0, %v3497
      %v3499 = vpop.f32.mrb[0].mxu0
      %v3500 = vadd.f32 0.0, %v3499
      %3501 = vmatprep.mubr.bf16.mxu0 %v2673
      %3502 = vmatmul.mubr.bf16.gmra.mrb[0].mxu0 %v2672
      %v3503 = vpop.f32.mrb[0].mxu0
      %v3504 = vadd.f32 0.0, %v3503
      %v3505 = vpop.f32.mrb[0].mxu0
      %v3506 = vadd.f32 0.0, %v3505
      %v3507 = vpop.f32.mrb[0].mxu0
      %v3508 = vadd.f32 0.0, %v3507
      %v3509 = vpop.f32.mrb[0].mxu0
      %v3510 = vadd.f32 0.0, %v3509
      %3511 = vdwg.mxu0
      %v3512 = vmul.f32 %v759, 0.17677669
      %v3513 = vmul.f32 %v761, 0.17677669
      %v3514 = vmul.f32 %v763, 0.17677669
      %v3515 = vmul.f32 %v765, 0.17677669
      %v3516 = vmul.f32 %v769, 0.17677669
      %v3517 = vmul.f32 %v771, 0.17677669
      %v3518 = vmul.f32 %v773, 0.17677669
      %v3519 = vmul.f32 %v775, 0.17677669
      %v3520 = vpack.c.bf16 %v3514, %v3512
      %v3521 = vpack.c.bf16 %v3515, %v3513
      %v3522 = vpack.c.bf16 %v3518, %v3516
      %v3523 = vpack.c.bf16 %v3519, %v3517
      %v3524 = vpack.c.bf16 %v843, %v839
      %v3525 = vpack.c.bf16 %v845, %v841
      %v3526 = vpack.c.bf16 %v853, %v849
      %v3527 = vpack.c.bf16 %v855, %v851
      %v3528 = vpack.c.bf16 %v923, %v919
      %v3529 = vpack.c.bf16 %v925, %v921
      %v3530 = vpack.c.bf16 %v933, %v929
      %v3531 = vpack.c.bf16 %v935, %v931
      %3532 = vxpose.xlu0.c.b16.start [1/8] %v3520, 128
      %3533 = vxpose.xlu0.c.b16.cont [2/8] %v3522, 128
      %3534 = vxpose.xlu0.c.b16.cont [3/8] 0, 128
      %3535 = vxpose.xlu0.c.b16.cont [4/8] 0, 128
      %3536 = vxpose.xlu0.c.b16.cont [5/8] 0, 128
      %3537 = vxpose.xlu0.c.b16.cont [6/8] 0, 128
      %3538 = vxpose.xlu0.c.b16.cont [7/8] 0, 128
      %3539 = vxpose.xlu0.c.b16.end [8/8] 0, 128
      %v3540 = vpop.trf.xlu0
      %v3541 = vpop.trf.xlu0
      %v3542 = vpop.trf.xlu0
      %v3543 = vpop.trf.xlu0
      %v3544 = vpop.trf.xlu0
      %v3545 = vpop.trf.xlu0
      %v3546 = vpop.trf.xlu0
      %v3547 = vpop.trf.xlu0
      %3548 = vxpose.xlu0.c.b16.start [1/8] %v3521, 128
      %3549 = vxpose.xlu0.c.b16.cont [2/8] %v3523, 128
      %3550 = vxpose.xlu0.c.b16.cont [3/8] 0, 128
      %3551 = vxpose.xlu0.c.b16.cont [4/8] 0, 128
      %3552 = vxpose.xlu0.c.b16.cont [5/8] 0, 128
      %3553 = vxpose.xlu0.c.b16.cont [6/8] 0, 128
      %3554 = vxpose.xlu0.c.b16.cont [7/8] 0, 128
      %3555 = vxpose.xlu0.c.b16.end [8/8] 0, 128
      %v3556 = vpop.trf.xlu0
      %v3557 = vpop.trf.xlu0
      %v3558 = vpop.trf.xlu0
      %v3559 = vpop.trf.xlu0
      %v3560 = vpop.trf.xlu0
      %v3561 = vpop.trf.xlu0
      %v3562 = vpop.trf.xlu0
      %v3563 = vpop.trf.xlu0
      %v3565 = vsel %vm989, %v3540, 0
      %v3568 = vsel %vm989, %v3541, 0
      %v3571 = vsel %vm989, %v3542, 0
      %v3574 = vsel %vm989, %v3543, 0
      %v3577 = vsel %vm989, %v3544, 0
      %v3580 = vsel %vm989, %v3545, 0
      %v3583 = vsel %vm989, %v3546, 0
      %v3586 = vsel %vm989, %v3547, 0
      %v3589 = vsel %vm989, %v3556, 0
      %v3592 = vsel %vm989, %v3557, 0
      %v3595 = vsel %vm989, %v3558, 0
      %v3598 = vsel %vm989, %v3559, 0
      %v3601 = vsel %vm989, %v3560, 0
      %v3604 = vsel %vm989, %v3561, 0
      %v3607 = vsel %vm989, %v3562, 0
      %v3610 = vsel %vm989, %v3563, 0
      %3612 = vmatprep.subr.bf16.mxu0 %v3525
      %3613 = vmatpush1.bf16.msra.mxu0 %v3524
      %3614 = vmatprep.subr.bf16.mxu0 %v3527
      %3615 = vmatpush1.bf16.msra.mxu0 %v3526
      %3616 = vmatprep.subr.bf16.mxu0 0
      %3617 = vmatpush1.bf16.msra.mxu0 0
      %3618 = vmatprep.subr.bf16.mxu0 0
      %3619 = vmatpush1.bf16.msra.mxu0 0
      %3620 = vmatprep.subr.bf16.mxu0 0
      %3621 = vmatpush1.bf16.msra.mxu0 0
      %3622 = vmatprep.subr.bf16.mxu0 0
      %3623 = vmatpush1.bf16.msra.mxu0 0
      %3624 = vmatprep.subr.bf16.mxu0 0
      %3625 = vmatpush1.bf16.msra.mxu0 0
      %3626 = vmatprep.subr.bf16.mxu0 0
      %3627 = vmatpush1.bf16.msra.mxu0 0
      %3628 = vmatprep.subr.bf16.mxu0 0
      %3629 = vmatpush1.bf16.msra.mxu0 0
      %3630 = vmatprep.subr.bf16.mxu0 0
      %3631 = vmatpush1.bf16.msra.mxu0 0
      %3632 = vmatprep.subr.bf16.mxu0 0
      %3633 = vmatpush1.bf16.msra.mxu0 0
      %3634 = vmatprep.subr.bf16.mxu0 0
      %3635 = vmatpush1.bf16.msra.mxu0 0
      %3636 = vmatprep.subr.bf16.mxu0 0
      %3637 = vmatpush1.bf16.msra.mxu0 0
      %3638 = vmatprep.subr.bf16.mxu0 0
      %3639 = vmatpush1.bf16.msra.mxu0 0
      %3640 = vmatprep.subr.bf16.mxu0 0
      %3641 = vmatpush1.bf16.msra.mxu0 0
      %3642 = vmatprep.subr.bf16.mxu0 0
      %3643 = vmatpush1.bf16.msra.mxu0 0
      %3644 = vmatprep.mubr.bf16.mxu0 0
      %3645 = vmatmul.mubr.bf16.gmra.mrb[0].mxu0 %v3565
      %v3646 = vpop.f32.mrb[0].mxu0
      %v3647 = vadd.f32 0.0, %v3646
      %v3648 = vpop.f32.mrb[0].mxu0
      %v3649 = vadd.f32 0.0, %v3648
      %v3650 = vpop.f32.mrb[0].mxu0
      %v3651 = vadd.f32 0.0, %v3650
      %v3652 = vpop.f32.mrb[0].mxu0
      %v3653 = vadd.f32 0.0, %v3652
      %3654 = vmatprep.mubr.bf16.mxu0 0
      %3655 = vmatmul.mubr.bf16.gmra.mrb[0].mxu0 %v3568
      %v3656 = vpop.f32.mrb[0].mxu0
      %v3657 = vadd.f32 0.0, %v3656
      %v3658 = vpop.f32.mrb[0].mxu0
      %v3659 = vadd.f32 0.0, %v3658
      %v3660 = vpop.f32.mrb[0].mxu0
      %v3661 = vadd.f32 0.0, %v3660
      %v3662 = vpop.f32.mrb[0].mxu0
      %v3663 = vadd.f32 0.0, %v3662
      %3664 = vmatprep.mubr.bf16.mxu0 0
      %3665 = vmatmul.mubr.bf16.gmra.mrb[0].mxu0 %v3571
      %v3666 = vpop.f32.mrb[0].mxu0
      %v3667 = vadd.f32 0.0, %v3666
      %v3668 = vpop.f32.mrb[0].mxu0
      %v3669 = vadd.f32 0.0, %v3668
      %v3670 = vpop.f32.mrb[0].mxu0
      %v3671 = vadd.f32 0.0, %v3670
      %v3672 = vpop.f32.mrb[0].mxu0
      %v3673 = vadd.f32 0.0, %v3672
      %3674 = vmatprep.mubr.bf16.mxu0 0
      %3675 = vmatmul.mubr.bf16.gmra.mrb[0].mxu0 %v3574
      %v3676 = vpop.f32.mrb[0].mxu0
      %v3677 = vadd.f32 0.0, %v3676
      %v3678 = vpop.f32.mrb[0].mxu0
      %v3679 = vadd.f32 0.0, %v3678
      %v3680 = vpop.f32.mrb[0].mxu0
      %v3681 = vadd.f32 0.0, %v3680
      %v3682 = vpop.f32.mrb[0].mxu0
      %v3683 = vadd.f32 0.0, %v3682
      %3684 = vmatprep.mubr.bf16.mxu0 0
      %3685 = vmatmul.mubr.bf16.gmra.mrb[0].mxu0 %v3577
      %v3686 = vpop.f32.mrb[0].mxu0
      %v3687 = vadd.f32 0.0, %v3686
      %v3688 = vpop.f32.mrb[0].mxu0
      %v3689 = vadd.f32 0.0, %v3688
      %v3690 = vpop.f32.mrb[0].mxu0
      %v3691 = vadd.f32 0.0, %v3690
      %v3692 = vpop.f32.mrb[0].mxu0
      %v3693 = vadd.f32 0.0, %v3692
      %3694 = vmatprep.mubr.bf16.mxu0 0
      %3695 = vmatmul.mubr.bf16.gmra.mrb[0].mxu0 %v3580
      %v3696 = vpop.f32.mrb[0].mxu0
      %v3697 = vadd.f32 0.0, %v3696
      %v3698 = vpop.f32.mrb[0].mxu0
      %v3699 = vadd.f32 0.0, %v3698
      %v3700 = vpop.f32.mrb[0].mxu0
      %v3701 = vadd.f32 0.0, %v3700
      %v3702 = vpop.f32.mrb[0].mxu0
      %v3703 = vadd.f32 0.0, %v3702
      %3704 = vmatprep.mubr.bf16.mxu0 0
      %3705 = vmatmul.mubr.bf16.gmra.mrb[0].mxu0 %v3583
      %v3706 = vpop.f32.mrb[0].mxu0
      %v3707 = vadd.f32 0.0, %v3706
      %v3708 = vpop.f32.mrb[0].mxu0
      %v3709 = vadd.f32 0.0, %v3708
      %v3710 = vpop.f32.mrb[0].mxu0
      %v3711 = vadd.f32 0.0, %v3710
      %v3712 = vpop.f32.mrb[0].mxu0
      %v3713 = vadd.f32 0.0, %v3712
      %3714 = vmatprep.mubr.bf16.mxu0 0
      %3715 = vmatmul.mubr.bf16.gmra.mrb[0].mxu0 %v3586
      %v3716 = vpop.f32.mrb[0].mxu0
      %v3717 = vadd.f32 0.0, %v3716
      %v3718 = vpop.f32.mrb[0].mxu0
      %v3719 = vadd.f32 0.0, %v3718
      %v3720 = vpop.f32.mrb[0].mxu0
      %v3721 = vadd.f32 0.0, %v3720
      %v3722 = vpop.f32.mrb[0].mxu0
      %v3723 = vadd.f32 0.0, %v3722
      %3724 = vmatprep.mubr.bf16.mxu0 0
      %3725 = vmatmul.mubr.bf16.gmra.mrb[0].mxu0 %v3589
      %v3726 = vpop.f32.mrb[0].mxu0
      %v3727 = vadd.f32 0.0, %v3726
      %v3728 = vpop.f32.mrb[0].mxu0
      %v3729 = vadd.f32 0.0, %v3728
      %v3730 = vpop.f32.mrb[0].mxu0
      %v3731 = vadd.f32 0.0, %v3730
      %v3732 = vpop.f32.mrb[0].mxu0
      %v3733 = vadd.f32 0.0, %v3732
      %3734 = vmatprep.mubr.bf16.mxu0 0
      %3735 = vmatmul.mubr.bf16.gmra.mrb[0].mxu0 %v3592
      %v3736 = vpop.f32.mrb[0].mxu0
      %v3737 = vadd.f32 0.0, %v3736
      %v3738 = vpop.f32.mrb[0].mxu0
      %v3739 = vadd.f32 0.0, %v3738
      %v3740 = vpop.f32.mrb[0].mxu0
      %v3741 = vadd.f32 0.0, %v3740
      %v3742 = vpop.f32.mrb[0].mxu0
      %v3743 = vadd.f32 0.0, %v3742
      %3744 = vmatprep.mubr.bf16.mxu0 0
      %3745 = vmatmul.mubr.bf16.gmra.mrb[0].mxu0 %v3595
      %v3746 = vpop.f32.mrb[0].mxu0
      %v3747 = vadd.f32 0.0, %v3746
      %v3748 = vpop.f32.mrb[0].mxu0
      %v3749 = vadd.f32 0.0, %v3748
      %v3750 = vpop.f32.mrb[0].mxu0
      %v3751 = vadd.f32 0.0, %v3750
      %v3752 = vpop.f32.mrb[0].mxu0
      %v3753 = vadd.f32 0.0, %v3752
      %3754 = vmatprep.mubr.bf16.mxu0 0
      %3755 = vmatmul.mubr.bf16.gmra.mrb[0].mxu0 %v3598
      %v3756 = vpop.f32.mrb[0].mxu0
      %v3757 = vadd.f32 0.0, %v3756
      %v3758 = vpop.f32.mrb[0].mxu0
      %v3759 = vadd.f32 0.0, %v3758
      %v3760 = vpop.f32.mrb[0].mxu0
      %v3761 = vadd.f32 0.0, %v3760
      %v3762 = vpop.f32.mrb[0].mxu0
      %v3763 = vadd.f32 0.0, %v3762
      %3764 = vmatprep.mubr.bf16.mxu0 0
      %3765 = vmatmul.mubr.bf16.gmra.mrb[0].mxu0 %v3601
      %v3766 = vpop.f32.mrb[0].mxu0
      %v3767 = vadd.f32 0.0, %v3766
      %v3768 = vpop.f32.mrb[0].mxu0
      %v3769 = vadd.f32 0.0, %v3768
      %v3770 = vpop.f32.mrb[0].mxu0
      %v3771 = vadd.f32 0.0, %v3770
      %v3772 = vpop.f32.mrb[0].mxu0
      %v3773 = vadd.f32 0.0, %v3772
      %3774 = vmatprep.mubr.bf16.mxu0 0
      %3775 = vmatmul.mubr.bf16.gmra.mrb[0].mxu0 %v3604
      %v3776 = vpop.f32.mrb[0].mxu0
      %v3777 = vadd.f32 0.0, %v3776
      %v3778 = vpop.f32.mrb[0].mxu0
      %v3779 = vadd.f32 0.0, %v3778
      %v3780 = vpop.f32.mrb[0].mxu0
      %v3781 = vadd.f32 0.0, %v3780
      %v3782 = vpop.f32.mrb[0].mxu0
      %v3783 = vadd.f32 0.0, %v3782
      %3784 = vmatprep.mubr.bf16.mxu0 0
      %3785 = vmatmul.mubr.bf16.gmra.mrb[0].mxu0 %v3607
      %v3786 = vpop.f32.mrb[0].mxu0
      %v3787 = vadd.f32 0.0, %v3786
      %v3788 = vpop.f32.mrb[0].mxu0
      %v3789 = vadd.f32 0.0, %v3788
      %v3790 = vpop.f32.mrb[0].mxu0
      %v3791 = vadd.f32 0.0, %v3790
      %v3792 = vpop.f32.mrb[0].mxu0
      %v3793 = vadd.f32 0.0, %v3792
      %3794 = vmatprep.mubr.bf16.mxu0 0
      %3795 = vmatmul.mubr.bf16.gmra.mrb[0].mxu0 %v3610
      %v3796 = vpop.f32.mrb[0].mxu0
      %v3797 = vadd.f32 0.0, %v3796
      %v3798 = vpop.f32.mrb[0].mxu0
      %v3799 = vadd.f32 0.0, %v3798
      %v3800 = vpop.f32.mrb[0].mxu0
      %v3801 = vadd.f32 0.0, %v3800
      %v3802 = vpop.f32.mrb[0].mxu0
      %v3803 = vadd.f32 0.0, %v3802
      %3804 = vdwg.mxu0
      %v3805 = vmax.f32 %v3647, %v3649
      %3806 = vmax.xlane.f32.xlu0 %v3805
      %v3807 = vpop.xlane.xlu0 %3806
      %v3808 = vmax.f32 %v3651, %v3653
      %3809 = vmax.xlane.f32.xlu0 %v3808
      %v3810 = vpop.xlane.xlu0 %3809
      %v3811 = vmax.f32 %v3657, %v3659
      %3812 = vmax.xlane.f32.xlu0 %v3811
      %v3813 = vpop.xlane.xlu0 %3812
      %v3814 = vmax.f32 %v3661, %v3663
      %3815 = vmax.xlane.f32.xlu0 %v3814
      %v3816 = vpop.xlane.xlu0 %3815
      %v3817 = vmax.f32 %v3667, %v3669
      %3818 = vmax.xlane.f32.xlu0 %v3817
      %v3819 = vpop.xlane.xlu0 %3818
      %v3820 = vmax.f32 %v3671, %v3673
      %3821 = vmax.xlane.f32.xlu0 %v3820
      %v3822 = vpop.xlane.xlu0 %3821
      %v3823 = vmax.f32 %v3677, %v3679
      %3824 = vmax.xlane.f32.xlu0 %v3823
      %v3825 = vpop.xlane.xlu0 %3824
      %v3826 = vmax.f32 %v3681, %v3683
      %3827 = vmax.xlane.f32.xlu0 %v3826
      %v3828 = vpop.xlane.xlu0 %3827
      %v3829 = vmax.f32 %v3687, %v3689
      %3830 = vmax.xlane.f32.xlu0 %v3829
      %v3831 = vpop.xlane.xlu0 %3830
      %v3832 = vmax.f32 %v3691, %v3693
      %3833 = vmax.xlane.f32.xlu0 %v3832
      %v3834 = vpop.xlane.xlu0 %3833
      %v3835 = vmax.f32 %v3697, %v3699
      %3836 = vmax.xlane.f32.xlu0 %v3835
      %v3837 = vpop.xlane.xlu0 %3836
      %v3838 = vmax.f32 %v3701, %v3703
      %3839 = vmax.xlane.f32.xlu0 %v3838
      %v3840 = vpop.xlane.xlu0 %3839
      %v3841 = vmax.f32 %v3707, %v3709
      %3842 = vmax.xlane.f32.xlu0 %v3841
      %v3843 = vpop.xlane.xlu0 %3842
      %v3844 = vmax.f32 %v3711, %v3713
      %3845 = vmax.xlane.f32.xlu0 %v3844
      %v3846 = vpop.xlane.xlu0 %3845
      %v3847 = vmax.f32 %v3717, %v3719
      %3848 = vmax.xlane.f32.xlu0 %v3847
      %v3849 = vpop.xlane.xlu0 %3848
      %v3850 = vmax.f32 %v3721, %v3723
      %3851 = vmax.xlane.f32.xlu0 %v3850
      %v3852 = vpop.xlane.xlu0 %3851
      %v3853 = vmax.f32 %v3727, %v3729
      %3854 = vmax.xlane.f32.xlu0 %v3853
      %v3855 = vpop.xlane.xlu0 %3854
      %v3856 = vmax.f32 %v3731, %v3733
      %3857 = vmax.xlane.f32.xlu0 %v3856
      %v3858 = vpop.xlane.xlu0 %3857
      %v3859 = vmax.f32 %v3737, %v3739
      %3860 = vmax.xlane.f32.xlu0 %v3859
      %v3861 = vpop.xlane.xlu0 %3860
      %v3862 = vmax.f32 %v3741, %v3743
      %3863 = vmax.xlane.f32.xlu0 %v3862
      %v3864 = vpop.xlane.xlu0 %3863
      %v3865 = vmax.f32 %v3747, %v3749
      %3866 = vmax.xlane.f32.xlu0 %v3865
      %v3867 = vpop.xlane.xlu0 %3866
      %v3868 = vmax.f32 %v3751, %v3753
      %3869 = vmax.xlane.f32.xlu0 %v3868
      %v3870 = vpop.xlane.xlu0 %3869
      %v3871 = vmax.f32 %v3757, %v3759
      %3872 = vmax.xlane.f32.xlu0 %v3871
      %v3873 = vpop.xlane.xlu0 %3872
      %v3874 = vmax.f32 %v3761, %v3763
      %3875 = vmax.xlane.f32.xlu0 %v3874
      %v3876 = vpop.xlane.xlu0 %3875
      %v3877 = vmax.f32 %v3767, %v3769
      %3878 = vmax.xlane.f32.xlu0 %v3877
      %v3879 = vpop.xlane.xlu0 %3878
      %v3880 = vmax.f32 %v3771, %v3773
      %3881 = vmax.xlane.f32.xlu0 %v3880
      %v3882 = vpop.xlane.xlu0 %3881
      %v3883 = vmax.f32 %v3777, %v3779
      %3884 = vmax.xlane.f32.xlu0 %v3883
      %v3885 = vpop.xlane.xlu0 %3884
      %v3886 = vmax.f32 %v3781, %v3783
      %3887 = vmax.xlane.f32.xlu0 %v3886
      %v3888 = vpop.xlane.xlu0 %3887
      %v3889 = vmax.f32 %v3787, %v3789
      %3890 = vmax.xlane.f32.xlu0 %v3889
      %v3891 = vpop.xlane.xlu0 %3890
      %v3892 = vmax.f32 %v3791, %v3793
      %3893 = vmax.xlane.f32.xlu0 %v3892
      %v3894 = vpop.xlane.xlu0 %3893
      %v3895 = vmax.f32 %v3797, %v3799
      %3896 = vmax.xlane.f32.xlu0 %v3895
      %v3897 = vpop.xlane.xlu0 %3896
      %v3898 = vmax.f32 %v3801, %v3803
      %3899 = vmax.xlane.f32.xlu0 %v3898
      %v3900 = vpop.xlane.xlu0 %3899
      %v3901 = vsub.f32 %v3647, %v3807
      %v3902 = vsub.f32 %v3649, %v3807
      %v3903 = vsub.f32 %v3651, %v3810
      %v3904 = vsub.f32 %v3653, %v3810
      %v3905 = vsub.f32 %v3657, %v3813
      %v3906 = vsub.f32 %v3659, %v3813
      %v3907 = vsub.f32 %v3661, %v3816
      %v3908 = vsub.f32 %v3663, %v3816
      %v3909 = vsub.f32 %v3667, %v3819
      %v3910 = vsub.f32 %v3669, %v3819
      %v3911 = vsub.f32 %v3671, %v3822
      %v3912 = vsub.f32 %v3673, %v3822
      %v3913 = vsub.f32 %v3677, %v3825
      %v3914 = vsub.f32 %v3679, %v3825
      %v3915 = vsub.f32 %v3681, %v3828
      %v3916 = vsub.f32 %v3683, %v3828
      %v3917 = vsub.f32 %v3687, %v3831
      %v3918 = vsub.f32 %v3689, %v3831
      %v3919 = vsub.f32 %v3691, %v3834
      %v3920 = vsub.f32 %v3693, %v3834
      %v3921 = vsub.f32 %v3697, %v3837
      %v3922 = vsub.f32 %v3699, %v3837
      %v3923 = vsub.f32 %v3701, %v3840
      %v3924 = vsub.f32 %v3703, %v3840
      %v3925 = vsub.f32 %v3707, %v3843
      %v3926 = vsub.f32 %v3709, %v3843
      %v3927 = vsub.f32 %v3711, %v3846
      %v3928 = vsub.f32 %v3713, %v3846
      %v3929 = vsub.f32 %v3717, %v3849
      %v3930 = vsub.f32 %v3719, %v3849
      %v3931 = vsub.f32 %v3721, %v3852
      %v3932 = vsub.f32 %v3723, %v3852
      %v3933 = vsub.f32 %v3727, %v3855
      %v3934 = vsub.f32 %v3729, %v3855
      %v3935 = vsub.f32 %v3731, %v3858
      %v3936 = vsub.f32 %v3733, %v3858
      %v3937 = vsub.f32 %v3737, %v3861
      %v3938 = vsub.f32 %v3739, %v3861
      %v3939 = vsub.f32 %v3741, %v3864
      %v3940 = vsub.f32 %v3743, %v3864
      %v3941 = vsub.f32 %v3747, %v3867
      %v3942 = vsub.f32 %v3749, %v3867
      %v3943 = vsub.f32 %v3751, %v3870
      %v3944 = vsub.f32 %v3753, %v3870
      %v3945 = vsub.f32 %v3757, %v3873
      %v3946 = vsub.f32 %v3759, %v3873
      %v3947 = vsub.f32 %v3761, %v3876
      %v3948 = vsub.f32 %v3763, %v3876
      %v3949 = vsub.f32 %v3767, %v3879
      %v3950 = vsub.f32 %v3769, %v3879
      %v3951 = vsub.f32 %v3771, %v3882
      %v3952 = vsub.f32 %v3773, %v3882
      %v3953 = vsub.f32 %v3777, %v3885
      %v3954 = vsub.f32 %v3779, %v3885
      %v3955 = vsub.f32 %v3781, %v3888
      %v3956 = vsub.f32 %v3783, %v3888
      %v3957 = vsub.f32 %v3787, %v3891
      %v3958 = vsub.f32 %v3789, %v3891
      %v3959 = vsub.f32 %v3791, %v3894
      %v3960 = vsub.f32 %v3793, %v3894
      %v3961 = vsub.f32 %v3797, %v3897
      %v3962 = vsub.f32 %v3799, %v3897
      %v3963 = vsub.f32 %v3801, %v3900
      %v3964 = vsub.f32 %v3803, %v3900
      %v3965 = vmul.f32 %v3901, 1.442695
      %v3966 = vpow.pop %v3965
      %v3967 = vmul.f32 %v3902, 1.442695
      %v3968 = vpow.pop %v3967
      %v3969 = vmul.f32 %v3903, 1.442695
      %v3970 = vpow.pop %v3969
      %v3971 = vmul.f32 %v3904, 1.442695
      %v3972 = vpow.pop %v3971
      %v3973 = vmul.f32 %v3905, 1.442695
      %v3974 = vpow.pop %v3973
      %v3975 = vmul.f32 %v3906, 1.442695
      %v3976 = vpow.pop %v3975
      %v3977 = vmul.f32 %v3907, 1.442695
      %v3978 = vpow.pop %v3977
      %v3979 = vmul.f32 %v3908, 1.442695
      %v3980 = vpow.pop %v3979
      %v3981 = vmul.f32 %v3909, 1.442695
      %v3982 = vpow.pop %v3981
      %v3983 = vmul.f32 %v3910, 1.442695
      %v3984 = vpow.pop %v3983
      %v3985 = vmul.f32 %v3911, 1.442695
      %v3986 = vpow.pop %v3985
      %v3987 = vmul.f32 %v3912, 1.442695
      %v3988 = vpow.pop %v3987
      %v3989 = vmul.f32 %v3913, 1.442695
      %v3990 = vpow.pop %v3989
      %v3991 = vmul.f32 %v3914, 1.442695
      %v3992 = vpow.pop %v3991
      %v3993 = vmul.f32 %v3915, 1.442695
      %v3994 = vpow.pop %v3993
      %v3995 = vmul.f32 %v3916, 1.442695
      %v3996 = vpow.pop %v3995
      %v3997 = vmul.f32 %v3917, 1.442695
      %v3998 = vpow.pop %v3997
      %v3999 = vmul.f32 %v3918, 1.442695
      %v4000 = vpow.pop %v3999
      %v4001 = vmul.f32 %v3919, 1.442695
      %v4002 = vpow.pop %v4001
      %v4003 = vmul.f32 %v3920, 1.442695
      %v4004 = vpow.pop %v4003
      %v4005 = vmul.f32 %v3921, 1.442695
      %v4006 = vpow.pop %v4005
      %v4007 = vmul.f32 %v3922, 1.442695
      %v4008 = vpow.pop %v4007
      %v4009 = vmul.f32 %v3923, 1.442695
      %v4010 = vpow.pop %v4009
      %v4011 = vmul.f32 %v3924, 1.442695
      %v4012 = vpow.pop %v4011
      %v4013 = vmul.f32 %v3925, 1.442695
      %v4014 = vpow.pop %v4013
      %v4015 = vmul.f32 %v3926, 1.442695
      %v4016 = vpow.pop %v4015
      %v4017 = vmul.f32 %v3927, 1.442695
      %v4018 = vpow.pop %v4017
      %v4019 = vmul.f32 %v3928, 1.442695
      %v4020 = vpow.pop %v4019
      %v4021 = vmul.f32 %v3929, 1.442695
      %v4022 = vpow.pop %v4021
      %v4023 = vmul.f32 %v3930, 1.442695
      %v4024 = vpow.pop %v4023
      %v4025 = vmul.f32 %v3931, 1.442695
      %v4026 = vpow.pop %v4025
      %v4027 = vmul.f32 %v3932, 1.442695
      %v4028 = vpow.pop %v4027
      %v4029 = vmul.f32 %v3933, 1.442695
      %v4030 = vpow.pop %v4029
      %v4031 = vmul.f32 %v3934, 1.442695
      %v4032 = vpow.pop %v4031
      %v4033 = vmul.f32 %v3935, 1.442695
      %v4034 = vpow.pop %v4033
      %v4035 = vmul.f32 %v3936, 1.442695
      %v4036 = vpow.pop %v4035
      %v4037 = vmul.f32 %v3937, 1.442695
      %v4038 = vpow.pop %v4037
      %v4039 = vmul.f32 %v3938, 1.442695
      %v4040 = vpow.pop %v4039
      %v4041 = vmul.f32 %v3939, 1.442695
      %v4042 = vpow.pop %v4041
      %v4043 = vmul.f32 %v3940, 1.442695
      %v4044 = vpow.pop %v4043
      %v4045 = vmul.f32 %v3941, 1.442695
      %v4046 = vpow.pop %v4045
      %v4047 = vmul.f32 %v3942, 1.442695
      %v4048 = vpow.pop %v4047
      %v4049 = vmul.f32 %v3943, 1.442695
      %v4050 = vpow.pop %v4049
      %v4051 = vmul.f32 %v3944, 1.442695
      %v4052 = vpow.pop %v4051
      %v4053 = vmul.f32 %v3945, 1.442695
      %v4054 = vpow.pop %v4053
      %v4055 = vmul.f32 %v3946, 1.442695
      %v4056 = vpow.pop %v4055
      %v4057 = vmul.f32 %v3947, 1.442695
      %v4058 = vpow.pop %v4057
      %v4059 = vmul.f32 %v3948, 1.442695
      %v4060 = vpow.pop %v4059
      %v4061 = vmul.f32 %v3949, 1.442695
      %v4062 = vpow.pop %v4061
      %v4063 = vmul.f32 %v3950, 1.442695
      %v4064 = vpow.pop %v4063
      %v4065 = vmul.f32 %v3951, 1.442695
      %v4066 = vpow.pop %v4065
      %v4067 = vmul.f32 %v3952, 1.442695
      %v4068 = vpow.pop %v4067
      %v4069 = vmul.f32 %v3953, 1.442695
      %v4070 = vpow.pop %v4069
      %v4071 = vmul.f32 %v3954, 1.442695
      %v4072 = vpow.pop %v4071
      %v4073 = vmul.f32 %v3955, 1.442695
      %v4074 = vpow.pop %v4073
      %v4075 = vmul.f32 %v3956, 1.442695
      %v4076 = vpow.pop %v4075
      %v4077 = vmul.f32 %v3957, 1.442695
      %v4078 = vpow.pop %v4077
      %v4079 = vmul.f32 %v3958, 1.442695
      %v4080 = vpow.pop %v4079
      %v4081 = vmul.f32 %v3959, 1.442695
      %v4082 = vpow.pop %v4081
      %v4083 = vmul.f32 %v3960, 1.442695
      %v4084 = vpow.pop %v4083
      %v4085 = vmul.f32 %v3961, 1.442695
      %v4086 = vpow.pop %v4085
      %v4087 = vmul.f32 %v3962, 1.442695
      %v4088 = vpow.pop %v4087
      %v4089 = vmul.f32 %v3963, 1.442695
      %v4090 = vpow.pop %v4089
      %v4091 = vmul.f32 %v3964, 1.442695
      %v4092 = vpow.pop %v4091
      %v4093 = vadd.f32 %v3966, %v3968
      %4094 = vadd.xlane.f32.xlu0 %v4093
      %v4095 = vpop.xlane.xlu0 %4094
      %v4096 = vadd.f32 %v3970, %v3972
      %4097 = vadd.xlane.f32.xlu0 %v4096
      %v4098 = vpop.xlane.xlu0 %4097
      %v4099 = vadd.f32 %v3974, %v3976
      %4100 = vadd.xlane.f32.xlu0 %v4099
      %v4101 = vpop.xlane.xlu0 %4100
      %v4102 = vadd.f32 %v3978, %v3980
      %4103 = vadd.xlane.f32.xlu0 %v4102
      %v4104 = vpop.xlane.xlu0 %4103
      %v4105 = vadd.f32 %v3982, %v3984
      %4106 = vadd.xlane.f32.xlu0 %v4105
      %v4107 = vpop.xlane.xlu0 %4106
      %v4108 = vadd.f32 %v3986, %v3988
      %4109 = vadd.xlane.f32.xlu0 %v4108
      %v4110 = vpop.xlane.xlu0 %4109
      %v4111 = vadd.f32 %v3990, %v3992
      %4112 = vadd.xlane.f32.xlu0 %v4111
      %v4113 = vpop.xlane.xlu0 %4112
      %v4114 = vadd.f32 %v3994, %v3996
      %4115 = vadd.xlane.f32.xlu0 %v4114
      %v4116 = vpop.xlane.xlu0 %4115
      %v4117 = vadd.f32 %v3998, %v4000
      %4118 = vadd.xlane.f32.xlu0 %v4117
      %v4119 = vpop.xlane.xlu0 %4118
      %v4120 = vadd.f32 %v4002, %v4004
      %4121 = vadd.xlane.f32.xlu0 %v4120
      %v4122 = vpop.xlane.xlu0 %4121
      %v4123 = vadd.f32 %v4006, %v4008
      %4124 = vadd.xlane.f32.xlu0 %v4123
      %v4125 = vpop.xlane.xlu0 %4124
      %v4126 = vadd.f32 %v4010, %v4012
      %4127 = vadd.xlane.f32.xlu0 %v4126
      %v4128 = vpop.xlane.xlu0 %4127
      %v4129 = vadd.f32 %v4014, %v4016
      %4130 = vadd.xlane.f32.xlu0 %v4129
      %v4131 = vpop.xlane.xlu0 %4130
      %v4132 = vadd.f32 %v4018, %v4020
      %4133 = vadd.xlane.f32.xlu0 %v4132
      %v4134 = vpop.xlane.xlu0 %4133
      %v4135 = vadd.f32 %v4022, %v4024
      %4136 = vadd.xlane.f32.xlu0 %v4135
      %v4137 = vpop.xlane.xlu0 %4136
      %v4138 = vadd.f32 %v4026, %v4028
      %4139 = vadd.xlane.f32.xlu0 %v4138
      %v4140 = vpop.xlane.xlu0 %4139
      %v4141 = vadd.f32 %v4030, %v4032
      %4142 = vadd.xlane.f32.xlu0 %v4141
      %v4143 = vpop.xlane.xlu0 %4142
      %v4144 = vadd.f32 %v4034, %v4036
      %4145 = vadd.xlane.f32.xlu0 %v4144
      %v4146 = vpop.xlane.xlu0 %4145
      %v4147 = vadd.f32 %v4038, %v4040
      %4148 = vadd.xlane.f32.xlu0 %v4147
      %v4149 = vpop.xlane.xlu0 %4148
      %v4150 = vadd.f32 %v4042, %v4044
      %4151 = vadd.xlane.f32.xlu0 %v4150
      %v4152 = vpop.xlane.xlu0 %4151
      %v4153 = vadd.f32 %v4046, %v4048
      %4154 = vadd.xlane.f32.xlu0 %v4153
      %v4155 = vpop.xlane.xlu0 %4154
      %v4156 = vadd.f32 %v4050, %v4052
      %4157 = vadd.xlane.f32.xlu0 %v4156
      %v4158 = vpop.xlane.xlu0 %4157
      %v4159 = vadd.f32 %v4054, %v4056
      %4160 = vadd.xlane.f32.xlu0 %v4159
      %v4161 = vpop.xlane.xlu0 %4160
      %v4162 = vadd.f32 %v4058, %v4060
      %4163 = vadd.xlane.f32.xlu0 %v4162
      %v4164 = vpop.xlane.xlu0 %4163
      %v4165 = vadd.f32 %v4062, %v4064
      %4166 = vadd.xlane.f32.xlu0 %v4165
      %v4167 = vpop.xlane.xlu0 %4166
      %v4168 = vadd.f32 %v4066, %v4068
      %4169 = vadd.xlane.f32.xlu0 %v4168
      %v4170 = vpop.xlane.xlu0 %4169
      %v4171 = vadd.f32 %v4070, %v4072
      %4172 = vadd.xlane.f32.xlu0 %v4171
      %v4173 = vpop.xlane.xlu0 %4172
      %v4174 = vadd.f32 %v4074, %v4076
      %4175 = vadd.xlane.f32.xlu0 %v4174
      %v4176 = vpop.xlane.xlu0 %4175
      %v4177 = vadd.f32 %v4078, %v4080
      %4178 = vadd.xlane.f32.xlu0 %v4177
      %v4179 = vpop.xlane.xlu0 %4178
      %v4180 = vadd.f32 %v4082, %v4084
      %4181 = vadd.xlane.f32.xlu0 %v4180
      %v4182 = vpop.xlane.xlu0 %4181
      %v4183 = vadd.f32 %v4086, %v4088
      %4184 = vadd.xlane.f32.xlu0 %v4183
      %v4185 = vpop.xlane.xlu0 %4184
      %v4186 = vadd.f32 %v4090, %v4092
      %4187 = vadd.xlane.f32.xlu0 %v4186
      %v4188 = vpop.xlane.xlu0 %4187
      %v4189 = vrcp.pop %v4095
      %v4190 = vrcp.pop %v4098
      %v4191 = vrcp.pop %v4101
      %v4192 = vrcp.pop %v4104
      %v4193 = vrcp.pop %v4107
      %v4194 = vrcp.pop %v4110
      %v4195 = vrcp.pop %v4113
      %v4196 = vrcp.pop %v4116
      %v4197 = vrcp.pop %v4119
      %v4198 = vrcp.pop %v4122
      %v4199 = vrcp.pop %v4125
      %v4200 = vrcp.pop %v4128
      %v4201 = vrcp.pop %v4131
      %v4202 = vrcp.pop %v4134
      %v4203 = vrcp.pop %v4137
      %v4204 = vrcp.pop %v4140
      %v4205 = vrcp.pop %v4143
      %v4206 = vrcp.pop %v4146
      %v4207 = vrcp.pop %v4149
      %v4208 = vrcp.pop %v4152
      %v4209 = vrcp.pop %v4155
      %v4210 = vrcp.pop %v4158
      %v4211 = vrcp.pop %v4161
      %v4212 = vrcp.pop %v4164
      %v4213 = vrcp.pop %v4167
      %v4214 = vrcp.pop %v4170
      %v4215 = vrcp.pop %v4173
      %v4216 = vrcp.pop %v4176
      %v4217 = vrcp.pop %v4179
      %v4218 = vrcp.pop %v4182
      %v4219 = vrcp.pop %v4185
      %v4220 = vrcp.pop %v4188
      %v4221 = vmul.f32 %v3966, %v4189
      %v4222 = vmul.f32 %v3968, %v4189
      %v4223 = vmul.f32 %v3970, %v4190
      %v4224 = vmul.f32 %v3972, %v4190
      %v4225 = vmul.f32 %v3974, %v4191
      %v4226 = vmul.f32 %v3976, %v4191
      %v4227 = vmul.f32 %v3978, %v4192
      %v4228 = vmul.f32 %v3980, %v4192
      %v4229 = vmul.f32 %v3982, %v4193
      %v4230 = vmul.f32 %v3984, %v4193
      %v4231 = vmul.f32 %v3986, %v4194
      %v4232 = vmul.f32 %v3988, %v4194
      %v4233 = vmul.f32 %v3990, %v4195
      %v4234 = vmul.f32 %v3992, %v4195
      %v4235 = vmul.f32 %v3994, %v4196
      %v4236 = vmul.f32 %v3996, %v4196
      %v4237 = vmul.f32 %v3998, %v4197
      %v4238 = vmul.f32 %v4000, %v4197
      %v4239 = vmul.f32 %v4002, %v4198
      %v4240 = vmul.f32 %v4004, %v4198
      %v4241 = vmul.f32 %v4006, %v4199
      %v4242 = vmul.f32 %v4008, %v4199
      %v4243 = vmul.f32 %v4010, %v4200
      %v4244 = vmul.f32 %v4012, %v4200
      %v4245 = vmul.f32 %v4014, %v4201
      %v4246 = vmul.f32 %v4016, %v4201
      %v4247 = vmul.f32 %v4018, %v4202
      %v4248 = vmul.f32 %v4020, %v4202
      %v4249 = vmul.f32 %v4022, %v4203
      %v4250 = vmul.f32 %v4024, %v4203
      %v4251 = vmul.f32 %v4026, %v4204
      %v4252 = vmul.f32 %v4028, %v4204
      %v4253 = vmul.f32 %v4030, %v4205
      %v4254 = vmul.f32 %v4032, %v4205
      %v4255 = vmul.f32 %v4034, %v4206
      %v4256 = vmul.f32 %v4036, %v4206
      %v4257 = vmul.f32 %v4038, %v4207
      %v4258 = vmul.f32 %v4040, %v4207
      %v4259 = vmul.f32 %v4042, %v4208
      %v4260 = vmul.f32 %v4044, %v4208
      %v4261 = vmul.f32 %v4046, %v4209
      %v4262 = vmul.f32 %v4048, %v4209
      %v4263 = vmul.f32 %v4050, %v4210
      %v4264 = vmul.f32 %v4052, %v4210
      %v4265 = vmul.f32 %v4054, %v4211
      %v4266 = vmul.f32 %v4056, %v4211
      %v4267 = vmul.f32 %v4058, %v4212
      %v4268 = vmul.f32 %v4060, %v4212
      %v4269 = vmul.f32 %v4062, %v4213
      %v4270 = vmul.f32 %v4064, %v4213
      %v4271 = vmul.f32 %v4066, %v4214
      %v4272 = vmul.f32 %v4068, %v4214
      %v4273 = vmul.f32 %v4070, %v4215
      %v4274 = vmul.f32 %v4072, %v4215
      %v4275 = vmul.f32 %v4074, %v4216
      %v4276 = vmul.f32 %v4076, %v4216
      %v4277 = vmul.f32 %v4078, %v4217
      %v4278 = vmul.f32 %v4080, %v4217
      %v4279 = vmul.f32 %v4082, %v4218
      %v4280 = vmul.f32 %v4084, %v4218
      %v4281 = vmul.f32 %v4086, %v4219
      %v4282 = vmul.f32 %v4088, %v4219
      %v4283 = vmul.f32 %v4090, %v4220
      %v4284 = vmul.f32 %v4092, %v4220
      %v4285 = vpack.c.bf16 %v4223, %v4221
      %v4286 = vpack.c.bf16 %v4224, %v4222
      %v4287 = vpack.c.bf16 %v4227, %v4225
      %v4288 = vpack.c.bf16 %v4228, %v4226
      %v4289 = vpack.c.bf16 %v4231, %v4229
      %v4290 = vpack.c.bf16 %v4232, %v4230
      %v4291 = vpack.c.bf16 %v4235, %v4233
      %v4292 = vpack.c.bf16 %v4236, %v4234
      %v4293 = vpack.c.bf16 %v4239, %v4237
      %v4294 = vpack.c.bf16 %v4240, %v4238
      %v4295 = vpack.c.bf16 %v4243, %v4241
      %v4296 = vpack.c.bf16 %v4244, %v4242
      %v4297 = vpack.c.bf16 %v4247, %v4245
      %v4298 = vpack.c.bf16 %v4248, %v4246
      %v4299 = vpack.c.bf16 %v4251, %v4249
      %v4300 = vpack.c.bf16 %v4252, %v4250
      %v4301 = vpack.c.bf16 %v4255, %v4253
      %v4302 = vpack.c.bf16 %v4256, %v4254
      %v4303 = vpack.c.bf16 %v4259, %v4257
      %v4304 = vpack.c.bf16 %v4260, %v4258
      %v4305 = vpack.c.bf16 %v4263, %v4261
      %v4306 = vpack.c.bf16 %v4264, %v4262
      %v4307 = vpack.c.bf16 %v4267, %v4265
      %v4308 = vpack.c.bf16 %v4268, %v4266
      %v4309 = vpack.c.bf16 %v4271, %v4269
      %v4310 = vpack.c.bf16 %v4272, %v4270
      %v4311 = vpack.c.bf16 %v4275, %v4273
      %v4312 = vpack.c.bf16 %v4276, %v4274
      %v4313 = vpack.c.bf16 %v4279, %v4277
      %v4314 = vpack.c.bf16 %v4280, %v4278
      %v4315 = vpack.c.bf16 %v4283, %v4281
      %v4316 = vpack.c.bf16 %v4284, %v4282
      %4317 = vmatprep.subr.bf16.mxu0 %v4286
      %4318 = vmatpush1.bf16.xpose.msra.mxu0 %v4285
      %4319 = vmatprep.subr.bf16.mxu0 %v4288
      %4320 = vmatpush1.bf16.xpose.msra.mxu0 %v4287
      %4321 = vmatprep.subr.bf16.mxu0 %v4290
      %4322 = vmatpush1.bf16.xpose.msra.mxu0 %v4289
      %4323 = vmatprep.subr.bf16.mxu0 %v4292
      %4324 = vmatpush1.bf16.xpose.msra.mxu0 %v4291
      %4325 = vmatprep.subr.bf16.mxu0 %v4294
      %4326 = vmatpush1.bf16.xpose.msra.mxu0 %v4293
      %4327 = vmatprep.subr.bf16.mxu0 %v4296
      %4328 = vmatpush1.bf16.xpose.msra.mxu0 %v4295
      %4329 = vmatprep.subr.bf16.mxu0 %v4298
      %4330 = vmatpush1.bf16.xpose.msra.mxu0 %v4297
      %4331 = vmatprep.subr.bf16.mxu0 %v4300
      %4332 = vmatpush1.bf16.xpose.msra.mxu0 %v4299
      %4333 = vmatprep.subr.bf16.mxu0 %v4302
      %4334 = vmatpush1.bf16.xpose.msra.mxu0 %v4301
      %4335 = vmatprep.subr.bf16.mxu0 %v4304
      %4336 = vmatpush1.bf16.xpose.msra.mxu0 %v4303
      %4337 = vmatprep.subr.bf16.mxu0 %v4306
      %4338 = vmatpush1.bf16.xpose.msra.mxu0 %v4305
      %4339 = vmatprep.subr.bf16.mxu0 %v4308
      %4340 = vmatpush1.bf16.xpose.msra.mxu0 %v4307
      %4341 = vmatprep.subr.bf16.mxu0 %v4310
      %4342 = vmatpush1.bf16.xpose.msra.mxu0 %v4309
      %4343 = vmatprep.subr.bf16.mxu0 %v4312
      %4344 = vmatpush1.bf16.xpose.msra.mxu0 %v4311
      %4345 = vmatprep.subr.bf16.mxu0 %v4314
      %4346 = vmatpush1.bf16.xpose.msra.mxu0 %v4313
      %4347 = vmatprep.subr.bf16.mxu0 %v4316
      %4348 = vmatpush1.bf16.xpose.msra.mxu0 %v4315
      %4349 = vmatprep.mubr.bf16.mxu0 %v3529
      %4350 = vmatmul.mubr.bf16.gmra.mrb[0].mxu0 %v3528
      %v4351 = vpop.f32.mrb[0].mxu0
      %v4352 = vadd.f32 0.0, %v4351
      %v4353 = vpop.f32.mrb[0].mxu0
      %v4354 = vadd.f32 0.0, %v4353
      %v4355 = vpop.f32.mrb[0].mxu0
      %v4356 = vadd.f32 0.0, %v4355
      %v4357 = vpop.f32.mrb[0].mxu0
      %v4358 = vadd.f32 0.0, %v4357
      %4359 = vmatprep.mubr.bf16.mxu0 %v3531
      %4360 = vmatmul.mubr.bf16.gmra.mrb[0].mxu0 %v3530
      %v4361 = vpop.f32.mrb[0].mxu0
      %v4362 = vadd.f32 0.0, %v4361
      %v4363 = vpop.f32.mrb[0].mxu0
      %v4364 = vadd.f32 0.0, %v4363
      %v4365 = vpop.f32.mrb[0].mxu0
      %v4366 = vadd.f32 0.0, %v4365
      %v4367 = vpop.f32.mrb[0].mxu0
      %v4368 = vadd.f32 0.0, %v4367
      %4369 = vdwg.mxu0
      %v4370 = vpack.c.bf16 %v1782, %v1778
      %v4371 = vpack.c.bf16 %v1784, %v1780
      %v4372 = vpack.c.bf16 %v1792, %v1788
      %v4373 = vpack.c.bf16 %v1794, %v1790
      %v4374 = vpack.c.bf16 %v2640, %v2636
      %v4375 = vpack.c.bf16 %v2642, %v2638
      %v4376 = vpack.c.bf16 %v2650, %v2646
      %v4377 = vpack.c.bf16 %v2652, %v2648
      %v4378 = vpack.c.bf16 %v3498, %v3494
      %v4379 = vpack.c.bf16 %v3500, %v3496
      %v4380 = vpack.c.bf16 %v3508, %v3504
      %v4381 = vpack.c.bf16 %v3510, %v3506
      %v4382 = vpack.c.bf16 %v4356, %v4352
      %v4383 = vpack.c.bf16 %v4358, %v4354
      %v4384 = vpack.c.bf16 %v4366, %v4362
      %v4385 = vpack.c.bf16 %v4368, %v4364
      %v4386 = vld [vmem:[%s2] sm:$0xf]
      %v4387 = vld [vmem:[%s2 + $0x4] sm:$0xf]
      %v4388 = vld [vmem:[%s2 + $0x8] sm:$0xf]
      %v4389 = vld [vmem:[%s2 + $0xc] sm:$0xf]
      %v4390 = vld [vmem:[%s2 + $0x10] sm:$0xf]
      %v4391 = vld [vmem:[%s2 + $0x14] sm:$0xf]
      %v4392 = vld [vmem:[%s2 + $0x18] sm:$0xf]
      %v4393 = vld [vmem:[%s2 + $0x1c] sm:$0xf]
      %v4394 = vld [vmem:[%s3] sm:$0xff]
      %v4395 = vld [vmem:[%s3 + $0x8] sm:$0xff]
      %v4396 = vld [vmem:[%s3 + $0x10] sm:$0xff]
      %v4397 = vld [vmem:[%s3 + $0x18] sm:$0xff]
      %v4398 = vld [vmem:[%s3 + $0x20] sm:$0xff]
      %v4399 = vld [vmem:[%s3 + $0x28] sm:$0xff]
      %v4400 = vld [vmem:[%s3 + $0x30] sm:$0xff]
      %v4401 = vld [vmem:[%s3 + $0x38] sm:$0xff]
      %4403 = vset.pattern.permute.xlu0 0
      %4404 = vperm.xlu0 %4403, %v4394
      %v4405 = vpop.permute.xlu0 %4404
      %4408 = vset.pattern.permute.xlu0 0
      %4409 = vperm.xlu0 %4408, %v4395
      %v4410 = vpop.permute.xlu0 %4409
      %4413 = vset.pattern.permute.xlu0 0
      %4414 = vperm.xlu0 %4413, %v4396
      %v4415 = vpop.permute.xlu0 %4414
      %4418 = vset.pattern.permute.xlu0 0
      %4419 = vperm.xlu0 %4418, %v4397
      %v4420 = vpop.permute.xlu0 %4419
      %4423 = vset.pattern.permute.xlu0 0
      %4424 = vperm.xlu0 %4423, %v4398
      %v4425 = vpop.permute.xlu0 %4424
      %4428 = vset.pattern.permute.xlu0 0
      %4429 = vperm.xlu0 %4428, %v4399
      %v4430 = vpop.permute.xlu0 %4429
      %4433 = vset.pattern.permute.xlu0 0
      %4434 = vperm.xlu0 %4433, %v4400
      %v4435 = vpop.permute.xlu0 %4434
      %4438 = vset.pattern.permute.xlu0 0
      %4439 = vperm.xlu0 %4438, %v4401
      %v4440 = vpop.permute.xlu0 %4439
      %v4450 = vunpack.c.l.b16 %v4386
      %v4451 = vunpack.c.l.b16 %v4387
      %v4452 = vunpack.c.l.b16 %v4388
      %v4453 = vunpack.c.l.b16 %v4389
      %v4454 = vunpack.c.l.b16 %v4390
      %v4455 = vunpack.c.l.b16 %v4391
      %v4456 = vunpack.c.l.b16 %v4392
      %v4457 = vunpack.c.l.b16 %v4393
      %v4458 = vpack.c.b16 %v4451, %v4450
      %v4459 = vpack.c.b16 %v4453, %v4452
      %v4460 = vpack.c.b16 %v4455, %v4454
      %v4461 = vpack.c.b16 %v4457, %v4456
      %4466 = vmatprep.subr.bf16.mxu0 %v4371
      %4467 = vmatpush1.bf16.msra.mxu0 %v4370
      %4468 = vmatprep.subr.bf16.mxu0 %v4373
      %4469 = vmatpush1.bf16.msra.mxu0 %v4372
      %4470 = vmatprep.subr.bf16.mxu0 %v4375
      %4471 = vmatpush1.bf16.msra.mxu0 %v4374
      %4472 = vmatprep.subr.bf16.mxu0 %v4377
      %4473 = vmatpush1.bf16.msra.mxu0 %v4376
      %4474 = vmatprep.subr.bf16.mxu0 %v4379
      %4475 = vmatpush1.bf16.msra.mxu0 %v4378
      %4476 = vmatprep.subr.bf16.mxu0 %v4381
      %4477 = vmatpush1.bf16.msra.mxu0 %v4380
      %4478 = vmatprep.subr.bf16.mxu0 %v4383
      %4479 = vmatpush1.bf16.msra.mxu0 %v4382
      %4480 = vmatprep.subr.bf16.mxu0 %v4385
      %4481 = vmatpush1.bf16.msra.mxu0 %v4384
      %4482 = vmatprep.subr.bf16.mxu0 0
      %4483 = vmatpush1.bf16.msra.mxu0 0
      %4484 = vmatprep.subr.bf16.mxu0 0
      %4485 = vmatpush1.bf16.msra.mxu0 0
      %4486 = vmatprep.subr.bf16.mxu0 0
      %4487 = vmatpush1.bf16.msra.mxu0 0
      %4488 = vmatprep.subr.bf16.mxu0 0
      %4489 = vmatpush1.bf16.msra.mxu0 0
      %4490 = vmatprep.subr.bf16.mxu0 0
      %4491 = vmatpush1.bf16.msra.mxu0 0
      %4492 = vmatprep.subr.bf16.mxu0 0
      %4493 = vmatpush1.bf16.msra.mxu0 0
      %4494 = vmatprep.subr.bf16.mxu0 0
      %4495 = vmatpush1.bf16.msra.mxu0 0
      %4496 = vmatprep.subr.bf16.mxu0 0
      %4497 = vmatpush1.bf16.msra.mxu0 0
      %4498 = vmatprep.mubr.bf16.mxu0 0
      %4499 = vmatmul.mubr.bf16.gmra.mrb[0].mxu0 %v4458
      %v4500 = vpop.f32.mrb[0].mxu0
      %v4501 = vadd.f32 %v4405, %v4500
      %v4502 = vpop.f32.mrb[0].mxu0
      %v4503 = vadd.f32 %v4405, %v4502
      %v4504 = vpop.f32.mrb[0].mxu0
      %v4505 = vadd.f32 %v4410, %v4504
      %v4506 = vpop.f32.mrb[0].mxu0
      %v4507 = vadd.f32 %v4410, %v4506
      %4508 = vmatprep.mubr.bf16.mxu0 0
      %4509 = vmatmul.mubr.bf16.gmra.mrb[0].mxu0 %v4459
      %v4510 = vpop.f32.mrb[0].mxu0
      %v4511 = vadd.f32 %v4415, %v4510
      %v4512 = vpop.f32.mrb[0].mxu0
      %v4513 = vadd.f32 %v4415, %v4512
      %v4514 = vpop.f32.mrb[0].mxu0
      %v4515 = vadd.f32 %v4420, %v4514
      %v4516 = vpop.f32.mrb[0].mxu0
      %v4517 = vadd.f32 %v4420, %v4516
      %4518 = vmatprep.mubr.bf16.mxu0 0
      %4519 = vmatmul.mubr.bf16.gmra.mrb[0].mxu0 %v4460
      %v4520 = vpop.f32.mrb[0].mxu0
      %v4521 = vadd.f32 %v4425, %v4520
      %v4522 = vpop.f32.mrb[0].mxu0
      %v4523 = vadd.f32 %v4425, %v4522
      %v4524 = vpop.f32.mrb[0].mxu0
      %v4525 = vadd.f32 %v4430, %v4524
      %v4526 = vpop.f32.mrb[0].mxu0
      %v4527 = vadd.f32 %v4430, %v4526
      %4528 = vmatprep.mubr.bf16.mxu0 0
      %4529 = vmatmul.mubr.bf16.gmra.mrb[0].mxu0 %v4461
      %v4530 = vpop.f32.mrb[0].mxu0
      %v4531 = vadd.f32 %v4435, %v4530
      %v4532 = vpop.f32.mrb[0].mxu0
      %v4533 = vadd.f32 %v4435, %v4532
      %v4534 = vpop.f32.mrb[0].mxu0
      %v4535 = vadd.f32 %v4440, %v4534
      %v4536 = vpop.f32.mrb[0].mxu0
      %v4537 = vadd.f32 %v4440, %v4536
      %4538 = vdwg.mxu0
      %v4539 = vadd.f32 %v4501, %v226
      %v4540 = vadd.f32 %v4503, %v227
      %v4541 = vadd.f32 %v4505, %v228
      %v4542 = vadd.f32 %v4507, %v229
      %v4543 = vadd.f32 %v4511, %v230
      %v4544 = vadd.f32 %v4513, %v231
      %v4545 = vadd.f32 %v4515, %v232
      %v4546 = vadd.f32 %v4517, %v233
      %v4547 = vadd.f32 %v4521, %v234
      %v4548 = vadd.f32 %v4523, %v235
      %v4549 = vadd.f32 %v4525, %v236
      %v4550 = vadd.f32 %v4527, %v237
      %v4551 = vadd.f32 %v4531, %v238
      %v4552 = vadd.f32 %v4533, %v239
      %v4553 = vadd.f32 %v4535, %v240
      %v4554 = vadd.f32 %v4537, %v241
      %4555 = vst [vmem:[%s224] sm:$0xff] %v4539
      %4556 = vst [vmem:[%s224 + $0x8] sm:$0xff] %v4540
      %4557 = vst [vmem:[%s224 + $0x10] sm:$0xff] %v4541
      %4558 = vst [vmem:[%s224 + $0x18] sm:$0xff] %v4542
      %4559 = vst [vmem:[%s224 + $0x20] sm:$0xff] %v4543
      %4560 = vst [vmem:[%s224 + $0x28] sm:$0xff] %v4544
      %4561 = vst [vmem:[%s224 + $0x30] sm:$0xff] %v4545
      %4562 = vst [vmem:[%s224 + $0x38] sm:$0xff] %v4546
      %4563 = vst [vmem:[%s224 + $0x40] sm:$0xff] %v4547
      %4564 = vst [vmem:[%s224 + $0x48] sm:$0xff] %v4548
      %4565 = vst [vmem:[%s224 + $0x50] sm:$0xff] %v4549
      %4566 = vst [vmem:[%s224 + $0x58] sm:$0xff] %v4550
      %4567 = vst [vmem:[%s224 + $0x60] sm:$0xff] %v4551
      %4568 = vst [vmem:[%s224 + $0x68] sm:$0xff] %v4552
      %4569 = vst [vmem:[%s224 + $0x70] sm:$0xff] %v4553
      %4570 = vst [vmem:[%s224 + $0x78] sm:$0xff] %v4554
      %p4571 = scmp.lt.s32.totalorder %s16, 1
      %s4572 = scalar_select %p4571, %s16, 1
      %s4573 = smul.addr %s4572, 16
      %s4574 = smul.addr %s4573, 8
      %s4575 = scalar_lea.vmem %s5, %s4574
      // Predicated region
      $region41: #{forward.3} parent=39 // pred_check
        %p4576 = pneg %p144
      $region42: #{forward.3} parent=39 // pred_check_branch
        %4578 = sbr.rel (%p4576) target = $region44
      $region43: #{forward.3} parent=39 // pred_region
        _
      $region44: #{forward.3} parent=39 // pred_fallthru
        _
    $region40: #{forward.3} parent=5 // pred_fallthru
      _
    %p4579 = scmp.le.s32.totalorder 2, %s11
    // Predicated region
    $region45: #{forward.3} parent=5 // pred_check
      %p4580 = pneg %p4579
    $region46: #{forward.3} parent=5 // pred_check_branch
      %4582 = sbr.rel (%p4580) target = $region48
    $region47: #{forward.3} parent=5 // pred_region
      %s4583 = ssub.s32 %s11, 2
      // Predicated region
      $region49: #{forward.3} parent=47 // pred_check
        %p4584 = pneg %p150
      $region50: #{forward.3} parent=47 // pred_check_branch
        %4586 = sbr.rel (%p4584) target = $region52
      $region51: #{forward.3} parent=47 // pred_region
        %p4587 = scmp.lt.s32.totalorder %s17, 1
        %s4588 = scalar_select %p4587, %s17, 1
        %s4589 = smul.addr %s4588, 16
        %s4590 = smul.addr %s4589, 8
        %s4591 = scalar_lea.vmem %s5, %s4590
      $region52: #{forward.3} parent=47 // pred_fallthru
        _
    $region48: #{forward.3} parent=5 // pred_fallthru
      _
  $region6: #{forward.3} parent=0 // loop_footer
    %s15 = sadd.s32 1, %s11
  $region7: #{forward.3} parent=0 // loop_footer_branch
    %10 = sbr.rel target = $region3
  $region8: #{forward.3} parent=0 // loop_exit
    _

</llo_original>
